<compile_context>
chip_gen: v5e
topology: v5e:2x2
jax: 0.10.0
libtpu: 0.0.40
codegen_flags: <defaults>
</compile_context>

<pallas_src>
import functools

import numpy as np
import jax
import jax.numpy as jnp
from jax.experimental import pallas as pl
from jax.experimental.pallas import tpu as pltpu

# ---------------------------- synthetic "cfg" ------------------------------
NUM_CLASSES = 8          # cfg.MODEL.CENTERNET.NUM_CLASSES (small synthetic)
SEG_FEAT_CH = 8          # cfg.MODEL.CENTERNET.SEG_FEAT_CHANNEL
CONV_WEIGHT_CH = 16      # dynamic-conv weight channels of the head
HEAD_CONV = 32           # hidden channels of each head branch
BACKBONE_CH = (16, 32)   # two stride-2 convs (synthetic backbone)
DECONV_CH = 32           # CenternetDeconv output channels
PIXEL_MEAN = np.asarray([0.408, 0.447, 0.470], np.float32)
PIXEL_STD = np.asarray([0.289, 0.274, 0.278], np.float32)

HEAD_NAMES = ("cls", "wh", "reg", "seg_feat", "conv_weight")
HEAD_SPLITS = (NUM_CLASSES, 2, 2, SEG_FEAT_CH, CONV_WEIGHT_CH)   # sum = 36
N_OUT = sum(HEAD_SPLITS)
N_OUT_PAD = 128          # lane-dense output channels (zero-padded, sliced in JAX)
N3 = len(HEAD_NAMES) * HEAD_CONV        # 160 fused 3x3-head channels

# ----------------------- fused-kernel layout constants ----------------------
# Every intermediate is a flat (grid_position, channel) buffer; all grids use
# a common row width of GW=10 so conv taps are uniform row shifts.
GW = 10
P1_MARGIN = 24           # front margin so all bb2 tap offsets are >= 0
P1_ROWS = 144            # 24 margin + 10x10 grid (phase-channel bb1 output) + tail
P2_ROWS = 128            # bb2 output, coords (u+2,v+2), u,v in [0,8)
U_ROWS = 104             # deconv output, coords (a+1,b+1), phases in channels
M2 = P2_ROWS             # bb2 matmul rows (== P2 layout, pad rows masked to 0)
MU = U_ROWS              # deconv matmul rows (== U layout, pad rows masked to 0)
M3 = 80                  # head rows per output phase (8 x 10 grid, last 2 cols garbage)
OUT_ROWS = 4 * M3        # 320 rows per image: [py][px][Y][X(=0..9)]

# Static tap-offset tables ----------------------------------------------------
# bb2 (3x3 stride-2): 4 merged taps (dA,dB) over the phase-channel bb1 buffer.
BB2_OFFS = tuple(2 + GW * dA + dB for dA in (0, 1) for dB in (0, 1))
# deconv (sub-pixel 3x3 stride-1): 9 taps over the bb2 buffer.
DEC_OFFS = tuple(GW * dy + dx for dy in range(3) for dx in range(3))
# head 3x3: per output parity, the two row (col) displacements of the up map.
_DD = {0: (-1, 0), 1: (0, 1)}
HEAD_OFFS = tuple(
    tuple((_DD[py][tA] + 1) * GW + (_DD[px][tB] + 1)
          for tA in range(2) for tB in range(2))
    for py in range(2) for px in range(2))            # [2*py+px][2*tA+tB]


# ------------------------------ Pallas kernel -------------------------------
def _centernet_kernel(x1_ref, w1_ref, w2_ref, kd_ref, w3_ref, wh_ref,
                      b2_ref, bd_ref, b3_ref, bh_ref, sig_ref,
                      m2_ref, mu_ref,
                      out_ref,
                      p1_ref, p2_ref, u_ref):
    """Whole CenterNet forward for ONE image (grid step = image)."""
    f32, bf16 = jnp.float32, jnp.bfloat16

    # -- bb1: one dot.  Bias is folded into an indicator column of w1aug so
    #    pad rows (all-zero patches) come out exactly 0 after the ReLU.
    p1_ref[...] = jnp.maximum(
        jnp.dot(x1_ref[0], w1_ref[...], preferred_element_type=f32), 0.0)

    # -- bb2 (3x3 stride-2): 4 phase-merged taps, K = 64 each.
    acc = None
    for t, off in enumerate(BB2_OFFS):
        xs = p1_ref[off:off + M2, :].astype(bf16)
        d = jnp.dot(xs, w2_ref[t], preferred_element_type=f32)
        acc = d if acc is None else acc + d
    y = jnp.maximum(acc + b2_ref[...], 0.0)
    p2_ref[...] = y * m2_ref[...]            # zero the layout's padding rows

    # -- deconv (ConvTranspose2d k4 s2 p1) as sub-pixel 3x3 conv; the 4
    #    sub-pixel phases are the 4 x 32 output channel blocks of U.
    acc = None
    for t, off in enumerate(DEC_OFFS):
        xs = p2_ref[off:off + MU, :].astype(bf16)
        d = jnp.dot(xs, kd_ref[t], preferred_element_type=f32)
        acc = d if acc is None else acc + d
    y = jnp.maximum(acc + bd_ref[...], 0.0)
    u_ref[...] = y * mu_ref[...]             # zero the layout's padding rows

    # -- head: for each of the 4 output parities, fused 3x3 conv of the five
    #    branches (4 phase-merged taps, K=128) + block-diag 1x1 (N padded to
    #    128 lanes) with sigmoid only on the cls columns.
    for op in range(4):
        acc = None
        for t in range(4):
            off = HEAD_OFFS[op][t]
            xs = u_ref[off:off + M3, :].astype(bf16)
            d = jnp.dot(xs, w3_ref[op * 4 + t], preferred_element_type=f32)
            acc = d if acc is None else acc + d
        h3 = jnp.maximum(acc + b3_ref[...], 0.0).astype(bf16)
        o = jnp.dot(h3, wh_ref[...], preferred_element_type=f32) + bh_ref[...]
        o = jnp.where(sig_ref[...] > 0.0, jax.nn.sigmoid(o), o)
        out_ref[0, op * M3:(op + 1) * M3, :] = o


def centernet_pallas(prep, x1):
    n = x1.shape[0]
    return pl.pallas_call(
        _centernet_kernel,
        out_shape=jax.ShapeDtypeStruct((n, OUT_ROWS, N_OUT_PAD), jnp.float32),
        grid_spec=pltpu.PrefetchScalarGridSpec(
            num_scalar_prefetch=0,
            grid=(n,),
            in_specs=[
                pl.BlockSpec((1, P1_ROWS, 76), lambda b: (b, 0, 0)),     # x1 patches
                pl.BlockSpec((76, 64), lambda b: (0, 0)),                # w1aug
                pl.BlockSpec((4, 64, 32), lambda b: (0, 0, 0)),          # w2big
                pl.BlockSpec((9, 32, 128), lambda b: (0, 0, 0)),         # kd (subpixel)
                pl.BlockSpec((16, 128, N3), lambda b: (0, 0, 0)),        # w3big
                pl.BlockSpec((N3, N_OUT_PAD), lambda b: (0, 0)),         # head 1x1
                pl.BlockSpec((1, 32), lambda b: (0, 0)),                 # b2
                pl.BlockSpec((1, 128), lambda b: (0, 0)),                # bd
                pl.BlockSpec((1, N3), lambda b: (0, 0)),                 # b3
                pl.BlockSpec((1, N_OUT_PAD), lambda b: (0, 0)),          # bh
                pl.BlockSpec((1, N_OUT_PAD), lambda b: (0, 0)),          # sigmoid mask
                pl.BlockSpec((P2_ROWS, 1), lambda b: (0, 0)),            # P2 valid mask
                pl.BlockSpec((U_ROWS, 1), lambda b: (0, 0)),             # U  valid mask
            ],
            out_specs=pl.BlockSpec((1, OUT_ROWS, N_OUT_PAD), lambda b: (b, 0, 0)),
            scratch_shapes=[
                pltpu.VMEM((P1_ROWS, 64), jnp.float32),    # bb1 out (phase channels)
                pltpu.VMEM((P2_ROWS, 32), jnp.float32),    # bb2 out
                pltpu.VMEM((U_ROWS, 128), jnp.float32),    # up map (phase channels)
            ],
        ),
        compiler_params=pltpu.CompilerParams(
            dimension_semantics=("parallel",)),
    )(x1, prep["w1aug"], prep["w2big"], prep["kd"], prep["w3big"], prep["wh"],
      prep["b2"], prep["bd"], prep["b3"], prep["bh"], prep["sig"],
      prep["m2"], prep["mu"])


# ------------------------------- parameters --------------------------------
def _init_conv(key, kh, kw, cin, cout, scale=0.05):
    kw_, kb_ = jax.random.split(key)
    w = scale * jax.random.normal(kw_, (kh, kw, cin, cout), jnp.float32)
    b = scale * jax.random.normal(kb_, (cout,), jnp.float32)
    return w, b


def init_params(key):
    keys = jax.random.split(key, 16)
    p = {}
    p["bb1"] = _init_conv(keys[0], 3, 3, 3, BACKBONE_CH[0])
    p["bb2"] = _init_conv(keys[1], 3, 3, BACKBONE_CH[0], BACKBONE_CH[1])
    p["deconv"] = _init_conv(keys[2], 4, 4, BACKBONE_CH[1], DECONV_CH)

    def head(k1, k2, cout, cls_bias=None):
        c0 = _init_conv(k1, 3, 3, DECONV_CH, HEAD_CONV)
        w1, b1 = _init_conv(k2, 1, 1, HEAD_CONV, cout)
        if cls_bias is not None:
            b1 = jnp.full_like(b1, cls_bias)   # CenterNet cls bias init -2.19
        return c0, (w1, b1)

    p["cls"] = head(keys[3], keys[4], NUM_CLASSES, cls_bias=-2.19)
    p["wh"] = head(keys[5], keys[6], 2)
    p["reg"] = head(keys[7], keys[8], 2)
    p["seg_feat"] = head(keys[9], keys[10], SEG_FEAT_CH)
    p["conv_weight"] = head(keys[11], keys[12], CONV_WEIGHT_CH)
    return p


def prepare_params(p):
    """One-time weight rearrangement (fusion, phase-merging, folding, bf16)."""
    prep = {}
    mean = jnp.asarray(PIXEL_MEAN)
    std = jnp.asarray(PIXEL_STD)
    scale = 1.0 / (255.0 * std)
    shift = -mean / std

    # --- bb1: fold normalization, embed the 4 space-to-depth phases as output
    #     channel blocks, fold the bias into an indicator column (row 75).
    w1, b1 = p["bb1"]                                       # (3,3,3,16), (16,)
    w1f = np.asarray(w1 * scale.reshape(1, 1, 3, 1), np.float32)
    b1f = np.asarray(b1 + jnp.einsum("ijcd,c->d", w1, shift), np.float32)
    w1aug = np.zeros((5 * 5 * 3 + 1, 4 * 16), np.float32)
    for pa in range(2):
        for pb in range(2):
            g = 2 * pa + pb
            for i in range(3):
                for j in range(3):
                    row = ((2 * pa + i) * 5 + (2 * pb + j)) * 3
                    w1aug[row:row + 3, g * 16:(g + 1) * 16] = w1f[i, j]
            w1aug[75, g * 16:(g + 1) * 16] = b1f
    prep["w1aug"] = jnp.asarray(w1aug, jnp.bfloat16)
    prep["pad_val"] = jnp.asarray(255.0 * PIXEL_MEAN, jnp.float32)

    # --- bb2: merge the 9 taps into 4 phase-merged (64, 32) matrices.
    w2, b2 = p["bb2"]
    w2n = np.asarray(w2, np.float32)                        # (3,3,16,32)
    w2big = np.zeros((4, 64, 32), np.float32)
    for dA in range(2):
        for dB in range(2):
            t = 2 * dA + dB
            for pa in range(2):
                for pb in range(2):
                    i, j = 2 * dA + pa - 1, 2 * dB + pb - 1
                    if 0 <= i < 3 and 0 <= j < 3:
                        g = 2 * pa + pb
                        w2big[t, g * 16:(g + 1) * 16, :] = w2n[i, j]
    prep["w2big"] = jnp.asarray(w2big, jnp.bfloat16)
    prep["b2"] = b2.reshape(1, -1).astype(jnp.float32)

    # --- deconv (ConvTranspose2d k4 s2 p1) -> sub-pixel 3x3 kernel (9,32,128).
    wd, bd = p["deconv"]
    wdn = np.asarray(wd, np.float32)                        # (4,4,32,32)
    k3 = np.zeros((3, 3, 32, 4, 32), np.float32)
    taps = {0: ((0, 3), (1, 1)), 1: ((1, 2), (2, 0))}       # phase -> (dy, ki) pairs
    for r in (0, 1):
        for s in (0, 1):
            ph = 2 * r + s
            for (dy, ki) in taps[r]:
                for (dx, kj) in taps[s]:
                    k3[dy, dx, :, ph, :] = wdn[ki, kj]
    prep["kd"] = jnp.asarray(k3.reshape(9, 32, 128), jnp.bfloat16)
    prep["bd"] = jnp.tile(bd, 4).reshape(1, -1).astype(jnp.float32)

    # --- head 3x3: five branches fused along cout, split by output parity into
    #     4 phase-merged (128, 160) matrices per output phase.
    w3 = np.asarray(jnp.concatenate([p[n][0][0] for n in HEAD_NAMES], axis=-1),
                    np.float32)                             # (3,3,32,160)
    b3 = jnp.concatenate([p[n][0][1] for n in HEAD_NAMES], axis=-1)

    def tapmap(parity):       # (dd, input-phase-parity) -> kernel tap index i
        return ({(-1, 1): 0, (0, 0): 1, (0, 1): 2} if parity == 0
                else {(0, 0): 0, (0, 1): 1, (1, 0): 2})

    w3big = np.zeros((4, 4, 128, N3), np.float32)
    for py in range(2):
        rm = tapmap(py)
        for px in range(2):
            cm = tapmap(px)
            op = 2 * py + px
            for tA, ddA in enumerate(_DD[py]):
                for tB, ddB in enumerate(_DD[px]):
                    t = 2 * tA + tB
                    for pr in range(2):
                        for pc in range(2):
                            i = rm.get((ddA, pr))
                            j = cm.get((ddB, pc))
                            if i is None or j is None:
                                continue
                            g = 2 * pr + pc
                            w3big[op, t, g * 32:(g + 1) * 32, :] = w3[i, j]
    prep["w3big"] = jnp.asarray(w3big.reshape(16, 128, N3), jnp.bfloat16)
    prep["b3"] = b3.reshape(1, -1).astype(jnp.float32)

    # --- head 1x1: block-diag (160, 36) zero-padded to 128 lane-dense columns.
    whd = np.zeros((N3, N_OUT_PAD), np.float32)
    bh = np.zeros((N_OUT_PAD,), np.float32)
    sig = np.zeros((N_OUT_PAD,), np.float32)
    off = 0
    for k, (name, ck) in enumerate(zip(HEAD_NAMES, HEAD_SPLITS)):
        w1x, b1x = p[name][1]
        whd[k * HEAD_CONV:(k + 1) * HEAD_CONV, off:off + ck] = \
            np.asarray(w1x, np.float32).reshape(HEAD_CONV, ck)
        bh[off:off + ck] = np.asarray(b1x, np.float32)
        if name == "cls":
            sig[off:off + ck] = 1.0              # sigmoid only on cls columns
        off += ck
    prep["wh"] = jnp.asarray(whd, jnp.bfloat16)
    prep["bh"] = jnp.asarray(bh.reshape(1, -1))
    prep["sig"] = jnp.asarray(sig.reshape(1, -1))

    # --- validity masks of the flat layouts (zero out the padding rows).
    m2 = np.zeros((P2_ROWS, 1), np.float32)
    for r in range(P2_ROWS):
        uu, vv = divmod(r, GW)
        if 2 <= uu < 10 and 2 <= vv < 10:
            m2[r] = 1.0
    mu = np.zeros((U_ROWS, 1), np.float32)
    for r in range(min(U_ROWS, 100)):
        aa, bb = divmod(r, GW)
        if 1 <= aa < 9 and 1 <= bb < 9:
            mu[r] = 1.0
    prep["m2"] = jnp.asarray(m2)
    prep["mu"] = jnp.asarray(mu)
    return prep


# -------------------------- JAX-side input / output -------------------------
def _prepare_x1(x_nchw, pad_val):
    """Raw NCHW uint-range image -> bb1 patch matrix in the fused layout.

    Rows enumerate the phase-channel bb1 grid (margin 24 + 10x10 grid + tail);
    real rows hold the 5x5x3 raw patch + an indicator column (for the folded
    bias); padding rows are all-zero so bb1's matmul emits exact zeros there.
    """
    n = x_nchw.shape[0]
    x = jnp.transpose(x_nchw, (0, 2, 3, 1)).astype(jnp.float32)     # NHWC
    # pad 1 on top/left with 255*mean (== 0 after the folded normalization)
    xp = jnp.broadcast_to(pad_val.reshape(1, 1, 1, 3), (n, 33, 33, 3))
    xp = xp.at[:, 1:, 1:, :].set(x)
    cols = []
    for di in range(5):
        for dj in range(5):
            cols.append(xp[:, di:di + 29:4, dj:dj + 29:4, :])
    patches = jnp.concatenate(cols, axis=-1)                        # (n,8,8,75)
    grid = jnp.zeros((n, 10, 10, 76), jnp.float32)
    grid = grid.at[:, 1:9, 1:9, :75].set(patches)
    grid = grid.at[:, 1:9, 1:9, 75].set(1.0)
    x1 = grid.reshape(n, 100, 76)
    x1 = jnp.pad(x1, ((0, 0), (P1_MARGIN, P1_ROWS - P1_MARGIN - 100), (0, 0)))
    return x1.astype(jnp.bfloat16)


def centernet_forward(prep, x_nchw):
    """images (NCHW, 0..255) -> pred_dict of NCHW maps at stride 2."""
    n = x_nchw.shape[0]
    x1 = _prepare_x1(x_nchw, prep["pad_val"])
    out = centernet_pallas(prep, x1)                                # (n,320,128)
    # undo the output-phase ordering and drop the 2 garbage grid columns
    o = out.reshape(n, 2, 2, 8, GW, N_OUT_PAD)[:, :, :, :, :8, :]
    o = o.transpose(0, 3, 1, 4, 2, 5).reshape(n, 16, 16, N_OUT_PAD)
    o = o[..., :N_OUT].transpose(0, 3, 1, 2)                        # NCHW
    pred, off = {}, 0
    for name, ck in zip(HEAD_NAMES, HEAD_SPLITS):
        pred[name] = o[:, off:off + ck]
        off += ck
    # TODO(synk): losses() / get_ground_truth() / inference decode need gt
    # instances and detectron2 structures (Instances, Boxes); not reproduced.
    return pred


# ------------------------------ pure-JAX reference --------------------------
def _conv_ref(x, w, b, stride):
    y = jax.lax.conv_general_dilated(
        x, w, window_strides=(stride, stride), padding=((1, 1), (1, 1)),
        dimension_numbers=("NHWC", "HWIO", "NHWC"),
        precision=jax.lax.Precision.HIGHEST)
    return y + b


def _deconv_ref(x, w, b):     # ConvTranspose2d(k=4, s=2, p=1), w: (4,4,ci,co)
    n, h, wd_, _ = x.shape
    co = w.shape[-1]
    out = jnp.zeros((n, 2 * h + 3, 2 * wd_ + 3, co), jnp.float32)
    for ky in range(4):
        for kx in range(4):
            contrib = jnp.einsum("nijc,cd->nijd", x, w[ky, kx])
            out = out.at[:, ky:ky + 2 * h:2, kx:kx + 2 * wd_:2, :].add(contrib)
    return out[:, 1:1 + 2 * h, 1:1 + 2 * wd_, :] + b


def reference_forward(params, x_nchw):
    x = jnp.transpose(x_nchw, (0, 2, 3, 1)).astype(jnp.float32)
    xn = (x / 255.0 - jnp.asarray(PIXEL_MEAN)) / jnp.asarray(PIXEL_STD)
    w, b = params["bb1"]
    f = jax.nn.relu(_conv_ref(xn, w, b, 2))
    w, b = params["bb2"]
    f = jax.nn.relu(_conv_ref(f, w, b, 2))
    w, b = params["deconv"]
    up = jax.nn.relu(_deconv_ref(f, w, b))
    pred = {}
    for name, ck in zip(HEAD_NAMES, HEAD_SPLITS):
        (w3, b3), (w1x, b1x) = params[name]
        h = jax.nn.relu(_conv_ref(up, w3, b3, 1))
        o = jnp.einsum("nijc,cd->nijd", h, w1x.reshape(HEAD_CONV, ck)) + b1x
        if name == "cls":
            o = jax.nn.sigmoid(o)
        pred[name] = jnp.transpose(o, (0, 3, 1, 2))
    return pred


# ---------------------------------- main ------------------------------------
if __name__ == "__main__":
    key = jax.random.PRNGKey(0)
    x = jax.random.uniform(key, (2, 3, 32, 32), jnp.float32, 0.0, 255.0)  # NCHW
    params = init_params(jax.random.PRNGKey(1))
    prep = prepare_params(params)

    fwd = jax.jit(functools.partial(centernet_forward, prep))
    pred = jax.block_until_ready(fwd(x))

    expected = {
        "cls": (2, NUM_CLASSES, 16, 16),
        "wh": (2, 2, 16, 16),
        "reg": (2, 2, 16, 16),
        "seg_feat": (2, SEG_FEAT_CH, 16, 16),
        "conv_weight": (2, CONV_WEIGHT_CH, 16, 16),
    }
    for k, shp in expected.items():
        assert pred[k].shape == shp, (k, pred[k].shape, shp)
        assert bool(jnp.all(jnp.isfinite(pred[k]))), k
    assert bool(jnp.all((pred["cls"] >= 0.0) & (pred["cls"] <= 1.0)))

    # numeric check vs. the f32 reference (bf16 MXU operands -> loose tol)
    ref = jax.block_until_ready(reference_forward(params, x))
    for k in expected:
        np.testing.assert_allclose(np.asarray(pred[k]), np.asarray(ref[k]),
                                   rtol=5e-2, atol=2e-2, err_msg=k)

    print("KERNEL_OK")
</pallas_src>

<mosaic_0001>
module attributes {stable_mosaic.version = 11 : i64} {
  func.func @_centernet_kernel(%arg0: i32, %arg1: memref<1x144x76xbf16, #tpu.memory_space<vmem>>, %arg2: memref<76x64xbf16, #tpu.memory_space<vmem>>, %arg3: memref<4x64x32xbf16, #tpu.memory_space<vmem>>, %arg4: memref<9x32x128xbf16, #tpu.memory_space<vmem>>, %arg5: memref<16x128x160xbf16, #tpu.memory_space<vmem>>, %arg6: memref<160x128xbf16, #tpu.memory_space<vmem>>, %arg7: memref<1x32xf32, #tpu.memory_space<vmem>>, %arg8: memref<1x128xf32, #tpu.memory_space<vmem>>, %arg9: memref<1x160xf32, #tpu.memory_space<vmem>>, %arg10: memref<1x128xf32, #tpu.memory_space<vmem>>, %arg11: memref<1x128xf32, #tpu.memory_space<vmem>>, %arg12: memref<128x1xf32, #tpu.memory_space<vmem>>, %arg13: memref<104x1xf32, #tpu.memory_space<vmem>>, %arg14: memref<1x320x128xf32, #tpu.memory_space<vmem>>, %arg15: memref<144x64xf32, #tpu.memory_space<vmem>>, %arg16: memref<128x32xf32, #tpu.memory_space<vmem>>, %arg17: memref<104x128xf32, #tpu.memory_space<vmem>>) attributes {dimension_semantics = [#tpu.dimension_semantics<parallel>], iteration_bounds = array<i64: 2>, scalar_prefetch = 0 : i64, scratch_operands = 3 : i64, tpu.core_type = #tpu.core_type<tc>, window_params = [{transform_indices = @transform_0, window_bounds = array<i64: 1, 144, 76>}, {pipeline_mode = #tpu.pipeline_mode<synchronous>, transform_indices = @transform_1, window_bounds = array<i64: 76, 64>}, {pipeline_mode = #tpu.pipeline_mode<synchronous>, transform_indices = @transform_2, window_bounds = array<i64: 4, 64, 32>}, {pipeline_mode = #tpu.pipeline_mode<synchronous>, transform_indices = @transform_3, window_bounds = array<i64: 9, 32, 128>}, {pipeline_mode = #tpu.pipeline_mode<synchronous>, transform_indices = @transform_4, window_bounds = array<i64: 16, 128, 160>}, {pipeline_mode = #tpu.pipeline_mode<synchronous>, transform_indices = @transform_5, window_bounds = array<i64: 160, 128>}, {pipeline_mode = #tpu.pipeline_mode<synchronous>, transform_indices = @transform_6, window_bounds = array<i64: 1, 32>}, {pipeline_mode = #tpu.pipeline_mode<synchronous>, transform_indices = @transform_7, window_bounds = array<i64: 1, 128>}, {pipeline_mode = #tpu.pipeline_mode<synchronous>, transform_indices = @transform_8, window_bounds = array<i64: 1, 160>}, {pipeline_mode = #tpu.pipeline_mode<synchronous>, transform_indices = @transform_9, window_bounds = array<i64: 1, 128>}, {pipeline_mode = #tpu.pipeline_mode<synchronous>, transform_indices = @transform_10, window_bounds = array<i64: 1, 128>}, {pipeline_mode = #tpu.pipeline_mode<synchronous>, transform_indices = @transform_11, window_bounds = array<i64: 128, 1>}, {pipeline_mode = #tpu.pipeline_mode<synchronous>, transform_indices = @transform_12, window_bounds = array<i64: 104, 1>}, {transform_indices = @transform_13, window_bounds = array<i64: 1, 320, 128>}]} {
    %c0 = arith.constant 0 : index
    %c0_0 = arith.constant 0 : index
    %c0_1 = arith.constant 0 : index
    %0 = vector.load %arg1[%c0, %c0_0, %c0_1] : memref<1x144x76xbf16, #tpu.memory_space<vmem>>, vector<1x144x76xbf16>
    %1 = vector.shape_cast %0 : vector<1x144x76xbf16> to vector<144x76xbf16>
    %c0_2 = arith.constant 0 : index
    %c0_3 = arith.constant 0 : index
    %2 = vector.load %arg2[%c0_2, %c0_3] : memref<76x64xbf16, #tpu.memory_space<vmem>>, vector<76x64xbf16>
    %cst = arith.constant dense<0.000000e+00> : vector<144x64xf32>
    %3 = tpu.matmul %1, %2, %cst {dimension_numbers = #tpu.dot_dimension_numbers<[1], [0], [0], [1], [0, 0, 1, 1], [], []>} : vector<144x76xbf16>, vector<76x64xbf16>, vector<144x64xf32> -> vector<144x64xf32>
    %cst_4 = arith.constant 0.000000e+00 : f32
    %4 = vector.broadcast %cst_4 : f32 to vector<144x64xf32>
    %5 = arith.maximumf %3, %4 : vector<144x64xf32>
    %c0_5 = arith.constant 0 : index
    %c0_6 = arith.constant 0 : index
    %6 = vector.load %arg15[%c0_5, %c0_6] : memref<144x64xf32, #tpu.memory_space<vmem>>, vector<144x64xf32>
    tpu.vector_store %arg15[%c0_5, %c0_6], %5 {strides = array<i32>} : memref<144x64xf32, #tpu.memory_space<vmem>>, vector<144x64xf32>,
    %c2 = arith.constant 2 : index
    %c0_7 = arith.constant 0 : index
    %7 = vector.load %arg15[%c2, %c0_7] : memref<144x64xf32, #tpu.memory_space<vmem>>, vector<128x64xf32>
    %8 = arith.truncf %7 : vector<128x64xf32> to vector<128x64xbf16>
    %c0_8 = arith.constant 0 : index
    %c0_9 = arith.constant 0 : index
    %c0_10 = arith.constant 0 : index
    %9 = vector.load %arg3[%c0_8, %c0_9, %c0_10] : memref<4x64x32xbf16, #tpu.memory_space<vmem>>, vector<1x64x32xbf16>
    %10 = vector.shape_cast %9 : vector<1x64x32xbf16> to vector<64x32xbf16>
    %cst_11 = arith.constant dense<0.000000e+00> : vector<128x32xf32>
    %11 = tpu.matmul %8, %10, %cst_11 {dimension_numbers = #tpu.dot_dimension_numbers<[1], [0], [0], [1], [0, 0, 1, 1], [], []>} : vector<128x64xbf16>, vector<64x32xbf16>, vector<128x32xf32> -> vector<128x32xf32>
    %c3 = arith.constant 3 : index
    %c0_12 = arith.constant 0 : index
    %12 = vector.load %arg15[%c3, %c0_12] : memref<144x64xf32, #tpu.memory_space<vmem>>, vector<128x64xf32>
    %13 = arith.truncf %12 : vector<128x64xf32> to vector<128x64xbf16>
    %c1 = arith.constant 1 : index
    %c0_13 = arith.constant 0 : index
    %c0_14 = arith.constant 0 : index
    %14 = vector.load %arg3[%c1, %c0_13, %c0_14] : memref<4x64x32xbf16, #tpu.memory_space<vmem>>, vector<1x64x32xbf16>
    %15 = vector.shape_cast %14 : vector<1x64x32xbf16> to vector<64x32xbf16>
    %cst_15 = arith.constant dense<0.000000e+00> : vector<128x32xf32>
    %16 = tpu.matmul %13, %15, %cst_15 {dimension_numbers = #tpu.dot_dimension_numbers<[1], [0], [0], [1], [0, 0, 1, 1], [], []>} : vector<128x64xbf16>, vector<64x32xbf16>, vector<128x32xf32> -> vector<128x32xf32>
    %17 = arith.addf %11, %16 : vector<128x32xf32>
    %c12 = arith.constant 12 : index
    %c0_16 = arith.constant 0 : index
    %18 = vector.load %arg15[%c12, %c0_16] : memref<144x64xf32, #tpu.memory_space<vmem>>, vector<128x64xf32>
    %19 = arith.truncf %18 : vector<128x64xf32> to vector<128x64xbf16>
    %c2_17 = arith.constant 2 : index
    %c0_18 = arith.constant 0 : index
    %c0_19 = arith.constant 0 : index
    %20 = vector.load %arg3[%c2_17, %c0_18, %c0_19] : memref<4x64x32xbf16, #tpu.memory_space<vmem>>, vector<1x64x32xbf16>
    %21 = vector.shape_cast %20 : vector<1x64x32xbf16> to vector<64x32xbf16>
    %cst_20 = arith.constant dense<0.000000e+00> : vector<128x32xf32>
    %22 = tpu.matmul %19, %21, %cst_20 {dimension_numbers = #tpu.dot_dimension_numbers<[1], [0], [0], [1], [0, 0, 1, 1], [], []>} : vector<128x64xbf16>, vector<64x32xbf16>, vector<128x32xf32> -> vector<128x32xf32>
    %23 = arith.addf %17, %22 : vector<128x32xf32>
    %c13 = arith.constant 13 : index
    %c0_21 = arith.constant 0 : index
    %24 = vector.load %arg15[%c13, %c0_21] : memref<144x64xf32, #tpu.memory_space<vmem>>, vector<128x64xf32>
    %25 = arith.truncf %24 : vector<128x64xf32> to vector<128x64xbf16>
    %c3_22 = arith.constant 3 : index
    %c0_23 = arith.constant 0 : index
    %c0_24 = arith.constant 0 : index
    %26 = vector.load %arg3[%c3_22, %c0_23, %c0_24] : memref<4x64x32xbf16, #tpu.memory_space<vmem>>, vector<1x64x32xbf16>
    %27 = vector.shape_cast %26 : vector<1x64x32xbf16> to vector<64x32xbf16>
    %cst_25 = arith.constant dense<0.000000e+00> : vector<128x32xf32>
    %28 = tpu.matmul %25, %27, %cst_25 {dimension_numbers = #tpu.dot_dimension_numbers<[1], [0], [0], [1], [0, 0, 1, 1], [], []>} : vector<128x64xbf16>, vector<64x32xbf16>, vector<128x32xf32> -> vector<128x32xf32>
    %29 = arith.addf %23, %28 : vector<128x32xf32>
    %c0_26 = arith.constant 0 : index
    %c0_27 = arith.constant 0 : index
    %30 = vector.load %arg7[%c0_26, %c0_27] : memref<1x32xf32, #tpu.memory_space<vmem>>, vector<1x32xf32>
    %31 = vector.broadcast %30 : vector<1x32xf32> to vector<128x32xf32>
    %32 = arith.addf %29, %31 : vector<128x32xf32>
    %cst_28 = arith.constant 0.000000e+00 : f32
    %33 = vector.broadcast %cst_28 : f32 to vector<128x32xf32>
    %34 = arith.maximumf %32, %33 : vector<128x32xf32>
    %c0_29 = arith.constant 0 : index
    %c0_30 = arith.constant 0 : index
    %35 = vector.load %arg12[%c0_29, %c0_30] : memref<128x1xf32, #tpu.memory_space<vmem>>, vector<128x1xf32>
    %36 = vector.broadcast %35 : vector<128x1xf32> to vector<128x32xf32>
    %37 = arith.mulf %34, %36 : vector<128x32xf32>
    %c0_31 = arith.constant 0 : index
    %c0_32 = arith.constant 0 : index
    %38 = vector.load %arg16[%c0_31, %c0_32] : memref<128x32xf32, #tpu.memory_space<vmem>>, vector<128x32xf32>
    tpu.vector_store %arg16[%c0_31, %c0_32], %37 {strides = array<i32>} : memref<128x32xf32, #tpu.memory_space<vmem>>, vector<128x32xf32>,
    %c0_33 = arith.constant 0 : index
    %c0_34 = arith.constant 0 : index
    %39 = vector.load %arg16[%c0_33, %c0_34] : memref<128x32xf32, #tpu.memory_space<vmem>>, vector<104x32xf32>
    %40 = arith.truncf %39 : vector<104x32xf32> to vector<104x32xbf16>
    %c0_35 = arith.constant 0 : index
    %c0_36 = arith.constant 0 : index
    %c0_37 = arith.constant 0 : index
    %41 = vector.load %arg4[%c0_35, %c0_36, %c0_37] : memref<9x32x128xbf16, #tpu.memory_space<vmem>>, vector<1x32x128xbf16>
    %42 = vector.shape_cast %41 : vector<1x32x128xbf16> to vector<32x128xbf16>
    %cst_38 = arith.constant dense<0.000000e+00> : vector<104x128xf32>
    %43 = tpu.matmul %40, %42, %cst_38 {dimension_numbers = #tpu.dot_dimension_numbers<[1], [0], [0], [1], [0, 0, 1, 1], [], []>} : vector<104x32xbf16>, vector<32x128xbf16>, vector<104x128xf32> -> vector<104x128xf32>
    %c1_39 = arith.constant 1 : index
    %c0_40 = arith.constant 0 : index
    %44 = vector.load %arg16[%c1_39, %c0_40] : memref<128x32xf32, #tpu.memory_space<vmem>>, vector<104x32xf32>
    %45 = arith.truncf %44 : vector<104x32xf32> to vector<104x32xbf16>
    %c1_41 = arith.constant 1 : index
    %c0_42 = arith.constant 0 : index
    %c0_43 = arith.constant 0 : index
    %46 = vector.load %arg4[%c1_41, %c0_42, %c0_43] : memref<9x32x128xbf16, #tpu.memory_space<vmem>>, vector<1x32x128xbf16>
    %47 = vector.shape_cast %46 : vector<1x32x128xbf16> to vector<32x128xbf16>
    %cst_44 = arith.constant dense<0.000000e+00> : vector<104x128xf32>
    %48 = tpu.matmul %45, %47, %cst_44 {dimension_numbers = #tpu.dot_dimension_numbers<[1], [0], [0], [1], [0, 0, 1, 1], [], []>} : vector<104x32xbf16>, vector<32x128xbf16>, vector<104x128xf32> -> vector<104x128xf32>
    %49 = arith.addf %43, %48 : vector<104x128xf32>
    %c2_45 = arith.constant 2 : index
    %c0_46 = arith.constant 0 : index
    %50 = vector.load %arg16[%c2_45, %c0_46] : memref<128x32xf32, #tpu.memory_space<vmem>>, vector<104x32xf32>
    %51 = arith.truncf %50 : vector<104x32xf32> to vector<104x32xbf16>
    %c2_47 = arith.constant 2 : index
    %c0_48 = arith.constant 0 : index
    %c0_49 = arith.constant 0 : index
    %52 = vector.load %arg4[%c2_47, %c0_48, %c0_49] : memref<9x32x128xbf16, #tpu.memory_space<vmem>>, vector<1x32x128xbf16>
    %53 = vector.shape_cast %52 : vector<1x32x128xbf16> to vector<32x128xbf16>
    %cst_50 = arith.constant dense<0.000000e+00> : vector<104x128xf32>
    %54 = tpu.matmul %51, %53, %cst_50 {dimension_numbers = #tpu.dot_dimension_numbers<[1], [0], [0], [1], [0, 0, 1, 1], [], []>} : vector<104x32xbf16>, vector<32x128xbf16>, vector<104x128xf32> -> vector<104x128xf32>
    %55 = arith.addf %49, %54 : vector<104x128xf32>
    %c10 = arith.constant 10 : index
    %c0_51 = arith.constant 0 : index
    %56 = vector.load %arg16[%c10, %c0_51] : memref<128x32xf32, #tpu.memory_space<vmem>>, vector<104x32xf32>
    %57 = arith.truncf %56 : vector<104x32xf32> to vector<104x32xbf16>
    %c3_52 = arith.constant 3 : index
    %c0_53 = arith.constant 0 : index
    %c0_54 = arith.constant 0 : index
    %58 = vector.load %arg4[%c3_52, %c0_53, %c0_54] : memref<9x32x128xbf16, #tpu.memory_space<vmem>>, vector<1x32x128xbf16>
    %59 = vector.shape_cast %58 : vector<1x32x128xbf16> to vector<32x128xbf16>
    %cst_55 = arith.constant dense<0.000000e+00> : vector<104x128xf32>
    %60 = tpu.matmul %57, %59, %cst_55 {dimension_numbers = #tpu.dot_dimension_numbers<[1], [0], [0], [1], [0, 0, 1, 1], [], []>} : vector<104x32xbf16>, vector<32x128xbf16>, vector<104x128xf32> -> vector<104x128xf32>
    %61 = arith.addf %55, %60 : vector<104x128xf32>
    %c11 = arith.constant 11 : index
    %c0_56 = arith.constant 0 : index
    %62 = vector.load %arg16[%c11, %c0_56] : memref<128x32xf32, #tpu.memory_space<vmem>>, vector<104x32xf32>
    %63 = arith.truncf %62 : vector<104x32xf32> to vector<104x32xbf16>
    %c4 = arith.constant 4 : index
    %c0_57 = arith.constant 0 : index
    %c0_58 = arith.constant 0 : index
    %64 = vector.load %arg4[%c4, %c0_57, %c0_58] : memref<9x32x128xbf16, #tpu.memory_space<vmem>>, vector<1x32x128xbf16>
    %65 = vector.shape_cast %64 : vector<1x32x128xbf16> to vector<32x128xbf16>
    %cst_59 = arith.constant dense<0.000000e+00> : vector<104x128xf32>
    %66 = tpu.matmul %63, %65, %cst_59 {dimension_numbers = #tpu.dot_dimension_numbers<[1], [0], [0], [1], [0, 0, 1, 1], [], []>} : vector<104x32xbf16>, vector<32x128xbf16>, vector<104x128xf32> -> vector<104x128xf32>
    %67 = arith.addf %61, %66 : vector<104x128xf32>
    %c12_60 = arith.constant 12 : index
    %c0_61 = arith.constant 0 : index
    %68 = vector.load %arg16[%c12_60, %c0_61] : memref<128x32xf32, #tpu.memory_space<vmem>>, vector<104x32xf32>
    %69 = arith.truncf %68 : vector<104x32xf32> to vector<104x32xbf16>
    %c5 = arith.constant 5 : index
    %c0_62 = arith.constant 0 : index
    %c0_63 = arith.constant 0 : index
    %70 = vector.load %arg4[%c5, %c0_62, %c0_63] : memref<9x32x128xbf16, #tpu.memory_space<vmem>>, vector<1x32x128xbf16>
    %71 = vector.shape_cast %70 : vector<1x32x128xbf16> to vector<32x128xbf16>
    %cst_64 = arith.constant dense<0.000000e+00> : vector<104x128xf32>
    %72 = tpu.matmul %69, %71, %cst_64 {dimension_numbers = #tpu.dot_dimension_numbers<[1], [0], [0], [1], [0, 0, 1, 1], [], []>} : vector<104x32xbf16>, vector<32x128xbf16>, vector<104x128xf32> -> vector<104x128xf32>
    %73 = arith.addf %67, %72 : vector<104x128xf32>
    %c20 = arith.constant 20 : index
    %c0_65 = arith.constant 0 : index
    %74 = vector.load %arg16[%c20, %c0_65] : memref<128x32xf32, #tpu.memory_space<vmem>>, vector<104x32xf32>
    %75 = arith.truncf %74 : vector<104x32xf32> to vector<104x32xbf16>
    %c6 = arith.constant 6 : index
    %c0_66 = arith.constant 0 : index
    %c0_67 = arith.constant 0 : index
    %76 = vector.load %arg4[%c6, %c0_66, %c0_67] : memref<9x32x128xbf16, #tpu.memory_space<vmem>>, vector<1x32x128xbf16>
    %77 = vector.shape_cast %76 : vector<1x32x128xbf16> to vector<32x128xbf16>
    %cst_68 = arith.constant dense<0.000000e+00> : vector<104x128xf32>
    %78 = tpu.matmul %75, %77, %cst_68 {dimension_numbers = #tpu.dot_dimension_numbers<[1], [0], [0], [1], [0, 0, 1, 1], [], []>} : vector<104x32xbf16>, vector<32x128xbf16>, vector<104x128xf32> -> vector<104x128xf32>
    %79 = arith.addf %73, %78 : vector<104x128xf32>
    %c21 = arith.constant 21 : index
    %c0_69 = arith.constant 0 : index
    %80 = vector.load %arg16[%c21, %c0_69] : memref<128x32xf32, #tpu.memory_space<vmem>>, vector<104x32xf32>
    %81 = arith.truncf %80 : vector<104x32xf32> to vector<104x32xbf16>
    %c7 = arith.constant 7 : index
    %c0_70 = arith.constant 0 : index
    %c0_71 = arith.constant 0 : index
    %82 = vector.load %arg4[%c7, %c0_70, %c0_71] : memref<9x32x128xbf16, #tpu.memory_space<vmem>>, vector<1x32x128xbf16>
    %83 = vector.shape_cast %82 : vector<1x32x128xbf16> to vector<32x128xbf16>
    %cst_72 = arith.constant dense<0.000000e+00> : vector<104x128xf32>
    %84 = tpu.matmul %81, %83, %cst_72 {dimension_numbers = #tpu.dot_dimension_numbers<[1], [0], [0], [1], [0, 0, 1, 1], [], []>} : vector<104x32xbf16>, vector<32x128xbf16>, vector<104x128xf32> -> vector<104x128xf32>
    %85 = arith.addf %79, %84 : vector<104x128xf32>
    %c22 = arith.constant 22 : index
    %c0_73 = arith.constant 0 : index
    %86 = vector.load %arg16[%c22, %c0_73] : memref<128x32xf32, #tpu.memory_space<vmem>>, vector<104x32xf32>
    %87 = arith.truncf %86 : vector<104x32xf32> to vector<104x32xbf16>
    %c8 = arith.constant 8 : index
    %c0_74 = arith.constant 0 : index
    %c0_75 = arith.constant 0 : index
    %88 = vector.load %arg4[%c8, %c0_74, %c0_75] : memref<9x32x128xbf16, #tpu.memory_space<vmem>>, vector<1x32x128xbf16>
    %89 = vector.shape_cast %88 : vector<1x32x128xbf16> to vector<32x128xbf16>
    %cst_76 = arith.constant dense<0.000000e+00> : vector<104x128xf32>
    %90 = tpu.matmul %87, %89, %cst_76 {dimension_numbers = #tpu.dot_dimension_numbers<[1], [0], [0], [1], [0, 0, 1, 1], [], []>} : vector<104x32xbf16>, vector<32x128xbf16>, vector<104x128xf32> -> vector<104x128xf32>
    %91 = arith.addf %85, %90 : vector<104x128xf32>
    %c0_77 = arith.constant 0 : index
    %c0_78 = arith.constant 0 : index
    %92 = vector.load %arg8[%c0_77, %c0_78] : memref<1x128xf32, #tpu.memory_space<vmem>>, vector<1x128xf32>
    %93 = vector.broadcast %92 : vector<1x128xf32> to vector<104x128xf32>
    %94 = arith.addf %91, %93 : vector<104x128xf32>
    %cst_79 = arith.constant 0.000000e+00 : f32
    %95 = vector.broadcast %cst_79 : f32 to vector<104x128xf32>
    %96 = arith.maximumf %94, %95 : vector<104x128xf32>
    %c0_80 = arith.constant 0 : index
    %c0_81 = arith.constant 0 : index
    %97 = vector.load %arg13[%c0_80, %c0_81] : memref<104x1xf32, #tpu.memory_space<vmem>>, vector<104x1xf32>
    %98 = vector.broadcast %97 : vector<104x1xf32> to vector<104x128xf32>
    %99 = arith.mulf %96, %98 : vector<104x128xf32>
    %c0_82 = arith.constant 0 : index
    %c0_83 = arith.constant 0 : index
    %100 = vector.load %arg17[%c0_82, %c0_83] : memref<104x128xf32, #tpu.memory_space<vmem>>, vector<104x128xf32>
    tpu.vector_store %arg17[%c0_82, %c0_83], %99 {strides = array<i32>} : memref<104x128xf32, #tpu.memory_space<vmem>>, vector<104x128xf32>,
    %c0_84 = arith.constant 0 : index
    %c0_85 = arith.constant 0 : index
    %101 = vector.load %arg17[%c0_84, %c0_85] : memref<104x128xf32, #tpu.memory_space<vmem>>, vector<80x128xf32>
    %102 = arith.truncf %101 : vector<80x128xf32> to vector<80x128xbf16>
    %c0_86 = arith.constant 0 : index
    %c0_87 = arith.constant 0 : index
    %c0_88 = arith.constant 0 : index
    %103 = vector.load %arg5[%c0_86, %c0_87, %c0_88] : memref<16x128x160xbf16, #tpu.memory_space<vmem>>, vector<1x128x160xbf16>
    %104 = vector.shape_cast %103 : vector<1x128x160xbf16> to vector<128x160xbf16>
    %cst_89 = arith.constant dense<0.000000e+00> : vector<80x160xf32>
    %105 = tpu.matmul %102, %104, %cst_89 {dimension_numbers = #tpu.dot_dimension_numbers<[1], [0], [0], [1], [0, 0, 1, 1], [], []>} : vector<80x128xbf16>, vector<128x160xbf16>, vector<80x160xf32> -> vector<80x160xf32>
    %c1_90 = arith.constant 1 : index
    %c0_91 = arith.constant 0 : index
    %106 = vector.load %arg17[%c1_90, %c0_91] : memref<104x128xf32, #tpu.memory_space<vmem>>, vector<80x128xf32>
    %107 = arith.truncf %106 : vector<80x128xf32> to vector<80x128xbf16>
    %c1_92 = arith.constant 1 : index
    %c0_93 = arith.constant 0 : index
    %c0_94 = arith.constant 0 : index
    %108 = vector.load %arg5[%c1_92, %c0_93, %c0_94] : memref<16x128x160xbf16, #tpu.memory_space<vmem>>, vector<1x128x160xbf16>
    %109 = vector.shape_cast %108 : vector<1x128x160xbf16> to vector<128x160xbf16>
    %cst_95 = arith.constant dense<0.000000e+00> : vector<80x160xf32>
    %110 = tpu.matmul %107, %109, %cst_95 {dimension_numbers = #tpu.dot_dimension_numbers<[1], [0], [0], [1], [0, 0, 1, 1], [], []>} : vector<80x128xbf16>, vector<128x160xbf16>, vector<80x160xf32> -> vector<80x160xf32>
    %111 = arith.addf %105, %110 : vector<80x160xf32>
    %c10_96 = arith.constant 10 : index
    %c0_97 = arith.constant 0 : index
    %112 = vector.load %arg17[%c10_96, %c0_97] : memref<104x128xf32, #tpu.memory_space<vmem>>, vector<80x128xf32>
    %113 = arith.truncf %112 : vector<80x128xf32> to vector<80x128xbf16>
    %c2_98 = arith.constant 2 : index
    %c0_99 = arith.constant 0 : index
    %c0_100 = arith.constant 0 : index
    %114 = vector.load %arg5[%c2_98, %c0_99, %c0_100] : memref<16x128x160xbf16, #tpu.memory_space<vmem>>, vector<1x128x160xbf16>
    %115 = vector.shape_cast %114 : vector<1x128x160xbf16> to vector<128x160xbf16>
    %cst_101 = arith.constant dense<0.000000e+00> : vector<80x160xf32>
    %116 = tpu.matmul %113, %115, %cst_101 {dimension_numbers = #tpu.dot_dimension_numbers<[1], [0], [0], [1], [0, 0, 1, 1], [], []>} : vector<80x128xbf16>, vector<128x160xbf16>, vector<80x160xf32> -> vector<80x160xf32>
    %117 = arith.addf %111, %116 : vector<80x160xf32>
    %c11_102 = arith.constant 11 : index
    %c0_103 = arith.constant 0 : index
    %118 = vector.load %arg17[%c11_102, %c0_103] : memref<104x128xf32, #tpu.memory_space<vmem>>, vector<80x128xf32>
    %119 = arith.truncf %118 : vector<80x128xf32> to vector<80x128xbf16>
    %c3_104 = arith.constant 3 : index
    %c0_105 = arith.constant 0 : index
    %c0_106 = arith.constant 0 : index
    %120 = vector.load %arg5[%c3_104, %c0_105, %c0_106] : memref<16x128x160xbf16, #tpu.memory_space<vmem>>, vector<1x128x160xbf16>
    %121 = vector.shape_cast %120 : vector<1x128x160xbf16> to vector<128x160xbf16>
    %cst_107 = arith.constant dense<0.000000e+00> : vector<80x160xf32>
    %122 = tpu.matmul %119, %121, %cst_107 {dimension_numbers = #tpu.dot_dimension_numbers<[1], [0], [0], [1], [0, 0, 1, 1], [], []>} : vector<80x128xbf16>, vector<128x160xbf16>, vector<80x160xf32> -> vector<80x160xf32>
    %123 = arith.addf %117, %122 : vector<80x160xf32>
    %c0_108 = arith.constant 0 : index
    %c0_109 = arith.constant 0 : index
    %124 = vector.load %arg9[%c0_108, %c0_109] : memref<1x160xf32, #tpu.memory_space<vmem>>, vector<1x160xf32>
    %125 = vector.broadcast %124 : vector<1x160xf32> to vector<80x160xf32>
    %126 = arith.addf %123, %125 : vector<80x160xf32>
    %cst_110 = arith.constant 0.000000e+00 : f32
    %127 = vector.broadcast %cst_110 : f32 to vector<80x160xf32>
    %128 = arith.maximumf %126, %127 : vector<80x160xf32>
    %129 = arith.truncf %128 : vector<80x160xf32> to vector<80x160xbf16>
    %c0_111 = arith.constant 0 : index
    %c0_112 = arith.constant 0 : index
    %130 = vector.load %arg6[%c0_111, %c0_112] : memref<160x128xbf16, #tpu.memory_space<vmem>>, vector<160x128xbf16>
    %cst_113 = arith.constant dense<0.000000e+00> : vector<80x128xf32>
    %131 = tpu.matmul %129, %130, %cst_113 {dimension_numbers = #tpu.dot_dimension_numbers<[1], [0], [0], [1], [0, 0, 1, 1], [], []>} : vector<80x160xbf16>, vector<160x128xbf16>, vector<80x128xf32> -> vector<80x128xf32>
    %c0_114 = arith.constant 0 : index
    %c0_115 = arith.constant 0 : index
    %132 = vector.load %arg10[%c0_114, %c0_115] : memref<1x128xf32, #tpu.memory_space<vmem>>, vector<1x128xf32>
    %133 = vector.broadcast %132 : vector<1x128xf32> to vector<80x128xf32>
    %134 = arith.addf %131, %133 : vector<80x128xf32>
    %c0_116 = arith.constant 0 : index
    %c0_117 = arith.constant 0 : index
    %135 = vector.load %arg11[%c0_116, %c0_117] : memref<1x128xf32, #tpu.memory_space<vmem>>, vector<1x128xf32>
    %cst_118 = arith.constant 0.000000e+00 : f32
    %136 = vector.broadcast %cst_118 : f32 to vector<1x128xf32>
    %137 = arith.cmpf ogt, %135, %136 : vector<1x128xf32>
    %138 = arith.negf %134 : vector<80x128xf32>
    %139 = math.exp %138 : vector<80x128xf32>
    %cst_119 = arith.constant 1.000000e+00 : f32
    %140 = vector.broadcast %cst_119 : f32 to vector<80x128xf32>
    %141 = arith.addf %140, %139 : vector<80x128xf32>
    %142 = arith.divf %140, %141 : vector<80x128xf32>
    %143 = vector.shape_cast %137 : vector<1x128xi1> to vector<1x128xi1>
    %144 = vector.broadcast %143 : vector<1x128xi1> to vector<80x128xi1>
    %145 = arith.select %144, %142, %134 : vector<80x128xi1>, vector<80x128xf32>
    %c0_120 = arith.constant 0 : index
    %c0_121 = arith.constant 0 : index
    %c0_122 = arith.constant 0 : index
    %146 = vector.load %arg14[%c0_120, %c0_121, %c0_122] : memref<1x320x128xf32, #tpu.memory_space<vmem>>, vector<1x80x128xf32>
    %147 = vector.shape_cast %146 : vector<1x80x128xf32> to vector<80x128xf32>
    %148 = vector.shape_cast %145 : vector<80x128xf32> to vector<1x80x128xf32>
    tpu.vector_store %arg14[%c0_120, %c0_121, %c0_122], %148 {strides = array<i32>} : memref<1x320x128xf32, #tpu.memory_space<vmem>>, vector<1x80x128xf32>,
    %c1_123 = arith.constant 1 : index
    %c0_124 = arith.constant 0 : index
    %149 = vector.load %arg17[%c1_123, %c0_124] : memref<104x128xf32, #tpu.memory_space<vmem>>, vector<80x128xf32>
    %150 = arith.truncf %149 : vector<80x128xf32> to vector<80x128xbf16>
    %c4_125 = arith.constant 4 : index
    %c0_126 = arith.constant 0 : index
    %c0_127 = arith.constant 0 : index
    %151 = vector.load %arg5[%c4_125, %c0_126, %c0_127] : memref<16x128x160xbf16, #tpu.memory_space<vmem>>, vector<1x128x160xbf16>
    %152 = vector.shape_cast %151 : vector<1x128x160xbf16> to vector<128x160xbf16>
    %cst_128 = arith.constant dense<0.000000e+00> : vector<80x160xf32>
    %153 = tpu.matmul %150, %152, %cst_128 {dimension_numbers = #tpu.dot_dimension_numbers<[1], [0], [0], [1], [0, 0, 1, 1], [], []>} : vector<80x128xbf16>, vector<128x160xbf16>, vector<80x160xf32> -> vector<80x160xf32>
    %c2_129 = arith.constant 2 : index
    %c0_130 = arith.constant 0 : index
    %154 = vector.load %arg17[%c2_129, %c0_130] : memref<104x128xf32, #tpu.memory_space<vmem>>, vector<80x128xf32>
    %155 = arith.truncf %154 : vector<80x128xf32> to vector<80x128xbf16>
    %c5_131 = arith.constant 5 : index
    %c0_132 = arith.constant 0 : index
    %c0_133 = arith.constant 0 : index
    %156 = vector.load %arg5[%c5_131, %c0_132, %c0_133] : memref<16x128x160xbf16, #tpu.memory_space<vmem>>, vector<1x128x160xbf16>
    %157 = vector.shape_cast %156 : vector<1x128x160xbf16> to vector<128x160xbf16>
    %cst_134 = arith.constant dense<0.000000e+00> : vector<80x160xf32>
    %158 = tpu.matmul %155, %157, %cst_134 {dimension_numbers = #tpu.dot_dimension_numbers<[1], [0], [0], [1], [0, 0, 1, 1], [], []>} : vector<80x128xbf16>, vector<128x160xbf16>, vector<80x160xf32> -> vector<80x160xf32>
    %159 = arith.addf %153, %158 : vector<80x160xf32>
    %c11_135 = arith.constant 11 : index
    %c0_136 = arith.constant 0 : index
    %160 = vector.load %arg17[%c11_135, %c0_136] : memref<104x128xf32, #tpu.memory_space<vmem>>, vector<80x128xf32>
    %161 = arith.truncf %160 : vector<80x128xf32> to vector<80x128xbf16>
    %c6_137 = arith.constant 6 : index
    %c0_138 = arith.constant 0 : index
    %c0_139 = arith.constant 0 : index
    %162 = vector.load %arg5[%c6_137, %c0_138, %c0_139] : memref<16x128x160xbf16, #tpu.memory_space<vmem>>, vector<1x128x160xbf16>
    %163 = vector.shape_cast %162 : vector<1x128x160xbf16> to vector<128x160xbf16>
    %cst_140 = arith.constant dense<0.000000e+00> : vector<80x160xf32>
    %164 = tpu.matmul %161, %163, %cst_140 {dimension_numbers = #tpu.dot_dimension_numbers<[1], [0], [0], [1], [0, 0, 1, 1], [], []>} : vector<80x128xbf16>, vector<128x160xbf16>, vector<80x160xf32> -> vector<80x160xf32>
    %165 = arith.addf %159, %164 : vector<80x160xf32>
    %c12_141 = arith.constant 12 : index
    %c0_142 = arith.constant 0 : index
    %166 = vector.load %arg17[%c12_141, %c0_142] : memref<104x128xf32, #tpu.memory_space<vmem>>, vector<80x128xf32>
    %167 = arith.truncf %166 : vector<80x128xf32> to vector<80x128xbf16>
    %c7_143 = arith.constant 7 : index
    %c0_144 = arith.constant 0 : index
    %c0_145 = arith.constant 0 : index
    %168 = vector.load %arg5[%c7_143, %c0_144, %c0_145] : memref<16x128x160xbf16, #tpu.memory_space<vmem>>, vector<1x128x160xbf16>
    %169 = vector.shape_cast %168 : vector<1x128x160xbf16> to vector<128x160xbf16>
    %cst_146 = arith.constant dense<0.000000e+00> : vector<80x160xf32>
    %170 = tpu.matmul %167, %169, %cst_146 {dimension_numbers = #tpu.dot_dimension_numbers<[1], [0], [0], [1], [0, 0, 1, 1], [], []>} : vector<80x128xbf16>, vector<128x160xbf16>, vector<80x160xf32> -> vector<80x160xf32>
    %171 = arith.addf %165, %170 : vector<80x160xf32>
    %c0_147 = arith.constant 0 : index
    %c0_148 = arith.constant 0 : index
    %172 = vector.load %arg9[%c0_147, %c0_148] : memref<1x160xf32, #tpu.memory_space<vmem>>, vector<1x160xf32>
    %173 = vector.broadcast %172 : vector<1x160xf32> to vector<80x160xf32>
    %174 = arith.addf %171, %173 : vector<80x160xf32>
    %cst_149 = arith.constant 0.000000e+00 : f32
    %175 = vector.broadcast %cst_149 : f32 to vector<80x160xf32>
    %176 = arith.maximumf %174, %175 : vector<80x160xf32>
    %177 = arith.truncf %176 : vector<80x160xf32> to vector<80x160xbf16>
    %c0_150 = arith.constant 0 : index
    %c0_151 = arith.constant 0 : index
    %178 = vector.load %arg6[%c0_150, %c0_151] : memref<160x128xbf16, #tpu.memory_space<vmem>>, vector<160x128xbf16>
    %cst_152 = arith.constant dense<0.000000e+00> : vector<80x128xf32>
    %179 = tpu.matmul %177, %178, %cst_152 {dimension_numbers = #tpu.dot_dimension_numbers<[1], [0], [0], [1], [0, 0, 1, 1], [], []>} : vector<80x160xbf16>, vector<160x128xbf16>, vector<80x128xf32> -> vector<80x128xf32>
    %c0_153 = arith.constant 0 : index
    %c0_154 = arith.constant 0 : index
    %180 = vector.load %arg10[%c0_153, %c0_154] : memref<1x128xf32, #tpu.memory_space<vmem>>, vector<1x128xf32>
    %181 = vector.broadcast %180 : vector<1x128xf32> to vector<80x128xf32>
    %182 = arith.addf %179, %181 : vector<80x128xf32>
    %c0_155 = arith.constant 0 : index
    %c0_156 = arith.constant 0 : index
    %183 = vector.load %arg11[%c0_155, %c0_156] : memref<1x128xf32, #tpu.memory_space<vmem>>, vector<1x128xf32>
    %cst_157 = arith.constant 0.000000e+00 : f32
    %184 = vector.broadcast %cst_157 : f32 to vector<1x128xf32>
    %185 = arith.cmpf ogt, %183, %184 : vector<1x128xf32>
    %186 = arith.negf %182 : vector<80x128xf32>
    %187 = math.exp %186 : vector<80x128xf32>
    %cst_158 = arith.constant 1.000000e+00 : f32
    %188 = vector.broadcast %cst_158 : f32 to vector<80x128xf32>
    %189 = arith.addf %188, %187 : vector<80x128xf32>
    %190 = arith.divf %188, %189 : vector<80x128xf32>
    %191 = vector.shape_cast %185 : vector<1x128xi1> to vector<1x128xi1>
    %192 = vector.broadcast %191 : vector<1x128xi1> to vector<80x128xi1>
    %193 = arith.select %192, %190, %182 : vector<80x128xi1>, vector<80x128xf32>
    %c0_159 = arith.constant 0 : index
    %c80 = arith.constant 80 : index
    %c0_160 = arith.constant 0 : index
    %194 = vector.load %arg14[%c0_159, %c80, %c0_160] : memref<1x320x128xf32, #tpu.memory_space<vmem>>, vector<1x80x128xf32>
    %195 = vector.shape_cast %194 : vector<1x80x128xf32> to vector<80x128xf32>
    %196 = vector.shape_cast %193 : vector<80x128xf32> to vector<1x80x128xf32>
    tpu.vector_store %arg14[%c0_159, %c80, %c0_160], %196 {strides = array<i32>} : memref<1x320x128xf32, #tpu.memory_space<vmem>>, vector<1x80x128xf32>,
    %c10_161 = arith.constant 10 : index
    %c0_162 = arith.constant 0 : index
    %197 = vector.load %arg17[%c10_161, %c0_162] : memref<104x128xf32, #tpu.memory_space<vmem>>, vector<80x128xf32>
    %198 = arith.truncf %197 : vector<80x128xf32> to vector<80x128xbf16>
    %c8_163 = arith.constant 8 : index
    %c0_164 = arith.constant 0 : index
    %c0_165 = arith.constant 0 : index
    %199 = vector.load %arg5[%c8_163, %c0_164, %c0_165] : memref<16x128x160xbf16, #tpu.memory_space<vmem>>, vector<1x128x160xbf16>
    %200 = vector.shape_cast %199 : vector<1x128x160xbf16> to vector<128x160xbf16>
    %cst_166 = arith.constant dense<0.000000e+00> : vector<80x160xf32>
    %201 = tpu.matmul %198, %200, %cst_166 {dimension_numbers = #tpu.dot_dimension_numbers<[1], [0], [0], [1], [0, 0, 1, 1], [], []>} : vector<80x128xbf16>, vector<128x160xbf16>, vector<80x160xf32> -> vector<80x160xf32>
    %c11_167 = arith.constant 11 : index
    %c0_168 = arith.constant 0 : index
    %202 = vector.load %arg17[%c11_167, %c0_168] : memref<104x128xf32, #tpu.memory_space<vmem>>, vector<80x128xf32>
    %203 = arith.truncf %202 : vector<80x128xf32> to vector<80x128xbf16>
    %c9 = arith.constant 9 : index
    %c0_169 = arith.constant 0 : index
    %c0_170 = arith.constant 0 : index
    %204 = vector.load %arg5[%c9, %c0_169, %c0_170] : memref<16x128x160xbf16, #tpu.memory_space<vmem>>, vector<1x128x160xbf16>
    %205 = vector.shape_cast %204 : vector<1x128x160xbf16> to vector<128x160xbf16>
    %cst_171 = arith.constant dense<0.000000e+00> : vector<80x160xf32>
    %206 = tpu.matmul %203, %205, %cst_171 {dimension_numbers = #tpu.dot_dimension_numbers<[1], [0], [0], [1], [0, 0, 1, 1], [], []>} : vector<80x128xbf16>, vector<128x160xbf16>, vector<80x160xf32> -> vector<80x160xf32>
    %207 = arith.addf %201, %206 : vector<80x160xf32>
    %c20_172 = arith.constant 20 : index
    %c0_173 = arith.constant 0 : index
    %208 = vector.load %arg17[%c20_172, %c0_173] : memref<104x128xf32, #tpu.memory_space<vmem>>, vector<80x128xf32>
    %209 = arith.truncf %208 : vector<80x128xf32> to vector<80x128xbf16>
    %c10_174 = arith.constant 10 : index
    %c0_175 = arith.constant 0 : index
    %c0_176 = arith.constant 0 : index
    %210 = vector.load %arg5[%c10_174, %c0_175, %c0_176] : memref<16x128x160xbf16, #tpu.memory_space<vmem>>, vector<1x128x160xbf16>
    %211 = vector.shape_cast %210 : vector<1x128x160xbf16> to vector<128x160xbf16>
    %cst_177 = arith.constant dense<0.000000e+00> : vector<80x160xf32>
    %212 = tpu.matmul %209, %211, %cst_177 {dimension_numbers = #tpu.dot_dimension_numbers<[1], [0], [0], [1], [0, 0, 1, 1], [], []>} : vector<80x128xbf16>, vector<128x160xbf16>, vector<80x160xf32> -> vector<80x160xf32>
    %213 = arith.addf %207, %212 : vector<80x160xf32>
    %c21_178 = arith.constant 21 : index
    %c0_179 = arith.constant 0 : index
    %214 = vector.load %arg17[%c21_178, %c0_179] : memref<104x128xf32, #tpu.memory_space<vmem>>, vector<80x128xf32>
    %215 = arith.truncf %214 : vector<80x128xf32> to vector<80x128xbf16>
    %c11_180 = arith.constant 11 : index
    %c0_181 = arith.constant 0 : index
    %c0_182 = arith.constant 0 : index
    %216 = vector.load %arg5[%c11_180, %c0_181, %c0_182] : memref<16x128x160xbf16, #tpu.memory_space<vmem>>, vector<1x128x160xbf16>
    %217 = vector.shape_cast %216 : vector<1x128x160xbf16> to vector<128x160xbf16>
    %cst_183 = arith.constant dense<0.000000e+00> : vector<80x160xf32>
    %218 = tpu.matmul %215, %217, %cst_183 {dimension_numbers = #tpu.dot_dimension_numbers<[1], [0], [0], [1], [0, 0, 1, 1], [], []>} : vector<80x128xbf16>, vector<128x160xbf16>, vector<80x160xf32> -> vector<80x160xf32>
    %219 = arith.addf %213, %218 : vector<80x160xf32>
    %c0_184 = arith.constant 0 : index
    %c0_185 = arith.constant 0 : index
    %220 = vector.load %arg9[%c0_184, %c0_185] : memref<1x160xf32, #tpu.memory_space<vmem>>, vector<1x160xf32>
    %221 = vector.broadcast %220 : vector<1x160xf32> to vector<80x160xf32>
    %222 = arith.addf %219, %221 : vector<80x160xf32>
    %cst_186 = arith.constant 0.000000e+00 : f32
    %223 = vector.broadcast %cst_186 : f32 to vector<80x160xf32>
    %224 = arith.maximumf %222, %223 : vector<80x160xf32>
    %225 = arith.truncf %224 : vector<80x160xf32> to vector<80x160xbf16>
    %c0_187 = arith.constant 0 : index
    %c0_188 = arith.constant 0 : index
    %226 = vector.load %arg6[%c0_187, %c0_188] : memref<160x128xbf16, #tpu.memory_space<vmem>>, vector<160x128xbf16>
    %cst_189 = arith.constant dense<0.000000e+00> : vector<80x128xf32>
    %227 = tpu.matmul %225, %226, %cst_189 {dimension_numbers = #tpu.dot_dimension_numbers<[1], [0], [0], [1], [0, 0, 1, 1], [], []>} : vector<80x160xbf16>, vector<160x128xbf16>, vector<80x128xf32> -> vector<80x128xf32>
    %c0_190 = arith.constant 0 : index
    %c0_191 = arith.constant 0 : index
    %228 = vector.load %arg10[%c0_190, %c0_191] : memref<1x128xf32, #tpu.memory_space<vmem>>, vector<1x128xf32>
    %229 = vector.broadcast %228 : vector<1x128xf32> to vector<80x128xf32>
    %230 = arith.addf %227, %229 : vector<80x128xf32>
    %c0_192 = arith.constant 0 : index
    %c0_193 = arith.constant 0 : index
    %231 = vector.load %arg11[%c0_192, %c0_193] : memref<1x128xf32, #tpu.memory_space<vmem>>, vector<1x128xf32>
    %cst_194 = arith.constant 0.000000e+00 : f32
    %232 = vector.broadcast %cst_194 : f32 to vector<1x128xf32>
    %233 = arith.cmpf ogt, %231, %232 : vector<1x128xf32>
    %234 = arith.negf %230 : vector<80x128xf32>
    %235 = math.exp %234 : vector<80x128xf32>
    %cst_195 = arith.constant 1.000000e+00 : f32
    %236 = vector.broadcast %cst_195 : f32 to vector<80x128xf32>
    %237 = arith.addf %236, %235 : vector<80x128xf32>
    %238 = arith.divf %236, %237 : vector<80x128xf32>
    %239 = vector.shape_cast %233 : vector<1x128xi1> to vector<1x128xi1>
    %240 = vector.broadcast %239 : vector<1x128xi1> to vector<80x128xi1>
    %241 = arith.select %240, %238, %230 : vector<80x128xi1>, vector<80x128xf32>
    %c0_196 = arith.constant 0 : index
    %c160 = arith.constant 160 : index
    %c0_197 = arith.constant 0 : index
    %242 = vector.load %arg14[%c0_196, %c160, %c0_197] : memref<1x320x128xf32, #tpu.memory_space<vmem>>, vector<1x80x128xf32>
    %243 = vector.shape_cast %242 : vector<1x80x128xf32> to vector<80x128xf32>
    %244 = vector.shape_cast %241 : vector<80x128xf32> to vector<1x80x128xf32>
    tpu.vector_store %arg14[%c0_196, %c160, %c0_197], %244 {strides = array<i32>} : memref<1x320x128xf32, #tpu.memory_space<vmem>>, vector<1x80x128xf32>,
    %c11_198 = arith.constant 11 : index
    %c0_199 = arith.constant 0 : index
    %245 = vector.load %arg17[%c11_198, %c0_199] : memref<104x128xf32, #tpu.memory_space<vmem>>, vector<80x128xf32>
    %246 = arith.truncf %245 : vector<80x128xf32> to vector<80x128xbf16>
    %c12_200 = arith.constant 12 : index
    %c0_201 = arith.constant 0 : index
    %c0_202 = arith.constant 0 : index
    %247 = vector.load %arg5[%c12_200, %c0_201, %c0_202] : memref<16x128x160xbf16, #tpu.memory_space<vmem>>, vector<1x128x160xbf16>
    %248 = vector.shape_cast %247 : vector<1x128x160xbf16> to vector<128x160xbf16>
    %cst_203 = arith.constant dense<0.000000e+00> : vector<80x160xf32>
    %249 = tpu.matmul %246, %248, %cst_203 {dimension_numbers = #tpu.dot_dimension_numbers<[1], [0], [0], [1], [0, 0, 1, 1], [], []>} : vector<80x128xbf16>, vector<128x160xbf16>, vector<80x160xf32> -> vector<80x160xf32>
    %c12_204 = arith.constant 12 : index
    %c0_205 = arith.constant 0 : index
    %250 = vector.load %arg17[%c12_204, %c0_205] : memref<104x128xf32, #tpu.memory_space<vmem>>, vector<80x128xf32>
    %251 = arith.truncf %250 : vector<80x128xf32> to vector<80x128xbf16>
    %c13_206 = arith.constant 13 : index
    %c0_207 = arith.constant 0 : index
    %c0_208 = arith.constant 0 : index
    %252 = vector.load %arg5[%c13_206, %c0_207, %c0_208] : memref<16x128x160xbf16, #tpu.memory_space<vmem>>, vector<1x128x160xbf16>
    %253 = vector.shape_cast %252 : vector<1x128x160xbf16> to vector<128x160xbf16>
    %cst_209 = arith.constant dense<0.000000e+00> : vector<80x160xf32>
    %254 = tpu.matmul %251, %253, %cst_209 {dimension_numbers = #tpu.dot_dimension_numbers<[1], [0], [0], [1], [0, 0, 1, 1], [], []>} : vector<80x128xbf16>, vector<128x160xbf16>, vector<80x160xf32> -> vector<80x160xf32>
    %255 = arith.addf %249, %254 : vector<80x160xf32>
    %c21_210 = arith.constant 21 : index
    %c0_211 = arith.constant 0 : index
    %256 = vector.load %arg17[%c21_210, %c0_211] : memref<104x128xf32, #tpu.memory_space<vmem>>, vector<80x128xf32>
    %257 = arith.truncf %256 : vector<80x128xf32> to vector<80x128xbf16>
    %c14 = arith.constant 14 : index
    %c0_212 = arith.constant 0 : index
    %c0_213 = arith.constant 0 : index
    %258 = vector.load %arg5[%c14, %c0_212, %c0_213] : memref<16x128x160xbf16, #tpu.memory_space<vmem>>, vector<1x128x160xbf16>
    %259 = vector.shape_cast %258 : vector<1x128x160xbf16> to vector<128x160xbf16>
    %cst_214 = arith.constant dense<0.000000e+00> : vector<80x160xf32>
    %260 = tpu.matmul %257, %259, %cst_214 {dimension_numbers = #tpu.dot_dimension_numbers<[1], [0], [0], [1], [0, 0, 1, 1], [], []>} : vector<80x128xbf16>, vector<128x160xbf16>, vector<80x160xf32> -> vector<80x160xf32>
    %261 = arith.addf %255, %260 : vector<80x160xf32>
    %c22_215 = arith.constant 22 : index
    %c0_216 = arith.constant 0 : index
    %262 = vector.load %arg17[%c22_215, %c0_216] : memref<104x128xf32, #tpu.memory_space<vmem>>, vector<80x128xf32>
    %263 = arith.truncf %262 : vector<80x128xf32> to vector<80x128xbf16>
    %c15 = arith.constant 15 : index
    %c0_217 = arith.constant 0 : index
    %c0_218 = arith.constant 0 : index
    %264 = vector.load %arg5[%c15, %c0_217, %c0_218] : memref<16x128x160xbf16, #tpu.memory_space<vmem>>, vector<1x128x160xbf16>
    %265 = vector.shape_cast %264 : vector<1x128x160xbf16> to vector<128x160xbf16>
    %cst_219 = arith.constant dense<0.000000e+00> : vector<80x160xf32>
    %266 = tpu.matmul %263, %265, %cst_219 {dimension_numbers = #tpu.dot_dimension_numbers<[1], [0], [0], [1], [0, 0, 1, 1], [], []>} : vector<80x128xbf16>, vector<128x160xbf16>, vector<80x160xf32> -> vector<80x160xf32>
    %267 = arith.addf %261, %266 : vector<80x160xf32>
    %c0_220 = arith.constant 0 : index
    %c0_221 = arith.constant 0 : index
    %268 = vector.load %arg9[%c0_220, %c0_221] : memref<1x160xf32, #tpu.memory_space<vmem>>, vector<1x160xf32>
    %269 = vector.broadcast %268 : vector<1x160xf32> to vector<80x160xf32>
    %270 = arith.addf %267, %269 : vector<80x160xf32>
    %cst_222 = arith.constant 0.000000e+00 : f32
    %271 = vector.broadcast %cst_222 : f32 to vector<80x160xf32>
    %272 = arith.maximumf %270, %271 : vector<80x160xf32>
    %273 = arith.truncf %272 : vector<80x160xf32> to vector<80x160xbf16>
    %c0_223 = arith.constant 0 : index
    %c0_224 = arith.constant 0 : index
    %274 = vector.load %arg6[%c0_223, %c0_224] : memref<160x128xbf16, #tpu.memory_space<vmem>>, vector<160x128xbf16>
    %cst_225 = arith.constant dense<0.000000e+00> : vector<80x128xf32>
    %275 = tpu.matmul %273, %274, %cst_225 {dimension_numbers = #tpu.dot_dimension_numbers<[1], [0], [0], [1], [0, 0, 1, 1], [], []>} : vector<80x160xbf16>, vector<160x128xbf16>, vector<80x128xf32> -> vector<80x128xf32>
    %c0_226 = arith.constant 0 : index
    %c0_227 = arith.constant 0 : index
    %276 = vector.load %arg10[%c0_226, %c0_227] : memref<1x128xf32, #tpu.memory_space<vmem>>, vector<1x128xf32>
    %277 = vector.broadcast %276 : vector<1x128xf32> to vector<80x128xf32>
    %278 = arith.addf %275, %277 : vector<80x128xf32>
    %c0_228 = arith.constant 0 : index
    %c0_229 = arith.constant 0 : index
    %279 = vector.load %arg11[%c0_228, %c0_229] : memref<1x128xf32, #tpu.memory_space<vmem>>, vector<1x128xf32>
    %cst_230 = arith.constant 0.000000e+00 : f32
    %280 = vector.broadcast %cst_230 : f32 to vector<1x128xf32>
    %281 = arith.cmpf ogt, %279, %280 : vector<1x128xf32>
    %282 = arith.negf %278 : vector<80x128xf32>
    %283 = math.exp %282 : vector<80x128xf32>
    %cst_231 = arith.constant 1.000000e+00 : f32
    %284 = vector.broadcast %cst_231 : f32 to vector<80x128xf32>
    %285 = arith.addf %284, %283 : vector<80x128xf32>
    %286 = arith.divf %284, %285 : vector<80x128xf32>
    %287 = vector.shape_cast %281 : vector<1x128xi1> to vector<1x128xi1>
    %288 = vector.broadcast %287 : vector<1x128xi1> to vector<80x128xi1>
    %289 = arith.select %288, %286, %278 : vector<80x128xi1>, vector<80x128xf32>
    %c0_232 = arith.constant 0 : index
    %c240 = arith.constant 240 : index
    %c0_233 = arith.constant 0 : index
    %290 = vector.load %arg14[%c0_232, %c240, %c0_233] : memref<1x320x128xf32, #tpu.memory_space<vmem>>, vector<1x80x128xf32>
    %291 = vector.shape_cast %290 : vector<1x80x128xf32> to vector<80x128xf32>
    %292 = vector.shape_cast %289 : vector<80x128xf32> to vector<1x80x128xf32>
    tpu.vector_store %arg14[%c0_232, %c240, %c0_233], %292 {strides = array<i32>} : memref<1x320x128xf32, #tpu.memory_space<vmem>>, vector<1x80x128xf32>,
    return
  }
  func.func @transform_0(%arg0: i32) -> (i32, i32, i32) {
    %c0_i32 = arith.constant 0 : i32
    %c0_i32_0 = arith.constant 0 : i32
    %c0_i32_1 = arith.constant 0 : i32
    return %arg0, %c0_i32, %c0_i32_0 : i32, i32, i32
  }
  func.func @transform_1(%arg0: i32) -> (i32, i32) {
    %c0_i32 = arith.constant 0 : i32
    %c0_i32_0 = arith.constant 0 : i32
    %c0_i32_1 = arith.constant 0 : i32
    return %c0_i32, %c0_i32_0 : i32, i32
  }
  func.func @transform_2(%arg0: i32) -> (i32, i32, i32) {
    %c0_i32 = arith.constant 0 : i32
    %c0_i32_0 = arith.constant 0 : i32
    %c0_i32_1 = arith.constant 0 : i32
    %c0_i32_2 = arith.constant 0 : i32
    return %c0_i32, %c0_i32_0, %c0_i32_1 : i32, i32, i32
  }
  func.func @transform_3(%arg0: i32) -> (i32, i32, i32) {
    %c0_i32 = arith.constant 0 : i32
    %c0_i32_0 = arith.constant 0 : i32
    %c0_i32_1 = arith.constant 0 : i32
    %c0_i32_2 = arith.constant 0 : i32
    return %c0_i32, %c0_i32_0, %c0_i32_1 : i32, i32, i32
  }
  func.func @transform_4(%arg0: i32) -> (i32, i32, i32) {
    %c0_i32 = arith.constant 0 : i32
    %c0_i32_0 = arith.constant 0 : i32
    %c0_i32_1 = arith.constant 0 : i32
    %c0_i32_2 = arith.constant 0 : i32
    return %c0_i32, %c0_i32_0, %c0_i32_1 : i32, i32, i32
  }
  func.func @transform_5(%arg0: i32) -> (i32, i32) {
    %c0_i32 = arith.constant 0 : i32
    %c0_i32_0 = arith.constant 0 : i32
    %c0_i32_1 = arith.constant 0 : i32
    return %c0_i32, %c0_i32_0 : i32, i32
  }
  func.func @transform_6(%arg0: i32) -> (i32, i32) {
    %c0_i32 = arith.constant 0 : i32
    %c0_i32_0 = arith.constant 0 : i32
    %c0_i32_1 = arith.constant 0 : i32
    return %c0_i32, %c0_i32_0 : i32, i32
  }
  func.func @transform_7(%arg0: i32) -> (i32, i32) {
    %c0_i32 = arith.constant 0 : i32
    %c0_i32_0 = arith.constant 0 : i32
    %c0_i32_1 = arith.constant 0 : i32
    return %c0_i32, %c0_i32_0 : i32, i32
  }
  func.func @transform_8(%arg0: i32) -> (i32, i32) {
    %c0_i32 = arith.constant 0 : i32
    %c0_i32_0 = arith.constant 0 : i32
    %c0_i32_1 = arith.constant 0 : i32
    return %c0_i32, %c0_i32_0 : i32, i32
  }
  func.func @transform_9(%arg0: i32) -> (i32, i32) {
    %c0_i32 = arith.constant 0 : i32
    %c0_i32_0 = arith.constant 0 : i32
    %c0_i32_1 = arith.constant 0 : i32
    return %c0_i32, %c0_i32_0 : i32, i32
  }
  func.func @transform_10(%arg0: i32) -> (i32, i32) {
    %c0_i32 = arith.constant 0 : i32
    %c0_i32_0 = arith.constant 0 : i32
    %c0_i32_1 = arith.constant 0 : i32
    return %c0_i32, %c0_i32_0 : i32, i32
  }
  func.func @transform_11(%arg0: i32) -> (i32, i32) {
    %c0_i32 = arith.constant 0 : i32
    %c0_i32_0 = arith.constant 0 : i32
    %c0_i32_1 = arith.constant 0 : i32
    return %c0_i32, %c0_i32_0 : i32, i32
  }
  func.func @transform_12(%arg0: i32) -> (i32, i32) {
    %c0_i32 = arith.constant 0 : i32
    %c0_i32_0 = arith.constant 0 : i32
    %c0_i32_1 = arith.constant 0 : i32
    return %c0_i32, %c0_i32_0 : i32, i32
  }
  func.func @transform_13(%arg0: i32) -> (i32, i32, i32) {
    %c0_i32 = arith.constant 0 : i32
    %c0_i32_0 = arith.constant 0 : i32
    %c0_i32_1 = arith.constant 0 : i32
    return %arg0, %c0_i32, %c0_i32_0 : i32, i32, i32
  }
}

</mosaic_0001>

<llo_original>
// kernel: centernet_forward.1
$region0: #{centernet_forward.1}
  #allocation0 [shape = 'u32[]', space=smem, size = 0x4, offset = 0x4, fixed_abs, tag = 'smem constant byte address 0x4 - core index']
  #allocation1 [shape = 'u32[72,128]{1,0:T(1,128)}', space=vmem, size = 0x9000, scoped, tag = 'internal scratch']
  #allocation2 [shape = 'f32[144,64]{1,0:T(8,128)}', space=vmem, size = 0x12000, scoped, tag = 'scratch operand']
  #allocation3 [shape = 'f32[128,32]{1,0:T(8,128)}', space=vmem, size = 0x10000, scoped, tag = 'scratch operand']
  #allocation4 [shape = 'f32[104,128]{1,0:T(8,128)}', space=vmem, size = 0xd000, scoped, tag = 'scratch operand']
  %s0 = inlined_call_operand.vmem [shape: bf16[2,144,76], index: 0, kind: input, shape index: {}]
  %s1 = inlined_call_operand.vmem [shape: bf16[76,64], index: 1, kind: input, shape index: {}]
  %s2 = inlined_call_operand.vmem [shape: bf16[4,64,32], index: 2, kind: input, shape index: {}]
  %s3 = inlined_call_operand.vmem [shape: bf16[9,32,128], index: 3, kind: input, shape index: {}]
  %s4 = inlined_call_operand.vmem [shape: bf16[16,128,160], index: 4, kind: input, shape index: {}]
  %s5 = inlined_call_operand.vmem [shape: bf16[160,128], index: 5, kind: input, shape index: {}]
  %s6 = inlined_call_operand.vmem [shape: f32[1,32], index: 6, kind: input, shape index: {}]
  %s7 = inlined_call_operand.vmem [shape: f32[1,128], index: 7, kind: input, shape index: {}]
  %s8 = inlined_call_operand.vmem [shape: f32[1,160], index: 8, kind: input, shape index: {}]
  %s9 = inlined_call_operand.vmem [shape: f32[1,128], index: 9, kind: input, shape index: {}]
  %s10 = inlined_call_operand.vmem [shape: f32[1,128], index: 10, kind: input, shape index: {}]
  %s11 = inlined_call_operand.vmem [shape: f32[128,1], index: 11, kind: input, shape index: {}]
  %s12 = inlined_call_operand.vmem [shape: f32[104,1], index: 12, kind: input, shape index: {}]
  %s13 = inlined_call_operand.vmem [shape: f32[2,320,128], index: 13, kind: output, shape index: {}]
  %s14 = sld [smem:[#allocation0]]
  $region85: #{centernet_forward.1} parent=0
    _
  %s16 = ssub.s32 1, %s14
  %s17 = scalar_select 0, %s16, %s14
  loop: start=0, step=1, limit=4
  $region2: #{centernet_forward.1} parent=0 // loop_pre_header
    _
  $region3: #{centernet_forward.1} parent=0 // loop_header
    %s19 = sphi 0, %s23
    %p20 = scmp.ge.s32.totalorder %s19, 4
    %s29 = sphi 0, %s31
    %s32 = sphi 0, %s29
    %s33 = sphi 0, %s32
    %s49 = sphi 0, %s33
    %s53 = sphi 0, %s53
    %s55 = sphi 0, %s53
    %s56 = sphi 0, %s55
    %s70 = sphi 0, %s56
    %s74 = sphi 0, %s74
    %s76 = sphi 0, %s74
    %s77 = sphi 0, %s76
    %s91 = sphi 0, %s77
    %s95 = sphi 0, %s95
    %s97 = sphi 0, %s95
    %s98 = sphi 0, %s97
    %s112 = sphi 0, %s98
    %s116 = sphi 0, %s116
    %s118 = sphi 0, %s116
    %s119 = sphi 0, %s118
    %s133 = sphi 0, %s119
    %s137 = sphi 0, %s137
    %s139 = sphi 0, %s137
    %s140 = sphi 0, %s139
    %s154 = sphi 0, %s140
    %s158 = sphi 0, %s158
    %s160 = sphi 0, %s158
    %s161 = sphi 0, %s160
    %s175 = sphi 0, %s161
    %s179 = sphi 0, %s179
    %s181 = sphi 0, %s179
    %s182 = sphi 0, %s181
    %s196 = sphi 0, %s182
    %s200 = sphi 0, %s200
    %s202 = sphi 0, %s200
    %s203 = sphi 0, %s202
    %s217 = sphi 0, %s203
    %s221 = sphi 0, %s221
    %s223 = sphi 0, %s221
    %s224 = sphi 0, %s223
    %s238 = sphi 0, %s224
    %s242 = sphi 0, %s242
    %s244 = sphi 0, %s242
    %s245 = sphi 0, %s244
    %s259 = sphi 0, %s245
    %s263 = sphi 0, %s263
    %s265 = sphi 0, %s263
    %s266 = sphi 0, %s265
    %s280 = sphi 0, %s266
    %s284 = sphi 0, %s284
    %s286 = sphi 0, %s284
    %s287 = sphi 0, %s286
    %s301 = sphi 0, %s287
    %s307 = sphi 0, %s309
    %s310 = sphi 0, %s307
    %s311 = sphi 0, %s310
    %s327 = sphi 0, %s311
  $region4: #{centernet_forward.1} parent=0 // loop_header_branch
    %22 = sbr.rel (%p20) target = $region8
  $region5: #{centernet_forward.1} parent=0 // loop_body
    %s24 = ssub.s32 %s19, 1
    %s25 = ssub.s32 %s19, 2
    %s26 = sadd.s32 %s19, 1
    %s27 = ssub.s32 %s19, %s26
    %p28 = scmp.eq.s32.totalorder %s27, 0
    %s30 = sadd.s32 %s29, 1
    %s31 = scalar_select %p28, %s29, %s30
    %p34 = pneg %p28
    %p35 = scmp.eq.s32.totalorder %s19, 1
    %p36 = por %p34, %p35
    %p37 = scmp.ne.s32.totalorder %s29, %s32
    %p38 = scmp.eq.s32.totalorder %s19, 0
    %p39 = por %p37, %p38
    %p40 = scmp.ne.s32.totalorder %s29, %s32
    %p41 = scmp.eq.s32.totalorder %s24, 1
    %p42 = por %p40, %p41
    %p43 = scmp.ne.s32.totalorder %s32, %s33
    %p44 = scmp.eq.s32.totalorder %s24, 0
    %p45 = por %p43, %p44
    %p46 = scmp.ne.s32.totalorder %s32, %s33
    %p47 = scmp.eq.s32.totalorder %s25, 1
    %p48 = por %p46, %p47
    %p50 = scmp.ne.s32.totalorder %s33, %s49
    %p51 = scmp.eq.s32.totalorder %s25, 0
    %p52 = por %p50, %p51
    %s54 = sadd.s32 %s53, 1
    %p57 = scmp.eq.s32.totalorder %s19, 1
    %p58 = scmp.ne.s32.totalorder %s53, %s55
    %p59 = scmp.eq.s32.totalorder %s19, 0
    %p60 = por %p58, %p59
    %p61 = scmp.ne.s32.totalorder %s53, %s55
    %p62 = scmp.eq.s32.totalorder %s24, 1
    %p63 = por %p61, %p62
    %p64 = scmp.ne.s32.totalorder %s55, %s56
    %p65 = scmp.eq.s32.totalorder %s24, 0
    %p66 = por %p64, %p65
    %p67 = scmp.ne.s32.totalorder %s55, %s56
    %p68 = scmp.eq.s32.totalorder %s25, 1
    %p69 = por %p67, %p68
    %p71 = scmp.ne.s32.totalorder %s56, %s70
    %p72 = scmp.eq.s32.totalorder %s25, 0
    %p73 = por %p71, %p72
    %s75 = sadd.s32 %s74, 1
    %p78 = scmp.eq.s32.totalorder %s19, 1
    %p79 = scmp.ne.s32.totalorder %s74, %s76
    %p80 = scmp.eq.s32.totalorder %s19, 0
    %p81 = por %p79, %p80
    %p82 = scmp.ne.s32.totalorder %s74, %s76
    %p83 = scmp.eq.s32.totalorder %s24, 1
    %p84 = por %p82, %p83
    %p85 = scmp.ne.s32.totalorder %s76, %s77
    %p86 = scmp.eq.s32.totalorder %s24, 0
    %p87 = por %p85, %p86
    %p88 = scmp.ne.s32.totalorder %s76, %s77
    %p89 = scmp.eq.s32.totalorder %s25, 1
    %p90 = por %p88, %p89
    %p92 = scmp.ne.s32.totalorder %s77, %s91
    %p93 = scmp.eq.s32.totalorder %s25, 0
    %p94 = por %p92, %p93
    %s96 = sadd.s32 %s95, 1
    %p99 = scmp.eq.s32.totalorder %s19, 1
    %p100 = scmp.ne.s32.totalorder %s95, %s97
    %p101 = scmp.eq.s32.totalorder %s19, 0
    %p102 = por %p100, %p101
    %p103 = scmp.ne.s32.totalorder %s95, %s97
    %p104 = scmp.eq.s32.totalorder %s24, 1
    %p105 = por %p103, %p104
    %p106 = scmp.ne.s32.totalorder %s97, %s98
    %p107 = scmp.eq.s32.totalorder %s24, 0
    %p108 = por %p106, %p107
    %p109 = scmp.ne.s32.totalorder %s97, %s98
    %p110 = scmp.eq.s32.totalorder %s25, 1
    %p111 = por %p109, %p110
    %p113 = scmp.ne.s32.totalorder %s98, %s112
    %p114 = scmp.eq.s32.totalorder %s25, 0
    %p115 = por %p113, %p114
    %s117 = sadd.s32 %s116, 1
    %p120 = scmp.eq.s32.totalorder %s19, 1
    %p121 = scmp.ne.s32.totalorder %s116, %s118
    %p122 = scmp.eq.s32.totalorder %s19, 0
    %p123 = por %p121, %p122
    %p124 = scmp.ne.s32.totalorder %s116, %s118
    %p125 = scmp.eq.s32.totalorder %s24, 1
    %p126 = por %p124, %p125
    %p127 = scmp.ne.s32.totalorder %s118, %s119
    %p128 = scmp.eq.s32.totalorder %s24, 0
    %p129 = por %p127, %p128
    %p130 = scmp.ne.s32.totalorder %s118, %s119
    %p131 = scmp.eq.s32.totalorder %s25, 1
    %p132 = por %p130, %p131
    %p134 = scmp.ne.s32.totalorder %s119, %s133
    %p135 = scmp.eq.s32.totalorder %s25, 0
    %p136 = por %p134, %p135
    %s138 = sadd.s32 %s137, 1
    %p141 = scmp.eq.s32.totalorder %s19, 1
    %p142 = scmp.ne.s32.totalorder %s137, %s139
    %p143 = scmp.eq.s32.totalorder %s19, 0
    %p144 = por %p142, %p143
    %p145 = scmp.ne.s32.totalorder %s137, %s139
    %p146 = scmp.eq.s32.totalorder %s24, 1
    %p147 = por %p145, %p146
    %p148 = scmp.ne.s32.totalorder %s139, %s140
    %p149 = scmp.eq.s32.totalorder %s24, 0
    %p150 = por %p148, %p149
    %p151 = scmp.ne.s32.totalorder %s139, %s140
    %p152 = scmp.eq.s32.totalorder %s25, 1
    %p153 = por %p151, %p152
    %p155 = scmp.ne.s32.totalorder %s140, %s154
    %p156 = scmp.eq.s32.totalorder %s25, 0
    %p157 = por %p155, %p156
    %s159 = sadd.s32 %s158, 1
    %p162 = scmp.eq.s32.totalorder %s19, 1
    %p163 = scmp.ne.s32.totalorder %s158, %s160
    %p164 = scmp.eq.s32.totalorder %s19, 0
    %p165 = por %p163, %p164
    %p166 = scmp.ne.s32.totalorder %s158, %s160
    %p167 = scmp.eq.s32.totalorder %s24, 1
    %p168 = por %p166, %p167
    %p169 = scmp.ne.s32.totalorder %s160, %s161
    %p170 = scmp.eq.s32.totalorder %s24, 0
    %p171 = por %p169, %p170
    %p172 = scmp.ne.s32.totalorder %s160, %s161
    %p173 = scmp.eq.s32.totalorder %s25, 1
    %p174 = por %p172, %p173
    %p176 = scmp.ne.s32.totalorder %s161, %s175
    %p177 = scmp.eq.s32.totalorder %s25, 0
    %p178 = por %p176, %p177
    %s180 = sadd.s32 %s179, 1
    %p183 = scmp.eq.s32.totalorder %s19, 1
    %p184 = scmp.ne.s32.totalorder %s179, %s181
    %p185 = scmp.eq.s32.totalorder %s19, 0
    %p186 = por %p184, %p185
    %p187 = scmp.ne.s32.totalorder %s179, %s181
    %p188 = scmp.eq.s32.totalorder %s24, 1
    %p189 = por %p187, %p188
    %p190 = scmp.ne.s32.totalorder %s181, %s182
    %p191 = scmp.eq.s32.totalorder %s24, 0
    %p192 = por %p190, %p191
    %p193 = scmp.ne.s32.totalorder %s181, %s182
    %p194 = scmp.eq.s32.totalorder %s25, 1
    %p195 = por %p193, %p194
    %p197 = scmp.ne.s32.totalorder %s182, %s196
    %p198 = scmp.eq.s32.totalorder %s25, 0
    %p199 = por %p197, %p198
    %s201 = sadd.s32 %s200, 1
    %p204 = scmp.eq.s32.totalorder %s19, 1
    %p205 = scmp.ne.s32.totalorder %s200, %s202
    %p206 = scmp.eq.s32.totalorder %s19, 0
    %p207 = por %p205, %p206
    %p208 = scmp.ne.s32.totalorder %s200, %s202
    %p209 = scmp.eq.s32.totalorder %s24, 1
    %p210 = por %p208, %p209
    %p211 = scmp.ne.s32.totalorder %s202, %s203
    %p212 = scmp.eq.s32.totalorder %s24, 0
    %p213 = por %p211, %p212
    %p214 = scmp.ne.s32.totalorder %s202, %s203
    %p215 = scmp.eq.s32.totalorder %s25, 1
    %p216 = por %p214, %p215
    %p218 = scmp.ne.s32.totalorder %s203, %s217
    %p219 = scmp.eq.s32.totalorder %s25, 0
    %p220 = por %p218, %p219
    %s222 = sadd.s32 %s221, 1
    %p225 = scmp.eq.s32.totalorder %s19, 1
    %p226 = scmp.ne.s32.totalorder %s221, %s223
    %p227 = scmp.eq.s32.totalorder %s19, 0
    %p228 = por %p226, %p227
    %p229 = scmp.ne.s32.totalorder %s221, %s223
    %p230 = scmp.eq.s32.totalorder %s24, 1
    %p231 = por %p229, %p230
    %p232 = scmp.ne.s32.totalorder %s223, %s224
    %p233 = scmp.eq.s32.totalorder %s24, 0
    %p234 = por %p232, %p233
    %p235 = scmp.ne.s32.totalorder %s223, %s224
    %p236 = scmp.eq.s32.totalorder %s25, 1
    %p237 = por %p235, %p236
    %p239 = scmp.ne.s32.totalorder %s224, %s238
    %p240 = scmp.eq.s32.totalorder %s25, 0
    %p241 = por %p239, %p240
    %s243 = sadd.s32 %s242, 1
    %p246 = scmp.eq.s32.totalorder %s19, 1
    %p247 = scmp.ne.s32.totalorder %s242, %s244
    %p248 = scmp.eq.s32.totalorder %s19, 0
    %p249 = por %p247, %p248
    %p250 = scmp.ne.s32.totalorder %s242, %s244
    %p251 = scmp.eq.s32.totalorder %s24, 1
    %p252 = por %p250, %p251
    %p253 = scmp.ne.s32.totalorder %s244, %s245
    %p254 = scmp.eq.s32.totalorder %s24, 0
    %p255 = por %p253, %p254
    %p256 = scmp.ne.s32.totalorder %s244, %s245
    %p257 = scmp.eq.s32.totalorder %s25, 1
    %p258 = por %p256, %p257
    %p260 = scmp.ne.s32.totalorder %s245, %s259
    %p261 = scmp.eq.s32.totalorder %s25, 0
    %p262 = por %p260, %p261
    %s264 = sadd.s32 %s263, 1
    %p267 = scmp.eq.s32.totalorder %s19, 1
    %p268 = scmp.ne.s32.totalorder %s263, %s265
    %p269 = scmp.eq.s32.totalorder %s19, 0
    %p270 = por %p268, %p269
    %p271 = scmp.ne.s32.totalorder %s263, %s265
    %p272 = scmp.eq.s32.totalorder %s24, 1
    %p273 = por %p271, %p272
    %p274 = scmp.ne.s32.totalorder %s265, %s266
    %p275 = scmp.eq.s32.totalorder %s24, 0
    %p276 = por %p274, %p275
    %p277 = scmp.ne.s32.totalorder %s265, %s266
    %p278 = scmp.eq.s32.totalorder %s25, 1
    %p279 = por %p277, %p278
    %p281 = scmp.ne.s32.totalorder %s266, %s280
    %p282 = scmp.eq.s32.totalorder %s25, 0
    %p283 = por %p281, %p282
    %s285 = sadd.s32 %s284, 1
    %p288 = scmp.eq.s32.totalorder %s19, 1
    %p289 = scmp.ne.s32.totalorder %s284, %s286
    %p290 = scmp.eq.s32.totalorder %s19, 0
    %p291 = por %p289, %p290
    %p292 = scmp.ne.s32.totalorder %s284, %s286
    %p293 = scmp.eq.s32.totalorder %s24, 1
    %p294 = por %p292, %p293
    %p295 = scmp.ne.s32.totalorder %s286, %s287
    %p296 = scmp.eq.s32.totalorder %s24, 0
    %p297 = por %p295, %p296
    %p298 = scmp.ne.s32.totalorder %s286, %s287
    %p299 = scmp.eq.s32.totalorder %s25, 1
    %p300 = por %p298, %p299
    %p302 = scmp.ne.s32.totalorder %s287, %s301
    %p303 = scmp.eq.s32.totalorder %s25, 0
    %p304 = por %p302, %p303
    %s305 = ssub.s32 %s19, %s26
    %p306 = scmp.eq.s32.totalorder %s305, 0
    %s308 = sadd.s32 %s307, 1
    %s309 = scalar_select %p306, %s307, %s308
    %p312 = pneg %p306
    %p313 = scmp.eq.s32.totalorder %s19, 1
    %p314 = por %p312, %p313
    %p315 = scmp.ne.s32.totalorder %s307, %s310
    %p316 = scmp.eq.s32.totalorder %s19, 0
    %p317 = por %p315, %p316
    %p318 = scmp.ne.s32.totalorder %s307, %s310
    %p319 = scmp.eq.s32.totalorder %s24, 1
    %p320 = por %p318, %p319
    %p321 = scmp.ne.s32.totalorder %s310, %s311
    %p322 = scmp.eq.s32.totalorder %s24, 0
    %p323 = por %p321, %p322
    %p324 = scmp.ne.s32.totalorder %s310, %s311
    %p325 = scmp.eq.s32.totalorder %s25, 1
    %p326 = por %p324, %p325
    %p328 = scmp.ne.s32.totalorder %s311, %s327
    %p329 = scmp.eq.s32.totalorder %s25, 0
    %p330 = por %p328, %p329
    %p331 = scmp.le.s32.totalorder 1, %s19
    %p332 = scmp.lt.s32.totalorder %s19, 3
    %p333 = pnand %p331, %p332
    %p334 = pneg %p333
    // Predicated region
    $region9: #{centernet_forward.1} parent=5 // pred_check
      _
    $region10: #{centernet_forward.1} parent=5 // pred_check_branch
      %336 = sbr.rel (%p333) target = $region12
    $region11: #{centernet_forward.1} parent=5 // pred_region
      %s337 = ssub.s32 %s19, 1
      // Predicated region
      $region13: #{centernet_forward.1} parent=11 // pred_check
        %p338 = pneg %p66
      $region14: #{centernet_forward.1} parent=11 // pred_check_branch
        %340 = sbr.rel (%p338) target = $region16
      $region15: #{centernet_forward.1} parent=11 // pred_region
        _
      $region16: #{centernet_forward.1} parent=11 // pred_fallthru
        _
      // Predicated region
      $region17: #{centernet_forward.1} parent=11 // pred_check
        %p341 = pneg %p87
      $region18: #{centernet_forward.1} parent=11 // pred_check_branch
        %343 = sbr.rel (%p341) target = $region20
      $region19: #{centernet_forward.1} parent=11 // pred_region
        _
      $region20: #{centernet_forward.1} parent=11 // pred_fallthru
        _
      // Predicated region
      $region21: #{centernet_forward.1} parent=11 // pred_check
        %p344 = pneg %p108
      $region22: #{centernet_forward.1} parent=11 // pred_check_branch
        %346 = sbr.rel (%p344) target = $region24
      $region23: #{centernet_forward.1} parent=11 // pred_region
        _
      $region24: #{centernet_forward.1} parent=11 // pred_fallthru
        _
      // Predicated region
      $region25: #{centernet_forward.1} parent=11 // pred_check
        %p347 = pneg %p129
      $region26: #{centernet_forward.1} parent=11 // pred_check_branch
        %349 = sbr.rel (%p347) target = $region28
      $region27: #{centernet_forward.1} parent=11 // pred_region
        _
      $region28: #{centernet_forward.1} parent=11 // pred_fallthru
        _
      // Predicated region
      $region29: #{centernet_forward.1} parent=11 // pred_check
        %p350 = pneg %p150
      $region30: #{centernet_forward.1} parent=11 // pred_check_branch
        %352 = sbr.rel (%p350) target = $region32
      $region31: #{centernet_forward.1} parent=11 // pred_region
        _
      $region32: #{centernet_forward.1} parent=11 // pred_fallthru
        _
      // Predicated region
      $region33: #{centernet_forward.1} parent=11 // pred_check
        %p353 = pneg %p171
      $region34: #{centernet_forward.1} parent=11 // pred_check_branch
        %355 = sbr.rel (%p353) target = $region36
      $region35: #{centernet_forward.1} parent=11 // pred_region
        _
      $region36: #{centernet_forward.1} parent=11 // pred_fallthru
        _
      // Predicated region
      $region37: #{centernet_forward.1} parent=11 // pred_check
        %p356 = pneg %p192
      $region38: #{centernet_forward.1} parent=11 // pred_check_branch
        %358 = sbr.rel (%p356) target = $region40
      $region39: #{centernet_forward.1} parent=11 // pred_region
        _
      $region40: #{centernet_forward.1} parent=11 // pred_fallthru
        _
      // Predicated region
      $region41: #{centernet_forward.1} parent=11 // pred_check
        %p359 = pneg %p213
      $region42: #{centernet_forward.1} parent=11 // pred_check_branch
        %361 = sbr.rel (%p359) target = $region44
      $region43: #{centernet_forward.1} parent=11 // pred_region
        _
      $region44: #{centernet_forward.1} parent=11 // pred_fallthru
        _
      // Predicated region
      $region45: #{centernet_forward.1} parent=11 // pred_check
        %p362 = pneg %p234
      $region46: #{centernet_forward.1} parent=11 // pred_check_branch
        %364 = sbr.rel (%p362) target = $region48
      $region47: #{centernet_forward.1} parent=11 // pred_region
        _
      $region48: #{centernet_forward.1} parent=11 // pred_fallthru
        _
      // Predicated region
      $region49: #{centernet_forward.1} parent=11 // pred_check
        %p365 = pneg %p255
      $region50: #{centernet_forward.1} parent=11 // pred_check_branch
        %367 = sbr.rel (%p365) target = $region52
      $region51: #{centernet_forward.1} parent=11 // pred_region
        _
      $region52: #{centernet_forward.1} parent=11 // pred_fallthru
        _
      // Predicated region
      $region53: #{centernet_forward.1} parent=11 // pred_check
        %p368 = pneg %p276
      $region54: #{centernet_forward.1} parent=11 // pred_check_branch
        %370 = sbr.rel (%p368) target = $region56
      $region55: #{centernet_forward.1} parent=11 // pred_region
        _
      $region56: #{centernet_forward.1} parent=11 // pred_fallthru
        _
      // Predicated region
      $region57: #{centernet_forward.1} parent=11 // pred_check
        %p371 = pneg %p297
      $region58: #{centernet_forward.1} parent=11 // pred_check_branch
        %373 = sbr.rel (%p371) target = $region60
      $region59: #{centernet_forward.1} parent=11 // pred_region
        _
      $region60: #{centernet_forward.1} parent=11 // pred_fallthru
        _
    $region12: #{centernet_forward.1} parent=5 // pred_fallthru
      _
    %p374 = scmp.lt.s32.totalorder %s19, 2
    // Predicated region
    $region61: #{centernet_forward.1} parent=5 // pred_check
      %p375 = pneg %p374
    $region62: #{centernet_forward.1} parent=5 // pred_check_branch
      %377 = sbr.rel (%p375) target = $region64
    $region63: #{centernet_forward.1} parent=5 // pred_region
      // Predicated region
      $region65: #{centernet_forward.1} parent=63 // pred_check
        %p378 = pneg %p39
      $region66: #{centernet_forward.1} parent=63 // pred_check_branch
        %380 = sbr.rel (%p378) target = $region68
      $region67: #{centernet_forward.1} parent=63 // pred_region
        %p381 = scmp.lt.s32.totalorder %s19, 1
        %s382 = scalar_select %p381, %s19, 1
        %s383 = smul.addr %s382, 18
        %s384 = smul.addr %s383, 4
        %s385 = scalar_lea.vmem %s0, %s384
      $region68: #{centernet_forward.1} parent=63 // pred_fallthru
        _
    $region64: #{centernet_forward.1} parent=5 // pred_fallthru
      _
    %p386 = scmp.le.s32.totalorder 1, %s19
    %p387 = scmp.lt.s32.totalorder %s19, 3
    %p388 = pnand %p386, %p387
    %p389 = pneg %p388
    // Predicated region
    $region69: #{centernet_forward.1} parent=5 // pred_check
      _
    $region70: #{centernet_forward.1} parent=5 // pred_check_branch
      %391 = sbr.rel (%p388) target = $region72
    $region71: #{centernet_forward.1} parent=5 // pred_region
      %s392 = ssub.s32 %s19, 1
      %p393 = scmp.lt.s32.totalorder %s24, 1
      %s394 = scalar_select %p393, %s24, 1
      %s395 = smul.addr %s394, 18
      %s396 = smul.addr %s395, 4
      %s397 = scalar_lea.vmem %s0, %s396
      %p398 = pneg %p45
      %p399 = pneg %p42
      %p400 = pneg %p66
      %p401 = pneg %p63
      %p402 = pneg %p87
      %p403 = pneg %p84
      %p404 = pneg %p108
      %p405 = pneg %p105
      %p406 = pneg %p129
      %p407 = pneg %p126
      %p408 = pneg %p150
      %p409 = pneg %p147
      %p410 = pneg %p171
      %p411 = pneg %p168
      %p412 = pneg %p192
      %p413 = pneg %p189
      %p414 = pneg %p213
      %p415 = pneg %p210
      %p416 = pneg %p234
      %p417 = pneg %p231
      %p418 = pneg %p255
      %p419 = pneg %p252
      %p420 = pneg %p276
      %p421 = pneg %p273
      %p422 = pneg %p297
      %p423 = pneg %p294
      %p424 = pneg %p323
      %p425 = pneg %p320
      %p426 = scmp.lt.s32.totalorder %s24, 1
      %s427 = scalar_select %p426, %s24, 1
      %s428 = smul.addr %s427, 40
      %s429 = smul.addr %s428, 8
      %s430 = scalar_lea.vmem %s13, %s429
      %p431 = scmp.lt.s32.totalorder %s24, 1
      %s432 = scalar_select %p431, %s24, 1
      %s433 = smul.addr %s432, 18
      %s434 = smul.addr %s433, 4
      %s435 = scalar_lea.vmem %s0, %s434
      %p436 = scmp.lt.s32.totalorder %s24, 1
      %s437 = scalar_select %p436, %s24, 1
      %s438 = smul.addr %s437, 40
      %s439 = smul.addr %s438, 8
      %s440 = scalar_lea.vmem %s13, %s439
      %v442 = vld [vmem:[%s435] sm:$0xf]
      %v443 = vld [vmem:[%s435 + $0x4] sm:$0xf]
      %v444 = vld [vmem:[%s435 + $0x8] sm:$0xf]
      %v445 = vld [vmem:[%s435 + $0xc] sm:$0xf]
      %v446 = vld [vmem:[%s435 + $0x10] sm:$0xf]
      %v447 = vld [vmem:[%s435 + $0x14] sm:$0xf]
      %v448 = vld [vmem:[%s435 + $0x18] sm:$0xf]
      %v449 = vld [vmem:[%s435 + $0x1c] sm:$0xf]
      %v450 = vld [vmem:[%s435 + $0x20] sm:$0xf]
      %v451 = vld [vmem:[%s435 + $0x24] sm:$0xf]
      %v452 = vld [vmem:[%s435 + $0x28] sm:$0xf]
      %v453 = vld [vmem:[%s435 + $0x2c] sm:$0xf]
      %v454 = vld [vmem:[%s435 + $0x30] sm:$0xf]
      %v455 = vld [vmem:[%s435 + $0x34] sm:$0xf]
      %v456 = vld [vmem:[%s435 + $0x38] sm:$0xf]
      %v457 = vld [vmem:[%s435 + $0x3c] sm:$0xf]
      %v458 = vld [vmem:[%s435 + $0x40] sm:$0xf]
      %v459 = vld [vmem:[%s435 + $0x44] sm:$0xf]
      %v460 = vld [vmem:[%s1] sm:$0xf]
      %v461 = vld [vmem:[%s1 + $0x4] sm:$0xf]
      %v462 = vld [vmem:[%s1 + $0x8] sm:$0xf]
      %v463 = vld [vmem:[%s1 + $0xc] sm:$0xf]
      %v464 = vld [vmem:[%s1 + $0x10] sm:$0xf]
      %v465 = vld [vmem:[%s1 + $0x14] sm:$0xf]
      %v466 = vld [vmem:[%s1 + $0x18] sm:$0xf]
      %v467 = vld [vmem:[%s1 + $0x1c] sm:$0xf]
      %v468 = vld [vmem:[%s1 + $0x20] sm:$0xf]
      %v469 = vld [vmem:[%s1 + $0x24] sm:$0x3]
      %v488 = vunpack.c.l.b16 %v442
      %v489 = vunpack.c.l.b16 %v443
      %v490 = vunpack.c.l.b16 %v444
      %v491 = vunpack.c.l.b16 %v445
      %v492 = vunpack.c.l.b16 %v446
      %v493 = vunpack.c.l.b16 %v447
      %v494 = vunpack.c.l.b16 %v448
      %v495 = vunpack.c.l.b16 %v449
      %v496 = vunpack.c.l.b16 %v450
      %v497 = vunpack.c.l.b16 %v451
      %v498 = vunpack.c.l.b16 %v452
      %v499 = vunpack.c.l.b16 %v453
      %v500 = vunpack.c.l.b16 %v454
      %v501 = vunpack.c.l.b16 %v455
      %v502 = vunpack.c.l.b16 %v456
      %v503 = vunpack.c.l.b16 %v457
      %v504 = vunpack.c.l.b16 %v458
      %v505 = vunpack.c.l.b16 %v459
      %v506 = vpack.c.b16 %v489, %v488
      %v507 = vpack.c.b16 %v491, %v490
      %v508 = vpack.c.b16 %v493, %v492
      %v509 = vpack.c.b16 %v495, %v494
      %v510 = vpack.c.b16 %v497, %v496
      %v511 = vpack.c.b16 %v499, %v498
      %v512 = vpack.c.b16 %v501, %v500
      %v513 = vpack.c.b16 %v503, %v502
      %v514 = vpack.c.b16 %v505, %v504
      %v525 = vunpack.c.l.b16 %v460
      %v526 = vunpack.c.l.b16 %v461
      %v527 = vunpack.c.l.b16 %v462
      %v528 = vunpack.c.l.b16 %v463
      %v529 = vunpack.c.l.b16 %v464
      %v530 = vunpack.c.l.b16 %v465
      %v531 = vunpack.c.l.b16 %v466
      %v532 = vunpack.c.l.b16 %v467
      %v533 = vunpack.c.l.b16 %v468
      %v534 = vunpack.c.l.b16 %v469
      %v535 = vpack.c.b16 %v526, %v525
      %v536 = vpack.c.b16 %v528, %v527
      %v537 = vpack.c.b16 %v530, %v529
      %v538 = vpack.c.b16 %v532, %v531
      %v539 = vpack.c.b16 %v534, %v533
      %vm544 = vcmask 621568
      %v546 = vsel %vm544, %v506, 0
      %v549 = vsel %vm544, %v507, 0
      %v552 = vsel %vm544, %v508, 0
      %v555 = vsel %vm544, %v509, 0
      %v558 = vsel %vm544, %v510, 0
      %v561 = vsel %vm544, %v511, 0
      %v564 = vsel %vm544, %v512, 0
      %v567 = vsel %vm544, %v513, 0
      %v570 = vsel %vm544, %v514, 0
      %vm572 = vcmask 1045504
      %v574 = vsel %vm572, %v539, 0
      %576 = vmatpush.bf16.msra.mxu0 0
      %577 = vmatpush.bf16.msra.mxu0 0
      %578 = vmatpush.bf16.msra.mxu0 0
      %579 = vmatpush.bf16.msra.mxu0 %v574
      %580 = vmatpush.bf16.msra.mxu0 %v538
      %581 = vmatpush.bf16.msra.mxu0 %v537
      %582 = vmatpush.bf16.msra.mxu0 %v536
      %583 = vmatpush.bf16.msra.mxu0 %v535
      %584 = vmatmul.bf16.gmra.mxu0 %v546
      %v585 = vpop.f32.mrf.mxu0
      %v586 = vadd.f32 0.0, %v585
      %v587 = vpop.f32.mrf.mxu0
      %v588 = vadd.f32 0.0, %v587
      %589 = vmatmul.bf16.gmra.mxu0 %v549
      %v590 = vpop.f32.mrf.mxu0
      %v591 = vadd.f32 0.0, %v590
      %v592 = vpop.f32.mrf.mxu0
      %v593 = vadd.f32 0.0, %v592
      %594 = vmatmul.bf16.gmra.mxu0 %v552
      %v595 = vpop.f32.mrf.mxu0
      %v596 = vadd.f32 0.0, %v595
      %v597 = vpop.f32.mrf.mxu0
      %v598 = vadd.f32 0.0, %v597
      %599 = vmatmul.bf16.gmra.mxu0 %v555
      %v600 = vpop.f32.mrf.mxu0
      %v601 = vadd.f32 0.0, %v600
      %v602 = vpop.f32.mrf.mxu0
      %v603 = vadd.f32 0.0, %v602
      %604 = vmatmul.bf16.gmra.mxu0 %v558
      %v605 = vpop.f32.mrf.mxu0
      %v606 = vadd.f32 0.0, %v605
      %v607 = vpop.f32.mrf.mxu0
      %v608 = vadd.f32 0.0, %v607
      %609 = vmatmul.bf16.gmra.mxu0 %v561
      %v610 = vpop.f32.mrf.mxu0
      %v611 = vadd.f32 0.0, %v610
      %v612 = vpop.f32.mrf.mxu0
      %v613 = vadd.f32 0.0, %v612
      %614 = vmatmul.bf16.gmra.mxu0 %v564
      %v615 = vpop.f32.mrf.mxu0
      %v616 = vadd.f32 0.0, %v615
      %v617 = vpop.f32.mrf.mxu0
      %v618 = vadd.f32 0.0, %v617
      %619 = vmatmul.bf16.gmra.mxu0 %v567
      %v620 = vpop.f32.mrf.mxu0
      %v621 = vadd.f32 0.0, %v620
      %v622 = vpop.f32.mrf.mxu0
      %v623 = vadd.f32 0.0, %v622
      %624 = vmatmul.bf16.gmra.mxu0 %v570
      %v625 = vpop.f32.mrf.mxu0
      %v626 = vadd.f32 0.0, %v625
      %v627 = vpop.f32.mrf.mxu0
      %v628 = vadd.f32 0.0, %v627
      %629 = vdwg.mxu0
      %v630 = vmax.f32 %v586, 0.0
      %v631 = vmax.f32 %v588, 0.0
      %v632 = vmax.f32 %v591, 0.0
      %v633 = vmax.f32 %v593, 0.0
      %v634 = vmax.f32 %v596, 0.0
      %v635 = vmax.f32 %v598, 0.0
      %v636 = vmax.f32 %v601, 0.0
      %v637 = vmax.f32 %v603, 0.0
      %v638 = vmax.f32 %v606, 0.0
      %v639 = vmax.f32 %v608, 0.0
      %v640 = vmax.f32 %v611, 0.0
      %v641 = vmax.f32 %v613, 0.0
      %v642 = vmax.f32 %v616, 0.0
      %v643 = vmax.f32 %v618, 0.0
      %v644 = vmax.f32 %v621, 0.0
      %v645 = vmax.f32 %v623, 0.0
      %v646 = vmax.f32 %v626, 0.0
      %v647 = vmax.f32 %v628, 0.0
      %vm648 = vcmask 523264
      %649 = vst.msk [vmem:[#allocation2] sm:$0xff] %vm648, %v630
      %650 = vst.msk [vmem:[#allocation2 + $0x8] sm:$0xff] %vm648, %v631
      %651 = vst.msk [vmem:[#allocation2 + $0x10] sm:$0xff] %vm648, %v632
      %652 = vst.msk [vmem:[#allocation2 + $0x18] sm:$0xff] %vm648, %v633
      %653 = vst.msk [vmem:[#allocation2 + $0x20] sm:$0xff] %vm648, %v634
      %654 = vst.msk [vmem:[#allocation2 + $0x28] sm:$0xff] %vm648, %v635
      %655 = vst.msk [vmem:[#allocation2 + $0x30] sm:$0xff] %vm648, %v636
      %656 = vst.msk [vmem:[#allocation2 + $0x38] sm:$0xff] %vm648, %v637
      %657 = vst.msk [vmem:[#allocation2 + $0x40] sm:$0xff] %vm648, %v638
      %658 = vst.msk [vmem:[#allocation2 + $0x48] sm:$0xff] %vm648, %v639
      %659 = vst.msk [vmem:[#allocation2 + $0x50] sm:$0xff] %vm648, %v640
      %660 = vst.msk [vmem:[#allocation2 + $0x58] sm:$0xff] %vm648, %v641
      %661 = vst.msk [vmem:[#allocation2 + $0x60] sm:$0xff] %vm648, %v642
      %662 = vst.msk [vmem:[#allocation2 + $0x68] sm:$0xff] %vm648, %v643
      %663 = vst.msk [vmem:[#allocation2 + $0x70] sm:$0xff] %vm648, %v644
      %664 = vst.msk [vmem:[#allocation2 + $0x78] sm:$0xff] %vm648, %v645
      %665 = vst.msk [vmem:[#allocation2 + $0x80] sm:$0xff] %vm648, %v646
      %666 = vst.msk [vmem:[#allocation2 + $0x88] sm:$0xff] %vm648, %v647
      %v667 = vld [vmem:[#allocation2 + $0x2] sm:$0xff]
      %v668 = vld [vmem:[#allocation2 + $0xa] sm:$0xff]
      %v669 = vld [vmem:[#allocation2 + $0x12] sm:$0xff]
      %v670 = vld [vmem:[#allocation2 + $0x1a] sm:$0xff]
      %v671 = vld [vmem:[#allocation2 + $0x22] sm:$0xff]
      %v672 = vld [vmem:[#allocation2 + $0x2a] sm:$0xff]
      %v673 = vld [vmem:[#allocation2 + $0x32] sm:$0xff]
      %v674 = vld [vmem:[#allocation2 + $0x3a] sm:$0xff]
      %v675 = vld [vmem:[#allocation2 + $0x42] sm:$0xff]
      %v676 = vld [vmem:[#allocation2 + $0x4a] sm:$0xff]
      %v677 = vld [vmem:[#allocation2 + $0x52] sm:$0xff]
      %v678 = vld [vmem:[#allocation2 + $0x5a] sm:$0xff]
      %v679 = vld [vmem:[#allocation2 + $0x62] sm:$0xff]
      %v680 = vld [vmem:[#allocation2 + $0x6a] sm:$0xff]
      %v681 = vld [vmem:[#allocation2 + $0x72] sm:$0xff]
      %v682 = vld [vmem:[#allocation2 + $0x7a] sm:$0xff]
      %v683 = vpack.c.bf16 %v668, %v667
      %v684 = vpack.c.bf16 %v670, %v669
      %v685 = vpack.c.bf16 %v672, %v671
      %v686 = vpack.c.bf16 %v674, %v673
      %v687 = vpack.c.bf16 %v676, %v675
      %v688 = vpack.c.bf16 %v678, %v677
      %v689 = vpack.c.bf16 %v680, %v679
      %v690 = vpack.c.bf16 %v682, %v681
      %v691 = vld [vmem:[%s2] sm:$0xf]
      %v692 = vld [vmem:[%s2 + $0x4] sm:$0xf]
      %v693 = vld [vmem:[%s2 + $0x8] sm:$0xf]
      %v694 = vld [vmem:[%s2 + $0xc] sm:$0xf]
      %v695 = vld [vmem:[%s2 + $0x10] sm:$0xf]
      %v696 = vld [vmem:[%s2 + $0x14] sm:$0xf]
      %v697 = vld [vmem:[%s2 + $0x18] sm:$0xf]
      %v698 = vld [vmem:[%s2 + $0x1c] sm:$0xf]
      %v699 = vld [vmem:[#allocation2 + $0x3] sm:$0xff]
      %v700 = vld [vmem:[#allocation2 + $0xb] sm:$0xff]
      %v701 = vld [vmem:[#allocation2 + $0x13] sm:$0xff]
      %v702 = vld [vmem:[#allocation2 + $0x1b] sm:$0xff]
      %v703 = vld [vmem:[#allocation2 + $0x23] sm:$0xff]
      %v704 = vld [vmem:[#allocation2 + $0x2b] sm:$0xff]
      %v705 = vld [vmem:[#allocation2 + $0x33] sm:$0xff]
      %v706 = vld [vmem:[#allocation2 + $0x3b] sm:$0xff]
      %v707 = vld [vmem:[#allocation2 + $0x43] sm:$0xff]
      %v708 = vld [vmem:[#allocation2 + $0x4b] sm:$0xff]
      %v709 = vld [vmem:[#allocation2 + $0x53] sm:$0xff]
      %v710 = vld [vmem:[#allocation2 + $0x5b] sm:$0xff]
      %v711 = vld [vmem:[#allocation2 + $0x63] sm:$0xff]
      %v712 = vld [vmem:[#allocation2 + $0x6b] sm:$0xff]
      %v713 = vld [vmem:[#allocation2 + $0x73] sm:$0xff]
      %v714 = vld [vmem:[#allocation2 + $0x7b] sm:$0xff]
      %v715 = vpack.c.bf16 %v700, %v699
      %v716 = vpack.c.bf16 %v702, %v701
      %v717 = vpack.c.bf16 %v704, %v703
      %v718 = vpack.c.bf16 %v706, %v705
      %v719 = vpack.c.bf16 %v708, %v707
      %v720 = vpack.c.bf16 %v710, %v709
      %v721 = vpack.c.bf16 %v712, %v711
      %v722 = vpack.c.bf16 %v714, %v713
      %s723 = scalar_lea.vmem %s2, 32
      %v724 = vld [vmem:[%s723] sm:$0xf]
      %v725 = vld [vmem:[%s723 + $0x4] sm:$0xf]
      %v726 = vld [vmem:[%s723 + $0x8] sm:$0xf]
      %v727 = vld [vmem:[%s723 + $0xc] sm:$0xf]
      %v728 = vld [vmem:[%s723 + $0x10] sm:$0xf]
      %v729 = vld [vmem:[%s723 + $0x14] sm:$0xf]
      %v730 = vld [vmem:[%s723 + $0x18] sm:$0xf]
      %v731 = vld [vmem:[%s723 + $0x1c] sm:$0xf]
      %v740 = vunpack.c.l.b16 %v724
      %v741 = vunpack.c.l.b16 %v725
      %v742 = vunpack.c.l.b16 %v726
      %v743 = vunpack.c.l.b16 %v727
      %v744 = vunpack.c.l.b16 %v728
      %v745 = vunpack.c.l.b16 %v729
      %v746 = vunpack.c.l.b16 %v730
      %v747 = vunpack.c.l.b16 %v731
      %v748 = vpack.c.b16 %v741, %v740
      %v749 = vpack.c.b16 %v743, %v742
      %v750 = vpack.c.b16 %v745, %v744
      %v751 = vpack.c.b16 %v747, %v746
      %v757 = vsel %vm648, %v715, 0
      %v760 = vsel %vm648, %v716, 0
      %v763 = vsel %vm648, %v717, 0
      %v766 = vsel %vm648, %v718, 0
      %v769 = vsel %vm648, %v719, 0
      %v772 = vsel %vm648, %v720, 0
      %v775 = vsel %vm648, %v721, 0
      %v778 = vsel %vm648, %v722, 0
      %780 = vmatpush.bf16.msra.mxu0 0
      %781 = vmatpush.bf16.msra.mxu0 0
      %782 = vmatpush.bf16.msra.mxu0 0
      %783 = vmatpush.bf16.msra.mxu0 0
      %784 = vmatpush.bf16.msra.mxu0 %v751
      %785 = vmatpush.bf16.msra.mxu0 %v750
      %786 = vmatpush.bf16.msra.mxu0 %v749
      %787 = vmatpush.bf16.msra.mxu0 %v748
      %788 = vmatmul.bf16.gmra.mxu0 %v757
      %v789 = vpop.f32.mrf.mxu0
      %v790 = vadd.f32 0.0, %v789
      %v791 = vpop.f32.mrf.mxu0
      %v792 = vadd.f32 0.0, %v791
      %793 = vmatmul.bf16.gmra.mxu0 %v760
      %v794 = vpop.f32.mrf.mxu0
      %v795 = vadd.f32 0.0, %v794
      %v796 = vpop.f32.mrf.mxu0
      %v797 = vadd.f32 0.0, %v796
      %798 = vmatmul.bf16.gmra.mxu0 %v763
      %v799 = vpop.f32.mrf.mxu0
      %v800 = vadd.f32 0.0, %v799
      %v801 = vpop.f32.mrf.mxu0
      %v802 = vadd.f32 0.0, %v801
      %803 = vmatmul.bf16.gmra.mxu0 %v766
      %v804 = vpop.f32.mrf.mxu0
      %v805 = vadd.f32 0.0, %v804
      %v806 = vpop.f32.mrf.mxu0
      %v807 = vadd.f32 0.0, %v806
      %808 = vmatmul.bf16.gmra.mxu0 %v769
      %v809 = vpop.f32.mrf.mxu0
      %v810 = vadd.f32 0.0, %v809
      %v811 = vpop.f32.mrf.mxu0
      %v812 = vadd.f32 0.0, %v811
      %813 = vmatmul.bf16.gmra.mxu0 %v772
      %v814 = vpop.f32.mrf.mxu0
      %v815 = vadd.f32 0.0, %v814
      %v816 = vpop.f32.mrf.mxu0
      %v817 = vadd.f32 0.0, %v816
      %818 = vmatmul.bf16.gmra.mxu0 %v775
      %v819 = vpop.f32.mrf.mxu0
      %v820 = vadd.f32 0.0, %v819
      %v821 = vpop.f32.mrf.mxu0
      %v822 = vadd.f32 0.0, %v821
      %823 = vmatmul.bf16.gmra.mxu0 %v778
      %v824 = vpop.f32.mrf.mxu0
      %v825 = vadd.f32 0.0, %v824
      %v826 = vpop.f32.mrf.mxu0
      %v827 = vadd.f32 0.0, %v826
      %828 = vdwg.mxu0
      %v837 = vunpack.c.l.b16 %v691
      %v838 = vunpack.c.l.b16 %v692
      %v839 = vunpack.c.l.b16 %v693
      %v840 = vunpack.c.l.b16 %v694
      %v841 = vunpack.c.l.b16 %v695
      %v842 = vunpack.c.l.b16 %v696
      %v843 = vunpack.c.l.b16 %v697
      %v844 = vunpack.c.l.b16 %v698
      %v845 = vpack.c.b16 %v838, %v837
      %v846 = vpack.c.b16 %v840, %v839
      %v847 = vpack.c.b16 %v842, %v841
      %v848 = vpack.c.b16 %v844, %v843
      %v854 = vsel %vm648, %v683, 0
      %v857 = vsel %vm648, %v684, 0
      %v860 = vsel %vm648, %v685, 0
      %v863 = vsel %vm648, %v686, 0
      %v866 = vsel %vm648, %v687, 0
      %v869 = vsel %vm648, %v688, 0
      %v872 = vsel %vm648, %v689, 0
      %v875 = vsel %vm648, %v690, 0
      %877 = vmatpush.bf16.msra.mxu0 0
      %878 = vmatpush.bf16.msra.mxu0 0
      %879 = vmatpush.bf16.msra.mxu0 0
      %880 = vmatpush.bf16.msra.mxu0 0
      %881 = vmatpush.bf16.msra.mxu0 %v848
      %882 = vmatpush.bf16.msra.mxu0 %v847
      %883 = vmatpush.bf16.msra.mxu0 %v846
      %884 = vmatpush.bf16.msra.mxu0 %v845
      %885 = vmatmul.bf16.gmra.mxu0 %v854
      %v886 = vpop.f32.mrf.mxu0
      %v887 = vadd.f32 %v790, %v886
      %v888 = vpop.f32.mrf.mxu0
      %v889 = vadd.f32 %v792, %v888
      %890 = vmatmul.bf16.gmra.mxu0 %v857
      %v891 = vpop.f32.mrf.mxu0
      %v892 = vadd.f32 %v795, %v891
      %v893 = vpop.f32.mrf.mxu0
      %v894 = vadd.f32 %v797, %v893
      %895 = vmatmul.bf16.gmra.mxu0 %v860
      %v896 = vpop.f32.mrf.mxu0
      %v897 = vadd.f32 %v800, %v896
      %v898 = vpop.f32.mrf.mxu0
      %v899 = vadd.f32 %v802, %v898
      %900 = vmatmul.bf16.gmra.mxu0 %v863
      %v901 = vpop.f32.mrf.mxu0
      %v902 = vadd.f32 %v805, %v901
      %v903 = vpop.f32.mrf.mxu0
      %v904 = vadd.f32 %v807, %v903
      %905 = vmatmul.bf16.gmra.mxu0 %v866
      %v906 = vpop.f32.mrf.mxu0
      %v907 = vadd.f32 %v810, %v906
      %v908 = vpop.f32.mrf.mxu0
      %v909 = vadd.f32 %v812, %v908
      %910 = vmatmul.bf16.gmra.mxu0 %v869
      %v911 = vpop.f32.mrf.mxu0
      %v912 = vadd.f32 %v815, %v911
      %v913 = vpop.f32.mrf.mxu0
      %v914 = vadd.f32 %v817, %v913
      %915 = vmatmul.bf16.gmra.mxu0 %v872
      %v916 = vpop.f32.mrf.mxu0
      %v917 = vadd.f32 %v820, %v916
      %v918 = vpop.f32.mrf.mxu0
      %v919 = vadd.f32 %v822, %v918
      %920 = vmatmul.bf16.gmra.mxu0 %v875
      %v921 = vpop.f32.mrf.mxu0
      %v922 = vadd.f32 %v825, %v921
      %v923 = vpop.f32.mrf.mxu0
      %v924 = vadd.f32 %v827, %v923
      %925 = vdwg.mxu0
      %v926 = vld [vmem:[#allocation2 + $0xc] sm:$0xff]
      %v927 = vld [vmem:[#allocation2 + $0x14] sm:$0xff]
      %v928 = vld [vmem:[#allocation2 + $0x1c] sm:$0xff]
      %v929 = vld [vmem:[#allocation2 + $0x24] sm:$0xff]
      %v930 = vld [vmem:[#allocation2 + $0x2c] sm:$0xff]
      %v931 = vld [vmem:[#allocation2 + $0x34] sm:$0xff]
      %v932 = vld [vmem:[#allocation2 + $0x3c] sm:$0xff]
      %v933 = vld [vmem:[#allocation2 + $0x44] sm:$0xff]
      %v934 = vld [vmem:[#allocation2 + $0x4c] sm:$0xff]
      %v935 = vld [vmem:[#allocation2 + $0x54] sm:$0xff]
      %v936 = vld [vmem:[#allocation2 + $0x5c] sm:$0xff]
      %v937 = vld [vmem:[#allocation2 + $0x64] sm:$0xff]
      %v938 = vld [vmem:[#allocation2 + $0x6c] sm:$0xff]
      %v939 = vld [vmem:[#allocation2 + $0x74] sm:$0xff]
      %v940 = vld [vmem:[#allocation2 + $0x7c] sm:$0xff]
      %v941 = vld [vmem:[#allocation2 + $0x84] sm:$0xff]
      %v942 = vpack.c.bf16 %v927, %v926
      %v943 = vpack.c.bf16 %v929, %v928
      %v944 = vpack.c.bf16 %v931, %v930
      %v945 = vpack.c.bf16 %v933, %v932
      %v946 = vpack.c.bf16 %v935, %v934
      %v947 = vpack.c.bf16 %v937, %v936
      %v948 = vpack.c.bf16 %v939, %v938
      %v949 = vpack.c.bf16 %v941, %v940
      %s950 = scalar_lea.vmem %s2, 64
      %v951 = vld [vmem:[%s950] sm:$0xf]
      %v952 = vld [vmem:[%s950 + $0x4] sm:$0xf]
      %v953 = vld [vmem:[%s950 + $0x8] sm:$0xf]
      %v954 = vld [vmem:[%s950 + $0xc] sm:$0xf]
      %v955 = vld [vmem:[%s950 + $0x10] sm:$0xf]
      %v956 = vld [vmem:[%s950 + $0x14] sm:$0xf]
      %v957 = vld [vmem:[%s950 + $0x18] sm:$0xf]
      %v958 = vld [vmem:[%s950 + $0x1c] sm:$0xf]
      %v967 = vunpack.c.l.b16 %v951
      %v968 = vunpack.c.l.b16 %v952
      %v969 = vunpack.c.l.b16 %v953
      %v970 = vunpack.c.l.b16 %v954
      %v971 = vunpack.c.l.b16 %v955
      %v972 = vunpack.c.l.b16 %v956
      %v973 = vunpack.c.l.b16 %v957
      %v974 = vunpack.c.l.b16 %v958
      %v975 = vpack.c.b16 %v968, %v967
      %v976 = vpack.c.b16 %v970, %v969
      %v977 = vpack.c.b16 %v972, %v971
      %v978 = vpack.c.b16 %v974, %v973
      %v984 = vsel %vm648, %v942, 0
      %v987 = vsel %vm648, %v943, 0
      %v990 = vsel %vm648, %v944, 0
      %v993 = vsel %vm648, %v945, 0
      %v996 = vsel %vm648, %v946, 0
      %v999 = vsel %vm648, %v947, 0
      %v1002 = vsel %vm648, %v948, 0
      %v1005 = vsel %vm648, %v949, 0
      %1007 = vmatpush.bf16.msra.mxu0 0
      %1008 = vmatpush.bf16.msra.mxu0 0
      %1009 = vmatpush.bf16.msra.mxu0 0
      %1010 = vmatpush.bf16.msra.mxu0 0
      %1011 = vmatpush.bf16.msra.mxu0 %v978
      %1012 = vmatpush.bf16.msra.mxu0 %v977
      %1013 = vmatpush.bf16.msra.mxu0 %v976
      %1014 = vmatpush.bf16.msra.mxu0 %v975
      %1015 = vmatmul.bf16.gmra.mxu0 %v984
      %v1016 = vpop.f32.mrf.mxu0
      %v1017 = vadd.f32 0.0, %v1016
      %v1018 = vpop.f32.mrf.mxu0
      %v1019 = vadd.f32 0.0, %v1018
      %1020 = vmatmul.bf16.gmra.mxu0 %v987
      %v1021 = vpop.f32.mrf.mxu0
      %v1022 = vadd.f32 0.0, %v1021
      %v1023 = vpop.f32.mrf.mxu0
      %v1024 = vadd.f32 0.0, %v1023
      %1025 = vmatmul.bf16.gmra.mxu0 %v990
      %v1026 = vpop.f32.mrf.mxu0
      %v1027 = vadd.f32 0.0, %v1026
      %v1028 = vpop.f32.mrf.mxu0
      %v1029 = vadd.f32 0.0, %v1028
      %1030 = vmatmul.bf16.gmra.mxu0 %v993
      %v1031 = vpop.f32.mrf.mxu0
      %v1032 = vadd.f32 0.0, %v1031
      %v1033 = vpop.f32.mrf.mxu0
      %v1034 = vadd.f32 0.0, %v1033
      %1035 = vmatmul.bf16.gmra.mxu0 %v996
      %v1036 = vpop.f32.mrf.mxu0
      %v1037 = vadd.f32 0.0, %v1036
      %v1038 = vpop.f32.mrf.mxu0
      %v1039 = vadd.f32 0.0, %v1038
      %1040 = vmatmul.bf16.gmra.mxu0 %v999
      %v1041 = vpop.f32.mrf.mxu0
      %v1042 = vadd.f32 0.0, %v1041
      %v1043 = vpop.f32.mrf.mxu0
      %v1044 = vadd.f32 0.0, %v1043
      %1045 = vmatmul.bf16.gmra.mxu0 %v1002
      %v1046 = vpop.f32.mrf.mxu0
      %v1047 = vadd.f32 0.0, %v1046
      %v1048 = vpop.f32.mrf.mxu0
      %v1049 = vadd.f32 0.0, %v1048
      %1050 = vmatmul.bf16.gmra.mxu0 %v1005
      %v1051 = vpop.f32.mrf.mxu0
      %v1052 = vadd.f32 0.0, %v1051
      %v1053 = vpop.f32.mrf.mxu0
      %v1054 = vadd.f32 0.0, %v1053
      %1055 = vdwg.mxu0
      %v1056 = vadd.f32 %v887, %v1017
      %v1057 = vadd.f32 %v889, %v1019
      %v1058 = vadd.f32 %v892, %v1022
      %v1059 = vadd.f32 %v894, %v1024
      %v1060 = vadd.f32 %v897, %v1027
      %v1061 = vadd.f32 %v899, %v1029
      %v1062 = vadd.f32 %v902, %v1032
      %v1063 = vadd.f32 %v904, %v1034
      %v1064 = vadd.f32 %v907, %v1037
      %v1065 = vadd.f32 %v909, %v1039
      %v1066 = vadd.f32 %v912, %v1042
      %v1067 = vadd.f32 %v914, %v1044
      %v1068 = vadd.f32 %v917, %v1047
      %v1069 = vadd.f32 %v919, %v1049
      %v1070 = vadd.f32 %v922, %v1052
      %v1071 = vadd.f32 %v924, %v1054
      %v1072 = vld [vmem:[#allocation2 + $0xd] sm:$0xff]
      %v1073 = vld [vmem:[#allocation2 + $0x15] sm:$0xff]
      %v1074 = vld [vmem:[#allocation2 + $0x1d] sm:$0xff]
      %v1075 = vld [vmem:[#allocation2 + $0x25] sm:$0xff]
      %v1076 = vld [vmem:[#allocation2 + $0x2d] sm:$0xff]
      %v1077 = vld [vmem:[#allocation2 + $0x35] sm:$0xff]
      %v1078 = vld [vmem:[#allocation2 + $0x3d] sm:$0xff]
      %v1079 = vld [vmem:[#allocation2 + $0x45] sm:$0xff]
      %v1080 = vld [vmem:[#allocation2 + $0x4d] sm:$0xff]
      %v1081 = vld [vmem:[#allocation2 + $0x55] sm:$0xff]
      %v1082 = vld [vmem:[#allocation2 + $0x5d] sm:$0xff]
      %v1083 = vld [vmem:[#allocation2 + $0x65] sm:$0xff]
      %v1084 = vld [vmem:[#allocation2 + $0x6d] sm:$0xff]
      %v1085 = vld [vmem:[#allocation2 + $0x75] sm:$0xff]
      %v1086 = vld [vmem:[#allocation2 + $0x7d] sm:$0xff]
      %v1087 = vld [vmem:[#allocation2 + $0x85] sm:$0xff]
      %v1088 = vpack.c.bf16 %v1073, %v1072
      %v1089 = vpack.c.bf16 %v1075, %v1074
      %v1090 = vpack.c.bf16 %v1077, %v1076
      %v1091 = vpack.c.bf16 %v1079, %v1078
      %v1092 = vpack.c.bf16 %v1081, %v1080
      %v1093 = vpack.c.bf16 %v1083, %v1082
      %v1094 = vpack.c.bf16 %v1085, %v1084
      %v1095 = vpack.c.bf16 %v1087, %v1086
      %s1096 = scalar_lea.vmem %s2, 96
      %v1097 = vld [vmem:[%s1096] sm:$0xf]
      %v1098 = vld [vmem:[%s1096 + $0x4] sm:$0xf]
      %v1099 = vld [vmem:[%s1096 + $0x8] sm:$0xf]
      %v1100 = vld [vmem:[%s1096 + $0xc] sm:$0xf]
      %v1101 = vld [vmem:[%s1096 + $0x10] sm:$0xf]
      %v1102 = vld [vmem:[%s1096 + $0x14] sm:$0xf]
      %v1103 = vld [vmem:[%s1096 + $0x18] sm:$0xf]
      %v1104 = vld [vmem:[%s1096 + $0x1c] sm:$0xf]
      %v1113 = vunpack.c.l.b16 %v1097
      %v1114 = vunpack.c.l.b16 %v1098
      %v1115 = vunpack.c.l.b16 %v1099
      %v1116 = vunpack.c.l.b16 %v1100
      %v1117 = vunpack.c.l.b16 %v1101
      %v1118 = vunpack.c.l.b16 %v1102
      %v1119 = vunpack.c.l.b16 %v1103
      %v1120 = vunpack.c.l.b16 %v1104
      %v1121 = vpack.c.b16 %v1114, %v1113
      %v1122 = vpack.c.b16 %v1116, %v1115
      %v1123 = vpack.c.b16 %v1118, %v1117
      %v1124 = vpack.c.b16 %v1120, %v1119
      %v1130 = vsel %vm648, %v1088, 0
      %v1133 = vsel %vm648, %v1089, 0
      %v1136 = vsel %vm648, %v1090, 0
      %v1139 = vsel %vm648, %v1091, 0
      %v1142 = vsel %vm648, %v1092, 0
      %v1145 = vsel %vm648, %v1093, 0
      %v1148 = vsel %vm648, %v1094, 0
      %v1151 = vsel %vm648, %v1095, 0
      %1153 = vmatpush.bf16.msra.mxu0 0
      %1154 = vmatpush.bf16.msra.mxu0 0
      %1155 = vmatpush.bf16.msra.mxu0 0
      %1156 = vmatpush.bf16.msra.mxu0 0
      %1157 = vmatpush.bf16.msra.mxu0 %v1124
      %1158 = vmatpush.bf16.msra.mxu0 %v1123
      %1159 = vmatpush.bf16.msra.mxu0 %v1122
      %1160 = vmatpush.bf16.msra.mxu0 %v1121
      %1161 = vmatmul.bf16.gmra.mxu0 %v1130
      %v1162 = vpop.f32.mrf.mxu0
      %v1163 = vadd.f32 0.0, %v1162
      %v1164 = vpop.f32.mrf.mxu0
      %v1165 = vadd.f32 0.0, %v1164
      %1166 = vmatmul.bf16.gmra.mxu0 %v1133
      %v1167 = vpop.f32.mrf.mxu0
      %v1168 = vadd.f32 0.0, %v1167
      %v1169 = vpop.f32.mrf.mxu0
      %v1170 = vadd.f32 0.0, %v1169
      %1171 = vmatmul.bf16.gmra.mxu0 %v1136
      %v1172 = vpop.f32.mrf.mxu0
      %v1173 = vadd.f32 0.0, %v1172
      %v1174 = vpop.f32.mrf.mxu0
      %v1175 = vadd.f32 0.0, %v1174
      %1176 = vmatmul.bf16.gmra.mxu0 %v1139
      %v1177 = vpop.f32.mrf.mxu0
      %v1178 = vadd.f32 0.0, %v1177
      %v1179 = vpop.f32.mrf.mxu0
      %v1180 = vadd.f32 0.0, %v1179
      %1181 = vmatmul.bf16.gmra.mxu0 %v1142
      %v1182 = vpop.f32.mrf.mxu0
      %v1183 = vadd.f32 0.0, %v1182
      %v1184 = vpop.f32.mrf.mxu0
      %v1185 = vadd.f32 0.0, %v1184
      %1186 = vmatmul.bf16.gmra.mxu0 %v1145
      %v1187 = vpop.f32.mrf.mxu0
      %v1188 = vadd.f32 0.0, %v1187
      %v1189 = vpop.f32.mrf.mxu0
      %v1190 = vadd.f32 0.0, %v1189
      %1191 = vmatmul.bf16.gmra.mxu0 %v1148
      %v1192 = vpop.f32.mrf.mxu0
      %v1193 = vadd.f32 0.0, %v1192
      %v1194 = vpop.f32.mrf.mxu0
      %v1195 = vadd.f32 0.0, %v1194
      %1196 = vmatmul.bf16.gmra.mxu0 %v1151
      %v1197 = vpop.f32.mrf.mxu0
      %v1198 = vadd.f32 0.0, %v1197
      %v1199 = vpop.f32.mrf.mxu0
      %v1200 = vadd.f32 0.0, %v1199
      %1201 = vdwg.mxu0
      %v1202 = vadd.f32 %v1056, %v1163
      %v1203 = vadd.f32 %v1057, %v1165
      %v1204 = vadd.f32 %v1058, %v1168
      %v1205 = vadd.f32 %v1059, %v1170
      %v1206 = vadd.f32 %v1060, %v1173
      %v1207 = vadd.f32 %v1061, %v1175
      %v1208 = vadd.f32 %v1062, %v1178
      %v1209 = vadd.f32 %v1063, %v1180
      %v1210 = vadd.f32 %v1064, %v1183
      %v1211 = vadd.f32 %v1065, %v1185
      %v1212 = vadd.f32 %v1066, %v1188
      %v1213 = vadd.f32 %v1067, %v1190
      %v1214 = vadd.f32 %v1068, %v1193
      %v1215 = vadd.f32 %v1069, %v1195
      %v1216 = vadd.f32 %v1070, %v1198
      %v1217 = vadd.f32 %v1071, %v1200
      %v1218 = vld [vmem:[%s6] sm:$0x1]
      %v1220 = vperm.slane %v1218, 0
      %v1222 = vadd.f32 %v1202, %v1220
      %v1223 = vadd.f32 %v1203, %v1220
      %v1224 = vadd.f32 %v1204, %v1220
      %v1225 = vadd.f32 %v1205, %v1220
      %v1226 = vadd.f32 %v1206, %v1220
      %v1227 = vadd.f32 %v1207, %v1220
      %v1228 = vadd.f32 %v1208, %v1220
      %v1229 = vadd.f32 %v1209, %v1220
      %v1230 = vadd.f32 %v1210, %v1220
      %v1231 = vadd.f32 %v1211, %v1220
      %v1232 = vadd.f32 %v1212, %v1220
      %v1233 = vadd.f32 %v1213, %v1220
      %v1234 = vadd.f32 %v1214, %v1220
      %v1235 = vadd.f32 %v1215, %v1220
      %v1236 = vadd.f32 %v1216, %v1220
      %v1237 = vadd.f32 %v1217, %v1220
      %v1238 = vmax.f32 %v1222, 0.0
      %v1239 = vmax.f32 %v1223, 0.0
      %v1240 = vmax.f32 %v1224, 0.0
      %v1241 = vmax.f32 %v1225, 0.0
      %v1242 = vmax.f32 %v1226, 0.0
      %v1243 = vmax.f32 %v1227, 0.0
      %v1244 = vmax.f32 %v1228, 0.0
      %v1245 = vmax.f32 %v1229, 0.0
      %v1246 = vmax.f32 %v1230, 0.0
      %v1247 = vmax.f32 %v1231, 0.0
      %v1248 = vmax.f32 %v1232, 0.0
      %v1249 = vmax.f32 %v1233, 0.0
      %v1250 = vmax.f32 %v1234, 0.0
      %v1251 = vmax.f32 %v1235, 0.0
      %v1252 = vmax.f32 %v1236, 0.0
      %v1253 = vmax.f32 %v1237, 0.0
      %v1254 = vld [vmem:[%s11] sm:$0xff]
      %v1255 = vld [vmem:[%s11 + $0x8] sm:$0xff]
      %v1256 = vld [vmem:[%s11 + $0x10] sm:$0xff]
      %v1257 = vld [vmem:[%s11 + $0x18] sm:$0xff]
      %v1258 = vld [vmem:[%s11 + $0x20] sm:$0xff]
      %v1259 = vld [vmem:[%s11 + $0x28] sm:$0xff]
      %v1260 = vld [vmem:[%s11 + $0x30] sm:$0xff]
      %v1261 = vld [vmem:[%s11 + $0x38] sm:$0xff]
      %v1262 = vld [vmem:[%s11 + $0x40] sm:$0xff]
      %v1263 = vld [vmem:[%s11 + $0x48] sm:$0xff]
      %v1264 = vld [vmem:[%s11 + $0x50] sm:$0xff]
      %v1265 = vld [vmem:[%s11 + $0x58] sm:$0xff]
      %v1266 = vld [vmem:[%s11 + $0x60] sm:$0xff]
      %v1267 = vld [vmem:[%s11 + $0x68] sm:$0xff]
      %v1268 = vld [vmem:[%s11 + $0x70] sm:$0xff]
      %v1269 = vld [vmem:[%s11 + $0x78] sm:$0xff]
      %1271 = vset.pattern.permute.xlu0 0
      %1272 = vperm.xlu0 %1271, %v1254
      %v1273 = vpop.permute.xlu0 %1272
      %1276 = vset.pattern.permute.xlu0 0
      %1277 = vperm.xlu0 %1276, %v1255
      %v1278 = vpop.permute.xlu0 %1277
      %1281 = vset.pattern.permute.xlu0 0
      %1282 = vperm.xlu0 %1281, %v1256
      %v1283 = vpop.permute.xlu0 %1282
      %1286 = vset.pattern.permute.xlu0 0
      %1287 = vperm.xlu0 %1286, %v1257
      %v1288 = vpop.permute.xlu0 %1287
      %1291 = vset.pattern.permute.xlu0 0
      %1292 = vperm.xlu0 %1291, %v1258
      %v1293 = vpop.permute.xlu0 %1292
      %1296 = vset.pattern.permute.xlu0 0
      %1297 = vperm.xlu0 %1296, %v1259
      %v1298 = vpop.permute.xlu0 %1297
      %1301 = vset.pattern.permute.xlu0 0
      %1302 = vperm.xlu0 %1301, %v1260
      %v1303 = vpop.permute.xlu0 %1302
      %1306 = vset.pattern.permute.xlu0 0
      %1307 = vperm.xlu0 %1306, %v1261
      %v1308 = vpop.permute.xlu0 %1307
      %1311 = vset.pattern.permute.xlu0 0
      %1312 = vperm.xlu0 %1311, %v1262
      %v1313 = vpop.permute.xlu0 %1312
      %1316 = vset.pattern.permute.xlu0 0
      %1317 = vperm.xlu0 %1316, %v1263
      %v1318 = vpop.permute.xlu0 %1317
      %1321 = vset.pattern.permute.xlu0 0
      %1322 = vperm.xlu0 %1321, %v1264
      %v1323 = vpop.permute.xlu0 %1322
      %1326 = vset.pattern.permute.xlu0 0
      %1327 = vperm.xlu0 %1326, %v1265
      %v1328 = vpop.permute.xlu0 %1327
      %1331 = vset.pattern.permute.xlu0 0
      %1332 = vperm.xlu0 %1331, %v1266
      %v1333 = vpop.permute.xlu0 %1332
      %1336 = vset.pattern.permute.xlu0 0
      %1337 = vperm.xlu0 %1336, %v1267
      %v1338 = vpop.permute.xlu0 %1337
      %1341 = vset.pattern.permute.xlu0 0
      %1342 = vperm.xlu0 %1341, %v1268
      %v1343 = vpop.permute.xlu0 %1342
      %1346 = vset.pattern.permute.xlu0 0
      %1347 = vperm.xlu0 %1346, %v1269
      %v1348 = vpop.permute.xlu0 %1347
      %v1350 = vmul.f32 %v1238, %v1273
      %v1351 = vmul.f32 %v1239, %v1278
      %v1352 = vmul.f32 %v1240, %v1283
      %v1353 = vmul.f32 %v1241, %v1288
      %v1354 = vmul.f32 %v1242, %v1293
      %v1355 = vmul.f32 %v1243, %v1298
      %v1356 = vmul.f32 %v1244, %v1303
      %v1357 = vmul.f32 %v1245, %v1308
      %v1358 = vmul.f32 %v1246, %v1313
      %v1359 = vmul.f32 %v1247, %v1318
      %v1360 = vmul.f32 %v1248, %v1323
      %v1361 = vmul.f32 %v1249, %v1328
      %v1362 = vmul.f32 %v1250, %v1333
      %v1363 = vmul.f32 %v1251, %v1338
      %v1364 = vmul.f32 %v1252, %v1343
      %v1365 = vmul.f32 %v1253, %v1348
      %vm1366 = vcmask 261120
      %1367 = vst.msk [vmem:[#allocation3] sm:$0xff] %vm1366, %v1350
      %1368 = vst.msk [vmem:[#allocation3 + $0x8] sm:$0xff] %vm1366, %v1351
      %1369 = vst.msk [vmem:[#allocation3 + $0x10] sm:$0xff] %vm1366, %v1352
      %1370 = vst.msk [vmem:[#allocation3 + $0x18] sm:$0xff] %vm1366, %v1353
      %1371 = vst.msk [vmem:[#allocation3 + $0x20] sm:$0xff] %vm1366, %v1354
      %1372 = vst.msk [vmem:[#allocation3 + $0x28] sm:$0xff] %vm1366, %v1355
      %1373 = vst.msk [vmem:[#allocation3 + $0x30] sm:$0xff] %vm1366, %v1356
      %1374 = vst.msk [vmem:[#allocation3 + $0x38] sm:$0xff] %vm1366, %v1357
      %1375 = vst.msk [vmem:[#allocation3 + $0x40] sm:$0xff] %vm1366, %v1358
      %1376 = vst.msk [vmem:[#allocation3 + $0x48] sm:$0xff] %vm1366, %v1359
      %1377 = vst.msk [vmem:[#allocation3 + $0x50] sm:$0xff] %vm1366, %v1360
      %1378 = vst.msk [vmem:[#allocation3 + $0x58] sm:$0xff] %vm1366, %v1361
      %1379 = vst.msk [vmem:[#allocation3 + $0x60] sm:$0xff] %vm1366, %v1362
      %1380 = vst.msk [vmem:[#allocation3 + $0x68] sm:$0xff] %vm1366, %v1363
      %1381 = vst.msk [vmem:[#allocation3 + $0x70] sm:$0xff] %vm1366, %v1364
      %1382 = vst.msk [vmem:[#allocation3 + $0x78] sm:$0xff] %vm1366, %v1365
      %v1383 = vld [vmem:[#allocation3] sm:$0xff]
      %v1384 = vld [vmem:[#allocation3 + $0x8] sm:$0xff]
      %v1385 = vld [vmem:[#allocation3 + $0x10] sm:$0xff]
      %v1386 = vld [vmem:[#allocation3 + $0x18] sm:$0xff]
      %v1387 = vld [vmem:[#allocation3 + $0x20] sm:$0xff]
      %v1388 = vld [vmem:[#allocation3 + $0x28] sm:$0xff]
      %v1389 = vld [vmem:[#allocation3 + $0x30] sm:$0xff]
      %v1390 = vld [vmem:[#allocation3 + $0x38] sm:$0xff]
      %v1391 = vld [vmem:[#allocation3 + $0x40] sm:$0xff]
      %v1392 = vld [vmem:[#allocation3 + $0x48] sm:$0xff]
      %v1393 = vld [vmem:[#allocation3 + $0x50] sm:$0xff]
      %v1394 = vld [vmem:[#allocation3 + $0x58] sm:$0xff]
      %v1395 = vld [vmem:[#allocation3 + $0x60] sm:$0xff]
      %v1396 = vpack.c.bf16 %v1384, %v1383
      %v1397 = vpack.c.bf16 %v1386, %v1385
      %v1398 = vpack.c.bf16 %v1388, %v1387
      %v1399 = vpack.c.bf16 %v1390, %v1389
      %v1400 = vpack.c.bf16 %v1392, %v1391
      %v1401 = vpack.c.bf16 %v1394, %v1393
      %v1402 = vpack.c.bf16 %v1395, %v1395
      %v1403 = vld [vmem:[%s3] sm:$0xf]
      %v1404 = vld [vmem:[%s3 + $0x4] sm:$0xf]
      %v1405 = vld [vmem:[%s3 + $0x8] sm:$0xf]
      %v1406 = vld [vmem:[%s3 + $0xc] sm:$0xf]
      %v1407 = vld [vmem:[#allocation3 + $0x1] sm:$0xff]
      %v1408 = vld [vmem:[#allocation3 + $0x9] sm:$0xff]
      %v1409 = vld [vmem:[#allocation3 + $0x11] sm:$0xff]
      %v1410 = vld [vmem:[#allocation3 + $0x19] sm:$0xff]
      %v1411 = vld [vmem:[#allocation3 + $0x21] sm:$0xff]
      %v1412 = vld [vmem:[#allocation3 + $0x29] sm:$0xff]
      %v1413 = vld [vmem:[#allocation3 + $0x31] sm:$0xff]
      %v1414 = vld [vmem:[#allocation3 + $0x39] sm:$0xff]
      %v1415 = vld [vmem:[#allocation3 + $0x41] sm:$0xff]
      %v1416 = vld [vmem:[#allocation3 + $0x49] sm:$0xff]
      %v1417 = vld [vmem:[#allocation3 + $0x51] sm:$0xff]
      %v1418 = vld [vmem:[#allocation3 + $0x59] sm:$0xff]
      %v1419 = vld [vmem:[#allocation3 + $0x61] sm:$0xff]
      %v1420 = vpack.c.bf16 %v1408, %v1407
      %v1421 = vpack.c.bf16 %v1410, %v1409
      %v1422 = vpack.c.bf16 %v1412, %v1411
      %v1423 = vpack.c.bf16 %v1414, %v1413
      %v1424 = vpack.c.bf16 %v1416, %v1415
      %v1425 = vpack.c.bf16 %v1418, %v1417
      %v1426 = vpack.c.bf16 %v1419, %v1419
      %s1427 = scalar_lea.vmem %s3, 16
      %v1428 = vld [vmem:[%s1427] sm:$0xf]
      %v1429 = vld [vmem:[%s1427 + $0x4] sm:$0xf]
      %v1430 = vld [vmem:[%s1427 + $0x8] sm:$0xf]
      %v1431 = vld [vmem:[%s1427 + $0xc] sm:$0xf]
      %v1436 = vunpack.c.l.b16 %v1428
      %v1437 = vunpack.c.l.b16 %v1429
      %v1438 = vunpack.c.l.b16 %v1430
      %v1439 = vunpack.c.l.b16 %v1431
      %v1440 = vpack.c.b16 %v1437, %v1436
      %v1441 = vpack.c.b16 %v1439, %v1438
      %v1445 = vsel %vm1366, %v1420, 0
      %v1448 = vsel %vm1366, %v1421, 0
      %v1451 = vsel %vm1366, %v1422, 0
      %v1454 = vsel %vm1366, %v1423, 0
      %v1457 = vsel %vm1366, %v1424, 0
      %v1460 = vsel %vm1366, %v1425, 0
      %v1463 = vsel %vm1366, %v1426, 0
      %1465 = vmatpush.bf16.msra.mxu0 0
      %1466 = vmatpush.bf16.msra.mxu0 0
      %1467 = vmatpush.bf16.msra.mxu0 0
      %1468 = vmatpush.bf16.msra.mxu0 0
      %1469 = vmatpush.bf16.msra.mxu0 0
      %1470 = vmatpush.bf16.msra.mxu0 0
      %1471 = vmatpush.bf16.msra.mxu0 %v1441
      %1472 = vmatpush.bf16.msra.mxu0 %v1440
      %1473 = vmatmul.bf16.gmra.mxu0 %v1445
      %v1474 = vpop.f32.mrf.mxu0
      %v1475 = vadd.f32 0.0, %v1474
      %v1476 = vpop.f32.mrf.mxu0
      %v1477 = vadd.f32 0.0, %v1476
      %1478 = vmatmul.bf16.gmra.mxu0 %v1448
      %v1479 = vpop.f32.mrf.mxu0
      %v1480 = vadd.f32 0.0, %v1479
      %v1481 = vpop.f32.mrf.mxu0
      %v1482 = vadd.f32 0.0, %v1481
      %1483 = vmatmul.bf16.gmra.mxu0 %v1451
      %v1484 = vpop.f32.mrf.mxu0
      %v1485 = vadd.f32 0.0, %v1484
      %v1486 = vpop.f32.mrf.mxu0
      %v1487 = vadd.f32 0.0, %v1486
      %1488 = vmatmul.bf16.gmra.mxu0 %v1454
      %v1489 = vpop.f32.mrf.mxu0
      %v1490 = vadd.f32 0.0, %v1489
      %v1491 = vpop.f32.mrf.mxu0
      %v1492 = vadd.f32 0.0, %v1491
      %1493 = vmatmul.bf16.gmra.mxu0 %v1457
      %v1494 = vpop.f32.mrf.mxu0
      %v1495 = vadd.f32 0.0, %v1494
      %v1496 = vpop.f32.mrf.mxu0
      %v1497 = vadd.f32 0.0, %v1496
      %1498 = vmatmul.bf16.gmra.mxu0 %v1460
      %v1499 = vpop.f32.mrf.mxu0
      %v1500 = vadd.f32 0.0, %v1499
      %v1501 = vpop.f32.mrf.mxu0
      %v1502 = vadd.f32 0.0, %v1501
      %1503 = vmatmul.bf16.gmra.mxu0 %v1463
      %v1504 = vpop.f32.mrf.mxu0
      %v1505 = vadd.f32 0.0, %v1504
      %v1506 = vpop.f32.mrf.mxu0
      %1507 = vdwg.mxu0
      %v1512 = vunpack.c.l.b16 %v1403
      %v1513 = vunpack.c.l.b16 %v1404
      %v1514 = vunpack.c.l.b16 %v1405
      %v1515 = vunpack.c.l.b16 %v1406
      %v1516 = vpack.c.b16 %v1513, %v1512
      %v1517 = vpack.c.b16 %v1515, %v1514
      %v1521 = vsel %vm1366, %v1396, 0
      %v1524 = vsel %vm1366, %v1397, 0
      %v1527 = vsel %vm1366, %v1398, 0
      %v1530 = vsel %vm1366, %v1399, 0
      %v1533 = vsel %vm1366, %v1400, 0
      %v1536 = vsel %vm1366, %v1401, 0
      %v1539 = vsel %vm1366, %v1402, 0
      %1541 = vmatpush.bf16.msra.mxu0 0
      %1542 = vmatpush.bf16.msra.mxu0 0
      %1543 = vmatpush.bf16.msra.mxu0 0
      %1544 = vmatpush.bf16.msra.mxu0 0
      %1545 = vmatpush.bf16.msra.mxu0 0
      %1546 = vmatpush.bf16.msra.mxu0 0
      %1547 = vmatpush.bf16.msra.mxu0 %v1517
      %1548 = vmatpush.bf16.msra.mxu0 %v1516
      %1549 = vmatmul.bf16.gmra.mxu0 %v1521
      %v1550 = vpop.f32.mrf.mxu0
      %v1551 = vadd.f32 %v1475, %v1550
      %v1552 = vpop.f32.mrf.mxu0
      %v1553 = vadd.f32 %v1477, %v1552
      %1554 = vmatmul.bf16.gmra.mxu0 %v1524
      %v1555 = vpop.f32.mrf.mxu0
      %v1556 = vadd.f32 %v1480, %v1555
      %v1557 = vpop.f32.mrf.mxu0
      %v1558 = vadd.f32 %v1482, %v1557
      %1559 = vmatmul.bf16.gmra.mxu0 %v1527
      %v1560 = vpop.f32.mrf.mxu0
      %v1561 = vadd.f32 %v1485, %v1560
      %v1562 = vpop.f32.mrf.mxu0
      %v1563 = vadd.f32 %v1487, %v1562
      %1564 = vmatmul.bf16.gmra.mxu0 %v1530
      %v1565 = vpop.f32.mrf.mxu0
      %v1566 = vadd.f32 %v1490, %v1565
      %v1567 = vpop.f32.mrf.mxu0
      %v1568 = vadd.f32 %v1492, %v1567
      %1569 = vmatmul.bf16.gmra.mxu0 %v1533
      %v1570 = vpop.f32.mrf.mxu0
      %v1571 = vadd.f32 %v1495, %v1570
      %v1572 = vpop.f32.mrf.mxu0
      %v1573 = vadd.f32 %v1497, %v1572
      %1574 = vmatmul.bf16.gmra.mxu0 %v1536
      %v1575 = vpop.f32.mrf.mxu0
      %v1576 = vadd.f32 %v1500, %v1575
      %v1577 = vpop.f32.mrf.mxu0
      %v1578 = vadd.f32 %v1502, %v1577
      %1579 = vmatmul.bf16.gmra.mxu0 %v1539
      %v1580 = vpop.f32.mrf.mxu0
      %v1581 = vadd.f32 %v1505, %v1580
      %v1582 = vpop.f32.mrf.mxu0
      %1583 = vdwg.mxu0
      %v1584 = vld [vmem:[#allocation3 + $0x2] sm:$0xff]
      %v1585 = vld [vmem:[#allocation3 + $0xa] sm:$0xff]
      %v1586 = vld [vmem:[#allocation3 + $0x12] sm:$0xff]
      %v1587 = vld [vmem:[#allocation3 + $0x1a] sm:$0xff]
      %v1588 = vld [vmem:[#allocation3 + $0x22] sm:$0xff]
      %v1589 = vld [vmem:[#allocation3 + $0x2a] sm:$0xff]
      %v1590 = vld [vmem:[#allocation3 + $0x32] sm:$0xff]
      %v1591 = vld [vmem:[#allocation3 + $0x3a] sm:$0xff]
      %v1592 = vld [vmem:[#allocation3 + $0x42] sm:$0xff]
      %v1593 = vld [vmem:[#allocation3 + $0x4a] sm:$0xff]
      %v1594 = vld [vmem:[#allocation3 + $0x52] sm:$0xff]
      %v1595 = vld [vmem:[#allocation3 + $0x5a] sm:$0xff]
      %v1596 = vld [vmem:[#allocation3 + $0x62] sm:$0xff]
      %v1597 = vpack.c.bf16 %v1585, %v1584
      %v1598 = vpack.c.bf16 %v1587, %v1586
      %v1599 = vpack.c.bf16 %v1589, %v1588
      %v1600 = vpack.c.bf16 %v1591, %v1590
      %v1601 = vpack.c.bf16 %v1593, %v1592
      %v1602 = vpack.c.bf16 %v1595, %v1594
      %v1603 = vpack.c.bf16 %v1596, %v1596
      %s1604 = scalar_lea.vmem %s3, 32
      %v1605 = vld [vmem:[%s1604] sm:$0xf]
      %v1606 = vld [vmem:[%s1604 + $0x4] sm:$0xf]
      %v1607 = vld [vmem:[%s1604 + $0x8] sm:$0xf]
      %v1608 = vld [vmem:[%s1604 + $0xc] sm:$0xf]
      %v1613 = vunpack.c.l.b16 %v1605
      %v1614 = vunpack.c.l.b16 %v1606
      %v1615 = vunpack.c.l.b16 %v1607
      %v1616 = vunpack.c.l.b16 %v1608
      %v1617 = vpack.c.b16 %v1614, %v1613
      %v1618 = vpack.c.b16 %v1616, %v1615
      %v1622 = vsel %vm1366, %v1597, 0
      %v1625 = vsel %vm1366, %v1598, 0
      %v1628 = vsel %vm1366, %v1599, 0
      %v1631 = vsel %vm1366, %v1600, 0
      %v1634 = vsel %vm1366, %v1601, 0
      %v1637 = vsel %vm1366, %v1602, 0
      %v1640 = vsel %vm1366, %v1603, 0
      %1642 = vmatpush.bf16.msra.mxu0 0
      %1643 = vmatpush.bf16.msra.mxu0 0
      %1644 = vmatpush.bf16.msra.mxu0 0
      %1645 = vmatpush.bf16.msra.mxu0 0
      %1646 = vmatpush.bf16.msra.mxu0 0
      %1647 = vmatpush.bf16.msra.mxu0 0
      %1648 = vmatpush.bf16.msra.mxu0 %v1618
      %1649 = vmatpush.bf16.msra.mxu0 %v1617
      %1650 = vmatmul.bf16.gmra.mxu0 %v1622
      %v1651 = vpop.f32.mrf.mxu0
      %v1652 = vadd.f32 0.0, %v1651
      %v1653 = vpop.f32.mrf.mxu0
      %v1654 = vadd.f32 0.0, %v1653
      %1655 = vmatmul.bf16.gmra.mxu0 %v1625
      %v1656 = vpop.f32.mrf.mxu0
      %v1657 = vadd.f32 0.0, %v1656
      %v1658 = vpop.f32.mrf.mxu0
      %v1659 = vadd.f32 0.0, %v1658
      %1660 = vmatmul.bf16.gmra.mxu0 %v1628
      %v1661 = vpop.f32.mrf.mxu0
      %v1662 = vadd.f32 0.0, %v1661
      %v1663 = vpop.f32.mrf.mxu0
      %v1664 = vadd.f32 0.0, %v1663
      %1665 = vmatmul.bf16.gmra.mxu0 %v1631
      %v1666 = vpop.f32.mrf.mxu0
      %v1667 = vadd.f32 0.0, %v1666
      %v1668 = vpop.f32.mrf.mxu0
      %v1669 = vadd.f32 0.0, %v1668
      %1670 = vmatmul.bf16.gmra.mxu0 %v1634
      %v1671 = vpop.f32.mrf.mxu0
      %v1672 = vadd.f32 0.0, %v1671
      %v1673 = vpop.f32.mrf.mxu0
      %v1674 = vadd.f32 0.0, %v1673
      %1675 = vmatmul.bf16.gmra.mxu0 %v1637
      %v1676 = vpop.f32.mrf.mxu0
      %v1677 = vadd.f32 0.0, %v1676
      %v1678 = vpop.f32.mrf.mxu0
      %v1679 = vadd.f32 0.0, %v1678
      %1680 = vmatmul.bf16.gmra.mxu0 %v1640
      %v1681 = vpop.f32.mrf.mxu0
      %v1682 = vadd.f32 0.0, %v1681
      %v1683 = vpop.f32.mrf.mxu0
      %1684 = vdwg.mxu0
      %v1685 = vadd.f32 %v1551, %v1652
      %v1686 = vadd.f32 %v1553, %v1654
      %v1687 = vadd.f32 %v1556, %v1657
      %v1688 = vadd.f32 %v1558, %v1659
      %v1689 = vadd.f32 %v1561, %v1662
      %v1690 = vadd.f32 %v1563, %v1664
      %v1691 = vadd.f32 %v1566, %v1667
      %v1692 = vadd.f32 %v1568, %v1669
      %v1693 = vadd.f32 %v1571, %v1672
      %v1694 = vadd.f32 %v1573, %v1674
      %v1695 = vadd.f32 %v1576, %v1677
      %v1696 = vadd.f32 %v1578, %v1679
      %v1697 = vadd.f32 %v1581, %v1682
      %v1698 = vld [vmem:[#allocation3 + $0xa] sm:$0xff]
      %v1699 = vld [vmem:[#allocation3 + $0x12] sm:$0xff]
      %v1700 = vld [vmem:[#allocation3 + $0x1a] sm:$0xff]
      %v1701 = vld [vmem:[#allocation3 + $0x22] sm:$0xff]
      %v1702 = vld [vmem:[#allocation3 + $0x2a] sm:$0xff]
      %v1703 = vld [vmem:[#allocation3 + $0x32] sm:$0xff]
      %v1704 = vld [vmem:[#allocation3 + $0x3a] sm:$0xff]
      %v1705 = vld [vmem:[#allocation3 + $0x42] sm:$0xff]
      %v1706 = vld [vmem:[#allocation3 + $0x4a] sm:$0xff]
      %v1707 = vld [vmem:[#allocation3 + $0x52] sm:$0xff]
      %v1708 = vld [vmem:[#allocation3 + $0x5a] sm:$0xff]
      %v1709 = vld [vmem:[#allocation3 + $0x62] sm:$0xff]
      %v1710 = vld [vmem:[#allocation3 + $0x6a] sm:$0xff]
      %v1711 = vpack.c.bf16 %v1699, %v1698
      %v1712 = vpack.c.bf16 %v1701, %v1700
      %v1713 = vpack.c.bf16 %v1703, %v1702
      %v1714 = vpack.c.bf16 %v1705, %v1704
      %v1715 = vpack.c.bf16 %v1707, %v1706
      %v1716 = vpack.c.bf16 %v1709, %v1708
      %v1717 = vpack.c.bf16 %v1710, %v1710
      %s1718 = scalar_lea.vmem %s3, 48
      %v1719 = vld [vmem:[%s1718] sm:$0xf]
      %v1720 = vld [vmem:[%s1718 + $0x4] sm:$0xf]
      %v1721 = vld [vmem:[%s1718 + $0x8] sm:$0xf]
      %v1722 = vld [vmem:[%s1718 + $0xc] sm:$0xf]
      %v1727 = vunpack.c.l.b16 %v1719
      %v1728 = vunpack.c.l.b16 %v1720
      %v1729 = vunpack.c.l.b16 %v1721
      %v1730 = vunpack.c.l.b16 %v1722
      %v1731 = vpack.c.b16 %v1728, %v1727
      %v1732 = vpack.c.b16 %v1730, %v1729
      %v1736 = vsel %vm1366, %v1711, 0
      %v1739 = vsel %vm1366, %v1712, 0
      %v1742 = vsel %vm1366, %v1713, 0
      %v1745 = vsel %vm1366, %v1714, 0
      %v1748 = vsel %vm1366, %v1715, 0
      %v1751 = vsel %vm1366, %v1716, 0
      %v1754 = vsel %vm1366, %v1717, 0
      %1756 = vmatpush.bf16.msra.mxu0 0
      %1757 = vmatpush.bf16.msra.mxu0 0
      %1758 = vmatpush.bf16.msra.mxu0 0
      %1759 = vmatpush.bf16.msra.mxu0 0
      %1760 = vmatpush.bf16.msra.mxu0 0
      %1761 = vmatpush.bf16.msra.mxu0 0
      %1762 = vmatpush.bf16.msra.mxu0 %v1732
      %1763 = vmatpush.bf16.msra.mxu0 %v1731
      %1764 = vmatmul.bf16.gmra.mxu0 %v1736
      %v1765 = vpop.f32.mrf.mxu0
      %v1766 = vadd.f32 0.0, %v1765
      %v1767 = vpop.f32.mrf.mxu0
      %v1768 = vadd.f32 0.0, %v1767
      %1769 = vmatmul.bf16.gmra.mxu0 %v1739
      %v1770 = vpop.f32.mrf.mxu0
      %v1771 = vadd.f32 0.0, %v1770
      %v1772 = vpop.f32.mrf.mxu0
      %v1773 = vadd.f32 0.0, %v1772
      %1774 = vmatmul.bf16.gmra.mxu0 %v1742
      %v1775 = vpop.f32.mrf.mxu0
      %v1776 = vadd.f32 0.0, %v1775
      %v1777 = vpop.f32.mrf.mxu0
      %v1778 = vadd.f32 0.0, %v1777
      %1779 = vmatmul.bf16.gmra.mxu0 %v1745
      %v1780 = vpop.f32.mrf.mxu0
      %v1781 = vadd.f32 0.0, %v1780
      %v1782 = vpop.f32.mrf.mxu0
      %v1783 = vadd.f32 0.0, %v1782
      %1784 = vmatmul.bf16.gmra.mxu0 %v1748
      %v1785 = vpop.f32.mrf.mxu0
      %v1786 = vadd.f32 0.0, %v1785
      %v1787 = vpop.f32.mrf.mxu0
      %v1788 = vadd.f32 0.0, %v1787
      %1789 = vmatmul.bf16.gmra.mxu0 %v1751
      %v1790 = vpop.f32.mrf.mxu0
      %v1791 = vadd.f32 0.0, %v1790
      %v1792 = vpop.f32.mrf.mxu0
      %v1793 = vadd.f32 0.0, %v1792
      %1794 = vmatmul.bf16.gmra.mxu0 %v1754
      %v1795 = vpop.f32.mrf.mxu0
      %v1796 = vadd.f32 0.0, %v1795
      %v1797 = vpop.f32.mrf.mxu0
      %1798 = vdwg.mxu0
      %v1799 = vadd.f32 %v1685, %v1766
      %v1800 = vadd.f32 %v1686, %v1768
      %v1801 = vadd.f32 %v1687, %v1771
      %v1802 = vadd.f32 %v1688, %v1773
      %v1803 = vadd.f32 %v1689, %v1776
      %v1804 = vadd.f32 %v1690, %v1778
      %v1805 = vadd.f32 %v1691, %v1781
      %v1806 = vadd.f32 %v1692, %v1783
      %v1807 = vadd.f32 %v1693, %v1786
      %v1808 = vadd.f32 %v1694, %v1788
      %v1809 = vadd.f32 %v1695, %v1791
      %v1810 = vadd.f32 %v1696, %v1793
      %v1811 = vadd.f32 %v1697, %v1796
      %v1812 = vld [vmem:[#allocation3 + $0xb] sm:$0xff]
      %v1813 = vld [vmem:[#allocation3 + $0x13] sm:$0xff]
      %v1814 = vld [vmem:[#allocation3 + $0x1b] sm:$0xff]
      %v1815 = vld [vmem:[#allocation3 + $0x23] sm:$0xff]
      %v1816 = vld [vmem:[#allocation3 + $0x2b] sm:$0xff]
      %v1817 = vld [vmem:[#allocation3 + $0x33] sm:$0xff]
      %v1818 = vld [vmem:[#allocation3 + $0x3b] sm:$0xff]
      %v1819 = vld [vmem:[#allocation3 + $0x43] sm:$0xff]
      %v1820 = vld [vmem:[#allocation3 + $0x4b] sm:$0xff]
      %v1821 = vld [vmem:[#allocation3 + $0x53] sm:$0xff]
      %v1822 = vld [vmem:[#allocation3 + $0x5b] sm:$0xff]
      %v1823 = vld [vmem:[#allocation3 + $0x63] sm:$0xff]
      %v1824 = vld [vmem:[#allocation3 + $0x6b] sm:$0xff]
      %v1825 = vpack.c.bf16 %v1813, %v1812
      %v1826 = vpack.c.bf16 %v1815, %v1814
      %v1827 = vpack.c.bf16 %v1817, %v1816
      %v1828 = vpack.c.bf16 %v1819, %v1818
      %v1829 = vpack.c.bf16 %v1821, %v1820
      %v1830 = vpack.c.bf16 %v1823, %v1822
      %v1831 = vpack.c.bf16 %v1824, %v1824
      %s1832 = scalar_lea.vmem %s3, 64
      %v1833 = vld [vmem:[%s1832] sm:$0xf]
      %v1834 = vld [vmem:[%s1832 + $0x4] sm:$0xf]
      %v1835 = vld [vmem:[%s1832 + $0x8] sm:$0xf]
      %v1836 = vld [vmem:[%s1832 + $0xc] sm:$0xf]
      %v1841 = vunpack.c.l.b16 %v1833
      %v1842 = vunpack.c.l.b16 %v1834
      %v1843 = vunpack.c.l.b16 %v1835
      %v1844 = vunpack.c.l.b16 %v1836
      %v1845 = vpack.c.b16 %v1842, %v1841
      %v1846 = vpack.c.b16 %v1844, %v1843
      %v1850 = vsel %vm1366, %v1825, 0
      %v1853 = vsel %vm1366, %v1826, 0
      %v1856 = vsel %vm1366, %v1827, 0
      %v1859 = vsel %vm1366, %v1828, 0
      %v1862 = vsel %vm1366, %v1829, 0
      %v1865 = vsel %vm1366, %v1830, 0
      %v1868 = vsel %vm1366, %v1831, 0
      %1870 = vmatpush.bf16.msra.mxu0 0
      %1871 = vmatpush.bf16.msra.mxu0 0
      %1872 = vmatpush.bf16.msra.mxu0 0
      %1873 = vmatpush.bf16.msra.mxu0 0
      %1874 = vmatpush.bf16.msra.mxu0 0
      %1875 = vmatpush.bf16.msra.mxu0 0
      %1876 = vmatpush.bf16.msra.mxu0 %v1846
      %1877 = vmatpush.bf16.msra.mxu0 %v1845
      %1878 = vmatmul.bf16.gmra.mxu0 %v1850
      %v1879 = vpop.f32.mrf.mxu0
      %v1880 = vadd.f32 0.0, %v1879
      %v1881 = vpop.f32.mrf.mxu0
      %v1882 = vadd.f32 0.0, %v1881
      %1883 = vmatmul.bf16.gmra.mxu0 %v1853
      %v1884 = vpop.f32.mrf.mxu0
      %v1885 = vadd.f32 0.0, %v1884
      %v1886 = vpop.f32.mrf.mxu0
      %v1887 = vadd.f32 0.0, %v1886
      %1888 = vmatmul.bf16.gmra.mxu0 %v1856
      %v1889 = vpop.f32.mrf.mxu0
      %v1890 = vadd.f32 0.0, %v1889
      %v1891 = vpop.f32.mrf.mxu0
      %v1892 = vadd.f32 0.0, %v1891
      %1893 = vmatmul.bf16.gmra.mxu0 %v1859
      %v1894 = vpop.f32.mrf.mxu0
      %v1895 = vadd.f32 0.0, %v1894
      %v1896 = vpop.f32.mrf.mxu0
      %v1897 = vadd.f32 0.0, %v1896
      %1898 = vmatmul.bf16.gmra.mxu0 %v1862
      %v1899 = vpop.f32.mrf.mxu0
      %v1900 = vadd.f32 0.0, %v1899
      %v1901 = vpop.f32.mrf.mxu0
      %v1902 = vadd.f32 0.0, %v1901
      %1903 = vmatmul.bf16.gmra.mxu0 %v1865
      %v1904 = vpop.f32.mrf.mxu0
      %v1905 = vadd.f32 0.0, %v1904
      %v1906 = vpop.f32.mrf.mxu0
      %v1907 = vadd.f32 0.0, %v1906
      %1908 = vmatmul.bf16.gmra.mxu0 %v1868
      %v1909 = vpop.f32.mrf.mxu0
      %v1910 = vadd.f32 0.0, %v1909
      %v1911 = vpop.f32.mrf.mxu0
      %1912 = vdwg.mxu0
      %v1913 = vadd.f32 %v1799, %v1880
      %v1914 = vadd.f32 %v1800, %v1882
      %v1915 = vadd.f32 %v1801, %v1885
      %v1916 = vadd.f32 %v1802, %v1887
      %v1917 = vadd.f32 %v1803, %v1890
      %v1918 = vadd.f32 %v1804, %v1892
      %v1919 = vadd.f32 %v1805, %v1895
      %v1920 = vadd.f32 %v1806, %v1897
      %v1921 = vadd.f32 %v1807, %v1900
      %v1922 = vadd.f32 %v1808, %v1902
      %v1923 = vadd.f32 %v1809, %v1905
      %v1924 = vadd.f32 %v1810, %v1907
      %v1925 = vadd.f32 %v1811, %v1910
      %v1926 = vld [vmem:[#allocation3 + $0xc] sm:$0xff]
      %v1927 = vld [vmem:[#allocation3 + $0x14] sm:$0xff]
      %v1928 = vld [vmem:[#allocation3 + $0x1c] sm:$0xff]
      %v1929 = vld [vmem:[#allocation3 + $0x24] sm:$0xff]
      %v1930 = vld [vmem:[#allocation3 + $0x2c] sm:$0xff]
      %v1931 = vld [vmem:[#allocation3 + $0x34] sm:$0xff]
      %v1932 = vld [vmem:[#allocation3 + $0x3c] sm:$0xff]
      %v1933 = vld [vmem:[#allocation3 + $0x44] sm:$0xff]
      %v1934 = vld [vmem:[#allocation3 + $0x4c] sm:$0xff]
      %v1935 = vld [vmem:[#allocation3 + $0x54] sm:$0xff]
      %v1936 = vld [vmem:[#allocation3 + $0x5c] sm:$0xff]
      %v1937 = vld [vmem:[#allocation3 + $0x64] sm:$0xff]
      %v1938 = vld [vmem:[#allocation3 + $0x6c] sm:$0xff]
      %v1939 = vpack.c.bf16 %v1927, %v1926
      %v1940 = vpack.c.bf16 %v1929, %v1928
      %v1941 = vpack.c.bf16 %v1931, %v1930
      %v1942 = vpack.c.bf16 %v1933, %v1932
      %v1943 = vpack.c.bf16 %v1935, %v1934
      %v1944 = vpack.c.bf16 %v1937, %v1936
      %v1945 = vpack.c.bf16 %v1938, %v1938
      %s1946 = scalar_lea.vmem %s3, 80
      %v1947 = vld [vmem:[%s1946] sm:$0xf]
      %v1948 = vld [vmem:[%s1946 + $0x4] sm:$0xf]
      %v1949 = vld [vmem:[%s1946 + $0x8] sm:$0xf]
      %v1950 = vld [vmem:[%s1946 + $0xc] sm:$0xf]
      %v1955 = vunpack.c.l.b16 %v1947
      %v1956 = vunpack.c.l.b16 %v1948
      %v1957 = vunpack.c.l.b16 %v1949
      %v1958 = vunpack.c.l.b16 %v1950
      %v1959 = vpack.c.b16 %v1956, %v1955
      %v1960 = vpack.c.b16 %v1958, %v1957
      %v1964 = vsel %vm1366, %v1939, 0
      %v1967 = vsel %vm1366, %v1940, 0
      %v1970 = vsel %vm1366, %v1941, 0
      %v1973 = vsel %vm1366, %v1942, 0
      %v1976 = vsel %vm1366, %v1943, 0
      %v1979 = vsel %vm1366, %v1944, 0
      %v1982 = vsel %vm1366, %v1945, 0
      %1984 = vmatpush.bf16.msra.mxu0 0
      %1985 = vmatpush.bf16.msra.mxu0 0
      %1986 = vmatpush.bf16.msra.mxu0 0
      %1987 = vmatpush.bf16.msra.mxu0 0
      %1988 = vmatpush.bf16.msra.mxu0 0
      %1989 = vmatpush.bf16.msra.mxu0 0
      %1990 = vmatpush.bf16.msra.mxu0 %v1960
      %1991 = vmatpush.bf16.msra.mxu0 %v1959
      %1992 = vmatmul.bf16.gmra.mxu0 %v1964
      %v1993 = vpop.f32.mrf.mxu0
      %v1994 = vadd.f32 0.0, %v1993
      %v1995 = vpop.f32.mrf.mxu0
      %v1996 = vadd.f32 0.0, %v1995
      %1997 = vmatmul.bf16.gmra.mxu0 %v1967
      %v1998 = vpop.f32.mrf.mxu0
      %v1999 = vadd.f32 0.0, %v1998
      %v2000 = vpop.f32.mrf.mxu0
      %v2001 = vadd.f32 0.0, %v2000
      %2002 = vmatmul.bf16.gmra.mxu0 %v1970
      %v2003 = vpop.f32.mrf.mxu0
      %v2004 = vadd.f32 0.0, %v2003
      %v2005 = vpop.f32.mrf.mxu0
      %v2006 = vadd.f32 0.0, %v2005
      %2007 = vmatmul.bf16.gmra.mxu0 %v1973
      %v2008 = vpop.f32.mrf.mxu0
      %v2009 = vadd.f32 0.0, %v2008
      %v2010 = vpop.f32.mrf.mxu0
      %v2011 = vadd.f32 0.0, %v2010
      %2012 = vmatmul.bf16.gmra.mxu0 %v1976
      %v2013 = vpop.f32.mrf.mxu0
      %v2014 = vadd.f32 0.0, %v2013
      %v2015 = vpop.f32.mrf.mxu0
      %v2016 = vadd.f32 0.0, %v2015
      %2017 = vmatmul.bf16.gmra.mxu0 %v1979
      %v2018 = vpop.f32.mrf.mxu0
      %v2019 = vadd.f32 0.0, %v2018
      %v2020 = vpop.f32.mrf.mxu0
      %v2021 = vadd.f32 0.0, %v2020
      %2022 = vmatmul.bf16.gmra.mxu0 %v1982
      %v2023 = vpop.f32.mrf.mxu0
      %v2024 = vadd.f32 0.0, %v2023
      %v2025 = vpop.f32.mrf.mxu0
      %2026 = vdwg.mxu0
      %v2027 = vadd.f32 %v1913, %v1994
      %v2028 = vadd.f32 %v1914, %v1996
      %v2029 = vadd.f32 %v1915, %v1999
      %v2030 = vadd.f32 %v1916, %v2001
      %v2031 = vadd.f32 %v1917, %v2004
      %v2032 = vadd.f32 %v1918, %v2006
      %v2033 = vadd.f32 %v1919, %v2009
      %v2034 = vadd.f32 %v1920, %v2011
      %v2035 = vadd.f32 %v1921, %v2014
      %v2036 = vadd.f32 %v1922, %v2016
      %v2037 = vadd.f32 %v1923, %v2019
      %v2038 = vadd.f32 %v1924, %v2021
      %v2039 = vadd.f32 %v1925, %v2024
      %v2040 = vld [vmem:[#allocation3 + $0x14] sm:$0xff]
      %v2041 = vld [vmem:[#allocation3 + $0x1c] sm:$0xff]
      %v2042 = vld [vmem:[#allocation3 + $0x24] sm:$0xff]
      %v2043 = vld [vmem:[#allocation3 + $0x2c] sm:$0xff]
      %v2044 = vld [vmem:[#allocation3 + $0x34] sm:$0xff]
      %v2045 = vld [vmem:[#allocation3 + $0x3c] sm:$0xff]
      %v2046 = vld [vmem:[#allocation3 + $0x44] sm:$0xff]
      %v2047 = vld [vmem:[#allocation3 + $0x4c] sm:$0xff]
      %v2048 = vld [vmem:[#allocation3 + $0x54] sm:$0xff]
      %v2049 = vld [vmem:[#allocation3 + $0x5c] sm:$0xff]
      %v2050 = vld [vmem:[#allocation3 + $0x64] sm:$0xff]
      %v2051 = vld [vmem:[#allocation3 + $0x6c] sm:$0xff]
      %v2052 = vld [vmem:[#allocation3 + $0x74] sm:$0xff]
      %v2053 = vpack.c.bf16 %v2041, %v2040
      %v2054 = vpack.c.bf16 %v2043, %v2042
      %v2055 = vpack.c.bf16 %v2045, %v2044
      %v2056 = vpack.c.bf16 %v2047, %v2046
      %v2057 = vpack.c.bf16 %v2049, %v2048
      %v2058 = vpack.c.bf16 %v2051, %v2050
      %v2059 = vpack.c.bf16 %v2052, %v2052
      %s2060 = scalar_lea.vmem %s3, 96
      %v2061 = vld [vmem:[%s2060] sm:$0xf]
      %v2062 = vld [vmem:[%s2060 + $0x4] sm:$0xf]
      %v2063 = vld [vmem:[%s2060 + $0x8] sm:$0xf]
      %v2064 = vld [vmem:[%s2060 + $0xc] sm:$0xf]
      %v2069 = vunpack.c.l.b16 %v2061
      %v2070 = vunpack.c.l.b16 %v2062
      %v2071 = vunpack.c.l.b16 %v2063
      %v2072 = vunpack.c.l.b16 %v2064
      %v2073 = vpack.c.b16 %v2070, %v2069
      %v2074 = vpack.c.b16 %v2072, %v2071
      %v2078 = vsel %vm1366, %v2053, 0
      %v2081 = vsel %vm1366, %v2054, 0
      %v2084 = vsel %vm1366, %v2055, 0
      %v2087 = vsel %vm1366, %v2056, 0
      %v2090 = vsel %vm1366, %v2057, 0
      %v2093 = vsel %vm1366, %v2058, 0
      %v2096 = vsel %vm1366, %v2059, 0
      %2098 = vmatpush.bf16.msra.mxu0 0
      %2099 = vmatpush.bf16.msra.mxu0 0
      %2100 = vmatpush.bf16.msra.mxu0 0
      %2101 = vmatpush.bf16.msra.mxu0 0
      %2102 = vmatpush.bf16.msra.mxu0 0
      %2103 = vmatpush.bf16.msra.mxu0 0
      %2104 = vmatpush.bf16.msra.mxu0 %v2074
      %2105 = vmatpush.bf16.msra.mxu0 %v2073
      %2106 = vmatmul.bf16.gmra.mxu0 %v2078
      %v2107 = vpop.f32.mrf.mxu0
      %v2108 = vadd.f32 0.0, %v2107
      %v2109 = vpop.f32.mrf.mxu0
      %v2110 = vadd.f32 0.0, %v2109
      %2111 = vmatmul.bf16.gmra.mxu0 %v2081
      %v2112 = vpop.f32.mrf.mxu0
      %v2113 = vadd.f32 0.0, %v2112
      %v2114 = vpop.f32.mrf.mxu0
      %v2115 = vadd.f32 0.0, %v2114
      %2116 = vmatmul.bf16.gmra.mxu0 %v2084
      %v2117 = vpop.f32.mrf.mxu0
      %v2118 = vadd.f32 0.0, %v2117
      %v2119 = vpop.f32.mrf.mxu0
      %v2120 = vadd.f32 0.0, %v2119
      %2121 = vmatmul.bf16.gmra.mxu0 %v2087
      %v2122 = vpop.f32.mrf.mxu0
      %v2123 = vadd.f32 0.0, %v2122
      %v2124 = vpop.f32.mrf.mxu0
      %v2125 = vadd.f32 0.0, %v2124
      %2126 = vmatmul.bf16.gmra.mxu0 %v2090
      %v2127 = vpop.f32.mrf.mxu0
      %v2128 = vadd.f32 0.0, %v2127
      %v2129 = vpop.f32.mrf.mxu0
      %v2130 = vadd.f32 0.0, %v2129
      %2131 = vmatmul.bf16.gmra.mxu0 %v2093
      %v2132 = vpop.f32.mrf.mxu0
      %v2133 = vadd.f32 0.0, %v2132
      %v2134 = vpop.f32.mrf.mxu0
      %v2135 = vadd.f32 0.0, %v2134
      %2136 = vmatmul.bf16.gmra.mxu0 %v2096
      %v2137 = vpop.f32.mrf.mxu0
      %v2138 = vadd.f32 0.0, %v2137
      %v2139 = vpop.f32.mrf.mxu0
      %2140 = vdwg.mxu0
      %v2141 = vadd.f32 %v2027, %v2108
      %v2142 = vadd.f32 %v2028, %v2110
      %v2143 = vadd.f32 %v2029, %v2113
      %v2144 = vadd.f32 %v2030, %v2115
      %v2145 = vadd.f32 %v2031, %v2118
      %v2146 = vadd.f32 %v2032, %v2120
      %v2147 = vadd.f32 %v2033, %v2123
      %v2148 = vadd.f32 %v2034, %v2125
      %v2149 = vadd.f32 %v2035, %v2128
      %v2150 = vadd.f32 %v2036, %v2130
      %v2151 = vadd.f32 %v2037, %v2133
      %v2152 = vadd.f32 %v2038, %v2135
      %v2153 = vadd.f32 %v2039, %v2138
      %v2154 = vld [vmem:[#allocation3 + $0x15] sm:$0xff]
      %v2155 = vld [vmem:[#allocation3 + $0x1d] sm:$0xff]
      %v2156 = vld [vmem:[#allocation3 + $0x25] sm:$0xff]
      %v2157 = vld [vmem:[#allocation3 + $0x2d] sm:$0xff]
      %v2158 = vld [vmem:[#allocation3 + $0x35] sm:$0xff]
      %v2159 = vld [vmem:[#allocation3 + $0x3d] sm:$0xff]
      %v2160 = vld [vmem:[#allocation3 + $0x45] sm:$0xff]
      %v2161 = vld [vmem:[#allocation3 + $0x4d] sm:$0xff]
      %v2162 = vld [vmem:[#allocation3 + $0x55] sm:$0xff]
      %v2163 = vld [vmem:[#allocation3 + $0x5d] sm:$0xff]
      %v2164 = vld [vmem:[#allocation3 + $0x65] sm:$0xff]
      %v2165 = vld [vmem:[#allocation3 + $0x6d] sm:$0xff]
      %v2166 = vld [vmem:[#allocation3 + $0x75] sm:$0xff]
      %v2167 = vpack.c.bf16 %v2155, %v2154
      %v2168 = vpack.c.bf16 %v2157, %v2156
      %v2169 = vpack.c.bf16 %v2159, %v2158
      %v2170 = vpack.c.bf16 %v2161, %v2160
      %v2171 = vpack.c.bf16 %v2163, %v2162
      %v2172 = vpack.c.bf16 %v2165, %v2164
      %v2173 = vpack.c.bf16 %v2166, %v2166
      %s2174 = scalar_lea.vmem %s3, 112
      %v2175 = vld [vmem:[%s2174] sm:$0xf]
      %v2176 = vld [vmem:[%s2174 + $0x4] sm:$0xf]
      %v2177 = vld [vmem:[%s2174 + $0x8] sm:$0xf]
      %v2178 = vld [vmem:[%s2174 + $0xc] sm:$0xf]
      %v2183 = vunpack.c.l.b16 %v2175
      %v2184 = vunpack.c.l.b16 %v2176
      %v2185 = vunpack.c.l.b16 %v2177
      %v2186 = vunpack.c.l.b16 %v2178
      %v2187 = vpack.c.b16 %v2184, %v2183
      %v2188 = vpack.c.b16 %v2186, %v2185
      %v2192 = vsel %vm1366, %v2167, 0
      %v2195 = vsel %vm1366, %v2168, 0
      %v2198 = vsel %vm1366, %v2169, 0
      %v2201 = vsel %vm1366, %v2170, 0
      %v2204 = vsel %vm1366, %v2171, 0
      %v2207 = vsel %vm1366, %v2172, 0
      %v2210 = vsel %vm1366, %v2173, 0
      %2212 = vmatpush.bf16.msra.mxu0 0
      %2213 = vmatpush.bf16.msra.mxu0 0
      %2214 = vmatpush.bf16.msra.mxu0 0
      %2215 = vmatpush.bf16.msra.mxu0 0
      %2216 = vmatpush.bf16.msra.mxu0 0
      %2217 = vmatpush.bf16.msra.mxu0 0
      %2218 = vmatpush.bf16.msra.mxu0 %v2188
      %2219 = vmatpush.bf16.msra.mxu0 %v2187
      %2220 = vmatmul.bf16.gmra.mxu0 %v2192
      %v2221 = vpop.f32.mrf.mxu0
      %v2222 = vadd.f32 0.0, %v2221
      %v2223 = vpop.f32.mrf.mxu0
      %v2224 = vadd.f32 0.0, %v2223
      %2225 = vmatmul.bf16.gmra.mxu0 %v2195
      %v2226 = vpop.f32.mrf.mxu0
      %v2227 = vadd.f32 0.0, %v2226
      %v2228 = vpop.f32.mrf.mxu0
      %v2229 = vadd.f32 0.0, %v2228
      %2230 = vmatmul.bf16.gmra.mxu0 %v2198
      %v2231 = vpop.f32.mrf.mxu0
      %v2232 = vadd.f32 0.0, %v2231
      %v2233 = vpop.f32.mrf.mxu0
      %v2234 = vadd.f32 0.0, %v2233
      %2235 = vmatmul.bf16.gmra.mxu0 %v2201
      %v2236 = vpop.f32.mrf.mxu0
      %v2237 = vadd.f32 0.0, %v2236
      %v2238 = vpop.f32.mrf.mxu0
      %v2239 = vadd.f32 0.0, %v2238
      %2240 = vmatmul.bf16.gmra.mxu0 %v2204
      %v2241 = vpop.f32.mrf.mxu0
      %v2242 = vadd.f32 0.0, %v2241
      %v2243 = vpop.f32.mrf.mxu0
      %v2244 = vadd.f32 0.0, %v2243
      %2245 = vmatmul.bf16.gmra.mxu0 %v2207
      %v2246 = vpop.f32.mrf.mxu0
      %v2247 = vadd.f32 0.0, %v2246
      %v2248 = vpop.f32.mrf.mxu0
      %v2249 = vadd.f32 0.0, %v2248
      %2250 = vmatmul.bf16.gmra.mxu0 %v2210
      %v2251 = vpop.f32.mrf.mxu0
      %v2252 = vadd.f32 0.0, %v2251
      %v2253 = vpop.f32.mrf.mxu0
      %2254 = vdwg.mxu0
      %v2255 = vadd.f32 %v2141, %v2222
      %v2256 = vadd.f32 %v2142, %v2224
      %v2257 = vadd.f32 %v2143, %v2227
      %v2258 = vadd.f32 %v2144, %v2229
      %v2259 = vadd.f32 %v2145, %v2232
      %v2260 = vadd.f32 %v2146, %v2234
      %v2261 = vadd.f32 %v2147, %v2237
      %v2262 = vadd.f32 %v2148, %v2239
      %v2263 = vadd.f32 %v2149, %v2242
      %v2264 = vadd.f32 %v2150, %v2244
      %v2265 = vadd.f32 %v2151, %v2247
      %v2266 = vadd.f32 %v2152, %v2249
      %v2267 = vadd.f32 %v2153, %v2252
      %v2268 = vld [vmem:[#allocation3 + $0x16] sm:$0xff]
      %v2269 = vld [vmem:[#allocation3 + $0x1e] sm:$0xff]
      %v2270 = vld [vmem:[#allocation3 + $0x26] sm:$0xff]
      %v2271 = vld [vmem:[#allocation3 + $0x2e] sm:$0xff]
      %v2272 = vld [vmem:[#allocation3 + $0x36] sm:$0xff]
      %v2273 = vld [vmem:[#allocation3 + $0x3e] sm:$0xff]
      %v2274 = vld [vmem:[#allocation3 + $0x46] sm:$0xff]
      %v2275 = vld [vmem:[#allocation3 + $0x4e] sm:$0xff]
      %v2276 = vld [vmem:[#allocation3 + $0x56] sm:$0xff]
      %v2277 = vld [vmem:[#allocation3 + $0x5e] sm:$0xff]
      %v2278 = vld [vmem:[#allocation3 + $0x66] sm:$0xff]
      %v2279 = vld [vmem:[#allocation3 + $0x6e] sm:$0xff]
      %v2280 = vld [vmem:[#allocation3 + $0x76] sm:$0xff]
      %v2281 = vpack.c.bf16 %v2269, %v2268
      %v2282 = vpack.c.bf16 %v2271, %v2270
      %v2283 = vpack.c.bf16 %v2273, %v2272
      %v2284 = vpack.c.bf16 %v2275, %v2274
      %v2285 = vpack.c.bf16 %v2277, %v2276
      %v2286 = vpack.c.bf16 %v2279, %v2278
      %v2287 = vpack.c.bf16 %v2280, %v2280
      %s2288 = scalar_lea.vmem %s3, 128
      %v2289 = vld [vmem:[%s2288] sm:$0xf]
      %v2290 = vld [vmem:[%s2288 + $0x4] sm:$0xf]
      %v2291 = vld [vmem:[%s2288 + $0x8] sm:$0xf]
      %v2292 = vld [vmem:[%s2288 + $0xc] sm:$0xf]
      %v2297 = vunpack.c.l.b16 %v2289
      %v2298 = vunpack.c.l.b16 %v2290
      %v2299 = vunpack.c.l.b16 %v2291
      %v2300 = vunpack.c.l.b16 %v2292
      %v2301 = vpack.c.b16 %v2298, %v2297
      %v2302 = vpack.c.b16 %v2300, %v2299
      %v2306 = vsel %vm1366, %v2281, 0
      %v2309 = vsel %vm1366, %v2282, 0
      %v2312 = vsel %vm1366, %v2283, 0
      %v2315 = vsel %vm1366, %v2284, 0
      %v2318 = vsel %vm1366, %v2285, 0
      %v2321 = vsel %vm1366, %v2286, 0
      %v2324 = vsel %vm1366, %v2287, 0
      %2326 = vmatpush.bf16.msra.mxu0 0
      %2327 = vmatpush.bf16.msra.mxu0 0
      %2328 = vmatpush.bf16.msra.mxu0 0
      %2329 = vmatpush.bf16.msra.mxu0 0
      %2330 = vmatpush.bf16.msra.mxu0 0
      %2331 = vmatpush.bf16.msra.mxu0 0
      %2332 = vmatpush.bf16.msra.mxu0 %v2302
      %2333 = vmatpush.bf16.msra.mxu0 %v2301
      %2334 = vmatmul.bf16.gmra.mxu0 %v2306
      %v2335 = vpop.f32.mrf.mxu0
      %v2336 = vadd.f32 0.0, %v2335
      %v2337 = vpop.f32.mrf.mxu0
      %v2338 = vadd.f32 0.0, %v2337
      %2339 = vmatmul.bf16.gmra.mxu0 %v2309
      %v2340 = vpop.f32.mrf.mxu0
      %v2341 = vadd.f32 0.0, %v2340
      %v2342 = vpop.f32.mrf.mxu0
      %v2343 = vadd.f32 0.0, %v2342
      %2344 = vmatmul.bf16.gmra.mxu0 %v2312
      %v2345 = vpop.f32.mrf.mxu0
      %v2346 = vadd.f32 0.0, %v2345
      %v2347 = vpop.f32.mrf.mxu0
      %v2348 = vadd.f32 0.0, %v2347
      %2349 = vmatmul.bf16.gmra.mxu0 %v2315
      %v2350 = vpop.f32.mrf.mxu0
      %v2351 = vadd.f32 0.0, %v2350
      %v2352 = vpop.f32.mrf.mxu0
      %v2353 = vadd.f32 0.0, %v2352
      %2354 = vmatmul.bf16.gmra.mxu0 %v2318
      %v2355 = vpop.f32.mrf.mxu0
      %v2356 = vadd.f32 0.0, %v2355
      %v2357 = vpop.f32.mrf.mxu0
      %v2358 = vadd.f32 0.0, %v2357
      %2359 = vmatmul.bf16.gmra.mxu0 %v2321
      %v2360 = vpop.f32.mrf.mxu0
      %v2361 = vadd.f32 0.0, %v2360
      %v2362 = vpop.f32.mrf.mxu0
      %v2363 = vadd.f32 0.0, %v2362
      %2364 = vmatmul.bf16.gmra.mxu0 %v2324
      %v2365 = vpop.f32.mrf.mxu0
      %v2366 = vadd.f32 0.0, %v2365
      %v2367 = vpop.f32.mrf.mxu0
      %2368 = vdwg.mxu0
      %v2369 = vadd.f32 %v2255, %v2336
      %v2370 = vadd.f32 %v2256, %v2338
      %v2371 = vadd.f32 %v2257, %v2341
      %v2372 = vadd.f32 %v2258, %v2343
      %v2373 = vadd.f32 %v2259, %v2346
      %v2374 = vadd.f32 %v2260, %v2348
      %v2375 = vadd.f32 %v2261, %v2351
      %v2376 = vadd.f32 %v2262, %v2353
      %v2377 = vadd.f32 %v2263, %v2356
      %v2378 = vadd.f32 %v2264, %v2358
      %v2379 = vadd.f32 %v2265, %v2361
      %v2380 = vadd.f32 %v2266, %v2363
      %v2381 = vadd.f32 %v2267, %v2366
      %v2382 = vld [vmem:[%s7] sm:$0x1]
      %v2384 = vperm.slane %v2382, 0
      %v2386 = vadd.f32 %v2369, %v2384
      %v2387 = vadd.f32 %v2370, %v2384
      %v2388 = vadd.f32 %v2371, %v2384
      %v2389 = vadd.f32 %v2372, %v2384
      %v2390 = vadd.f32 %v2373, %v2384
      %v2391 = vadd.f32 %v2374, %v2384
      %v2392 = vadd.f32 %v2375, %v2384
      %v2393 = vadd.f32 %v2376, %v2384
      %v2394 = vadd.f32 %v2377, %v2384
      %v2395 = vadd.f32 %v2378, %v2384
      %v2396 = vadd.f32 %v2379, %v2384
      %v2397 = vadd.f32 %v2380, %v2384
      %v2398 = vadd.f32 %v2381, %v2384
      %v2399 = vmax.f32 %v2386, 0.0
      %v2400 = vmax.f32 %v2387, 0.0
      %v2401 = vmax.f32 %v2388, 0.0
      %v2402 = vmax.f32 %v2389, 0.0
      %v2403 = vmax.f32 %v2390, 0.0
      %v2404 = vmax.f32 %v2391, 0.0
      %v2405 = vmax.f32 %v2392, 0.0
      %v2406 = vmax.f32 %v2393, 0.0
      %v2407 = vmax.f32 %v2394, 0.0
      %v2408 = vmax.f32 %v2395, 0.0
      %v2409 = vmax.f32 %v2396, 0.0
      %v2410 = vmax.f32 %v2397, 0.0
      %v2411 = vmax.f32 %v2398, 0.0
      %v2412 = vld [vmem:[%s12] sm:$0xff]
      %v2413 = vld [vmem:[%s12 + $0x8] sm:$0xff]
      %v2414 = vld [vmem:[%s12 + $0x10] sm:$0xff]
      %v2415 = vld [vmem:[%s12 + $0x18] sm:$0xff]
      %v2416 = vld [vmem:[%s12 + $0x20] sm:$0xff]
      %v2417 = vld [vmem:[%s12 + $0x28] sm:$0xff]
      %v2418 = vld [vmem:[%s12 + $0x30] sm:$0xff]
      %v2419 = vld [vmem:[%s12 + $0x38] sm:$0xff]
      %v2420 = vld [vmem:[%s12 + $0x40] sm:$0xff]
      %v2421 = vld [vmem:[%s12 + $0x48] sm:$0xff]
      %v2422 = vld [vmem:[%s12 + $0x50] sm:$0xff]
      %v2423 = vld [vmem:[%s12 + $0x58] sm:$0xff]
      %v2424 = vld [vmem:[%s12 + $0x60] sm:$0xff]
      %2426 = vset.pattern.permute.xlu0 0
      %2427 = vperm.xlu0 %2426, %v2412
      %v2428 = vpop.permute.xlu0 %2427
      %2431 = vset.pattern.permute.xlu0 0
      %2432 = vperm.xlu0 %2431, %v2413
      %v2433 = vpop.permute.xlu0 %2432
      %2436 = vset.pattern.permute.xlu0 0
      %2437 = vperm.xlu0 %2436, %v2414
      %v2438 = vpop.permute.xlu0 %2437
      %2441 = vset.pattern.permute.xlu0 0
      %2442 = vperm.xlu0 %2441, %v2415
      %v2443 = vpop.permute.xlu0 %2442
      %2446 = vset.pattern.permute.xlu0 0
      %2447 = vperm.xlu0 %2446, %v2416
      %v2448 = vpop.permute.xlu0 %2447
      %2451 = vset.pattern.permute.xlu0 0
      %2452 = vperm.xlu0 %2451, %v2417
      %v2453 = vpop.permute.xlu0 %2452
      %2456 = vset.pattern.permute.xlu0 0
      %2457 = vperm.xlu0 %2456, %v2418
      %v2458 = vpop.permute.xlu0 %2457
      %2461 = vset.pattern.permute.xlu0 0
      %2462 = vperm.xlu0 %2461, %v2419
      %v2463 = vpop.permute.xlu0 %2462
      %2466 = vset.pattern.permute.xlu0 0
      %2467 = vperm.xlu0 %2466, %v2420
      %v2468 = vpop.permute.xlu0 %2467
      %2471 = vset.pattern.permute.xlu0 0
      %2472 = vperm.xlu0 %2471, %v2421
      %v2473 = vpop.permute.xlu0 %2472
      %2476 = vset.pattern.permute.xlu0 0
      %2477 = vperm.xlu0 %2476, %v2422
      %v2478 = vpop.permute.xlu0 %2477
      %2481 = vset.pattern.permute.xlu0 0
      %2482 = vperm.xlu0 %2481, %v2423
      %v2483 = vpop.permute.xlu0 %2482
      %2486 = vset.pattern.permute.xlu0 0
      %2487 = vperm.xlu0 %2486, %v2424
      %v2488 = vpop.permute.xlu0 %2487
      %v2490 = vmul.f32 %v2399, %v2428
      %v2491 = vmul.f32 %v2400, %v2433
      %v2492 = vmul.f32 %v2401, %v2438
      %v2493 = vmul.f32 %v2402, %v2443
      %v2494 = vmul.f32 %v2403, %v2448
      %v2495 = vmul.f32 %v2404, %v2453
      %v2496 = vmul.f32 %v2405, %v2458
      %v2497 = vmul.f32 %v2406, %v2463
      %v2498 = vmul.f32 %v2407, %v2468
      %v2499 = vmul.f32 %v2408, %v2473
      %v2500 = vmul.f32 %v2409, %v2478
      %v2501 = vmul.f32 %v2410, %v2483
      %v2502 = vmul.f32 %v2411, %v2488
      %2503 = vst [vmem:[#allocation4] sm:$0xff] %v2490
      %2504 = vst [vmem:[#allocation4 + $0x8] sm:$0xff] %v2491
      %2505 = vst [vmem:[#allocation4 + $0x10] sm:$0xff] %v2492
      %2506 = vst [vmem:[#allocation4 + $0x18] sm:$0xff] %v2493
      %2507 = vst [vmem:[#allocation4 + $0x20] sm:$0xff] %v2494
      %2508 = vst [vmem:[#allocation4 + $0x28] sm:$0xff] %v2495
      %2509 = vst [vmem:[#allocation4 + $0x30] sm:$0xff] %v2496
      %2510 = vst [vmem:[#allocation4 + $0x38] sm:$0xff] %v2497
      %2511 = vst [vmem:[#allocation4 + $0x40] sm:$0xff] %v2498
      %2512 = vst [vmem:[#allocation4 + $0x48] sm:$0xff] %v2499
      %2513 = vst [vmem:[#allocation4 + $0x50] sm:$0xff] %v2500
      %2514 = vst [vmem:[#allocation4 + $0x58] sm:$0xff] %v2501
      %2515 = vst [vmem:[#allocation4 + $0x60] sm:$0xff] %v2502
      %v2516 = vld [vmem:[#allocation4] sm:$0xff]
      %v2517 = vld [vmem:[#allocation4 + $0x8] sm:$0xff]
      %v2518 = vld [vmem:[#allocation4 + $0x10] sm:$0xff]
      %v2519 = vld [vmem:[#allocation4 + $0x18] sm:$0xff]
      %v2520 = vld [vmem:[#allocation4 + $0x20] sm:$0xff]
      %v2521 = vld [vmem:[#allocation4 + $0x28] sm:$0xff]
      %v2522 = vld [vmem:[#allocation4 + $0x30] sm:$0xff]
      %v2523 = vld [vmem:[#allocation4 + $0x38] sm:$0xff]
      %v2524 = vld [vmem:[#allocation4 + $0x40] sm:$0xff]
      %v2525 = vld [vmem:[#allocation4 + $0x48] sm:$0xff]
      %v2526 = vpack.c.bf16 %v2517, %v2516
      %v2527 = vpack.c.bf16 %v2519, %v2518
      %v2528 = vpack.c.bf16 %v2521, %v2520
      %v2529 = vpack.c.bf16 %v2523, %v2522
      %v2530 = vpack.c.bf16 %v2525, %v2524
      %v2531 = vld [vmem:[%s4] sm:$0xff]
      %v2532 = vld [vmem:[%s4 + $0x8] sm:$0xff]
      %v2533 = vld [vmem:[%s4 + $0x10] sm:$0xff]
      %v2534 = vld [vmem:[%s4 + $0x18] sm:$0xff]
      %v2535 = vld [vmem:[%s4 + $0x20] sm:$0xff]
      %v2536 = vld [vmem:[%s4 + $0x28] sm:$0xff]
      %v2537 = vld [vmem:[%s4 + $0x30] sm:$0xff]
      %v2538 = vld [vmem:[%s4 + $0x38] sm:$0xff]
      %v2539 = vld [vmem:[%s4 + $0x40] sm:$0xff]
      %v2540 = vld [vmem:[%s4 + $0x48] sm:$0xff]
      %v2541 = vld [vmem:[%s4 + $0x50] sm:$0xff]
      %v2542 = vld [vmem:[%s4 + $0x58] sm:$0xff]
      %v2543 = vld [vmem:[%s4 + $0x60] sm:$0xff]
      %v2544 = vld [vmem:[%s4 + $0x68] sm:$0xff]
      %v2545 = vld [vmem:[%s4 + $0x70] sm:$0xff]
      %v2546 = vld [vmem:[%s4 + $0x78] sm:$0xff]
      %v2547 = vld [vmem:[#allocation4 + $0x1] sm:$0xff]
      %v2548 = vld [vmem:[#allocation4 + $0x9] sm:$0xff]
      %v2549 = vld [vmem:[#allocation4 + $0x11] sm:$0xff]
      %v2550 = vld [vmem:[#allocation4 + $0x19] sm:$0xff]
      %v2551 = vld [vmem:[#allocation4 + $0x21] sm:$0xff]
      %v2552 = vld [vmem:[#allocation4 + $0x29] sm:$0xff]
      %v2553 = vld [vmem:[#allocation4 + $0x31] sm:$0xff]
      %v2554 = vld [vmem:[#allocation4 + $0x39] sm:$0xff]
      %v2555 = vld [vmem:[#allocation4 + $0x41] sm:$0xff]
      %v2556 = vld [vmem:[#allocation4 + $0x49] sm:$0xff]
      %v2557 = vpack.c.bf16 %v2548, %v2547
      %v2558 = vpack.c.bf16 %v2550, %v2549
      %v2559 = vpack.c.bf16 %v2552, %v2551
      %v2560 = vpack.c.bf16 %v2554, %v2553
      %v2561 = vpack.c.bf16 %v2556, %v2555
      %s2562 = scalar_lea.vmem %s4, 128
      %v2563 = vld [vmem:[%s2562] sm:$0xff]
      %v2564 = vld [vmem:[%s2562 + $0x8] sm:$0xff]
      %v2565 = vld [vmem:[%s2562 + $0x10] sm:$0xff]
      %v2566 = vld [vmem:[%s2562 + $0x18] sm:$0xff]
      %v2567 = vld [vmem:[%s2562 + $0x20] sm:$0xff]
      %v2568 = vld [vmem:[%s2562 + $0x28] sm:$0xff]
      %v2569 = vld [vmem:[%s2562 + $0x30] sm:$0xff]
      %v2570 = vld [vmem:[%s2562 + $0x38] sm:$0xff]
      %v2571 = vld [vmem:[%s2562 + $0x40] sm:$0xff]
      %v2572 = vld [vmem:[%s2562 + $0x48] sm:$0xff]
      %v2573 = vld [vmem:[%s2562 + $0x50] sm:$0xff]
      %v2574 = vld [vmem:[%s2562 + $0x58] sm:$0xff]
      %v2575 = vld [vmem:[%s2562 + $0x60] sm:$0xff]
      %v2576 = vld [vmem:[%s2562 + $0x68] sm:$0xff]
      %v2577 = vld [vmem:[%s2562 + $0x70] sm:$0xff]
      %v2578 = vld [vmem:[%s2562 + $0x78] sm:$0xff]
      %v2595 = vunpack.c.l.b16 %v2563
      %v2596 = vunpack.c.h.b16 %v2563
      %v2597 = vunpack.c.l.b16 %v2564
      %v2598 = vunpack.c.h.b16 %v2564
      %v2599 = vunpack.c.l.b16 %v2565
      %v2600 = vunpack.c.h.b16 %v2565
      %v2601 = vunpack.c.l.b16 %v2566
      %v2602 = vunpack.c.h.b16 %v2566
      %v2603 = vunpack.c.l.b16 %v2567
      %v2604 = vunpack.c.h.b16 %v2567
      %v2605 = vunpack.c.l.b16 %v2568
      %v2606 = vunpack.c.h.b16 %v2568
      %v2607 = vunpack.c.l.b16 %v2569
      %v2608 = vunpack.c.h.b16 %v2569
      %v2609 = vunpack.c.l.b16 %v2570
      %v2610 = vunpack.c.h.b16 %v2570
      %v2611 = vunpack.c.l.b16 %v2571
      %v2612 = vunpack.c.h.b16 %v2571
      %v2613 = vunpack.c.l.b16 %v2572
      %v2614 = vunpack.c.h.b16 %v2572
      %v2615 = vunpack.c.l.b16 %v2573
      %v2616 = vunpack.c.h.b16 %v2573
      %v2617 = vunpack.c.l.b16 %v2574
      %v2618 = vunpack.c.h.b16 %v2574
      %v2619 = vunpack.c.l.b16 %v2575
      %v2620 = vunpack.c.h.b16 %v2575
      %v2621 = vunpack.c.l.b16 %v2576
      %v2622 = vunpack.c.h.b16 %v2576
      %v2623 = vunpack.c.l.b16 %v2577
      %v2624 = vunpack.c.h.b16 %v2577
      %v2625 = vunpack.c.l.b16 %v2578
      %v2626 = vunpack.c.h.b16 %v2578
      %v2627 = vpack.c.b16 %v2597, %v2595
      %v2628 = vpack.c.b16 %v2598, %v2596
      %v2629 = vpack.c.b16 %v2601, %v2599
      %v2630 = vpack.c.b16 %v2602, %v2600
      %v2631 = vpack.c.b16 %v2605, %v2603
      %v2632 = vpack.c.b16 %v2606, %v2604
      %v2633 = vpack.c.b16 %v2609, %v2607
      %v2634 = vpack.c.b16 %v2610, %v2608
      %v2635 = vpack.c.b16 %v2613, %v2611
      %v2636 = vpack.c.b16 %v2614, %v2612
      %v2637 = vpack.c.b16 %v2617, %v2615
      %v2638 = vpack.c.b16 %v2618, %v2616
      %v2639 = vpack.c.b16 %v2621, %v2619
      %v2640 = vpack.c.b16 %v2622, %v2620
      %v2641 = vpack.c.b16 %v2625, %v2623
      %v2642 = vpack.c.b16 %v2626, %v2624
      %2659 = vmatpush.bf16.msra.mxu0 %v2641
      %2660 = vmatpush.bf16.msra.mxu0 %v2639
      %2661 = vmatpush.bf16.msra.mxu0 %v2637
      %2662 = vmatpush.bf16.msra.mxu0 %v2635
      %2663 = vmatpush.bf16.msra.mxu0 %v2633
      %2664 = vmatpush.bf16.msra.mxu0 %v2631
      %2665 = vmatpush.bf16.msra.mxu0 %v2629
      %2666 = vmatpush.bf16.msra.mxu0 %v2627
      %2667 = vmatmul.bf16.gmra.mxu0 %v2557
      %v2668 = vpop.f32.mrf.mxu0
      %v2669 = vadd.f32 0.0, %v2668
      %v2670 = vpop.f32.mrf.mxu0
      %v2671 = vadd.f32 0.0, %v2670
      %2672 = vmatmul.bf16.gmra.mxu0 %v2558
      %v2673 = vpop.f32.mrf.mxu0
      %v2674 = vadd.f32 0.0, %v2673
      %v2675 = vpop.f32.mrf.mxu0
      %v2676 = vadd.f32 0.0, %v2675
      %2677 = vmatmul.bf16.gmra.mxu0 %v2559
      %v2678 = vpop.f32.mrf.mxu0
      %v2679 = vadd.f32 0.0, %v2678
      %v2680 = vpop.f32.mrf.mxu0
      %v2681 = vadd.f32 0.0, %v2680
      %2682 = vmatmul.bf16.gmra.mxu0 %v2560
      %v2683 = vpop.f32.mrf.mxu0
      %v2684 = vadd.f32 0.0, %v2683
      %v2685 = vpop.f32.mrf.mxu0
      %v2686 = vadd.f32 0.0, %v2685
      %2687 = vmatmul.bf16.gmra.mxu0 %v2561
      %v2688 = vpop.f32.mrf.mxu0
      %v2689 = vadd.f32 0.0, %v2688
      %v2690 = vpop.f32.mrf.mxu0
      %v2691 = vadd.f32 0.0, %v2690
      %2692 = vdwg.mxu0
      %2693 = vmatpush.bf16.msra.mxu0 %v2642
      %2694 = vmatpush.bf16.msra.mxu0 %v2640
      %2695 = vmatpush.bf16.msra.mxu0 %v2638
      %2696 = vmatpush.bf16.msra.mxu0 %v2636
      %2697 = vmatpush.bf16.msra.mxu0 %v2634
      %2698 = vmatpush.bf16.msra.mxu0 %v2632
      %2699 = vmatpush.bf16.msra.mxu0 %v2630
      %2700 = vmatpush.bf16.msra.mxu0 %v2628
      %2701 = vmatmul.bf16.gmra.mxu0 %v2557
      %v2702 = vpop.f32.mrf.mxu0
      %v2703 = vadd.f32 0.0, %v2702
      %v2704 = vpop.f32.mrf.mxu0
      %v2705 = vadd.f32 0.0, %v2704
      %2706 = vmatmul.bf16.gmra.mxu0 %v2558
      %v2707 = vpop.f32.mrf.mxu0
      %v2708 = vadd.f32 0.0, %v2707
      %v2709 = vpop.f32.mrf.mxu0
      %v2710 = vadd.f32 0.0, %v2709
      %2711 = vmatmul.bf16.gmra.mxu0 %v2559
      %v2712 = vpop.f32.mrf.mxu0
      %v2713 = vadd.f32 0.0, %v2712
      %v2714 = vpop.f32.mrf.mxu0
      %v2715 = vadd.f32 0.0, %v2714
      %2716 = vmatmul.bf16.gmra.mxu0 %v2560
      %v2717 = vpop.f32.mrf.mxu0
      %v2718 = vadd.f32 0.0, %v2717
      %v2719 = vpop.f32.mrf.mxu0
      %v2720 = vadd.f32 0.0, %v2719
      %2721 = vmatmul.bf16.gmra.mxu0 %v2561
      %v2722 = vpop.f32.mrf.mxu0
      %v2723 = vadd.f32 0.0, %v2722
      %v2724 = vpop.f32.mrf.mxu0
      %v2725 = vadd.f32 0.0, %v2724
      %2726 = vdwg.mxu0
      %v2743 = vunpack.c.l.b16 %v2531
      %v2744 = vunpack.c.h.b16 %v2531
      %v2745 = vunpack.c.l.b16 %v2532
      %v2746 = vunpack.c.h.b16 %v2532
      %v2747 = vunpack.c.l.b16 %v2533
      %v2748 = vunpack.c.h.b16 %v2533
      %v2749 = vunpack.c.l.b16 %v2534
      %v2750 = vunpack.c.h.b16 %v2534
      %v2751 = vunpack.c.l.b16 %v2535
      %v2752 = vunpack.c.h.b16 %v2535
      %v2753 = vunpack.c.l.b16 %v2536
      %v2754 = vunpack.c.h.b16 %v2536
      %v2755 = vunpack.c.l.b16 %v2537
      %v2756 = vunpack.c.h.b16 %v2537
      %v2757 = vunpack.c.l.b16 %v2538
      %v2758 = vunpack.c.h.b16 %v2538
      %v2759 = vunpack.c.l.b16 %v2539
      %v2760 = vunpack.c.h.b16 %v2539
      %v2761 = vunpack.c.l.b16 %v2540
      %v2762 = vunpack.c.h.b16 %v2540
      %v2763 = vunpack.c.l.b16 %v2541
      %v2764 = vunpack.c.h.b16 %v2541
      %v2765 = vunpack.c.l.b16 %v2542
      %v2766 = vunpack.c.h.b16 %v2542
      %v2767 = vunpack.c.l.b16 %v2543
      %v2768 = vunpack.c.h.b16 %v2543
      %v2769 = vunpack.c.l.b16 %v2544
      %v2770 = vunpack.c.h.b16 %v2544
      %v2771 = vunpack.c.l.b16 %v2545
      %v2772 = vunpack.c.h.b16 %v2545
      %v2773 = vunpack.c.l.b16 %v2546
      %v2774 = vunpack.c.h.b16 %v2546
      %v2775 = vpack.c.b16 %v2745, %v2743
      %v2776 = vpack.c.b16 %v2746, %v2744
      %v2777 = vpack.c.b16 %v2749, %v2747
      %v2778 = vpack.c.b16 %v2750, %v2748
      %v2779 = vpack.c.b16 %v2753, %v2751
      %v2780 = vpack.c.b16 %v2754, %v2752
      %v2781 = vpack.c.b16 %v2757, %v2755
      %v2782 = vpack.c.b16 %v2758, %v2756
      %v2783 = vpack.c.b16 %v2761, %v2759
      %v2784 = vpack.c.b16 %v2762, %v2760
      %v2785 = vpack.c.b16 %v2765, %v2763
      %v2786 = vpack.c.b16 %v2766, %v2764
      %v2787 = vpack.c.b16 %v2769, %v2767
      %v2788 = vpack.c.b16 %v2770, %v2768
      %v2789 = vpack.c.b16 %v2773, %v2771
      %v2790 = vpack.c.b16 %v2774, %v2772
      %2807 = vmatpush.bf16.msra.mxu0 %v2789
      %2808 = vmatpush.bf16.msra.mxu0 %v2787
      %2809 = vmatpush.bf16.msra.mxu0 %v2785
      %2810 = vmatpush.bf16.msra.mxu0 %v2783
      %2811 = vmatpush.bf16.msra.mxu0 %v2781
      %2812 = vmatpush.bf16.msra.mxu0 %v2779
      %2813 = vmatpush.bf16.msra.mxu0 %v2777
      %2814 = vmatpush.bf16.msra.mxu0 %v2775
      %2815 = vmatmul.bf16.gmra.mxu0 %v2526
      %v2816 = vpop.f32.mrf.mxu0
      %v2817 = vadd.f32 %v2669, %v2816
      %v2818 = vpop.f32.mrf.mxu0
      %v2819 = vadd.f32 %v2671, %v2818
      %2820 = vmatmul.bf16.gmra.mxu0 %v2527
      %v2821 = vpop.f32.mrf.mxu0
      %v2822 = vadd.f32 %v2674, %v2821
      %v2823 = vpop.f32.mrf.mxu0
      %v2824 = vadd.f32 %v2676, %v2823
      %2825 = vmatmul.bf16.gmra.mxu0 %v2528
      %v2826 = vpop.f32.mrf.mxu0
      %v2827 = vadd.f32 %v2679, %v2826
      %v2828 = vpop.f32.mrf.mxu0
      %v2829 = vadd.f32 %v2681, %v2828
      %2830 = vmatmul.bf16.gmra.mxu0 %v2529
      %v2831 = vpop.f32.mrf.mxu0
      %v2832 = vadd.f32 %v2684, %v2831
      %v2833 = vpop.f32.mrf.mxu0
      %v2834 = vadd.f32 %v2686, %v2833
      %2835 = vmatmul.bf16.gmra.mxu0 %v2530
      %v2836 = vpop.f32.mrf.mxu0
      %v2837 = vadd.f32 %v2689, %v2836
      %v2838 = vpop.f32.mrf.mxu0
      %v2839 = vadd.f32 %v2691, %v2838
      %2840 = vdwg.mxu0
      %2841 = vmatpush.bf16.msra.mxu0 %v2790
      %2842 = vmatpush.bf16.msra.mxu0 %v2788
      %2843 = vmatpush.bf16.msra.mxu0 %v2786
      %2844 = vmatpush.bf16.msra.mxu0 %v2784
      %2845 = vmatpush.bf16.msra.mxu0 %v2782
      %2846 = vmatpush.bf16.msra.mxu0 %v2780
      %2847 = vmatpush.bf16.msra.mxu0 %v2778
      %2848 = vmatpush.bf16.msra.mxu0 %v2776
      %2849 = vmatmul.bf16.gmra.mxu0 %v2526
      %v2850 = vpop.f32.mrf.mxu0
      %v2851 = vadd.f32 %v2703, %v2850
      %v2852 = vpop.f32.mrf.mxu0
      %v2853 = vadd.f32 %v2705, %v2852
      %2854 = vmatmul.bf16.gmra.mxu0 %v2527
      %v2855 = vpop.f32.mrf.mxu0
      %v2856 = vadd.f32 %v2708, %v2855
      %v2857 = vpop.f32.mrf.mxu0
      %v2858 = vadd.f32 %v2710, %v2857
      %2859 = vmatmul.bf16.gmra.mxu0 %v2528
      %v2860 = vpop.f32.mrf.mxu0
      %v2861 = vadd.f32 %v2713, %v2860
      %v2862 = vpop.f32.mrf.mxu0
      %v2863 = vadd.f32 %v2715, %v2862
      %2864 = vmatmul.bf16.gmra.mxu0 %v2529
      %v2865 = vpop.f32.mrf.mxu0
      %v2866 = vadd.f32 %v2718, %v2865
      %v2867 = vpop.f32.mrf.mxu0
      %v2868 = vadd.f32 %v2720, %v2867
      %2869 = vmatmul.bf16.gmra.mxu0 %v2530
      %v2870 = vpop.f32.mrf.mxu0
      %v2871 = vadd.f32 %v2723, %v2870
      %v2872 = vpop.f32.mrf.mxu0
      %v2873 = vadd.f32 %v2725, %v2872
      %2874 = vdwg.mxu0
      %v2875 = vld [vmem:[#allocation4 + $0xa] sm:$0xff]
      %v2876 = vld [vmem:[#allocation4 + $0x12] sm:$0xff]
      %v2877 = vld [vmem:[#allocation4 + $0x1a] sm:$0xff]
      %v2878 = vld [vmem:[#allocation4 + $0x22] sm:$0xff]
      %v2879 = vld [vmem:[#allocation4 + $0x2a] sm:$0xff]
      %v2880 = vld [vmem:[#allocation4 + $0x32] sm:$0xff]
      %v2881 = vld [vmem:[#allocation4 + $0x3a] sm:$0xff]
      %v2882 = vld [vmem:[#allocation4 + $0x42] sm:$0xff]
      %v2883 = vld [vmem:[#allocation4 + $0x4a] sm:$0xff]
      %v2884 = vld [vmem:[#allocation4 + $0x52] sm:$0xff]
      %v2885 = vpack.c.bf16 %v2876, %v2875
      %v2886 = vpack.c.bf16 %v2878, %v2877
      %v2887 = vpack.c.bf16 %v2880, %v2879
      %v2888 = vpack.c.bf16 %v2882, %v2881
      %v2889 = vpack.c.bf16 %v2884, %v2883
      %s2890 = scalar_lea.vmem %s4, 256
      %v2891 = vld [vmem:[%s2890] sm:$0xff]
      %v2892 = vld [vmem:[%s2890 + $0x8] sm:$0xff]
      %v2893 = vld [vmem:[%s2890 + $0x10] sm:$0xff]
      %v2894 = vld [vmem:[%s2890 + $0x18] sm:$0xff]
      %v2895 = vld [vmem:[%s2890 + $0x20] sm:$0xff]
      %v2896 = vld [vmem:[%s2890 + $0x28] sm:$0xff]
      %v2897 = vld [vmem:[%s2890 + $0x30] sm:$0xff]
      %v2898 = vld [vmem:[%s2890 + $0x38] sm:$0xff]
      %v2899 = vld [vmem:[%s2890 + $0x40] sm:$0xff]
      %v2900 = vld [vmem:[%s2890 + $0x48] sm:$0xff]
      %v2901 = vld [vmem:[%s2890 + $0x50] sm:$0xff]
      %v2902 = vld [vmem:[%s2890 + $0x58] sm:$0xff]
      %v2903 = vld [vmem:[%s2890 + $0x60] sm:$0xff]
      %v2904 = vld [vmem:[%s2890 + $0x68] sm:$0xff]
      %v2905 = vld [vmem:[%s2890 + $0x70] sm:$0xff]
      %v2906 = vld [vmem:[%s2890 + $0x78] sm:$0xff]
      %v2923 = vunpack.c.l.b16 %v2891
      %v2924 = vunpack.c.h.b16 %v2891
      %v2925 = vunpack.c.l.b16 %v2892
      %v2926 = vunpack.c.h.b16 %v2892
      %v2927 = vunpack.c.l.b16 %v2893
      %v2928 = vunpack.c.h.b16 %v2893
      %v2929 = vunpack.c.l.b16 %v2894
      %v2930 = vunpack.c.h.b16 %v2894
      %v2931 = vunpack.c.l.b16 %v2895
      %v2932 = vunpack.c.h.b16 %v2895
      %v2933 = vunpack.c.l.b16 %v2896
      %v2934 = vunpack.c.h.b16 %v2896
      %v2935 = vunpack.c.l.b16 %v2897
      %v2936 = vunpack.c.h.b16 %v2897
      %v2937 = vunpack.c.l.b16 %v2898
      %v2938 = vunpack.c.h.b16 %v2898
      %v2939 = vunpack.c.l.b16 %v2899
      %v2940 = vunpack.c.h.b16 %v2899
      %v2941 = vunpack.c.l.b16 %v2900
      %v2942 = vunpack.c.h.b16 %v2900
      %v2943 = vunpack.c.l.b16 %v2901
      %v2944 = vunpack.c.h.b16 %v2901
      %v2945 = vunpack.c.l.b16 %v2902
      %v2946 = vunpack.c.h.b16 %v2902
      %v2947 = vunpack.c.l.b16 %v2903
      %v2948 = vunpack.c.h.b16 %v2903
      %v2949 = vunpack.c.l.b16 %v2904
      %v2950 = vunpack.c.h.b16 %v2904
      %v2951 = vunpack.c.l.b16 %v2905
      %v2952 = vunpack.c.h.b16 %v2905
      %v2953 = vunpack.c.l.b16 %v2906
      %v2954 = vunpack.c.h.b16 %v2906
      %v2955 = vpack.c.b16 %v2925, %v2923
      %v2956 = vpack.c.b16 %v2926, %v2924
      %v2957 = vpack.c.b16 %v2929, %v2927
      %v2958 = vpack.c.b16 %v2930, %v2928
      %v2959 = vpack.c.b16 %v2933, %v2931
      %v2960 = vpack.c.b16 %v2934, %v2932
      %v2961 = vpack.c.b16 %v2937, %v2935
      %v2962 = vpack.c.b16 %v2938, %v2936
      %v2963 = vpack.c.b16 %v2941, %v2939
      %v2964 = vpack.c.b16 %v2942, %v2940
      %v2965 = vpack.c.b16 %v2945, %v2943
      %v2966 = vpack.c.b16 %v2946, %v2944
      %v2967 = vpack.c.b16 %v2949, %v2947
      %v2968 = vpack.c.b16 %v2950, %v2948
      %v2969 = vpack.c.b16 %v2953, %v2951
      %v2970 = vpack.c.b16 %v2954, %v2952
      %2987 = vmatpush.bf16.msra.mxu0 %v2969
      %2988 = vmatpush.bf16.msra.mxu0 %v2967
      %2989 = vmatpush.bf16.msra.mxu0 %v2965
      %2990 = vmatpush.bf16.msra.mxu0 %v2963
      %2991 = vmatpush.bf16.msra.mxu0 %v2961
      %2992 = vmatpush.bf16.msra.mxu0 %v2959
      %2993 = vmatpush.bf16.msra.mxu0 %v2957
      %2994 = vmatpush.bf16.msra.mxu0 %v2955
      %2995 = vmatmul.bf16.gmra.mxu0 %v2885
      %v2996 = vpop.f32.mrf.mxu0
      %v2997 = vadd.f32 0.0, %v2996
      %v2998 = vpop.f32.mrf.mxu0
      %v2999 = vadd.f32 0.0, %v2998
      %3000 = vmatmul.bf16.gmra.mxu0 %v2886
      %v3001 = vpop.f32.mrf.mxu0
      %v3002 = vadd.f32 0.0, %v3001
      %v3003 = vpop.f32.mrf.mxu0
      %v3004 = vadd.f32 0.0, %v3003
      %3005 = vmatmul.bf16.gmra.mxu0 %v2887
      %v3006 = vpop.f32.mrf.mxu0
      %v3007 = vadd.f32 0.0, %v3006
      %v3008 = vpop.f32.mrf.mxu0
      %v3009 = vadd.f32 0.0, %v3008
      %3010 = vmatmul.bf16.gmra.mxu0 %v2888
      %v3011 = vpop.f32.mrf.mxu0
      %v3012 = vadd.f32 0.0, %v3011
      %v3013 = vpop.f32.mrf.mxu0
      %v3014 = vadd.f32 0.0, %v3013
      %3015 = vmatmul.bf16.gmra.mxu0 %v2889
      %v3016 = vpop.f32.mrf.mxu0
      %v3017 = vadd.f32 0.0, %v3016
      %v3018 = vpop.f32.mrf.mxu0
      %v3019 = vadd.f32 0.0, %v3018
      %3020 = vdwg.mxu0
      %3021 = vmatpush.bf16.msra.mxu0 %v2970
      %3022 = vmatpush.bf16.msra.mxu0 %v2968
      %3023 = vmatpush.bf16.msra.mxu0 %v2966
      %3024 = vmatpush.bf16.msra.mxu0 %v2964
      %3025 = vmatpush.bf16.msra.mxu0 %v2962
      %3026 = vmatpush.bf16.msra.mxu0 %v2960
      %3027 = vmatpush.bf16.msra.mxu0 %v2958
      %3028 = vmatpush.bf16.msra.mxu0 %v2956
      %3029 = vmatmul.bf16.gmra.mxu0 %v2885
      %v3030 = vpop.f32.mrf.mxu0
      %v3031 = vadd.f32 0.0, %v3030
      %v3032 = vpop.f32.mrf.mxu0
      %v3033 = vadd.f32 0.0, %v3032
      %3034 = vmatmul.bf16.gmra.mxu0 %v2886
      %v3035 = vpop.f32.mrf.mxu0
      %v3036 = vadd.f32 0.0, %v3035
      %v3037 = vpop.f32.mrf.mxu0
      %v3038 = vadd.f32 0.0, %v3037
      %3039 = vmatmul.bf16.gmra.mxu0 %v2887
      %v3040 = vpop.f32.mrf.mxu0
      %v3041 = vadd.f32 0.0, %v3040
      %v3042 = vpop.f32.mrf.mxu0
      %v3043 = vadd.f32 0.0, %v3042
      %3044 = vmatmul.bf16.gmra.mxu0 %v2888
      %v3045 = vpop.f32.mrf.mxu0
      %v3046 = vadd.f32 0.0, %v3045
      %v3047 = vpop.f32.mrf.mxu0
      %v3048 = vadd.f32 0.0, %v3047
      %3049 = vmatmul.bf16.gmra.mxu0 %v2889
      %v3050 = vpop.f32.mrf.mxu0
      %v3051 = vadd.f32 0.0, %v3050
      %v3052 = vpop.f32.mrf.mxu0
      %v3053 = vadd.f32 0.0, %v3052
      %3054 = vdwg.mxu0
      %v3055 = vadd.f32 %v2817, %v2997
      %v3056 = vadd.f32 %v2851, %v3031
      %v3057 = vadd.f32 %v2819, %v2999
      %v3058 = vadd.f32 %v2853, %v3033
      %v3059 = vadd.f32 %v2822, %v3002
      %v3060 = vadd.f32 %v2856, %v3036
      %v3061 = vadd.f32 %v2824, %v3004
      %v3062 = vadd.f32 %v2858, %v3038
      %v3063 = vadd.f32 %v2827, %v3007
      %v3064 = vadd.f32 %v2861, %v3041
      %v3065 = vadd.f32 %v2829, %v3009
      %v3066 = vadd.f32 %v2863, %v3043
      %v3067 = vadd.f32 %v2832, %v3012
      %v3068 = vadd.f32 %v2866, %v3046
      %v3069 = vadd.f32 %v2834, %v3014
      %v3070 = vadd.f32 %v2868, %v3048
      %v3071 = vadd.f32 %v2837, %v3017
      %v3072 = vadd.f32 %v2871, %v3051
      %v3073 = vadd.f32 %v2839, %v3019
      %v3074 = vadd.f32 %v2873, %v3053
      %v3075 = vld [vmem:[#allocation4 + $0xb] sm:$0xff]
      %v3076 = vld [vmem:[#allocation4 + $0x13] sm:$0xff]
      %v3077 = vld [vmem:[#allocation4 + $0x1b] sm:$0xff]
      %v3078 = vld [vmem:[#allocation4 + $0x23] sm:$0xff]
      %v3079 = vld [vmem:[#allocation4 + $0x2b] sm:$0xff]
      %v3080 = vld [vmem:[#allocation4 + $0x33] sm:$0xff]
      %v3081 = vld [vmem:[#allocation4 + $0x3b] sm:$0xff]
      %v3082 = vld [vmem:[#allocation4 + $0x43] sm:$0xff]
      %v3083 = vld [vmem:[#allocation4 + $0x4b] sm:$0xff]
      %v3084 = vld [vmem:[#allocation4 + $0x53] sm:$0xff]
      %v3085 = vpack.c.bf16 %v3076, %v3075
      %v3086 = vpack.c.bf16 %v3078, %v3077
      %v3087 = vpack.c.bf16 %v3080, %v3079
      %v3088 = vpack.c.bf16 %v3082, %v3081
      %v3089 = vpack.c.bf16 %v3084, %v3083
      %s3090 = scalar_lea.vmem %s4, 384
      %v3091 = vld [vmem:[%s3090] sm:$0xff]
      %v3092 = vld [vmem:[%s3090 + $0x8] sm:$0xff]
      %v3093 = vld [vmem:[%s3090 + $0x10] sm:$0xff]
      %v3094 = vld [vmem:[%s3090 + $0x18] sm:$0xff]
      %v3095 = vld [vmem:[%s3090 + $0x20] sm:$0xff]
      %v3096 = vld [vmem:[%s3090 + $0x28] sm:$0xff]
      %v3097 = vld [vmem:[%s3090 + $0x30] sm:$0xff]
      %v3098 = vld [vmem:[%s3090 + $0x38] sm:$0xff]
      %v3099 = vld [vmem:[%s3090 + $0x40] sm:$0xff]
      %v3100 = vld [vmem:[%s3090 + $0x48] sm:$0xff]
      %v3101 = vld [vmem:[%s3090 + $0x50] sm:$0xff]
      %v3102 = vld [vmem:[%s3090 + $0x58] sm:$0xff]
      %v3103 = vld [vmem:[%s3090 + $0x60] sm:$0xff]
      %v3104 = vld [vmem:[%s3090 + $0x68] sm:$0xff]
      %v3105 = vld [vmem:[%s3090 + $0x70] sm:$0xff]
      %v3106 = vld [vmem:[%s3090 + $0x78] sm:$0xff]
      %v3123 = vunpack.c.l.b16 %v3091
      %v3124 = vunpack.c.h.b16 %v3091
      %v3125 = vunpack.c.l.b16 %v3092
      %v3126 = vunpack.c.h.b16 %v3092
      %v3127 = vunpack.c.l.b16 %v3093
      %v3128 = vunpack.c.h.b16 %v3093
      %v3129 = vunpack.c.l.b16 %v3094
      %v3130 = vunpack.c.h.b16 %v3094
      %v3131 = vunpack.c.l.b16 %v3095
      %v3132 = vunpack.c.h.b16 %v3095
      %v3133 = vunpack.c.l.b16 %v3096
      %v3134 = vunpack.c.h.b16 %v3096
      %v3135 = vunpack.c.l.b16 %v3097
      %v3136 = vunpack.c.h.b16 %v3097
      %v3137 = vunpack.c.l.b16 %v3098
      %v3138 = vunpack.c.h.b16 %v3098
      %v3139 = vunpack.c.l.b16 %v3099
      %v3140 = vunpack.c.h.b16 %v3099
      %v3141 = vunpack.c.l.b16 %v3100
      %v3142 = vunpack.c.h.b16 %v3100
      %v3143 = vunpack.c.l.b16 %v3101
      %v3144 = vunpack.c.h.b16 %v3101
      %v3145 = vunpack.c.l.b16 %v3102
      %v3146 = vunpack.c.h.b16 %v3102
      %v3147 = vunpack.c.l.b16 %v3103
      %v3148 = vunpack.c.h.b16 %v3103
      %v3149 = vunpack.c.l.b16 %v3104
      %v3150 = vunpack.c.h.b16 %v3104
      %v3151 = vunpack.c.l.b16 %v3105
      %v3152 = vunpack.c.h.b16 %v3105
      %v3153 = vunpack.c.l.b16 %v3106
      %v3154 = vunpack.c.h.b16 %v3106
      %v3155 = vpack.c.b16 %v3125, %v3123
      %v3156 = vpack.c.b16 %v3126, %v3124
      %v3157 = vpack.c.b16 %v3129, %v3127
      %v3158 = vpack.c.b16 %v3130, %v3128
      %v3159 = vpack.c.b16 %v3133, %v3131
      %v3160 = vpack.c.b16 %v3134, %v3132
      %v3161 = vpack.c.b16 %v3137, %v3135
      %v3162 = vpack.c.b16 %v3138, %v3136
      %v3163 = vpack.c.b16 %v3141, %v3139
      %v3164 = vpack.c.b16 %v3142, %v3140
      %v3165 = vpack.c.b16 %v3145, %v3143
      %v3166 = vpack.c.b16 %v3146, %v3144
      %v3167 = vpack.c.b16 %v3149, %v3147
      %v3168 = vpack.c.b16 %v3150, %v3148
      %v3169 = vpack.c.b16 %v3153, %v3151
      %v3170 = vpack.c.b16 %v3154, %v3152
      %3187 = vmatpush.bf16.msra.mxu0 %v3169
      %3188 = vmatpush.bf16.msra.mxu0 %v3167
      %3189 = vmatpush.bf16.msra.mxu0 %v3165
      %3190 = vmatpush.bf16.msra.mxu0 %v3163
      %3191 = vmatpush.bf16.msra.mxu0 %v3161
      %3192 = vmatpush.bf16.msra.mxu0 %v3159
      %3193 = vmatpush.bf16.msra.mxu0 %v3157
      %3194 = vmatpush.bf16.msra.mxu0 %v3155
      %3195 = vmatmul.bf16.gmra.mxu0 %v3085
      %v3196 = vpop.f32.mrf.mxu0
      %v3197 = vadd.f32 0.0, %v3196
      %v3198 = vpop.f32.mrf.mxu0
      %v3199 = vadd.f32 0.0, %v3198
      %3200 = vmatmul.bf16.gmra.mxu0 %v3086
      %v3201 = vpop.f32.mrf.mxu0
      %v3202 = vadd.f32 0.0, %v3201
      %v3203 = vpop.f32.mrf.mxu0
      %v3204 = vadd.f32 0.0, %v3203
      %3205 = vmatmul.bf16.gmra.mxu0 %v3087
      %v3206 = vpop.f32.mrf.mxu0
      %v3207 = vadd.f32 0.0, %v3206
      %v3208 = vpop.f32.mrf.mxu0
      %v3209 = vadd.f32 0.0, %v3208
      %3210 = vmatmul.bf16.gmra.mxu0 %v3088
      %v3211 = vpop.f32.mrf.mxu0
      %v3212 = vadd.f32 0.0, %v3211
      %v3213 = vpop.f32.mrf.mxu0
      %v3214 = vadd.f32 0.0, %v3213
      %3215 = vmatmul.bf16.gmra.mxu0 %v3089
      %v3216 = vpop.f32.mrf.mxu0
      %v3217 = vadd.f32 0.0, %v3216
      %v3218 = vpop.f32.mrf.mxu0
      %v3219 = vadd.f32 0.0, %v3218
      %3220 = vdwg.mxu0
      %3221 = vmatpush.bf16.msra.mxu0 %v3170
      %3222 = vmatpush.bf16.msra.mxu0 %v3168
      %3223 = vmatpush.bf16.msra.mxu0 %v3166
      %3224 = vmatpush.bf16.msra.mxu0 %v3164
      %3225 = vmatpush.bf16.msra.mxu0 %v3162
      %3226 = vmatpush.bf16.msra.mxu0 %v3160
      %3227 = vmatpush.bf16.msra.mxu0 %v3158
      %3228 = vmatpush.bf16.msra.mxu0 %v3156
      %3229 = vmatmul.bf16.gmra.mxu0 %v3085
      %v3230 = vpop.f32.mrf.mxu0
      %v3231 = vadd.f32 0.0, %v3230
      %v3232 = vpop.f32.mrf.mxu0
      %v3233 = vadd.f32 0.0, %v3232
      %3234 = vmatmul.bf16.gmra.mxu0 %v3086
      %v3235 = vpop.f32.mrf.mxu0
      %v3236 = vadd.f32 0.0, %v3235
      %v3237 = vpop.f32.mrf.mxu0
      %v3238 = vadd.f32 0.0, %v3237
      %3239 = vmatmul.bf16.gmra.mxu0 %v3087
      %v3240 = vpop.f32.mrf.mxu0
      %v3241 = vadd.f32 0.0, %v3240
      %v3242 = vpop.f32.mrf.mxu0
      %v3243 = vadd.f32 0.0, %v3242
      %3244 = vmatmul.bf16.gmra.mxu0 %v3088
      %v3245 = vpop.f32.mrf.mxu0
      %v3246 = vadd.f32 0.0, %v3245
      %v3247 = vpop.f32.mrf.mxu0
      %v3248 = vadd.f32 0.0, %v3247
      %3249 = vmatmul.bf16.gmra.mxu0 %v3089
      %v3250 = vpop.f32.mrf.mxu0
      %v3251 = vadd.f32 0.0, %v3250
      %v3252 = vpop.f32.mrf.mxu0
      %v3253 = vadd.f32 0.0, %v3252
      %3254 = vdwg.mxu0
      %v3255 = vadd.f32 %v3055, %v3197
      %v3256 = vadd.f32 %v3056, %v3231
      %v3257 = vadd.f32 %v3057, %v3199
      %v3258 = vadd.f32 %v3058, %v3233
      %v3259 = vadd.f32 %v3059, %v3202
      %v3260 = vadd.f32 %v3060, %v3236
      %v3261 = vadd.f32 %v3061, %v3204
      %v3262 = vadd.f32 %v3062, %v3238
      %v3263 = vadd.f32 %v3063, %v3207
      %v3264 = vadd.f32 %v3064, %v3241
      %v3265 = vadd.f32 %v3065, %v3209
      %v3266 = vadd.f32 %v3066, %v3243
      %v3267 = vadd.f32 %v3067, %v3212
      %v3268 = vadd.f32 %v3068, %v3246
      %v3269 = vadd.f32 %v3069, %v3214
      %v3270 = vadd.f32 %v3070, %v3248
      %v3271 = vadd.f32 %v3071, %v3217
      %v3272 = vadd.f32 %v3072, %v3251
      %v3273 = vadd.f32 %v3073, %v3219
      %v3274 = vadd.f32 %v3074, %v3253
      %v3275 = vld [vmem:[%s8] sm:$0x3]
      %v3277 = vperm.slane %v3275, 0
      %v3278 = vperm.slane %v3275, 1
      %v3281 = vadd.f32 %v3255, %v3277
      %v3282 = vadd.f32 %v3256, %v3278
      %v3283 = vadd.f32 %v3257, %v3277
      %v3284 = vadd.f32 %v3258, %v3278
      %v3285 = vadd.f32 %v3259, %v3277
      %v3286 = vadd.f32 %v3260, %v3278
      %v3287 = vadd.f32 %v3261, %v3277
      %v3288 = vadd.f32 %v3262, %v3278
      %v3289 = vadd.f32 %v3263, %v3277
      %v3290 = vadd.f32 %v3264, %v3278
      %v3291 = vadd.f32 %v3265, %v3277
      %v3292 = vadd.f32 %v3266, %v3278
      %v3293 = vadd.f32 %v3267, %v3277
      %v3294 = vadd.f32 %v3268, %v3278
      %v3295 = vadd.f32 %v3269, %v3277
      %v3296 = vadd.f32 %v3270, %v3278
      %v3297 = vadd.f32 %v3271, %v3277
      %v3298 = vadd.f32 %v3272, %v3278
      %v3299 = vadd.f32 %v3273, %v3277
      %v3300 = vadd.f32 %v3274, %v3278
      %v3301 = vmax.f32 %v3281, 0.0
      %v3302 = vmax.f32 %v3282, 0.0
      %v3303 = vmax.f32 %v3283, 0.0
      %v3304 = vmax.f32 %v3284, 0.0
      %v3305 = vmax.f32 %v3285, 0.0
      %v3306 = vmax.f32 %v3286, 0.0
      %v3307 = vmax.f32 %v3287, 0.0
      %v3308 = vmax.f32 %v3288, 0.0
      %v3309 = vmax.f32 %v3289, 0.0
      %v3310 = vmax.f32 %v3290, 0.0
      %v3311 = vmax.f32 %v3291, 0.0
      %v3312 = vmax.f32 %v3292, 0.0
      %v3313 = vmax.f32 %v3293, 0.0
      %v3314 = vmax.f32 %v3294, 0.0
      %v3315 = vmax.f32 %v3295, 0.0
      %v3316 = vmax.f32 %v3296, 0.0
      %v3317 = vmax.f32 %v3297, 0.0
      %v3318 = vmax.f32 %v3298, 0.0
      %v3319 = vmax.f32 %v3299, 0.0
      %v3320 = vmax.f32 %v3300, 0.0
      %v3321 = vpack.c.bf16 %v3303, %v3301
      %v3322 = vpack.c.bf16 %v3304, %v3302
      %v3323 = vpack.c.bf16 %v3307, %v3305
      %v3324 = vpack.c.bf16 %v3308, %v3306
      %v3325 = vpack.c.bf16 %v3311, %v3309
      %v3326 = vpack.c.bf16 %v3312, %v3310
      %v3327 = vpack.c.bf16 %v3315, %v3313
      %v3328 = vpack.c.bf16 %v3316, %v3314
      %v3329 = vpack.c.bf16 %v3319, %v3317
      %v3330 = vpack.c.bf16 %v3320, %v3318
      %v3331 = vld [vmem:[%s5] sm:$0xf]
      %v3332 = vld [vmem:[%s5 + $0x4] sm:$0xf]
      %v3333 = vld [vmem:[%s5 + $0x8] sm:$0xf]
      %v3334 = vld [vmem:[%s5 + $0xc] sm:$0xf]
      %v3335 = vld [vmem:[%s5 + $0x10] sm:$0xf]
      %v3336 = vld [vmem:[%s5 + $0x14] sm:$0xf]
      %v3337 = vld [vmem:[%s5 + $0x18] sm:$0xf]
      %v3338 = vld [vmem:[%s5 + $0x1c] sm:$0xf]
      %v3339 = vld [vmem:[%s5 + $0x20] sm:$0xf]
      %v3340 = vld [vmem:[%s5 + $0x24] sm:$0xf]
      %v3341 = vld [vmem:[%s5 + $0x28] sm:$0xf]
      %v3342 = vld [vmem:[%s5 + $0x2c] sm:$0xf]
      %v3343 = vld [vmem:[%s5 + $0x30] sm:$0xf]
      %v3344 = vld [vmem:[%s5 + $0x34] sm:$0xf]
      %v3345 = vld [vmem:[%s5 + $0x38] sm:$0xf]
      %v3346 = vld [vmem:[%s5 + $0x3c] sm:$0xf]
      %v3347 = vld [vmem:[%s5 + $0x40] sm:$0xf]
      %v3348 = vld [vmem:[%s5 + $0x44] sm:$0xf]
      %v3349 = vld [vmem:[%s5 + $0x48] sm:$0xf]
      %v3350 = vld [vmem:[%s5 + $0x4c] sm:$0xf]
      %v3351 = vld [vmem:[%s9] sm:$0x1]
      %v3353 = vperm.slane %v3351, 0
      %v3375 = vunpack.c.l.b16 %v3331
      %v3376 = vunpack.c.l.b16 %v3332
      %v3377 = vunpack.c.l.b16 %v3333
      %v3378 = vunpack.c.l.b16 %v3334
      %v3379 = vunpack.c.l.b16 %v3335
      %v3380 = vunpack.c.l.b16 %v3336
      %v3381 = vunpack.c.l.b16 %v3337
      %v3382 = vunpack.c.l.b16 %v3338
      %v3383 = vunpack.c.l.b16 %v3339
      %v3384 = vunpack.c.l.b16 %v3340
      %v3385 = vunpack.c.l.b16 %v3341
      %v3386 = vunpack.c.l.b16 %v3342
      %v3387 = vunpack.c.l.b16 %v3343
      %v3388 = vunpack.c.l.b16 %v3344
      %v3389 = vunpack.c.l.b16 %v3345
      %v3390 = vunpack.c.l.b16 %v3346
      %v3391 = vunpack.c.l.b16 %v3347
      %v3392 = vunpack.c.l.b16 %v3348
      %v3393 = vunpack.c.l.b16 %v3349
      %v3394 = vunpack.c.l.b16 %v3350
      %v3395 = vpack.c.b16 %v3376, %v3375
      %v3396 = vpack.c.b16 %v3378, %v3377
      %v3397 = vpack.c.b16 %v3380, %v3379
      %v3398 = vpack.c.b16 %v3382, %v3381
      %v3399 = vpack.c.b16 %v3384, %v3383
      %v3400 = vpack.c.b16 %v3386, %v3385
      %v3401 = vpack.c.b16 %v3388, %v3387
      %v3402 = vpack.c.b16 %v3390, %v3389
      %v3403 = vpack.c.b16 %v3392, %v3391
      %v3404 = vpack.c.b16 %v3394, %v3393
      %v3416 = vsel %vm1366, %v3322, 0
      %v3419 = vsel %vm1366, %v3324, 0
      %v3422 = vsel %vm1366, %v3326, 0
      %v3425 = vsel %vm1366, %v3328, 0
      %v3428 = vsel %vm1366, %v3330, 0
      %3430 = vmatpush.bf16.msra.mxu0 %v3402
      %3431 = vmatpush.bf16.msra.mxu0 %v3401
      %3432 = vmatpush.bf16.msra.mxu0 %v3400
      %3433 = vmatpush.bf16.msra.mxu0 %v3399
      %3434 = vmatpush.bf16.msra.mxu0 %v3398
      %3435 = vmatpush.bf16.msra.mxu0 %v3397
      %3436 = vmatpush.bf16.msra.mxu0 %v3396
      %3437 = vmatpush.bf16.msra.mxu0 %v3395
      %3438 = vmatmul.bf16.gmra.mxu0 %v3321
      %v3439 = vpop.f32.mrf.mxu0
      %v3440 = vadd.f32 %v3353, %v3439
      %v3441 = vpop.f32.mrf.mxu0
      %v3442 = vadd.f32 %v3353, %v3441
      %3443 = vmatmul.bf16.gmra.mxu0 %v3323
      %v3444 = vpop.f32.mrf.mxu0
      %v3445 = vadd.f32 %v3353, %v3444
      %v3446 = vpop.f32.mrf.mxu0
      %v3447 = vadd.f32 %v3353, %v3446
      %3448 = vmatmul.bf16.gmra.mxu0 %v3325
      %v3449 = vpop.f32.mrf.mxu0
      %v3450 = vadd.f32 %v3353, %v3449
      %v3451 = vpop.f32.mrf.mxu0
      %v3452 = vadd.f32 %v3353, %v3451
      %3453 = vmatmul.bf16.gmra.mxu0 %v3327
      %v3454 = vpop.f32.mrf.mxu0
      %v3455 = vadd.f32 %v3353, %v3454
      %v3456 = vpop.f32.mrf.mxu0
      %v3457 = vadd.f32 %v3353, %v3456
      %3458 = vmatmul.bf16.gmra.mxu0 %v3329
      %v3459 = vpop.f32.mrf.mxu0
      %v3460 = vadd.f32 %v3353, %v3459
      %v3461 = vpop.f32.mrf.mxu0
      %v3462 = vadd.f32 %v3353, %v3461
      %3463 = vdwg.mxu0
      %3464 = vmatpush.bf16.msra.mxu0 0
      %3465 = vmatpush.bf16.msra.mxu0 0
      %3466 = vmatpush.bf16.msra.mxu0 0
      %3467 = vmatpush.bf16.msra.mxu0 0
      %3468 = vmatpush.bf16.msra.mxu0 0
      %3469 = vmatpush.bf16.msra.mxu0 0
      %3470 = vmatpush.bf16.msra.mxu0 %v3404
      %3471 = vmatpush.bf16.msra.mxu0 %v3403
      %3472 = vmatmul.bf16.gmra.mxu0 %v3416
      %v3473 = vpop.f32.mrf.mxu0
      %v3474 = vadd.f32 %v3440, %v3473
      %v3475 = vpop.f32.mrf.mxu0
      %v3476 = vadd.f32 %v3442, %v3475
      %3477 = vmatmul.bf16.gmra.mxu0 %v3419
      %v3478 = vpop.f32.mrf.mxu0
      %v3479 = vadd.f32 %v3445, %v3478
      %v3480 = vpop.f32.mrf.mxu0
      %v3481 = vadd.f32 %v3447, %v3480
      %3482 = vmatmul.bf16.gmra.mxu0 %v3422
      %v3483 = vpop.f32.mrf.mxu0
      %v3484 = vadd.f32 %v3450, %v3483
      %v3485 = vpop.f32.mrf.mxu0
      %v3486 = vadd.f32 %v3452, %v3485
      %3487 = vmatmul.bf16.gmra.mxu0 %v3425
      %v3488 = vpop.f32.mrf.mxu0
      %v3489 = vadd.f32 %v3455, %v3488
      %v3490 = vpop.f32.mrf.mxu0
      %v3491 = vadd.f32 %v3457, %v3490
      %3492 = vmatmul.bf16.gmra.mxu0 %v3428
      %v3493 = vpop.f32.mrf.mxu0
      %v3494 = vadd.f32 %v3460, %v3493
      %v3495 = vpop.f32.mrf.mxu0
      %v3496 = vadd.f32 %v3462, %v3495
      %3497 = vdwg.mxu0
      %v3498 = vld [vmem:[%s10] sm:$0x1]
      %vm3499 = vcmp.gt.f32.partialorder %v3498, 0.0
      %v3500 = vxor.u32 %v3474, 2147483648
      %v3501 = vxor.u32 %v3476, 2147483648
      %v3502 = vxor.u32 %v3479, 2147483648
      %v3503 = vxor.u32 %v3481, 2147483648
      %v3504 = vxor.u32 %v3484, 2147483648
      %v3505 = vxor.u32 %v3486, 2147483648
      %v3506 = vxor.u32 %v3489, 2147483648
      %v3507 = vxor.u32 %v3491, 2147483648
      %v3508 = vxor.u32 %v3494, 2147483648
      %v3509 = vxor.u32 %v3496, 2147483648
      %v3510 = vmul.f32 %v3500, 1.442695
      %v3511 = vpow.pop %v3510
      %v3512 = vmul.f32 %v3501, 1.442695
      %v3513 = vpow.pop %v3512
      %v3514 = vmul.f32 %v3502, 1.442695
      %v3515 = vpow.pop %v3514
      %v3516 = vmul.f32 %v3503, 1.442695
      %v3517 = vpow.pop %v3516
      %v3518 = vmul.f32 %v3504, 1.442695
      %v3519 = vpow.pop %v3518
      %v3520 = vmul.f32 %v3505, 1.442695
      %v3521 = vpow.pop %v3520
      %v3522 = vmul.f32 %v3506, 1.442695
      %v3523 = vpow.pop %v3522
      %v3524 = vmul.f32 %v3507, 1.442695
      %v3525 = vpow.pop %v3524
      %v3526 = vmul.f32 %v3508, 1.442695
      %v3527 = vpow.pop %v3526
      %v3528 = vmul.f32 %v3509, 1.442695
      %v3529 = vpow.pop %v3528
      %v3530 = vadd.f32 %v3511, 1.0
      %v3531 = vadd.f32 %v3513, 1.0
      %v3532 = vadd.f32 %v3515, 1.0
      %v3533 = vadd.f32 %v3517, 1.0
      %v3534 = vadd.f32 %v3519, 1.0
      %v3535 = vadd.f32 %v3521, 1.0
      %v3536 = vadd.f32 %v3523, 1.0
      %v3537 = vadd.f32 %v3525, 1.0
      %v3538 = vadd.f32 %v3527, 1.0
      %v3539 = vadd.f32 %v3529, 1.0
      %v3540 = vrcp.pop %v3530
      %v3541 = vmul.f32 %v3530, %v3540
      %v3542 = vsub.f32 1.0, %v3541
      %v3543 = vmul.f32 %v3540, %v3542
      %v3544 = vadd.f32 %v3540, %v3543
      %vm3545 = vweird.f32 %v3530
      %vm3546 = vweird.f32 %v3540
      %vm3547 = vmor %vm3545, %vm3546
      %v3548 = vsel %vm3547, %v3540, %v3544
      %v3549 = vand.u32 2147483647, %v3530
      %vm3550 = vcmp.eq.f32.partialorder %v3549, 8.507059e+37
      %v3551 = vand.u32 %v3530, 2147483648
      %v3552 = vor.u32 1.1754944e-38, %v3551
      %v3553 = vsel %vm3550, %v3552, %v3548
      %v3554 = vmul.f32 1.0, %v3553
      %v3555 = vrcp.pop %v3531
      %v3556 = vmul.f32 %v3531, %v3555
      %v3557 = vsub.f32 1.0, %v3556
      %v3558 = vmul.f32 %v3555, %v3557
      %v3559 = vadd.f32 %v3555, %v3558
      %vm3560 = vweird.f32 %v3531
      %vm3561 = vweird.f32 %v3555
      %vm3562 = vmor %vm3560, %vm3561
      %v3563 = vsel %vm3562, %v3555, %v3559
      %v3564 = vand.u32 2147483647, %v3531
      %vm3565 = vcmp.eq.f32.partialorder %v3564, 8.507059e+37
      %v3566 = vand.u32 %v3531, 2147483648
      %v3567 = vor.u32 1.1754944e-38, %v3566
      %v3568 = vsel %vm3565, %v3567, %v3563
      %v3569 = vmul.f32 1.0, %v3568
      %v3570 = vrcp.pop %v3532
      %v3571 = vmul.f32 %v3532, %v3570
      %v3572 = vsub.f32 1.0, %v3571
      %v3573 = vmul.f32 %v3570, %v3572
      %v3574 = vadd.f32 %v3570, %v3573
      %vm3575 = vweird.f32 %v3532
      %vm3576 = vweird.f32 %v3570
      %vm3577 = vmor %vm3575, %vm3576
      %v3578 = vsel %vm3577, %v3570, %v3574
      %v3579 = vand.u32 2147483647, %v3532
      %vm3580 = vcmp.eq.f32.partialorder %v3579, 8.507059e+37
      %v3581 = vand.u32 %v3532, 2147483648
      %v3582 = vor.u32 1.1754944e-38, %v3581
      %v3583 = vsel %vm3580, %v3582, %v3578
      %v3584 = vmul.f32 1.0, %v3583
      %v3585 = vrcp.pop %v3533
      %v3586 = vmul.f32 %v3533, %v3585
      %v3587 = vsub.f32 1.0, %v3586
      %v3588 = vmul.f32 %v3585, %v3587
      %v3589 = vadd.f32 %v3585, %v3588
      %vm3590 = vweird.f32 %v3533
      %vm3591 = vweird.f32 %v3585
      %vm3592 = vmor %vm3590, %vm3591
      %v3593 = vsel %vm3592, %v3585, %v3589
      %v3594 = vand.u32 2147483647, %v3533
      %vm3595 = vcmp.eq.f32.partialorder %v3594, 8.507059e+37
      %v3596 = vand.u32 %v3533, 2147483648
      %v3597 = vor.u32 1.1754944e-38, %v3596
      %v3598 = vsel %vm3595, %v3597, %v3593
      %v3599 = vmul.f32 1.0, %v3598
      %v3600 = vrcp.pop %v3534
      %v3601 = vmul.f32 %v3534, %v3600
      %v3602 = vsub.f32 1.0, %v3601
      %v3603 = vmul.f32 %v3600, %v3602
      %v3604 = vadd.f32 %v3600, %v3603
      %vm3605 = vweird.f32 %v3534
      %vm3606 = vweird.f32 %v3600
      %vm3607 = vmor %vm3605, %vm3606
      %v3608 = vsel %vm3607, %v3600, %v3604
      %v3609 = vand.u32 2147483647, %v3534
      %vm3610 = vcmp.eq.f32.partialorder %v3609, 8.507059e+37
      %v3611 = vand.u32 %v3534, 2147483648
      %v3612 = vor.u32 1.1754944e-38, %v3611
      %v3613 = vsel %vm3610, %v3612, %v3608
      %v3614 = vmul.f32 1.0, %v3613
      %v3615 = vrcp.pop %v3535
      %v3616 = vmul.f32 %v3535, %v3615
      %v3617 = vsub.f32 1.0, %v3616
      %v3618 = vmul.f32 %v3615, %v3617
      %v3619 = vadd.f32 %v3615, %v3618
      %vm3620 = vweird.f32 %v3535
      %vm3621 = vweird.f32 %v3615
      %vm3622 = vmor %vm3620, %vm3621
      %v3623 = vsel %vm3622, %v3615, %v3619
      %v3624 = vand.u32 2147483647, %v3535
      %vm3625 = vcmp.eq.f32.partialorder %v3624, 8.507059e+37
      %v3626 = vand.u32 %v3535, 2147483648
      %v3627 = vor.u32 1.1754944e-38, %v3626
      %v3628 = vsel %vm3625, %v3627, %v3623
      %v3629 = vmul.f32 1.0, %v3628
      %v3630 = vrcp.pop %v3536
      %v3631 = vmul.f32 %v3536, %v3630
      %v3632 = vsub.f32 1.0, %v3631
      %v3633 = vmul.f32 %v3630, %v3632
      %v3634 = vadd.f32 %v3630, %v3633
      %vm3635 = vweird.f32 %v3536
      %vm3636 = vweird.f32 %v3630
      %vm3637 = vmor %vm3635, %vm3636
      %v3638 = vsel %vm3637, %v3630, %v3634
      %v3639 = vand.u32 2147483647, %v3536
      %vm3640 = vcmp.eq.f32.partialorder %v3639, 8.507059e+37
      %v3641 = vand.u32 %v3536, 2147483648
      %v3642 = vor.u32 1.1754944e-38, %v3641
      %v3643 = vsel %vm3640, %v3642, %v3638
      %v3644 = vmul.f32 1.0, %v3643
      %v3645 = vrcp.pop %v3537
      %v3646 = vmul.f32 %v3537, %v3645
      %v3647 = vsub.f32 1.0, %v3646
      %v3648 = vmul.f32 %v3645, %v3647
      %v3649 = vadd.f32 %v3645, %v3648
      %vm3650 = vweird.f32 %v3537
      %vm3651 = vweird.f32 %v3645
      %vm3652 = vmor %vm3650, %vm3651
      %v3653 = vsel %vm3652, %v3645, %v3649
      %v3654 = vand.u32 2147483647, %v3537
      %vm3655 = vcmp.eq.f32.partialorder %v3654, 8.507059e+37
      %v3656 = vand.u32 %v3537, 2147483648
      %v3657 = vor.u32 1.1754944e-38, %v3656
      %v3658 = vsel %vm3655, %v3657, %v3653
      %v3659 = vmul.f32 1.0, %v3658
      %v3660 = vrcp.pop %v3538
      %v3661 = vmul.f32 %v3538, %v3660
      %v3662 = vsub.f32 1.0, %v3661
      %v3663 = vmul.f32 %v3660, %v3662
      %v3664 = vadd.f32 %v3660, %v3663
      %vm3665 = vweird.f32 %v3538
      %vm3666 = vweird.f32 %v3660
      %vm3667 = vmor %vm3665, %vm3666
      %v3668 = vsel %vm3667, %v3660, %v3664
      %v3669 = vand.u32 2147483647, %v3538
      %vm3670 = vcmp.eq.f32.partialorder %v3669, 8.507059e+37
      %v3671 = vand.u32 %v3538, 2147483648
      %v3672 = vor.u32 1.1754944e-38, %v3671
      %v3673 = vsel %vm3670, %v3672, %v3668
      %v3674 = vmul.f32 1.0, %v3673
      %v3675 = vrcp.pop %v3539
      %v3676 = vmul.f32 %v3539, %v3675
      %v3677 = vsub.f32 1.0, %v3676
      %v3678 = vmul.f32 %v3675, %v3677
      %v3679 = vadd.f32 %v3675, %v3678
      %vm3680 = vweird.f32 %v3539
      %vm3681 = vweird.f32 %v3675
      %vm3682 = vmor %vm3680, %vm3681
      %v3683 = vsel %vm3682, %v3675, %v3679
      %v3684 = vand.u32 2147483647, %v3539
      %vm3685 = vcmp.eq.f32.partialorder %v3684, 8.507059e+37
      %v3686 = vand.u32 %v3539, 2147483648
      %v3687 = vor.u32 1.1754944e-38, %v3686
      %v3688 = vsel %vm3685, %v3687, %v3683
      %v3689 = vmul.f32 1.0, %v3688
      %v3690 = vsel %vm3499, 1, 0
      %v3691 = vperm.slane %v3690, 0
      %vm3692 = vcmp.eq.s32.totalorder %v3691, 1
      %v3693 = vsel %vm3692, %v3554, %v3474
      %v3694 = vsel %vm3692, %v3569, %v3476
      %v3695 = vsel %vm3692, %v3584, %v3479
      %v3696 = vsel %vm3692, %v3599, %v3481
      %v3697 = vsel %vm3692, %v3614, %v3484
      %v3698 = vsel %vm3692, %v3629, %v3486
      %v3699 = vsel %vm3692, %v3644, %v3489
      %v3700 = vsel %vm3692, %v3659, %v3491
      %v3701 = vsel %vm3692, %v3674, %v3494
      %v3702 = vsel %vm3692, %v3689, %v3496
      %3703 = vst [vmem:[%s440] sm:$0xff] %v3693
      %3704 = vst [vmem:[%s440 + $0x8] sm:$0xff] %v3694
      %3705 = vst [vmem:[%s440 + $0x10] sm:$0xff] %v3695
      %3706 = vst [vmem:[%s440 + $0x18] sm:$0xff] %v3696
      %3707 = vst [vmem:[%s440 + $0x20] sm:$0xff] %v3697
      %3708 = vst [vmem:[%s440 + $0x28] sm:$0xff] %v3698
      %3709 = vst [vmem:[%s440 + $0x30] sm:$0xff] %v3699
      %3710 = vst [vmem:[%s440 + $0x38] sm:$0xff] %v3700
      %3711 = vst [vmem:[%s440 + $0x40] sm:$0xff] %v3701
      %3712 = vst [vmem:[%s440 + $0x48] sm:$0xff] %v3702
      %v3713 = vld [vmem:[#allocation4 + $0x1] sm:$0xff]
      %v3714 = vld [vmem:[#allocation4 + $0x9] sm:$0xff]
      %v3715 = vld [vmem:[#allocation4 + $0x11] sm:$0xff]
      %v3716 = vld [vmem:[#allocation4 + $0x19] sm:$0xff]
      %v3717 = vld [vmem:[#allocation4 + $0x21] sm:$0xff]
      %v3718 = vld [vmem:[#allocation4 + $0x29] sm:$0xff]
      %v3719 = vld [vmem:[#allocation4 + $0x31] sm:$0xff]
      %v3720 = vld [vmem:[#allocation4 + $0x39] sm:$0xff]
      %v3721 = vld [vmem:[#allocation4 + $0x41] sm:$0xff]
      %v3722 = vld [vmem:[#allocation4 + $0x49] sm:$0xff]
      %v3723 = vpack.c.bf16 %v3714, %v3713
      %v3724 = vpack.c.bf16 %v3716, %v3715
      %v3725 = vpack.c.bf16 %v3718, %v3717
      %v3726 = vpack.c.bf16 %v3720, %v3719
      %v3727 = vpack.c.bf16 %v3722, %v3721
      %s3728 = scalar_lea.vmem %s4, 512
      %v3729 = vld [vmem:[%s3728] sm:$0xff]
      %v3730 = vld [vmem:[%s3728 + $0x8] sm:$0xff]
      %v3731 = vld [vmem:[%s3728 + $0x10] sm:$0xff]
      %v3732 = vld [vmem:[%s3728 + $0x18] sm:$0xff]
      %v3733 = vld [vmem:[%s3728 + $0x20] sm:$0xff]
      %v3734 = vld [vmem:[%s3728 + $0x28] sm:$0xff]
      %v3735 = vld [vmem:[%s3728 + $0x30] sm:$0xff]
      %v3736 = vld [vmem:[%s3728 + $0x38] sm:$0xff]
      %v3737 = vld [vmem:[%s3728 + $0x40] sm:$0xff]
      %v3738 = vld [vmem:[%s3728 + $0x48] sm:$0xff]
      %v3739 = vld [vmem:[%s3728 + $0x50] sm:$0xff]
      %v3740 = vld [vmem:[%s3728 + $0x58] sm:$0xff]
      %v3741 = vld [vmem:[%s3728 + $0x60] sm:$0xff]
      %v3742 = vld [vmem:[%s3728 + $0x68] sm:$0xff]
      %v3743 = vld [vmem:[%s3728 + $0x70] sm:$0xff]
      %v3744 = vld [vmem:[%s3728 + $0x78] sm:$0xff]
      %v3745 = vld [vmem:[#allocation4 + $0x2] sm:$0xff]
      %v3746 = vld [vmem:[#allocation4 + $0xa] sm:$0xff]
      %v3747 = vld [vmem:[#allocation4 + $0x12] sm:$0xff]
      %v3748 = vld [vmem:[#allocation4 + $0x1a] sm:$0xff]
      %v3749 = vld [vmem:[#allocation4 + $0x22] sm:$0xff]
      %v3750 = vld [vmem:[#allocation4 + $0x2a] sm:$0xff]
      %v3751 = vld [vmem:[#allocation4 + $0x32] sm:$0xff]
      %v3752 = vld [vmem:[#allocation4 + $0x3a] sm:$0xff]
      %v3753 = vld [vmem:[#allocation4 + $0x42] sm:$0xff]
      %v3754 = vld [vmem:[#allocation4 + $0x4a] sm:$0xff]
      %v3755 = vpack.c.bf16 %v3746, %v3745
      %v3756 = vpack.c.bf16 %v3748, %v3747
      %v3757 = vpack.c.bf16 %v3750, %v3749
      %v3758 = vpack.c.bf16 %v3752, %v3751
      %v3759 = vpack.c.bf16 %v3754, %v3753
      %s3760 = scalar_lea.vmem %s4, 640
      %v3761 = vld [vmem:[%s3760] sm:$0xff]
      %v3762 = vld [vmem:[%s3760 + $0x8] sm:$0xff]
      %v3763 = vld [vmem:[%s3760 + $0x10] sm:$0xff]
      %v3764 = vld [vmem:[%s3760 + $0x18] sm:$0xff]
      %v3765 = vld [vmem:[%s3760 + $0x20] sm:$0xff]
      %v3766 = vld [vmem:[%s3760 + $0x28] sm:$0xff]
      %v3767 = vld [vmem:[%s3760 + $0x30] sm:$0xff]
      %v3768 = vld [vmem:[%s3760 + $0x38] sm:$0xff]
      %v3769 = vld [vmem:[%s3760 + $0x40] sm:$0xff]
      %v3770 = vld [vmem:[%s3760 + $0x48] sm:$0xff]
      %v3771 = vld [vmem:[%s3760 + $0x50] sm:$0xff]
      %v3772 = vld [vmem:[%s3760 + $0x58] sm:$0xff]
      %v3773 = vld [vmem:[%s3760 + $0x60] sm:$0xff]
      %v3774 = vld [vmem:[%s3760 + $0x68] sm:$0xff]
      %v3775 = vld [vmem:[%s3760 + $0x70] sm:$0xff]
      %v3776 = vld [vmem:[%s3760 + $0x78] sm:$0xff]
      %v3793 = vunpack.c.l.b16 %v3761
      %v3794 = vunpack.c.h.b16 %v3761
      %v3795 = vunpack.c.l.b16 %v3762
      %v3796 = vunpack.c.h.b16 %v3762
      %v3797 = vunpack.c.l.b16 %v3763
      %v3798 = vunpack.c.h.b16 %v3763
      %v3799 = vunpack.c.l.b16 %v3764
      %v3800 = vunpack.c.h.b16 %v3764
      %v3801 = vunpack.c.l.b16 %v3765
      %v3802 = vunpack.c.h.b16 %v3765
      %v3803 = vunpack.c.l.b16 %v3766
      %v3804 = vunpack.c.h.b16 %v3766
      %v3805 = vunpack.c.l.b16 %v3767
      %v3806 = vunpack.c.h.b16 %v3767
      %v3807 = vunpack.c.l.b16 %v3768
      %v3808 = vunpack.c.h.b16 %v3768
      %v3809 = vunpack.c.l.b16 %v3769
      %v3810 = vunpack.c.h.b16 %v3769
      %v3811 = vunpack.c.l.b16 %v3770
      %v3812 = vunpack.c.h.b16 %v3770
      %v3813 = vunpack.c.l.b16 %v3771
      %v3814 = vunpack.c.h.b16 %v3771
      %v3815 = vunpack.c.l.b16 %v3772
      %v3816 = vunpack.c.h.b16 %v3772
      %v3817 = vunpack.c.l.b16 %v3773
      %v3818 = vunpack.c.h.b16 %v3773
      %v3819 = vunpack.c.l.b16 %v3774
      %v3820 = vunpack.c.h.b16 %v3774
      %v3821 = vunpack.c.l.b16 %v3775
      %v3822 = vunpack.c.h.b16 %v3775
      %v3823 = vunpack.c.l.b16 %v3776
      %v3824 = vunpack.c.h.b16 %v3776
      %v3825 = vpack.c.b16 %v3795, %v3793
      %v3826 = vpack.c.b16 %v3796, %v3794
      %v3827 = vpack.c.b16 %v3799, %v3797
      %v3828 = vpack.c.b16 %v3800, %v3798
      %v3829 = vpack.c.b16 %v3803, %v3801
      %v3830 = vpack.c.b16 %v3804, %v3802
      %v3831 = vpack.c.b16 %v3807, %v3805
      %v3832 = vpack.c.b16 %v3808, %v3806
      %v3833 = vpack.c.b16 %v3811, %v3809
      %v3834 = vpack.c.b16 %v3812, %v3810
      %v3835 = vpack.c.b16 %v3815, %v3813
      %v3836 = vpack.c.b16 %v3816, %v3814
      %v3837 = vpack.c.b16 %v3819, %v3817
      %v3838 = vpack.c.b16 %v3820, %v3818
      %v3839 = vpack.c.b16 %v3823, %v3821
      %v3840 = vpack.c.b16 %v3824, %v3822
      %3857 = vmatpush.bf16.msra.mxu0 %v3839
      %3858 = vmatpush.bf16.msra.mxu0 %v3837
      %3859 = vmatpush.bf16.msra.mxu0 %v3835
      %3860 = vmatpush.bf16.msra.mxu0 %v3833
      %3861 = vmatpush.bf16.msra.mxu0 %v3831
      %3862 = vmatpush.bf16.msra.mxu0 %v3829
      %3863 = vmatpush.bf16.msra.mxu0 %v3827
      %3864 = vmatpush.bf16.msra.mxu0 %v3825
      %3865 = vmatmul.bf16.gmra.mxu0 %v3755
      %v3866 = vpop.f32.mrf.mxu0
      %v3867 = vadd.f32 0.0, %v3866
      %v3868 = vpop.f32.mrf.mxu0
      %v3869 = vadd.f32 0.0, %v3868
      %3870 = vmatmul.bf16.gmra.mxu0 %v3756
      %v3871 = vpop.f32.mrf.mxu0
      %v3872 = vadd.f32 0.0, %v3871
      %v3873 = vpop.f32.mrf.mxu0
      %v3874 = vadd.f32 0.0, %v3873
      %3875 = vmatmul.bf16.gmra.mxu0 %v3757
      %v3876 = vpop.f32.mrf.mxu0
      %v3877 = vadd.f32 0.0, %v3876
      %v3878 = vpop.f32.mrf.mxu0
      %v3879 = vadd.f32 0.0, %v3878
      %3880 = vmatmul.bf16.gmra.mxu0 %v3758
      %v3881 = vpop.f32.mrf.mxu0
      %v3882 = vadd.f32 0.0, %v3881
      %v3883 = vpop.f32.mrf.mxu0
      %v3884 = vadd.f32 0.0, %v3883
      %3885 = vmatmul.bf16.gmra.mxu0 %v3759
      %v3886 = vpop.f32.mrf.mxu0
      %v3887 = vadd.f32 0.0, %v3886
      %v3888 = vpop.f32.mrf.mxu0
      %v3889 = vadd.f32 0.0, %v3888
      %3890 = vdwg.mxu0
      %3891 = vmatpush.bf16.msra.mxu0 %v3840
      %3892 = vmatpush.bf16.msra.mxu0 %v3838
      %3893 = vmatpush.bf16.msra.mxu0 %v3836
      %3894 = vmatpush.bf16.msra.mxu0 %v3834
      %3895 = vmatpush.bf16.msra.mxu0 %v3832
      %3896 = vmatpush.bf16.msra.mxu0 %v3830
      %3897 = vmatpush.bf16.msra.mxu0 %v3828
      %3898 = vmatpush.bf16.msra.mxu0 %v3826
      %3899 = vmatmul.bf16.gmra.mxu0 %v3755
      %v3900 = vpop.f32.mrf.mxu0
      %v3901 = vadd.f32 0.0, %v3900
      %v3902 = vpop.f32.mrf.mxu0
      %v3903 = vadd.f32 0.0, %v3902
      %3904 = vmatmul.bf16.gmra.mxu0 %v3756
      %v3905 = vpop.f32.mrf.mxu0
      %v3906 = vadd.f32 0.0, %v3905
      %v3907 = vpop.f32.mrf.mxu0
      %v3908 = vadd.f32 0.0, %v3907
      %3909 = vmatmul.bf16.gmra.mxu0 %v3757
      %v3910 = vpop.f32.mrf.mxu0
      %v3911 = vadd.f32 0.0, %v3910
      %v3912 = vpop.f32.mrf.mxu0
      %v3913 = vadd.f32 0.0, %v3912
      %3914 = vmatmul.bf16.gmra.mxu0 %v3758
      %v3915 = vpop.f32.mrf.mxu0
      %v3916 = vadd.f32 0.0, %v3915
      %v3917 = vpop.f32.mrf.mxu0
      %v3918 = vadd.f32 0.0, %v3917
      %3919 = vmatmul.bf16.gmra.mxu0 %v3759
      %v3920 = vpop.f32.mrf.mxu0
      %v3921 = vadd.f32 0.0, %v3920
      %v3922 = vpop.f32.mrf.mxu0
      %v3923 = vadd.f32 0.0, %v3922
      %3924 = vdwg.mxu0
      %v3941 = vunpack.c.l.b16 %v3729
      %v3942 = vunpack.c.h.b16 %v3729
      %v3943 = vunpack.c.l.b16 %v3730
      %v3944 = vunpack.c.h.b16 %v3730
      %v3945 = vunpack.c.l.b16 %v3731
      %v3946 = vunpack.c.h.b16 %v3731
      %v3947 = vunpack.c.l.b16 %v3732
      %v3948 = vunpack.c.h.b16 %v3732
      %v3949 = vunpack.c.l.b16 %v3733
      %v3950 = vunpack.c.h.b16 %v3733
      %v3951 = vunpack.c.l.b16 %v3734
      %v3952 = vunpack.c.h.b16 %v3734
      %v3953 = vunpack.c.l.b16 %v3735
      %v3954 = vunpack.c.h.b16 %v3735
      %v3955 = vunpack.c.l.b16 %v3736
      %v3956 = vunpack.c.h.b16 %v3736
      %v3957 = vunpack.c.l.b16 %v3737
      %v3958 = vunpack.c.h.b16 %v3737
      %v3959 = vunpack.c.l.b16 %v3738
      %v3960 = vunpack.c.h.b16 %v3738
      %v3961 = vunpack.c.l.b16 %v3739
      %v3962 = vunpack.c.h.b16 %v3739
      %v3963 = vunpack.c.l.b16 %v3740
      %v3964 = vunpack.c.h.b16 %v3740
      %v3965 = vunpack.c.l.b16 %v3741
      %v3966 = vunpack.c.h.b16 %v3741
      %v3967 = vunpack.c.l.b16 %v3742
      %v3968 = vunpack.c.h.b16 %v3742
      %v3969 = vunpack.c.l.b16 %v3743
      %v3970 = vunpack.c.h.b16 %v3743
      %v3971 = vunpack.c.l.b16 %v3744
      %v3972 = vunpack.c.h.b16 %v3744
      %v3973 = vpack.c.b16 %v3943, %v3941
      %v3974 = vpack.c.b16 %v3944, %v3942
      %v3975 = vpack.c.b16 %v3947, %v3945
      %v3976 = vpack.c.b16 %v3948, %v3946
      %v3977 = vpack.c.b16 %v3951, %v3949
      %v3978 = vpack.c.b16 %v3952, %v3950
      %v3979 = vpack.c.b16 %v3955, %v3953
      %v3980 = vpack.c.b16 %v3956, %v3954
      %v3981 = vpack.c.b16 %v3959, %v3957
      %v3982 = vpack.c.b16 %v3960, %v3958
      %v3983 = vpack.c.b16 %v3963, %v3961
      %v3984 = vpack.c.b16 %v3964, %v3962
      %v3985 = vpack.c.b16 %v3967, %v3965
      %v3986 = vpack.c.b16 %v3968, %v3966
      %v3987 = vpack.c.b16 %v3971, %v3969
      %v3988 = vpack.c.b16 %v3972, %v3970
      %4005 = vmatpush.bf16.msra.mxu0 %v3987
      %4006 = vmatpush.bf16.msra.mxu0 %v3985
      %4007 = vmatpush.bf16.msra.mxu0 %v3983
      %4008 = vmatpush.bf16.msra.mxu0 %v3981
      %4009 = vmatpush.bf16.msra.mxu0 %v3979
      %4010 = vmatpush.bf16.msra.mxu0 %v3977
      %4011 = vmatpush.bf16.msra.mxu0 %v3975
      %4012 = vmatpush.bf16.msra.mxu0 %v3973
      %4013 = vmatmul.bf16.gmra.mxu0 %v3723
      %v4014 = vpop.f32.mrf.mxu0
      %v4015 = vadd.f32 %v3867, %v4014
      %v4016 = vpop.f32.mrf.mxu0
      %v4017 = vadd.f32 %v3869, %v4016
      %4018 = vmatmul.bf16.gmra.mxu0 %v3724
      %v4019 = vpop.f32.mrf.mxu0
      %v4020 = vadd.f32 %v3872, %v4019
      %v4021 = vpop.f32.mrf.mxu0
      %v4022 = vadd.f32 %v3874, %v4021
      %4023 = vmatmul.bf16.gmra.mxu0 %v3725
      %v4024 = vpop.f32.mrf.mxu0
      %v4025 = vadd.f32 %v3877, %v4024
      %v4026 = vpop.f32.mrf.mxu0
      %v4027 = vadd.f32 %v3879, %v4026
      %4028 = vmatmul.bf16.gmra.mxu0 %v3726
      %v4029 = vpop.f32.mrf.mxu0
      %v4030 = vadd.f32 %v3882, %v4029
      %v4031 = vpop.f32.mrf.mxu0
      %v4032 = vadd.f32 %v3884, %v4031
      %4033 = vmatmul.bf16.gmra.mxu0 %v3727
      %v4034 = vpop.f32.mrf.mxu0
      %v4035 = vadd.f32 %v3887, %v4034
      %v4036 = vpop.f32.mrf.mxu0
      %v4037 = vadd.f32 %v3889, %v4036
      %4038 = vdwg.mxu0
      %4039 = vmatpush.bf16.msra.mxu0 %v3988
      %4040 = vmatpush.bf16.msra.mxu0 %v3986
      %4041 = vmatpush.bf16.msra.mxu0 %v3984
      %4042 = vmatpush.bf16.msra.mxu0 %v3982
      %4043 = vmatpush.bf16.msra.mxu0 %v3980
      %4044 = vmatpush.bf16.msra.mxu0 %v3978
      %4045 = vmatpush.bf16.msra.mxu0 %v3976
      %4046 = vmatpush.bf16.msra.mxu0 %v3974
      %4047 = vmatmul.bf16.gmra.mxu0 %v3723
      %v4048 = vpop.f32.mrf.mxu0
      %v4049 = vadd.f32 %v3901, %v4048
      %v4050 = vpop.f32.mrf.mxu0
      %v4051 = vadd.f32 %v3903, %v4050
      %4052 = vmatmul.bf16.gmra.mxu0 %v3724
      %v4053 = vpop.f32.mrf.mxu0
      %v4054 = vadd.f32 %v3906, %v4053
      %v4055 = vpop.f32.mrf.mxu0
      %v4056 = vadd.f32 %v3908, %v4055
      %4057 = vmatmul.bf16.gmra.mxu0 %v3725
      %v4058 = vpop.f32.mrf.mxu0
      %v4059 = vadd.f32 %v3911, %v4058
      %v4060 = vpop.f32.mrf.mxu0
      %v4061 = vadd.f32 %v3913, %v4060
      %4062 = vmatmul.bf16.gmra.mxu0 %v3726
      %v4063 = vpop.f32.mrf.mxu0
      %v4064 = vadd.f32 %v3916, %v4063
      %v4065 = vpop.f32.mrf.mxu0
      %v4066 = vadd.f32 %v3918, %v4065
      %4067 = vmatmul.bf16.gmra.mxu0 %v3727
      %v4068 = vpop.f32.mrf.mxu0
      %v4069 = vadd.f32 %v3921, %v4068
      %v4070 = vpop.f32.mrf.mxu0
      %v4071 = vadd.f32 %v3923, %v4070
      %4072 = vdwg.mxu0
      %v4073 = vld [vmem:[#allocation4 + $0xb] sm:$0xff]
      %v4074 = vld [vmem:[#allocation4 + $0x13] sm:$0xff]
      %v4075 = vld [vmem:[#allocation4 + $0x1b] sm:$0xff]
      %v4076 = vld [vmem:[#allocation4 + $0x23] sm:$0xff]
      %v4077 = vld [vmem:[#allocation4 + $0x2b] sm:$0xff]
      %v4078 = vld [vmem:[#allocation4 + $0x33] sm:$0xff]
      %v4079 = vld [vmem:[#allocation4 + $0x3b] sm:$0xff]
      %v4080 = vld [vmem:[#allocation4 + $0x43] sm:$0xff]
      %v4081 = vld [vmem:[#allocation4 + $0x4b] sm:$0xff]
      %v4082 = vld [vmem:[#allocation4 + $0x53] sm:$0xff]
      %v4083 = vpack.c.bf16 %v4074, %v4073
      %v4084 = vpack.c.bf16 %v4076, %v4075
      %v4085 = vpack.c.bf16 %v4078, %v4077
      %v4086 = vpack.c.bf16 %v4080, %v4079
      %v4087 = vpack.c.bf16 %v4082, %v4081
      %s4088 = scalar_lea.vmem %s4, 768
      %v4089 = vld [vmem:[%s4088] sm:$0xff]
      %v4090 = vld [vmem:[%s4088 + $0x8] sm:$0xff]
      %v4091 = vld [vmem:[%s4088 + $0x10] sm:$0xff]
      %v4092 = vld [vmem:[%s4088 + $0x18] sm:$0xff]
      %v4093 = vld [vmem:[%s4088 + $0x20] sm:$0xff]
      %v4094 = vld [vmem:[%s4088 + $0x28] sm:$0xff]
      %v4095 = vld [vmem:[%s4088 + $0x30] sm:$0xff]
      %v4096 = vld [vmem:[%s4088 + $0x38] sm:$0xff]
      %v4097 = vld [vmem:[%s4088 + $0x40] sm:$0xff]
      %v4098 = vld [vmem:[%s4088 + $0x48] sm:$0xff]
      %v4099 = vld [vmem:[%s4088 + $0x50] sm:$0xff]
      %v4100 = vld [vmem:[%s4088 + $0x58] sm:$0xff]
      %v4101 = vld [vmem:[%s4088 + $0x60] sm:$0xff]
      %v4102 = vld [vmem:[%s4088 + $0x68] sm:$0xff]
      %v4103 = vld [vmem:[%s4088 + $0x70] sm:$0xff]
      %v4104 = vld [vmem:[%s4088 + $0x78] sm:$0xff]
      %v4121 = vunpack.c.l.b16 %v4089
      %v4122 = vunpack.c.h.b16 %v4089
      %v4123 = vunpack.c.l.b16 %v4090
      %v4124 = vunpack.c.h.b16 %v4090
      %v4125 = vunpack.c.l.b16 %v4091
      %v4126 = vunpack.c.h.b16 %v4091
      %v4127 = vunpack.c.l.b16 %v4092
      %v4128 = vunpack.c.h.b16 %v4092
      %v4129 = vunpack.c.l.b16 %v4093
      %v4130 = vunpack.c.h.b16 %v4093
      %v4131 = vunpack.c.l.b16 %v4094
      %v4132 = vunpack.c.h.b16 %v4094
      %v4133 = vunpack.c.l.b16 %v4095
      %v4134 = vunpack.c.h.b16 %v4095
      %v4135 = vunpack.c.l.b16 %v4096
      %v4136 = vunpack.c.h.b16 %v4096
      %v4137 = vunpack.c.l.b16 %v4097
      %v4138 = vunpack.c.h.b16 %v4097
      %v4139 = vunpack.c.l.b16 %v4098
      %v4140 = vunpack.c.h.b16 %v4098
      %v4141 = vunpack.c.l.b16 %v4099
      %v4142 = vunpack.c.h.b16 %v4099
      %v4143 = vunpack.c.l.b16 %v4100
      %v4144 = vunpack.c.h.b16 %v4100
      %v4145 = vunpack.c.l.b16 %v4101
      %v4146 = vunpack.c.h.b16 %v4101
      %v4147 = vunpack.c.l.b16 %v4102
      %v4148 = vunpack.c.h.b16 %v4102
      %v4149 = vunpack.c.l.b16 %v4103
      %v4150 = vunpack.c.h.b16 %v4103
      %v4151 = vunpack.c.l.b16 %v4104
      %v4152 = vunpack.c.h.b16 %v4104
      %v4153 = vpack.c.b16 %v4123, %v4121
      %v4154 = vpack.c.b16 %v4124, %v4122
      %v4155 = vpack.c.b16 %v4127, %v4125
      %v4156 = vpack.c.b16 %v4128, %v4126
      %v4157 = vpack.c.b16 %v4131, %v4129
      %v4158 = vpack.c.b16 %v4132, %v4130
      %v4159 = vpack.c.b16 %v4135, %v4133
      %v4160 = vpack.c.b16 %v4136, %v4134
      %v4161 = vpack.c.b16 %v4139, %v4137
      %v4162 = vpack.c.b16 %v4140, %v4138
      %v4163 = vpack.c.b16 %v4143, %v4141
      %v4164 = vpack.c.b16 %v4144, %v4142
      %v4165 = vpack.c.b16 %v4147, %v4145
      %v4166 = vpack.c.b16 %v4148, %v4146
      %v4167 = vpack.c.b16 %v4151, %v4149
      %v4168 = vpack.c.b16 %v4152, %v4150
      %4185 = vmatpush.bf16.msra.mxu0 %v4167
      %4186 = vmatpush.bf16.msra.mxu0 %v4165
      %4187 = vmatpush.bf16.msra.mxu0 %v4163
      %4188 = vmatpush.bf16.msra.mxu0 %v4161
      %4189 = vmatpush.bf16.msra.mxu0 %v4159
      %4190 = vmatpush.bf16.msra.mxu0 %v4157
      %4191 = vmatpush.bf16.msra.mxu0 %v4155
      %4192 = vmatpush.bf16.msra.mxu0 %v4153
      %4193 = vmatmul.bf16.gmra.mxu0 %v4083
      %v4194 = vpop.f32.mrf.mxu0
      %v4195 = vadd.f32 0.0, %v4194
      %v4196 = vpop.f32.mrf.mxu0
      %v4197 = vadd.f32 0.0, %v4196
      %4198 = vmatmul.bf16.gmra.mxu0 %v4084
      %v4199 = vpop.f32.mrf.mxu0
      %v4200 = vadd.f32 0.0, %v4199
      %v4201 = vpop.f32.mrf.mxu0
      %v4202 = vadd.f32 0.0, %v4201
      %4203 = vmatmul.bf16.gmra.mxu0 %v4085
      %v4204 = vpop.f32.mrf.mxu0
      %v4205 = vadd.f32 0.0, %v4204
      %v4206 = vpop.f32.mrf.mxu0
      %v4207 = vadd.f32 0.0, %v4206
      %4208 = vmatmul.bf16.gmra.mxu0 %v4086
      %v4209 = vpop.f32.mrf.mxu0
      %v4210 = vadd.f32 0.0, %v4209
      %v4211 = vpop.f32.mrf.mxu0
      %v4212 = vadd.f32 0.0, %v4211
      %4213 = vmatmul.bf16.gmra.mxu0 %v4087
      %v4214 = vpop.f32.mrf.mxu0
      %v4215 = vadd.f32 0.0, %v4214
      %v4216 = vpop.f32.mrf.mxu0
      %v4217 = vadd.f32 0.0, %v4216
      %4218 = vdwg.mxu0
      %4219 = vmatpush.bf16.msra.mxu0 %v4168
      %4220 = vmatpush.bf16.msra.mxu0 %v4166
      %4221 = vmatpush.bf16.msra.mxu0 %v4164
      %4222 = vmatpush.bf16.msra.mxu0 %v4162
      %4223 = vmatpush.bf16.msra.mxu0 %v4160
      %4224 = vmatpush.bf16.msra.mxu0 %v4158
      %4225 = vmatpush.bf16.msra.mxu0 %v4156
      %4226 = vmatpush.bf16.msra.mxu0 %v4154
      %4227 = vmatmul.bf16.gmra.mxu0 %v4083
      %v4228 = vpop.f32.mrf.mxu0
      %v4229 = vadd.f32 0.0, %v4228
      %v4230 = vpop.f32.mrf.mxu0
      %v4231 = vadd.f32 0.0, %v4230
      %4232 = vmatmul.bf16.gmra.mxu0 %v4084
      %v4233 = vpop.f32.mrf.mxu0
      %v4234 = vadd.f32 0.0, %v4233
      %v4235 = vpop.f32.mrf.mxu0
      %v4236 = vadd.f32 0.0, %v4235
      %4237 = vmatmul.bf16.gmra.mxu0 %v4085
      %v4238 = vpop.f32.mrf.mxu0
      %v4239 = vadd.f32 0.0, %v4238
      %v4240 = vpop.f32.mrf.mxu0
      %v4241 = vadd.f32 0.0, %v4240
      %4242 = vmatmul.bf16.gmra.mxu0 %v4086
      %v4243 = vpop.f32.mrf.mxu0
      %v4244 = vadd.f32 0.0, %v4243
      %v4245 = vpop.f32.mrf.mxu0
      %v4246 = vadd.f32 0.0, %v4245
      %4247 = vmatmul.bf16.gmra.mxu0 %v4087
      %v4248 = vpop.f32.mrf.mxu0
      %v4249 = vadd.f32 0.0, %v4248
      %v4250 = vpop.f32.mrf.mxu0
      %v4251 = vadd.f32 0.0, %v4250
      %4252 = vdwg.mxu0
      %v4253 = vadd.f32 %v4015, %v4195
      %v4254 = vadd.f32 %v4049, %v4229
      %v4255 = vadd.f32 %v4017, %v4197
      %v4256 = vadd.f32 %v4051, %v4231
      %v4257 = vadd.f32 %v4020, %v4200
      %v4258 = vadd.f32 %v4054, %v4234
      %v4259 = vadd.f32 %v4022, %v4202
      %v4260 = vadd.f32 %v4056, %v4236
      %v4261 = vadd.f32 %v4025, %v4205
      %v4262 = vadd.f32 %v4059, %v4239
      %v4263 = vadd.f32 %v4027, %v4207
      %v4264 = vadd.f32 %v4061, %v4241
      %v4265 = vadd.f32 %v4030, %v4210
      %v4266 = vadd.f32 %v4064, %v4244
      %v4267 = vadd.f32 %v4032, %v4212
      %v4268 = vadd.f32 %v4066, %v4246
      %v4269 = vadd.f32 %v4035, %v4215
      %v4270 = vadd.f32 %v4069, %v4249
      %v4271 = vadd.f32 %v4037, %v4217
      %v4272 = vadd.f32 %v4071, %v4251
      %v4273 = vld [vmem:[#allocation4 + $0xc] sm:$0xff]
      %v4274 = vld [vmem:[#allocation4 + $0x14] sm:$0xff]
      %v4275 = vld [vmem:[#allocation4 + $0x1c] sm:$0xff]
      %v4276 = vld [vmem:[#allocation4 + $0x24] sm:$0xff]
      %v4277 = vld [vmem:[#allocation4 + $0x2c] sm:$0xff]
      %v4278 = vld [vmem:[#allocation4 + $0x34] sm:$0xff]
      %v4279 = vld [vmem:[#allocation4 + $0x3c] sm:$0xff]
      %v4280 = vld [vmem:[#allocation4 + $0x44] sm:$0xff]
      %v4281 = vld [vmem:[#allocation4 + $0x4c] sm:$0xff]
      %v4282 = vld [vmem:[#allocation4 + $0x54] sm:$0xff]
      %v4283 = vpack.c.bf16 %v4274, %v4273
      %v4284 = vpack.c.bf16 %v4276, %v4275
      %v4285 = vpack.c.bf16 %v4278, %v4277
      %v4286 = vpack.c.bf16 %v4280, %v4279
      %v4287 = vpack.c.bf16 %v4282, %v4281
      %s4288 = scalar_lea.vmem %s4, 896
      %v4289 = vld [vmem:[%s4288] sm:$0xff]
      %v4290 = vld [vmem:[%s4288 + $0x8] sm:$0xff]
      %v4291 = vld [vmem:[%s4288 + $0x10] sm:$0xff]
      %v4292 = vld [vmem:[%s4288 + $0x18] sm:$0xff]
      %v4293 = vld [vmem:[%s4288 + $0x20] sm:$0xff]
      %v4294 = vld [vmem:[%s4288 + $0x28] sm:$0xff]
      %v4295 = vld [vmem:[%s4288 + $0x30] sm:$0xff]
      %v4296 = vld [vmem:[%s4288 + $0x38] sm:$0xff]
      %v4297 = vld [vmem:[%s4288 + $0x40] sm:$0xff]
      %v4298 = vld [vmem:[%s4288 + $0x48] sm:$0xff]
      %v4299 = vld [vmem:[%s4288 + $0x50] sm:$0xff]
      %v4300 = vld [vmem:[%s4288 + $0x58] sm:$0xff]
      %v4301 = vld [vmem:[%s4288 + $0x60] sm:$0xff]
      %v4302 = vld [vmem:[%s4288 + $0x68] sm:$0xff]
      %v4303 = vld [vmem:[%s4288 + $0x70] sm:$0xff]
      %v4304 = vld [vmem:[%s4288 + $0x78] sm:$0xff]
      %v4321 = vunpack.c.l.b16 %v4289
      %v4322 = vunpack.c.h.b16 %v4289
      %v4323 = vunpack.c.l.b16 %v4290
      %v4324 = vunpack.c.h.b16 %v4290
      %v4325 = vunpack.c.l.b16 %v4291
      %v4326 = vunpack.c.h.b16 %v4291
      %v4327 = vunpack.c.l.b16 %v4292
      %v4328 = vunpack.c.h.b16 %v4292
      %v4329 = vunpack.c.l.b16 %v4293
      %v4330 = vunpack.c.h.b16 %v4293
      %v4331 = vunpack.c.l.b16 %v4294
      %v4332 = vunpack.c.h.b16 %v4294
      %v4333 = vunpack.c.l.b16 %v4295
      %v4334 = vunpack.c.h.b16 %v4295
      %v4335 = vunpack.c.l.b16 %v4296
      %v4336 = vunpack.c.h.b16 %v4296
      %v4337 = vunpack.c.l.b16 %v4297
      %v4338 = vunpack.c.h.b16 %v4297
      %v4339 = vunpack.c.l.b16 %v4298
      %v4340 = vunpack.c.h.b16 %v4298
      %v4341 = vunpack.c.l.b16 %v4299
      %v4342 = vunpack.c.h.b16 %v4299
      %v4343 = vunpack.c.l.b16 %v4300
      %v4344 = vunpack.c.h.b16 %v4300
      %v4345 = vunpack.c.l.b16 %v4301
      %v4346 = vunpack.c.h.b16 %v4301
      %v4347 = vunpack.c.l.b16 %v4302
      %v4348 = vunpack.c.h.b16 %v4302
      %v4349 = vunpack.c.l.b16 %v4303
      %v4350 = vunpack.c.h.b16 %v4303
      %v4351 = vunpack.c.l.b16 %v4304
      %v4352 = vunpack.c.h.b16 %v4304
      %v4353 = vpack.c.b16 %v4323, %v4321
      %v4354 = vpack.c.b16 %v4324, %v4322
      %v4355 = vpack.c.b16 %v4327, %v4325
      %v4356 = vpack.c.b16 %v4328, %v4326
      %v4357 = vpack.c.b16 %v4331, %v4329
      %v4358 = vpack.c.b16 %v4332, %v4330
      %v4359 = vpack.c.b16 %v4335, %v4333
      %v4360 = vpack.c.b16 %v4336, %v4334
      %v4361 = vpack.c.b16 %v4339, %v4337
      %v4362 = vpack.c.b16 %v4340, %v4338
      %v4363 = vpack.c.b16 %v4343, %v4341
      %v4364 = vpack.c.b16 %v4344, %v4342
      %v4365 = vpack.c.b16 %v4347, %v4345
      %v4366 = vpack.c.b16 %v4348, %v4346
      %v4367 = vpack.c.b16 %v4351, %v4349
      %v4368 = vpack.c.b16 %v4352, %v4350
      %4385 = vmatpush.bf16.msra.mxu0 %v4367
      %4386 = vmatpush.bf16.msra.mxu0 %v4365
      %4387 = vmatpush.bf16.msra.mxu0 %v4363
      %4388 = vmatpush.bf16.msra.mxu0 %v4361
      %4389 = vmatpush.bf16.msra.mxu0 %v4359
      %4390 = vmatpush.bf16.msra.mxu0 %v4357
      %4391 = vmatpush.bf16.msra.mxu0 %v4355
      %4392 = vmatpush.bf16.msra.mxu0 %v4353
      %4393 = vmatmul.bf16.gmra.mxu0 %v4283
      %v4394 = vpop.f32.mrf.mxu0
      %v4395 = vadd.f32 0.0, %v4394
      %v4396 = vpop.f32.mrf.mxu0
      %v4397 = vadd.f32 0.0, %v4396
      %4398 = vmatmul.bf16.gmra.mxu0 %v4284
      %v4399 = vpop.f32.mrf.mxu0
      %v4400 = vadd.f32 0.0, %v4399
      %v4401 = vpop.f32.mrf.mxu0
      %v4402 = vadd.f32 0.0, %v4401
      %4403 = vmatmul.bf16.gmra.mxu0 %v4285
      %v4404 = vpop.f32.mrf.mxu0
      %v4405 = vadd.f32 0.0, %v4404
      %v4406 = vpop.f32.mrf.mxu0
      %v4407 = vadd.f32 0.0, %v4406
      %4408 = vmatmul.bf16.gmra.mxu0 %v4286
      %v4409 = vpop.f32.mrf.mxu0
      %v4410 = vadd.f32 0.0, %v4409
      %v4411 = vpop.f32.mrf.mxu0
      %v4412 = vadd.f32 0.0, %v4411
      %4413 = vmatmul.bf16.gmra.mxu0 %v4287
      %v4414 = vpop.f32.mrf.mxu0
      %v4415 = vadd.f32 0.0, %v4414
      %v4416 = vpop.f32.mrf.mxu0
      %v4417 = vadd.f32 0.0, %v4416
      %4418 = vdwg.mxu0
      %4419 = vmatpush.bf16.msra.mxu0 %v4368
      %4420 = vmatpush.bf16.msra.mxu0 %v4366
      %4421 = vmatpush.bf16.msra.mxu0 %v4364
      %4422 = vmatpush.bf16.msra.mxu0 %v4362
      %4423 = vmatpush.bf16.msra.mxu0 %v4360
      %4424 = vmatpush.bf16.msra.mxu0 %v4358
      %4425 = vmatpush.bf16.msra.mxu0 %v4356
      %4426 = vmatpush.bf16.msra.mxu0 %v4354
      %4427 = vmatmul.bf16.gmra.mxu0 %v4283
      %v4428 = vpop.f32.mrf.mxu0
      %v4429 = vadd.f32 0.0, %v4428
      %v4430 = vpop.f32.mrf.mxu0
      %v4431 = vadd.f32 0.0, %v4430
      %4432 = vmatmul.bf16.gmra.mxu0 %v4284
      %v4433 = vpop.f32.mrf.mxu0
      %v4434 = vadd.f32 0.0, %v4433
      %v4435 = vpop.f32.mrf.mxu0
      %v4436 = vadd.f32 0.0, %v4435
      %4437 = vmatmul.bf16.gmra.mxu0 %v4285
      %v4438 = vpop.f32.mrf.mxu0
      %v4439 = vadd.f32 0.0, %v4438
      %v4440 = vpop.f32.mrf.mxu0
      %v4441 = vadd.f32 0.0, %v4440
      %4442 = vmatmul.bf16.gmra.mxu0 %v4286
      %v4443 = vpop.f32.mrf.mxu0
      %v4444 = vadd.f32 0.0, %v4443
      %v4445 = vpop.f32.mrf.mxu0
      %v4446 = vadd.f32 0.0, %v4445
      %4447 = vmatmul.bf16.gmra.mxu0 %v4287
      %v4448 = vpop.f32.mrf.mxu0
      %v4449 = vadd.f32 0.0, %v4448
      %v4450 = vpop.f32.mrf.mxu0
      %v4451 = vadd.f32 0.0, %v4450
      %4452 = vdwg.mxu0
      %v4453 = vadd.f32 %v4253, %v4395
      %v4454 = vadd.f32 %v4254, %v4429
      %v4455 = vadd.f32 %v4255, %v4397
      %v4456 = vadd.f32 %v4256, %v4431
      %v4457 = vadd.f32 %v4257, %v4400
      %v4458 = vadd.f32 %v4258, %v4434
      %v4459 = vadd.f32 %v4259, %v4402
      %v4460 = vadd.f32 %v4260, %v4436
      %v4461 = vadd.f32 %v4261, %v4405
      %v4462 = vadd.f32 %v4262, %v4439
      %v4463 = vadd.f32 %v4263, %v4407
      %v4464 = vadd.f32 %v4264, %v4441
      %v4465 = vadd.f32 %v4265, %v4410
      %v4466 = vadd.f32 %v4266, %v4444
      %v4467 = vadd.f32 %v4267, %v4412
      %v4468 = vadd.f32 %v4268, %v4446
      %v4469 = vadd.f32 %v4269, %v4415
      %v4470 = vadd.f32 %v4270, %v4449
      %v4471 = vadd.f32 %v4271, %v4417
      %v4472 = vadd.f32 %v4272, %v4451
      %v4473 = vld [vmem:[%s8] sm:$0x3]
      %v4475 = vperm.slane %v4473, 0
      %v4476 = vperm.slane %v4473, 1
      %v4479 = vadd.f32 %v4453, %v4475
      %v4480 = vadd.f32 %v4454, %v4476
      %v4481 = vadd.f32 %v4455, %v4475
      %v4482 = vadd.f32 %v4456, %v4476
      %v4483 = vadd.f32 %v4457, %v4475
      %v4484 = vadd.f32 %v4458, %v4476
      %v4485 = vadd.f32 %v4459, %v4475
      %v4486 = vadd.f32 %v4460, %v4476
      %v4487 = vadd.f32 %v4461, %v4475
      %v4488 = vadd.f32 %v4462, %v4476
      %v4489 = vadd.f32 %v4463, %v4475
      %v4490 = vadd.f32 %v4464, %v4476
      %v4491 = vadd.f32 %v4465, %v4475
      %v4492 = vadd.f32 %v4466, %v4476
      %v4493 = vadd.f32 %v4467, %v4475
      %v4494 = vadd.f32 %v4468, %v4476
      %v4495 = vadd.f32 %v4469, %v4475
      %v4496 = vadd.f32 %v4470, %v4476
      %v4497 = vadd.f32 %v4471, %v4475
      %v4498 = vadd.f32 %v4472, %v4476
      %v4499 = vmax.f32 %v4479, 0.0
      %v4500 = vmax.f32 %v4480, 0.0
      %v4501 = vmax.f32 %v4481, 0.0
      %v4502 = vmax.f32 %v4482, 0.0
      %v4503 = vmax.f32 %v4483, 0.0
      %v4504 = vmax.f32 %v4484, 0.0
      %v4505 = vmax.f32 %v4485, 0.0
      %v4506 = vmax.f32 %v4486, 0.0
      %v4507 = vmax.f32 %v4487, 0.0
      %v4508 = vmax.f32 %v4488, 0.0
      %v4509 = vmax.f32 %v4489, 0.0
      %v4510 = vmax.f32 %v4490, 0.0
      %v4511 = vmax.f32 %v4491, 0.0
      %v4512 = vmax.f32 %v4492, 0.0
      %v4513 = vmax.f32 %v4493, 0.0
      %v4514 = vmax.f32 %v4494, 0.0
      %v4515 = vmax.f32 %v4495, 0.0
      %v4516 = vmax.f32 %v4496, 0.0
      %v4517 = vmax.f32 %v4497, 0.0
      %v4518 = vmax.f32 %v4498, 0.0
      %v4519 = vpack.c.bf16 %v4501, %v4499
      %v4520 = vpack.c.bf16 %v4502, %v4500
      %v4521 = vpack.c.bf16 %v4505, %v4503
      %v4522 = vpack.c.bf16 %v4506, %v4504
      %v4523 = vpack.c.bf16 %v4509, %v4507
      %v4524 = vpack.c.bf16 %v4510, %v4508
      %v4525 = vpack.c.bf16 %v4513, %v4511
      %v4526 = vpack.c.bf16 %v4514, %v4512
      %v4527 = vpack.c.bf16 %v4517, %v4515
      %v4528 = vpack.c.bf16 %v4518, %v4516
      %v4529 = vld [vmem:[%s5] sm:$0xf]
      %v4530 = vld [vmem:[%s5 + $0x4] sm:$0xf]
      %v4531 = vld [vmem:[%s5 + $0x8] sm:$0xf]
      %v4532 = vld [vmem:[%s5 + $0xc] sm:$0xf]
      %v4533 = vld [vmem:[%s5 + $0x10] sm:$0xf]
      %v4534 = vld [vmem:[%s5 + $0x14] sm:$0xf]
      %v4535 = vld [vmem:[%s5 + $0x18] sm:$0xf]
      %v4536 = vld [vmem:[%s5 + $0x1c] sm:$0xf]
      %v4537 = vld [vmem:[%s5 + $0x20] sm:$0xf]
      %v4538 = vld [vmem:[%s5 + $0x24] sm:$0xf]
      %v4539 = vld [vmem:[%s5 + $0x28] sm:$0xf]
      %v4540 = vld [vmem:[%s5 + $0x2c] sm:$0xf]
      %v4541 = vld [vmem:[%s5 + $0x30] sm:$0xf]
      %v4542 = vld [vmem:[%s5 + $0x34] sm:$0xf]
      %v4543 = vld [vmem:[%s5 + $0x38] sm:$0xf]
      %v4544 = vld [vmem:[%s5 + $0x3c] sm:$0xf]
      %v4545 = vld [vmem:[%s5 + $0x40] sm:$0xf]
      %v4546 = vld [vmem:[%s5 + $0x44] sm:$0xf]
      %v4547 = vld [vmem:[%s5 + $0x48] sm:$0xf]
      %v4548 = vld [vmem:[%s5 + $0x4c] sm:$0xf]
      %v4549 = vld [vmem:[%s9] sm:$0x1]
      %v4551 = vperm.slane %v4549, 0
      %v4573 = vunpack.c.l.b16 %v4529
      %v4574 = vunpack.c.l.b16 %v4530
      %v4575 = vunpack.c.l.b16 %v4531
      %v4576 = vunpack.c.l.b16 %v4532
      %v4577 = vunpack.c.l.b16 %v4533
      %v4578 = vunpack.c.l.b16 %v4534
      %v4579 = vunpack.c.l.b16 %v4535
      %v4580 = vunpack.c.l.b16 %v4536
      %v4581 = vunpack.c.l.b16 %v4537
      %v4582 = vunpack.c.l.b16 %v4538
      %v4583 = vunpack.c.l.b16 %v4539
      %v4584 = vunpack.c.l.b16 %v4540
      %v4585 = vunpack.c.l.b16 %v4541
      %v4586 = vunpack.c.l.b16 %v4542
      %v4587 = vunpack.c.l.b16 %v4543
      %v4588 = vunpack.c.l.b16 %v4544
      %v4589 = vunpack.c.l.b16 %v4545
      %v4590 = vunpack.c.l.b16 %v4546
      %v4591 = vunpack.c.l.b16 %v4547
      %v4592 = vunpack.c.l.b16 %v4548
      %v4593 = vpack.c.b16 %v4574, %v4573
      %v4594 = vpack.c.b16 %v4576, %v4575
      %v4595 = vpack.c.b16 %v4578, %v4577
      %v4596 = vpack.c.b16 %v4580, %v4579
      %v4597 = vpack.c.b16 %v4582, %v4581
      %v4598 = vpack.c.b16 %v4584, %v4583
      %v4599 = vpack.c.b16 %v4586, %v4585
      %v4600 = vpack.c.b16 %v4588, %v4587
      %v4601 = vpack.c.b16 %v4590, %v4589
      %v4602 = vpack.c.b16 %v4592, %v4591
      %v4614 = vsel %vm1366, %v4520, 0
      %v4617 = vsel %vm1366, %v4522, 0
      %v4620 = vsel %vm1366, %v4524, 0
      %v4623 = vsel %vm1366, %v4526, 0
      %v4626 = vsel %vm1366, %v4528, 0
      %4628 = vmatpush.bf16.msra.mxu0 %v4600
      %4629 = vmatpush.bf16.msra.mxu0 %v4599
      %4630 = vmatpush.bf16.msra.mxu0 %v4598
      %4631 = vmatpush.bf16.msra.mxu0 %v4597
      %4632 = vmatpush.bf16.msra.mxu0 %v4596
      %4633 = vmatpush.bf16.msra.mxu0 %v4595
      %4634 = vmatpush.bf16.msra.mxu0 %v4594
      %4635 = vmatpush.bf16.msra.mxu0 %v4593
      %4636 = vmatmul.bf16.gmra.mxu0 %v4519
      %v4637 = vpop.f32.mrf.mxu0
      %v4638 = vadd.f32 %v4551, %v4637
      %v4639 = vpop.f32.mrf.mxu0
      %v4640 = vadd.f32 %v4551, %v4639
      %4641 = vmatmul.bf16.gmra.mxu0 %v4521
      %v4642 = vpop.f32.mrf.mxu0
      %v4643 = vadd.f32 %v4551, %v4642
      %v4644 = vpop.f32.mrf.mxu0
      %v4645 = vadd.f32 %v4551, %v4644
      %4646 = vmatmul.bf16.gmra.mxu0 %v4523
      %v4647 = vpop.f32.mrf.mxu0
      %v4648 = vadd.f32 %v4551, %v4647
      %v4649 = vpop.f32.mrf.mxu0
      %v4650 = vadd.f32 %v4551, %v4649
      %4651 = vmatmul.bf16.gmra.mxu0 %v4525
      %v4652 = vpop.f32.mrf.mxu0
      %v4653 = vadd.f32 %v4551, %v4652
      %v4654 = vpop.f32.mrf.mxu0
      %v4655 = vadd.f32 %v4551, %v4654
      %4656 = vmatmul.bf16.gmra.mxu0 %v4527
      %v4657 = vpop.f32.mrf.mxu0
      %v4658 = vadd.f32 %v4551, %v4657
      %v4659 = vpop.f32.mrf.mxu0
      %v4660 = vadd.f32 %v4551, %v4659
      %4661 = vdwg.mxu0
      %4662 = vmatpush.bf16.msra.mxu0 0
      %4663 = vmatpush.bf16.msra.mxu0 0
      %4664 = vmatpush.bf16.msra.mxu0 0
      %4665 = vmatpush.bf16.msra.mxu0 0
      %4666 = vmatpush.bf16.msra.mxu0 0
      %4667 = vmatpush.bf16.msra.mxu0 0
      %4668 = vmatpush.bf16.msra.mxu0 %v4602
      %4669 = vmatpush.bf16.msra.mxu0 %v4601
      %4670 = vmatmul.bf16.gmra.mxu0 %v4614
      %v4671 = vpop.f32.mrf.mxu0
      %v4672 = vadd.f32 %v4638, %v4671
      %v4673 = vpop.f32.mrf.mxu0
      %v4674 = vadd.f32 %v4640, %v4673
      %4675 = vmatmul.bf16.gmra.mxu0 %v4617
      %v4676 = vpop.f32.mrf.mxu0
      %v4677 = vadd.f32 %v4643, %v4676
      %v4678 = vpop.f32.mrf.mxu0
      %v4679 = vadd.f32 %v4645, %v4678
      %4680 = vmatmul.bf16.gmra.mxu0 %v4620
      %v4681 = vpop.f32.mrf.mxu0
      %v4682 = vadd.f32 %v4648, %v4681
      %v4683 = vpop.f32.mrf.mxu0
      %v4684 = vadd.f32 %v4650, %v4683
      %4685 = vmatmul.bf16.gmra.mxu0 %v4623
      %v4686 = vpop.f32.mrf.mxu0
      %v4687 = vadd.f32 %v4653, %v4686
      %v4688 = vpop.f32.mrf.mxu0
      %v4689 = vadd.f32 %v4655, %v4688
      %4690 = vmatmul.bf16.gmra.mxu0 %v4626
      %v4691 = vpop.f32.mrf.mxu0
      %v4692 = vadd.f32 %v4658, %v4691
      %v4693 = vpop.f32.mrf.mxu0
      %v4694 = vadd.f32 %v4660, %v4693
      %4695 = vdwg.mxu0
      %v4696 = vld [vmem:[%s10] sm:$0x1]
      %vm4697 = vcmp.gt.f32.partialorder %v4696, 0.0
      %v4698 = vxor.u32 %v4672, 2147483648
      %v4699 = vxor.u32 %v4674, 2147483648
      %v4700 = vxor.u32 %v4677, 2147483648
      %v4701 = vxor.u32 %v4679, 2147483648
      %v4702 = vxor.u32 %v4682, 2147483648
      %v4703 = vxor.u32 %v4684, 2147483648
      %v4704 = vxor.u32 %v4687, 2147483648
      %v4705 = vxor.u32 %v4689, 2147483648
      %v4706 = vxor.u32 %v4692, 2147483648
      %v4707 = vxor.u32 %v4694, 2147483648
      %v4708 = vmul.f32 %v4698, 1.442695
      %v4709 = vpow.pop %v4708
      %v4710 = vmul.f32 %v4699, 1.442695
      %v4711 = vpow.pop %v4710
      %v4712 = vmul.f32 %v4700, 1.442695
      %v4713 = vpow.pop %v4712
      %v4714 = vmul.f32 %v4701, 1.442695
      %v4715 = vpow.pop %v4714
      %v4716 = vmul.f32 %v4702, 1.442695
      %v4717 = vpow.pop %v4716
      %v4718 = vmul.f32 %v4703, 1.442695
      %v4719 = vpow.pop %v4718
      %v4720 = vmul.f32 %v4704, 1.442695
      %v4721 = vpow.pop %v4720
      %v4722 = vmul.f32 %v4705, 1.442695
      %v4723 = vpow.pop %v4722
      %v4724 = vmul.f32 %v4706, 1.442695
      %v4725 = vpow.pop %v4724
      %v4726 = vmul.f32 %v4707, 1.442695
      %v4727 = vpow.pop %v4726
      %v4728 = vadd.f32 %v4709, 1.0
      %v4729 = vadd.f32 %v4711, 1.0
      %v4730 = vadd.f32 %v4713, 1.0
      %v4731 = vadd.f32 %v4715, 1.0
      %v4732 = vadd.f32 %v4717, 1.0
      %v4733 = vadd.f32 %v4719, 1.0
      %v4734 = vadd.f32 %v4721, 1.0
      %v4735 = vadd.f32 %v4723, 1.0
      %v4736 = vadd.f32 %v4725, 1.0
      %v4737 = vadd.f32 %v4727, 1.0
      %v4738 = vrcp.pop %v4728
      %v4739 = vmul.f32 %v4728, %v4738
      %v4740 = vsub.f32 1.0, %v4739
      %v4741 = vmul.f32 %v4738, %v4740
      %v4742 = vadd.f32 %v4738, %v4741
      %vm4743 = vweird.f32 %v4728
      %vm4744 = vweird.f32 %v4738
      %vm4745 = vmor %vm4743, %vm4744
      %v4746 = vsel %vm4745, %v4738, %v4742
      %v4747 = vand.u32 2147483647, %v4728
      %vm4748 = vcmp.eq.f32.partialorder %v4747, 8.507059e+37
      %v4749 = vand.u32 %v4728, 2147483648
      %v4750 = vor.u32 1.1754944e-38, %v4749
      %v4751 = vsel %vm4748, %v4750, %v4746
      %v4752 = vmul.f32 1.0, %v4751
      %v4753 = vrcp.pop %v4729
      %v4754 = vmul.f32 %v4729, %v4753
      %v4755 = vsub.f32 1.0, %v4754
      %v4756 = vmul.f32 %v4753, %v4755
      %v4757 = vadd.f32 %v4753, %v4756
      %vm4758 = vweird.f32 %v4729
      %vm4759 = vweird.f32 %v4753
      %vm4760 = vmor %vm4758, %vm4759
      %v4761 = vsel %vm4760, %v4753, %v4757
      %v4762 = vand.u32 2147483647, %v4729
      %vm4763 = vcmp.eq.f32.partialorder %v4762, 8.507059e+37
      %v4764 = vand.u32 %v4729, 2147483648
      %v4765 = vor.u32 1.1754944e-38, %v4764
      %v4766 = vsel %vm4763, %v4765, %v4761
      %v4767 = vmul.f32 1.0, %v4766
      %v4768 = vrcp.pop %v4730
      %v4769 = vmul.f32 %v4730, %v4768
      %v4770 = vsub.f32 1.0, %v4769
      %v4771 = vmul.f32 %v4768, %v4770
      %v4772 = vadd.f32 %v4768, %v4771
      %vm4773 = vweird.f32 %v4730
      %vm4774 = vweird.f32 %v4768
      %vm4775 = vmor %vm4773, %vm4774
      %v4776 = vsel %vm4775, %v4768, %v4772
      %v4777 = vand.u32 2147483647, %v4730
      %vm4778 = vcmp.eq.f32.partialorder %v4777, 8.507059e+37
      %v4779 = vand.u32 %v4730, 2147483648
      %v4780 = vor.u32 1.1754944e-38, %v4779
      %v4781 = vsel %vm4778, %v4780, %v4776
      %v4782 = vmul.f32 1.0, %v4781
      %v4783 = vrcp.pop %v4731
      %v4784 = vmul.f32 %v4731, %v4783
      %v4785 = vsub.f32 1.0, %v4784
      %v4786 = vmul.f32 %v4783, %v4785
      %v4787 = vadd.f32 %v4783, %v4786
      %vm4788 = vweird.f32 %v4731
      %vm4789 = vweird.f32 %v4783
      %vm4790 = vmor %vm4788, %vm4789
      %v4791 = vsel %vm4790, %v4783, %v4787
      %v4792 = vand.u32 2147483647, %v4731
      %vm4793 = vcmp.eq.f32.partialorder %v4792, 8.507059e+37
      %v4794 = vand.u32 %v4731, 2147483648
      %v4795 = vor.u32 1.1754944e-38, %v4794
      %v4796 = vsel %vm4793, %v4795, %v4791
      %v4797 = vmul.f32 1.0, %v4796
      %v4798 = vrcp.pop %v4732
      %v4799 = vmul.f32 %v4732, %v4798
      %v4800 = vsub.f32 1.0, %v4799
      %v4801 = vmul.f32 %v4798, %v4800
      %v4802 = vadd.f32 %v4798, %v4801
      %vm4803 = vweird.f32 %v4732
      %vm4804 = vweird.f32 %v4798
      %vm4805 = vmor %vm4803, %vm4804
      %v4806 = vsel %vm4805, %v4798, %v4802
      %v4807 = vand.u32 2147483647, %v4732
      %vm4808 = vcmp.eq.f32.partialorder %v4807, 8.507059e+37
      %v4809 = vand.u32 %v4732, 2147483648
      %v4810 = vor.u32 1.1754944e-38, %v4809
      %v4811 = vsel %vm4808, %v4810, %v4806
      %v4812 = vmul.f32 1.0, %v4811
      %v4813 = vrcp.pop %v4733
      %v4814 = vmul.f32 %v4733, %v4813
      %v4815 = vsub.f32 1.0, %v4814
      %v4816 = vmul.f32 %v4813, %v4815
      %v4817 = vadd.f32 %v4813, %v4816
      %vm4818 = vweird.f32 %v4733
      %vm4819 = vweird.f32 %v4813
      %vm4820 = vmor %vm4818, %vm4819
      %v4821 = vsel %vm4820, %v4813, %v4817
      %v4822 = vand.u32 2147483647, %v4733
      %vm4823 = vcmp.eq.f32.partialorder %v4822, 8.507059e+37
      %v4824 = vand.u32 %v4733, 2147483648
      %v4825 = vor.u32 1.1754944e-38, %v4824
      %v4826 = vsel %vm4823, %v4825, %v4821
      %v4827 = vmul.f32 1.0, %v4826
      %v4828 = vrcp.pop %v4734
      %v4829 = vmul.f32 %v4734, %v4828
      %v4830 = vsub.f32 1.0, %v4829
      %v4831 = vmul.f32 %v4828, %v4830
      %v4832 = vadd.f32 %v4828, %v4831
      %vm4833 = vweird.f32 %v4734
      %vm4834 = vweird.f32 %v4828
      %vm4835 = vmor %vm4833, %vm4834
      %v4836 = vsel %vm4835, %v4828, %v4832
      %v4837 = vand.u32 2147483647, %v4734
      %vm4838 = vcmp.eq.f32.partialorder %v4837, 8.507059e+37
      %v4839 = vand.u32 %v4734, 2147483648
      %v4840 = vor.u32 1.1754944e-38, %v4839
      %v4841 = vsel %vm4838, %v4840, %v4836
      %v4842 = vmul.f32 1.0, %v4841
      %v4843 = vrcp.pop %v4735
      %v4844 = vmul.f32 %v4735, %v4843
      %v4845 = vsub.f32 1.0, %v4844
      %v4846 = vmul.f32 %v4843, %v4845
      %v4847 = vadd.f32 %v4843, %v4846
      %vm4848 = vweird.f32 %v4735
      %vm4849 = vweird.f32 %v4843
      %vm4850 = vmor %vm4848, %vm4849
      %v4851 = vsel %vm4850, %v4843, %v4847
      %v4852 = vand.u32 2147483647, %v4735
      %vm4853 = vcmp.eq.f32.partialorder %v4852, 8.507059e+37
      %v4854 = vand.u32 %v4735, 2147483648
      %v4855 = vor.u32 1.1754944e-38, %v4854
      %v4856 = vsel %vm4853, %v4855, %v4851
      %v4857 = vmul.f32 1.0, %v4856
      %v4858 = vrcp.pop %v4736
      %v4859 = vmul.f32 %v4736, %v4858
      %v4860 = vsub.f32 1.0, %v4859
      %v4861 = vmul.f32 %v4858, %v4860
      %v4862 = vadd.f32 %v4858, %v4861
      %vm4863 = vweird.f32 %v4736
      %vm4864 = vweird.f32 %v4858
      %vm4865 = vmor %vm4863, %vm4864
      %v4866 = vsel %vm4865, %v4858, %v4862
      %v4867 = vand.u32 2147483647, %v4736
      %vm4868 = vcmp.eq.f32.partialorder %v4867, 8.507059e+37
      %v4869 = vand.u32 %v4736, 2147483648
      %v4870 = vor.u32 1.1754944e-38, %v4869
      %v4871 = vsel %vm4868, %v4870, %v4866
      %v4872 = vmul.f32 1.0, %v4871
      %v4873 = vrcp.pop %v4737
      %v4874 = vmul.f32 %v4737, %v4873
      %v4875 = vsub.f32 1.0, %v4874
      %v4876 = vmul.f32 %v4873, %v4875
      %v4877 = vadd.f32 %v4873, %v4876
      %vm4878 = vweird.f32 %v4737
      %vm4879 = vweird.f32 %v4873
      %vm4880 = vmor %vm4878, %vm4879
      %v4881 = vsel %vm4880, %v4873, %v4877
      %v4882 = vand.u32 2147483647, %v4737
      %vm4883 = vcmp.eq.f32.partialorder %v4882, 8.507059e+37
      %v4884 = vand.u32 %v4737, 2147483648
      %v4885 = vor.u32 1.1754944e-38, %v4884
      %v4886 = vsel %vm4883, %v4885, %v4881
      %v4887 = vmul.f32 1.0, %v4886
      %v4888 = vsel %vm4697, 1, 0
      %v4889 = vperm.slane %v4888, 0
      %vm4890 = vcmp.eq.s32.totalorder %v4889, 1
      %v4891 = vsel %vm4890, %v4752, %v4672
      %v4892 = vsel %vm4890, %v4767, %v4674
      %v4893 = vsel %vm4890, %v4782, %v4677
      %v4894 = vsel %vm4890, %v4797, %v4679
      %v4895 = vsel %vm4890, %v4812, %v4682
      %v4896 = vsel %vm4890, %v4827, %v4684
      %v4897 = vsel %vm4890, %v4842, %v4687
      %v4898 = vsel %vm4890, %v4857, %v4689
      %v4899 = vsel %vm4890, %v4872, %v4692
      %v4900 = vsel %vm4890, %v4887, %v4694
      %4901 = vst [vmem:[%s440 + $0x50] sm:$0xff] %v4891
      %4902 = vst [vmem:[%s440 + $0x58] sm:$0xff] %v4892
      %4903 = vst [vmem:[%s440 + $0x60] sm:$0xff] %v4893
      %4904 = vst [vmem:[%s440 + $0x68] sm:$0xff] %v4894
      %4905 = vst [vmem:[%s440 + $0x70] sm:$0xff] %v4895
      %4906 = vst [vmem:[%s440 + $0x78] sm:$0xff] %v4896
      %4907 = vst [vmem:[%s440 + $0x80] sm:$0xff] %v4897
      %4908 = vst [vmem:[%s440 + $0x88] sm:$0xff] %v4898
      %4909 = vst [vmem:[%s440 + $0x90] sm:$0xff] %v4899
      %4910 = vst [vmem:[%s440 + $0x98] sm:$0xff] %v4900
      %v4911 = vld [vmem:[#allocation4 + $0xa] sm:$0xff]
      %v4912 = vld [vmem:[#allocation4 + $0x12] sm:$0xff]
      %v4913 = vld [vmem:[#allocation4 + $0x1a] sm:$0xff]
      %v4914 = vld [vmem:[#allocation4 + $0x22] sm:$0xff]
      %v4915 = vld [vmem:[#allocation4 + $0x2a] sm:$0xff]
      %v4916 = vld [vmem:[#allocation4 + $0x32] sm:$0xff]
      %v4917 = vld [vmem:[#allocation4 + $0x3a] sm:$0xff]
      %v4918 = vld [vmem:[#allocation4 + $0x42] sm:$0xff]
      %v4919 = vld [vmem:[#allocation4 + $0x4a] sm:$0xff]
      %v4920 = vld [vmem:[#allocation4 + $0x52] sm:$0xff]
      %v4921 = vpack.c.bf16 %v4912, %v4911
      %v4922 = vpack.c.bf16 %v4914, %v4913
      %v4923 = vpack.c.bf16 %v4916, %v4915
      %v4924 = vpack.c.bf16 %v4918, %v4917
      %v4925 = vpack.c.bf16 %v4920, %v4919
      %s4926 = scalar_lea.vmem %s4, 1024
      %v4927 = vld [vmem:[%s4926] sm:$0xff]
      %v4928 = vld [vmem:[%s4926 + $0x8] sm:$0xff]
      %v4929 = vld [vmem:[%s4926 + $0x10] sm:$0xff]
      %v4930 = vld [vmem:[%s4926 + $0x18] sm:$0xff]
      %v4931 = vld [vmem:[%s4926 + $0x20] sm:$0xff]
      %v4932 = vld [vmem:[%s4926 + $0x28] sm:$0xff]
      %v4933 = vld [vmem:[%s4926 + $0x30] sm:$0xff]
      %v4934 = vld [vmem:[%s4926 + $0x38] sm:$0xff]
      %v4935 = vld [vmem:[%s4926 + $0x40] sm:$0xff]
      %v4936 = vld [vmem:[%s4926 + $0x48] sm:$0xff]
      %v4937 = vld [vmem:[%s4926 + $0x50] sm:$0xff]
      %v4938 = vld [vmem:[%s4926 + $0x58] sm:$0xff]
      %v4939 = vld [vmem:[%s4926 + $0x60] sm:$0xff]
      %v4940 = vld [vmem:[%s4926 + $0x68] sm:$0xff]
      %v4941 = vld [vmem:[%s4926 + $0x70] sm:$0xff]
      %v4942 = vld [vmem:[%s4926 + $0x78] sm:$0xff]
      %v4943 = vld [vmem:[#allocation4 + $0xb] sm:$0xff]
      %v4944 = vld [vmem:[#allocation4 + $0x13] sm:$0xff]
      %v4945 = vld [vmem:[#allocation4 + $0x1b] sm:$0xff]
      %v4946 = vld [vmem:[#allocation4 + $0x23] sm:$0xff]
      %v4947 = vld [vmem:[#allocation4 + $0x2b] sm:$0xff]
      %v4948 = vld [vmem:[#allocation4 + $0x33] sm:$0xff]
      %v4949 = vld [vmem:[#allocation4 + $0x3b] sm:$0xff]
      %v4950 = vld [vmem:[#allocation4 + $0x43] sm:$0xff]
      %v4951 = vld [vmem:[#allocation4 + $0x4b] sm:$0xff]
      %v4952 = vld [vmem:[#allocation4 + $0x53] sm:$0xff]
      %v4953 = vpack.c.bf16 %v4944, %v4943
      %v4954 = vpack.c.bf16 %v4946, %v4945
      %v4955 = vpack.c.bf16 %v4948, %v4947
      %v4956 = vpack.c.bf16 %v4950, %v4949
      %v4957 = vpack.c.bf16 %v4952, %v4951
      %s4958 = scalar_lea.vmem %s4, 1152
      %v4959 = vld [vmem:[%s4958] sm:$0xff]
      %v4960 = vld [vmem:[%s4958 + $0x8] sm:$0xff]
      %v4961 = vld [vmem:[%s4958 + $0x10] sm:$0xff]
      %v4962 = vld [vmem:[%s4958 + $0x18] sm:$0xff]
      %v4963 = vld [vmem:[%s4958 + $0x20] sm:$0xff]
      %v4964 = vld [vmem:[%s4958 + $0x28] sm:$0xff]
      %v4965 = vld [vmem:[%s4958 + $0x30] sm:$0xff]
      %v4966 = vld [vmem:[%s4958 + $0x38] sm:$0xff]
      %v4967 = vld [vmem:[%s4958 + $0x40] sm:$0xff]
      %v4968 = vld [vmem:[%s4958 + $0x48] sm:$0xff]
      %v4969 = vld [vmem:[%s4958 + $0x50] sm:$0xff]
      %v4970 = vld [vmem:[%s4958 + $0x58] sm:$0xff]
      %v4971 = vld [vmem:[%s4958 + $0x60] sm:$0xff]
      %v4972 = vld [vmem:[%s4958 + $0x68] sm:$0xff]
      %v4973 = vld [vmem:[%s4958 + $0x70] sm:$0xff]
      %v4974 = vld [vmem:[%s4958 + $0x78] sm:$0xff]
      %v4991 = vunpack.c.l.b16 %v4959
      %v4992 = vunpack.c.h.b16 %v4959
      %v4993 = vunpack.c.l.b16 %v4960
      %v4994 = vunpack.c.h.b16 %v4960
      %v4995 = vunpack.c.l.b16 %v4961
      %v4996 = vunpack.c.h.b16 %v4961
      %v4997 = vunpack.c.l.b16 %v4962
      %v4998 = vunpack.c.h.b16 %v4962
      %v4999 = vunpack.c.l.b16 %v4963
      %v5000 = vunpack.c.h.b16 %v4963
      %v5001 = vunpack.c.l.b16 %v4964
      %v5002 = vunpack.c.h.b16 %v4964
      %v5003 = vunpack.c.l.b16 %v4965
      %v5004 = vunpack.c.h.b16 %v4965
      %v5005 = vunpack.c.l.b16 %v4966
      %v5006 = vunpack.c.h.b16 %v4966
      %v5007 = vunpack.c.l.b16 %v4967
      %v5008 = vunpack.c.h.b16 %v4967
      %v5009 = vunpack.c.l.b16 %v4968
      %v5010 = vunpack.c.h.b16 %v4968
      %v5011 = vunpack.c.l.b16 %v4969
      %v5012 = vunpack.c.h.b16 %v4969
      %v5013 = vunpack.c.l.b16 %v4970
      %v5014 = vunpack.c.h.b16 %v4970
      %v5015 = vunpack.c.l.b16 %v4971
      %v5016 = vunpack.c.h.b16 %v4971
      %v5017 = vunpack.c.l.b16 %v4972
      %v5018 = vunpack.c.h.b16 %v4972
      %v5019 = vunpack.c.l.b16 %v4973
      %v5020 = vunpack.c.h.b16 %v4973
      %v5021 = vunpack.c.l.b16 %v4974
      %v5022 = vunpack.c.h.b16 %v4974
      %v5023 = vpack.c.b16 %v4993, %v4991
      %v5024 = vpack.c.b16 %v4994, %v4992
      %v5025 = vpack.c.b16 %v4997, %v4995
      %v5026 = vpack.c.b16 %v4998, %v4996
      %v5027 = vpack.c.b16 %v5001, %v4999
      %v5028 = vpack.c.b16 %v5002, %v5000
      %v5029 = vpack.c.b16 %v5005, %v5003
      %v5030 = vpack.c.b16 %v5006, %v5004
      %v5031 = vpack.c.b16 %v5009, %v5007
      %v5032 = vpack.c.b16 %v5010, %v5008
      %v5033 = vpack.c.b16 %v5013, %v5011
      %v5034 = vpack.c.b16 %v5014, %v5012
      %v5035 = vpack.c.b16 %v5017, %v5015
      %v5036 = vpack.c.b16 %v5018, %v5016
      %v5037 = vpack.c.b16 %v5021, %v5019
      %v5038 = vpack.c.b16 %v5022, %v5020
      %5055 = vmatpush.bf16.msra.mxu0 %v5037
      %5056 = vmatpush.bf16.msra.mxu0 %v5035
      %5057 = vmatpush.bf16.msra.mxu0 %v5033
      %5058 = vmatpush.bf16.msra.mxu0 %v5031
      %5059 = vmatpush.bf16.msra.mxu0 %v5029
      %5060 = vmatpush.bf16.msra.mxu0 %v5027
      %5061 = vmatpush.bf16.msra.mxu0 %v5025
      %5062 = vmatpush.bf16.msra.mxu0 %v5023
      %5063 = vmatmul.bf16.gmra.mxu0 %v4953
      %v5064 = vpop.f32.mrf.mxu0
      %v5065 = vadd.f32 0.0, %v5064
      %v5066 = vpop.f32.mrf.mxu0
      %v5067 = vadd.f32 0.0, %v5066
      %5068 = vmatmul.bf16.gmra.mxu0 %v4954
      %v5069 = vpop.f32.mrf.mxu0
      %v5070 = vadd.f32 0.0, %v5069
      %v5071 = vpop.f32.mrf.mxu0
      %v5072 = vadd.f32 0.0, %v5071
      %5073 = vmatmul.bf16.gmra.mxu0 %v4955
      %v5074 = vpop.f32.mrf.mxu0
      %v5075 = vadd.f32 0.0, %v5074
      %v5076 = vpop.f32.mrf.mxu0
      %v5077 = vadd.f32 0.0, %v5076
      %5078 = vmatmul.bf16.gmra.mxu0 %v4956
      %v5079 = vpop.f32.mrf.mxu0
      %v5080 = vadd.f32 0.0, %v5079
      %v5081 = vpop.f32.mrf.mxu0
      %v5082 = vadd.f32 0.0, %v5081
      %5083 = vmatmul.bf16.gmra.mxu0 %v4957
      %v5084 = vpop.f32.mrf.mxu0
      %v5085 = vadd.f32 0.0, %v5084
      %v5086 = vpop.f32.mrf.mxu0
      %v5087 = vadd.f32 0.0, %v5086
      %5088 = vdwg.mxu0
      %5089 = vmatpush.bf16.msra.mxu0 %v5038
      %5090 = vmatpush.bf16.msra.mxu0 %v5036
      %5091 = vmatpush.bf16.msra.mxu0 %v5034
      %5092 = vmatpush.bf16.msra.mxu0 %v5032
      %5093 = vmatpush.bf16.msra.mxu0 %v5030
      %5094 = vmatpush.bf16.msra.mxu0 %v5028
      %5095 = vmatpush.bf16.msra.mxu0 %v5026
      %5096 = vmatpush.bf16.msra.mxu0 %v5024
      %5097 = vmatmul.bf16.gmra.mxu0 %v4953
      %v5098 = vpop.f32.mrf.mxu0
      %v5099 = vadd.f32 0.0, %v5098
      %v5100 = vpop.f32.mrf.mxu0
      %v5101 = vadd.f32 0.0, %v5100
      %5102 = vmatmul.bf16.gmra.mxu0 %v4954
      %v5103 = vpop.f32.mrf.mxu0
      %v5104 = vadd.f32 0.0, %v5103
      %v5105 = vpop.f32.mrf.mxu0
      %v5106 = vadd.f32 0.0, %v5105
      %5107 = vmatmul.bf16.gmra.mxu0 %v4955
      %v5108 = vpop.f32.mrf.mxu0
      %v5109 = vadd.f32 0.0, %v5108
      %v5110 = vpop.f32.mrf.mxu0
      %v5111 = vadd.f32 0.0, %v5110
      %5112 = vmatmul.bf16.gmra.mxu0 %v4956
      %v5113 = vpop.f32.mrf.mxu0
      %v5114 = vadd.f32 0.0, %v5113
      %v5115 = vpop.f32.mrf.mxu0
      %v5116 = vadd.f32 0.0, %v5115
      %5117 = vmatmul.bf16.gmra.mxu0 %v4957
      %v5118 = vpop.f32.mrf.mxu0
      %v5119 = vadd.f32 0.0, %v5118
      %v5120 = vpop.f32.mrf.mxu0
      %v5121 = vadd.f32 0.0, %v5120
      %5122 = vdwg.mxu0
      %v5139 = vunpack.c.l.b16 %v4927
      %v5140 = vunpack.c.h.b16 %v4927
      %v5141 = vunpack.c.l.b16 %v4928
      %v5142 = vunpack.c.h.b16 %v4928
      %v5143 = vunpack.c.l.b16 %v4929
      %v5144 = vunpack.c.h.b16 %v4929
      %v5145 = vunpack.c.l.b16 %v4930
      %v5146 = vunpack.c.h.b16 %v4930
      %v5147 = vunpack.c.l.b16 %v4931
      %v5148 = vunpack.c.h.b16 %v4931
      %v5149 = vunpack.c.l.b16 %v4932
      %v5150 = vunpack.c.h.b16 %v4932
      %v5151 = vunpack.c.l.b16 %v4933
      %v5152 = vunpack.c.h.b16 %v4933
      %v5153 = vunpack.c.l.b16 %v4934
      %v5154 = vunpack.c.h.b16 %v4934
      %v5155 = vunpack.c.l.b16 %v4935
      %v5156 = vunpack.c.h.b16 %v4935
      %v5157 = vunpack.c.l.b16 %v4936
      %v5158 = vunpack.c.h.b16 %v4936
      %v5159 = vunpack.c.l.b16 %v4937
      %v5160 = vunpack.c.h.b16 %v4937
      %v5161 = vunpack.c.l.b16 %v4938
      %v5162 = vunpack.c.h.b16 %v4938
      %v5163 = vunpack.c.l.b16 %v4939
      %v5164 = vunpack.c.h.b16 %v4939
      %v5165 = vunpack.c.l.b16 %v4940
      %v5166 = vunpack.c.h.b16 %v4940
      %v5167 = vunpack.c.l.b16 %v4941
      %v5168 = vunpack.c.h.b16 %v4941
      %v5169 = vunpack.c.l.b16 %v4942
      %v5170 = vunpack.c.h.b16 %v4942
      %v5171 = vpack.c.b16 %v5141, %v5139
      %v5172 = vpack.c.b16 %v5142, %v5140
      %v5173 = vpack.c.b16 %v5145, %v5143
      %v5174 = vpack.c.b16 %v5146, %v5144
      %v5175 = vpack.c.b16 %v5149, %v5147
      %v5176 = vpack.c.b16 %v5150, %v5148
      %v5177 = vpack.c.b16 %v5153, %v5151
      %v5178 = vpack.c.b16 %v5154, %v5152
      %v5179 = vpack.c.b16 %v5157, %v5155
      %v5180 = vpack.c.b16 %v5158, %v5156
      %v5181 = vpack.c.b16 %v5161, %v5159
      %v5182 = vpack.c.b16 %v5162, %v5160
      %v5183 = vpack.c.b16 %v5165, %v5163
      %v5184 = vpack.c.b16 %v5166, %v5164
      %v5185 = vpack.c.b16 %v5169, %v5167
      %v5186 = vpack.c.b16 %v5170, %v5168
      %5203 = vmatpush.bf16.msra.mxu0 %v5185
      %5204 = vmatpush.bf16.msra.mxu0 %v5183
      %5205 = vmatpush.bf16.msra.mxu0 %v5181
      %5206 = vmatpush.bf16.msra.mxu0 %v5179
      %5207 = vmatpush.bf16.msra.mxu0 %v5177
      %5208 = vmatpush.bf16.msra.mxu0 %v5175
      %5209 = vmatpush.bf16.msra.mxu0 %v5173
      %5210 = vmatpush.bf16.msra.mxu0 %v5171
      %5211 = vmatmul.bf16.gmra.mxu0 %v4921
      %v5212 = vpop.f32.mrf.mxu0
      %v5213 = vadd.f32 %v5065, %v5212
      %v5214 = vpop.f32.mrf.mxu0
      %v5215 = vadd.f32 %v5067, %v5214
      %5216 = vmatmul.bf16.gmra.mxu0 %v4922
      %v5217 = vpop.f32.mrf.mxu0
      %v5218 = vadd.f32 %v5070, %v5217
      %v5219 = vpop.f32.mrf.mxu0
      %v5220 = vadd.f32 %v5072, %v5219
      %5221 = vmatmul.bf16.gmra.mxu0 %v4923
      %v5222 = vpop.f32.mrf.mxu0
      %v5223 = vadd.f32 %v5075, %v5222
      %v5224 = vpop.f32.mrf.mxu0
      %v5225 = vadd.f32 %v5077, %v5224
      %5226 = vmatmul.bf16.gmra.mxu0 %v4924
      %v5227 = vpop.f32.mrf.mxu0
      %v5228 = vadd.f32 %v5080, %v5227
      %v5229 = vpop.f32.mrf.mxu0
      %v5230 = vadd.f32 %v5082, %v5229
      %5231 = vmatmul.bf16.gmra.mxu0 %v4925
      %v5232 = vpop.f32.mrf.mxu0
      %v5233 = vadd.f32 %v5085, %v5232
      %v5234 = vpop.f32.mrf.mxu0
      %v5235 = vadd.f32 %v5087, %v5234
      %5236 = vdwg.mxu0
      %5237 = vmatpush.bf16.msra.mxu0 %v5186
      %5238 = vmatpush.bf16.msra.mxu0 %v5184
      %5239 = vmatpush.bf16.msra.mxu0 %v5182
      %5240 = vmatpush.bf16.msra.mxu0 %v5180
      %5241 = vmatpush.bf16.msra.mxu0 %v5178
      %5242 = vmatpush.bf16.msra.mxu0 %v5176
      %5243 = vmatpush.bf16.msra.mxu0 %v5174
      %5244 = vmatpush.bf16.msra.mxu0 %v5172
      %5245 = vmatmul.bf16.gmra.mxu0 %v4921
      %v5246 = vpop.f32.mrf.mxu0
      %v5247 = vadd.f32 %v5099, %v5246
      %v5248 = vpop.f32.mrf.mxu0
      %v5249 = vadd.f32 %v5101, %v5248
      %5250 = vmatmul.bf16.gmra.mxu0 %v4922
      %v5251 = vpop.f32.mrf.mxu0
      %v5252 = vadd.f32 %v5104, %v5251
      %v5253 = vpop.f32.mrf.mxu0
      %v5254 = vadd.f32 %v5106, %v5253
      %5255 = vmatmul.bf16.gmra.mxu0 %v4923
      %v5256 = vpop.f32.mrf.mxu0
      %v5257 = vadd.f32 %v5109, %v5256
      %v5258 = vpop.f32.mrf.mxu0
      %v5259 = vadd.f32 %v5111, %v5258
      %5260 = vmatmul.bf16.gmra.mxu0 %v4924
      %v5261 = vpop.f32.mrf.mxu0
      %v5262 = vadd.f32 %v5114, %v5261
      %v5263 = vpop.f32.mrf.mxu0
      %v5264 = vadd.f32 %v5116, %v5263
      %5265 = vmatmul.bf16.gmra.mxu0 %v4925
      %v5266 = vpop.f32.mrf.mxu0
      %v5267 = vadd.f32 %v5119, %v5266
      %v5268 = vpop.f32.mrf.mxu0
      %v5269 = vadd.f32 %v5121, %v5268
      %5270 = vdwg.mxu0
      %v5271 = vld [vmem:[#allocation4 + $0x14] sm:$0xff]
      %v5272 = vld [vmem:[#allocation4 + $0x1c] sm:$0xff]
      %v5273 = vld [vmem:[#allocation4 + $0x24] sm:$0xff]
      %v5274 = vld [vmem:[#allocation4 + $0x2c] sm:$0xff]
      %v5275 = vld [vmem:[#allocation4 + $0x34] sm:$0xff]
      %v5276 = vld [vmem:[#allocation4 + $0x3c] sm:$0xff]
      %v5277 = vld [vmem:[#allocation4 + $0x44] sm:$0xff]
      %v5278 = vld [vmem:[#allocation4 + $0x4c] sm:$0xff]
      %v5279 = vld [vmem:[#allocation4 + $0x54] sm:$0xff]
      %v5280 = vld [vmem:[#allocation4 + $0x5c] sm:$0xff]
      %v5281 = vpack.c.bf16 %v5272, %v5271
      %v5282 = vpack.c.bf16 %v5274, %v5273
      %v5283 = vpack.c.bf16 %v5276, %v5275
      %v5284 = vpack.c.bf16 %v5278, %v5277
      %v5285 = vpack.c.bf16 %v5280, %v5279
      %s5286 = scalar_lea.vmem %s4, 1280
      %v5287 = vld [vmem:[%s5286] sm:$0xff]
      %v5288 = vld [vmem:[%s5286 + $0x8] sm:$0xff]
      %v5289 = vld [vmem:[%s5286 + $0x10] sm:$0xff]
      %v5290 = vld [vmem:[%s5286 + $0x18] sm:$0xff]
      %v5291 = vld [vmem:[%s5286 + $0x20] sm:$0xff]
      %v5292 = vld [vmem:[%s5286 + $0x28] sm:$0xff]
      %v5293 = vld [vmem:[%s5286 + $0x30] sm:$0xff]
      %v5294 = vld [vmem:[%s5286 + $0x38] sm:$0xff]
      %v5295 = vld [vmem:[%s5286 + $0x40] sm:$0xff]
      %v5296 = vld [vmem:[%s5286 + $0x48] sm:$0xff]
      %v5297 = vld [vmem:[%s5286 + $0x50] sm:$0xff]
      %v5298 = vld [vmem:[%s5286 + $0x58] sm:$0xff]
      %v5299 = vld [vmem:[%s5286 + $0x60] sm:$0xff]
      %v5300 = vld [vmem:[%s5286 + $0x68] sm:$0xff]
      %v5301 = vld [vmem:[%s5286 + $0x70] sm:$0xff]
      %v5302 = vld [vmem:[%s5286 + $0x78] sm:$0xff]
      %v5319 = vunpack.c.l.b16 %v5287
      %v5320 = vunpack.c.h.b16 %v5287
      %v5321 = vunpack.c.l.b16 %v5288
      %v5322 = vunpack.c.h.b16 %v5288
      %v5323 = vunpack.c.l.b16 %v5289
      %v5324 = vunpack.c.h.b16 %v5289
      %v5325 = vunpack.c.l.b16 %v5290
      %v5326 = vunpack.c.h.b16 %v5290
      %v5327 = vunpack.c.l.b16 %v5291
      %v5328 = vunpack.c.h.b16 %v5291
      %v5329 = vunpack.c.l.b16 %v5292
      %v5330 = vunpack.c.h.b16 %v5292
      %v5331 = vunpack.c.l.b16 %v5293
      %v5332 = vunpack.c.h.b16 %v5293
      %v5333 = vunpack.c.l.b16 %v5294
      %v5334 = vunpack.c.h.b16 %v5294
      %v5335 = vunpack.c.l.b16 %v5295
      %v5336 = vunpack.c.h.b16 %v5295
      %v5337 = vunpack.c.l.b16 %v5296
      %v5338 = vunpack.c.h.b16 %v5296
      %v5339 = vunpack.c.l.b16 %v5297
      %v5340 = vunpack.c.h.b16 %v5297
      %v5341 = vunpack.c.l.b16 %v5298
      %v5342 = vunpack.c.h.b16 %v5298
      %v5343 = vunpack.c.l.b16 %v5299
      %v5344 = vunpack.c.h.b16 %v5299
      %v5345 = vunpack.c.l.b16 %v5300
      %v5346 = vunpack.c.h.b16 %v5300
      %v5347 = vunpack.c.l.b16 %v5301
      %v5348 = vunpack.c.h.b16 %v5301
      %v5349 = vunpack.c.l.b16 %v5302
      %v5350 = vunpack.c.h.b16 %v5302
      %v5351 = vpack.c.b16 %v5321, %v5319
      %v5352 = vpack.c.b16 %v5322, %v5320
      %v5353 = vpack.c.b16 %v5325, %v5323
      %v5354 = vpack.c.b16 %v5326, %v5324
      %v5355 = vpack.c.b16 %v5329, %v5327
      %v5356 = vpack.c.b16 %v5330, %v5328
      %v5357 = vpack.c.b16 %v5333, %v5331
      %v5358 = vpack.c.b16 %v5334, %v5332
      %v5359 = vpack.c.b16 %v5337, %v5335
      %v5360 = vpack.c.b16 %v5338, %v5336
      %v5361 = vpack.c.b16 %v5341, %v5339
      %v5362 = vpack.c.b16 %v5342, %v5340
      %v5363 = vpack.c.b16 %v5345, %v5343
      %v5364 = vpack.c.b16 %v5346, %v5344
      %v5365 = vpack.c.b16 %v5349, %v5347
      %v5366 = vpack.c.b16 %v5350, %v5348
      %5383 = vmatpush.bf16.msra.mxu0 %v5365
      %5384 = vmatpush.bf16.msra.mxu0 %v5363
      %5385 = vmatpush.bf16.msra.mxu0 %v5361
      %5386 = vmatpush.bf16.msra.mxu0 %v5359
      %5387 = vmatpush.bf16.msra.mxu0 %v5357
      %5388 = vmatpush.bf16.msra.mxu0 %v5355
      %5389 = vmatpush.bf16.msra.mxu0 %v5353
      %5390 = vmatpush.bf16.msra.mxu0 %v5351
      %5391 = vmatmul.bf16.gmra.mxu0 %v5281
      %v5392 = vpop.f32.mrf.mxu0
      %v5393 = vadd.f32 0.0, %v5392
      %v5394 = vpop.f32.mrf.mxu0
      %v5395 = vadd.f32 0.0, %v5394
      %5396 = vmatmul.bf16.gmra.mxu0 %v5282
      %v5397 = vpop.f32.mrf.mxu0
      %v5398 = vadd.f32 0.0, %v5397
      %v5399 = vpop.f32.mrf.mxu0
      %v5400 = vadd.f32 0.0, %v5399
      %5401 = vmatmul.bf16.gmra.mxu0 %v5283
      %v5402 = vpop.f32.mrf.mxu0
      %v5403 = vadd.f32 0.0, %v5402
      %v5404 = vpop.f32.mrf.mxu0
      %v5405 = vadd.f32 0.0, %v5404
      %5406 = vmatmul.bf16.gmra.mxu0 %v5284
      %v5407 = vpop.f32.mrf.mxu0
      %v5408 = vadd.f32 0.0, %v5407
      %v5409 = vpop.f32.mrf.mxu0
      %v5410 = vadd.f32 0.0, %v5409
      %5411 = vmatmul.bf16.gmra.mxu0 %v5285
      %v5412 = vpop.f32.mrf.mxu0
      %v5413 = vadd.f32 0.0, %v5412
      %v5414 = vpop.f32.mrf.mxu0
      %v5415 = vadd.f32 0.0, %v5414
      %5416 = vdwg.mxu0
      %5417 = vmatpush.bf16.msra.mxu0 %v5366
      %5418 = vmatpush.bf16.msra.mxu0 %v5364
      %5419 = vmatpush.bf16.msra.mxu0 %v5362
      %5420 = vmatpush.bf16.msra.mxu0 %v5360
      %5421 = vmatpush.bf16.msra.mxu0 %v5358
      %5422 = vmatpush.bf16.msra.mxu0 %v5356
      %5423 = vmatpush.bf16.msra.mxu0 %v5354
      %5424 = vmatpush.bf16.msra.mxu0 %v5352
      %5425 = vmatmul.bf16.gmra.mxu0 %v5281
      %v5426 = vpop.f32.mrf.mxu0
      %v5427 = vadd.f32 0.0, %v5426
      %v5428 = vpop.f32.mrf.mxu0
      %v5429 = vadd.f32 0.0, %v5428
      %5430 = vmatmul.bf16.gmra.mxu0 %v5282
      %v5431 = vpop.f32.mrf.mxu0
      %v5432 = vadd.f32 0.0, %v5431
      %v5433 = vpop.f32.mrf.mxu0
      %v5434 = vadd.f32 0.0, %v5433
      %5435 = vmatmul.bf16.gmra.mxu0 %v5283
      %v5436 = vpop.f32.mrf.mxu0
      %v5437 = vadd.f32 0.0, %v5436
      %v5438 = vpop.f32.mrf.mxu0
      %v5439 = vadd.f32 0.0, %v5438
      %5440 = vmatmul.bf16.gmra.mxu0 %v5284
      %v5441 = vpop.f32.mrf.mxu0
      %v5442 = vadd.f32 0.0, %v5441
      %v5443 = vpop.f32.mrf.mxu0
      %v5444 = vadd.f32 0.0, %v5443
      %5445 = vmatmul.bf16.gmra.mxu0 %v5285
      %v5446 = vpop.f32.mrf.mxu0
      %v5447 = vadd.f32 0.0, %v5446
      %v5448 = vpop.f32.mrf.mxu0
      %v5449 = vadd.f32 0.0, %v5448
      %5450 = vdwg.mxu0
      %v5451 = vadd.f32 %v5213, %v5393
      %v5452 = vadd.f32 %v5247, %v5427
      %v5453 = vadd.f32 %v5215, %v5395
      %v5454 = vadd.f32 %v5249, %v5429
      %v5455 = vadd.f32 %v5218, %v5398
      %v5456 = vadd.f32 %v5252, %v5432
      %v5457 = vadd.f32 %v5220, %v5400
      %v5458 = vadd.f32 %v5254, %v5434
      %v5459 = vadd.f32 %v5223, %v5403
      %v5460 = vadd.f32 %v5257, %v5437
      %v5461 = vadd.f32 %v5225, %v5405
      %v5462 = vadd.f32 %v5259, %v5439
      %v5463 = vadd.f32 %v5228, %v5408
      %v5464 = vadd.f32 %v5262, %v5442
      %v5465 = vadd.f32 %v5230, %v5410
      %v5466 = vadd.f32 %v5264, %v5444
      %v5467 = vadd.f32 %v5233, %v5413
      %v5468 = vadd.f32 %v5267, %v5447
      %v5469 = vadd.f32 %v5235, %v5415
      %v5470 = vadd.f32 %v5269, %v5449
      %v5471 = vld [vmem:[#allocation4 + $0x15] sm:$0xff]
      %v5472 = vld [vmem:[#allocation4 + $0x1d] sm:$0xff]
      %v5473 = vld [vmem:[#allocation4 + $0x25] sm:$0xff]
      %v5474 = vld [vmem:[#allocation4 + $0x2d] sm:$0xff]
      %v5475 = vld [vmem:[#allocation4 + $0x35] sm:$0xff]
      %v5476 = vld [vmem:[#allocation4 + $0x3d] sm:$0xff]
      %v5477 = vld [vmem:[#allocation4 + $0x45] sm:$0xff]
      %v5478 = vld [vmem:[#allocation4 + $0x4d] sm:$0xff]
      %v5479 = vld [vmem:[#allocation4 + $0x55] sm:$0xff]
      %v5480 = vld [vmem:[#allocation4 + $0x5d] sm:$0xff]
      %v5481 = vpack.c.bf16 %v5472, %v5471
      %v5482 = vpack.c.bf16 %v5474, %v5473
      %v5483 = vpack.c.bf16 %v5476, %v5475
      %v5484 = vpack.c.bf16 %v5478, %v5477
      %v5485 = vpack.c.bf16 %v5480, %v5479
      %s5486 = scalar_lea.vmem %s4, 1408
      %v5487 = vld [vmem:[%s5486] sm:$0xff]
      %v5488 = vld [vmem:[%s5486 + $0x8] sm:$0xff]
      %v5489 = vld [vmem:[%s5486 + $0x10] sm:$0xff]
      %v5490 = vld [vmem:[%s5486 + $0x18] sm:$0xff]
      %v5491 = vld [vmem:[%s5486 + $0x20] sm:$0xff]
      %v5492 = vld [vmem:[%s5486 + $0x28] sm:$0xff]
      %v5493 = vld [vmem:[%s5486 + $0x30] sm:$0xff]
      %v5494 = vld [vmem:[%s5486 + $0x38] sm:$0xff]
      %v5495 = vld [vmem:[%s5486 + $0x40] sm:$0xff]
      %v5496 = vld [vmem:[%s5486 + $0x48] sm:$0xff]
      %v5497 = vld [vmem:[%s5486 + $0x50] sm:$0xff]
      %v5498 = vld [vmem:[%s5486 + $0x58] sm:$0xff]
      %v5499 = vld [vmem:[%s5486 + $0x60] sm:$0xff]
      %v5500 = vld [vmem:[%s5486 + $0x68] sm:$0xff]
      %v5501 = vld [vmem:[%s5486 + $0x70] sm:$0xff]
      %v5502 = vld [vmem:[%s5486 + $0x78] sm:$0xff]
      %v5519 = vunpack.c.l.b16 %v5487
      %v5520 = vunpack.c.h.b16 %v5487
      %v5521 = vunpack.c.l.b16 %v5488
      %v5522 = vunpack.c.h.b16 %v5488
      %v5523 = vunpack.c.l.b16 %v5489
      %v5524 = vunpack.c.h.b16 %v5489
      %v5525 = vunpack.c.l.b16 %v5490
      %v5526 = vunpack.c.h.b16 %v5490
      %v5527 = vunpack.c.l.b16 %v5491
      %v5528 = vunpack.c.h.b16 %v5491
      %v5529 = vunpack.c.l.b16 %v5492
      %v5530 = vunpack.c.h.b16 %v5492
      %v5531 = vunpack.c.l.b16 %v5493
      %v5532 = vunpack.c.h.b16 %v5493
      %v5533 = vunpack.c.l.b16 %v5494
      %v5534 = vunpack.c.h.b16 %v5494
      %v5535 = vunpack.c.l.b16 %v5495
      %v5536 = vunpack.c.h.b16 %v5495
      %v5537 = vunpack.c.l.b16 %v5496
      %v5538 = vunpack.c.h.b16 %v5496
      %v5539 = vunpack.c.l.b16 %v5497
      %v5540 = vunpack.c.h.b16 %v5497
      %v5541 = vunpack.c.l.b16 %v5498
      %v5542 = vunpack.c.h.b16 %v5498
      %v5543 = vunpack.c.l.b16 %v5499
      %v5544 = vunpack.c.h.b16 %v5499
      %v5545 = vunpack.c.l.b16 %v5500
      %v5546 = vunpack.c.h.b16 %v5500
      %v5547 = vunpack.c.l.b16 %v5501
      %v5548 = vunpack.c.h.b16 %v5501
      %v5549 = vunpack.c.l.b16 %v5502
      %v5550 = vunpack.c.h.b16 %v5502
      %v5551 = vpack.c.b16 %v5521, %v5519
      %v5552 = vpack.c.b16 %v5522, %v5520
      %v5553 = vpack.c.b16 %v5525, %v5523
      %v5554 = vpack.c.b16 %v5526, %v5524
      %v5555 = vpack.c.b16 %v5529, %v5527
      %v5556 = vpack.c.b16 %v5530, %v5528
      %v5557 = vpack.c.b16 %v5533, %v5531
      %v5558 = vpack.c.b16 %v5534, %v5532
      %v5559 = vpack.c.b16 %v5537, %v5535
      %v5560 = vpack.c.b16 %v5538, %v5536
      %v5561 = vpack.c.b16 %v5541, %v5539
      %v5562 = vpack.c.b16 %v5542, %v5540
      %v5563 = vpack.c.b16 %v5545, %v5543
      %v5564 = vpack.c.b16 %v5546, %v5544
      %v5565 = vpack.c.b16 %v5549, %v5547
      %v5566 = vpack.c.b16 %v5550, %v5548
      %5583 = vmatpush.bf16.msra.mxu0 %v5565
      %5584 = vmatpush.bf16.msra.mxu0 %v5563
      %5585 = vmatpush.bf16.msra.mxu0 %v5561
      %5586 = vmatpush.bf16.msra.mxu0 %v5559
      %5587 = vmatpush.bf16.msra.mxu0 %v5557
      %5588 = vmatpush.bf16.msra.mxu0 %v5555
      %5589 = vmatpush.bf16.msra.mxu0 %v5553
      %5590 = vmatpush.bf16.msra.mxu0 %v5551
      %5591 = vmatmul.bf16.gmra.mxu0 %v5481
      %v5592 = vpop.f32.mrf.mxu0
      %v5593 = vadd.f32 0.0, %v5592
      %v5594 = vpop.f32.mrf.mxu0
      %v5595 = vadd.f32 0.0, %v5594
      %5596 = vmatmul.bf16.gmra.mxu0 %v5482
      %v5597 = vpop.f32.mrf.mxu0
      %v5598 = vadd.f32 0.0, %v5597
      %v5599 = vpop.f32.mrf.mxu0
      %v5600 = vadd.f32 0.0, %v5599
      %5601 = vmatmul.bf16.gmra.mxu0 %v5483
      %v5602 = vpop.f32.mrf.mxu0
      %v5603 = vadd.f32 0.0, %v5602
      %v5604 = vpop.f32.mrf.mxu0
      %v5605 = vadd.f32 0.0, %v5604
      %5606 = vmatmul.bf16.gmra.mxu0 %v5484
      %v5607 = vpop.f32.mrf.mxu0
      %v5608 = vadd.f32 0.0, %v5607
      %v5609 = vpop.f32.mrf.mxu0
      %v5610 = vadd.f32 0.0, %v5609
      %5611 = vmatmul.bf16.gmra.mxu0 %v5485
      %v5612 = vpop.f32.mrf.mxu0
      %v5613 = vadd.f32 0.0, %v5612
      %v5614 = vpop.f32.mrf.mxu0
      %v5615 = vadd.f32 0.0, %v5614
      %5616 = vdwg.mxu0
      %5617 = vmatpush.bf16.msra.mxu0 %v5566
      %5618 = vmatpush.bf16.msra.mxu0 %v5564
      %5619 = vmatpush.bf16.msra.mxu0 %v5562
      %5620 = vmatpush.bf16.msra.mxu0 %v5560
      %5621 = vmatpush.bf16.msra.mxu0 %v5558
      %5622 = vmatpush.bf16.msra.mxu0 %v5556
      %5623 = vmatpush.bf16.msra.mxu0 %v5554
      %5624 = vmatpush.bf16.msra.mxu0 %v5552
      %5625 = vmatmul.bf16.gmra.mxu0 %v5481
      %v5626 = vpop.f32.mrf.mxu0
      %v5627 = vadd.f32 0.0, %v5626
      %v5628 = vpop.f32.mrf.mxu0
      %v5629 = vadd.f32 0.0, %v5628
      %5630 = vmatmul.bf16.gmra.mxu0 %v5482
      %v5631 = vpop.f32.mrf.mxu0
      %v5632 = vadd.f32 0.0, %v5631
      %v5633 = vpop.f32.mrf.mxu0
      %v5634 = vadd.f32 0.0, %v5633
      %5635 = vmatmul.bf16.gmra.mxu0 %v5483
      %v5636 = vpop.f32.mrf.mxu0
      %v5637 = vadd.f32 0.0, %v5636
      %v5638 = vpop.f32.mrf.mxu0
      %v5639 = vadd.f32 0.0, %v5638
      %5640 = vmatmul.bf16.gmra.mxu0 %v5484
      %v5641 = vpop.f32.mrf.mxu0
      %v5642 = vadd.f32 0.0, %v5641
      %v5643 = vpop.f32.mrf.mxu0
      %v5644 = vadd.f32 0.0, %v5643
      %5645 = vmatmul.bf16.gmra.mxu0 %v5485
      %v5646 = vpop.f32.mrf.mxu0
      %v5647 = vadd.f32 0.0, %v5646
      %v5648 = vpop.f32.mrf.mxu0
      %v5649 = vadd.f32 0.0, %v5648
      %5650 = vdwg.mxu0
      %v5651 = vadd.f32 %v5451, %v5593
      %v5652 = vadd.f32 %v5452, %v5627
      %v5653 = vadd.f32 %v5453, %v5595
      %v5654 = vadd.f32 %v5454, %v5629
      %v5655 = vadd.f32 %v5455, %v5598
      %v5656 = vadd.f32 %v5456, %v5632
      %v5657 = vadd.f32 %v5457, %v5600
      %v5658 = vadd.f32 %v5458, %v5634
      %v5659 = vadd.f32 %v5459, %v5603
      %v5660 = vadd.f32 %v5460, %v5637
      %v5661 = vadd.f32 %v5461, %v5605
      %v5662 = vadd.f32 %v5462, %v5639
      %v5663 = vadd.f32 %v5463, %v5608
      %v5664 = vadd.f32 %v5464, %v5642
      %v5665 = vadd.f32 %v5465, %v5610
      %v5666 = vadd.f32 %v5466, %v5644
      %v5667 = vadd.f32 %v5467, %v5613
      %v5668 = vadd.f32 %v5468, %v5647
      %v5669 = vadd.f32 %v5469, %v5615
      %v5670 = vadd.f32 %v5470, %v5649
      %v5671 = vld [vmem:[%s8] sm:$0x3]
      %v5673 = vperm.slane %v5671, 0
      %v5674 = vperm.slane %v5671, 1
      %v5677 = vadd.f32 %v5651, %v5673
      %v5678 = vadd.f32 %v5652, %v5674
      %v5679 = vadd.f32 %v5653, %v5673
      %v5680 = vadd.f32 %v5654, %v5674
      %v5681 = vadd.f32 %v5655, %v5673
      %v5682 = vadd.f32 %v5656, %v5674
      %v5683 = vadd.f32 %v5657, %v5673
      %v5684 = vadd.f32 %v5658, %v5674
      %v5685 = vadd.f32 %v5659, %v5673
      %v5686 = vadd.f32 %v5660, %v5674
      %v5687 = vadd.f32 %v5661, %v5673
      %v5688 = vadd.f32 %v5662, %v5674
      %v5689 = vadd.f32 %v5663, %v5673
      %v5690 = vadd.f32 %v5664, %v5674
      %v5691 = vadd.f32 %v5665, %v5673
      %v5692 = vadd.f32 %v5666, %v5674
      %v5693 = vadd.f32 %v5667, %v5673
      %v5694 = vadd.f32 %v5668, %v5674
      %v5695 = vadd.f32 %v5669, %v5673
      %v5696 = vadd.f32 %v5670, %v5674
      %v5697 = vmax.f32 %v5677, 0.0
      %v5698 = vmax.f32 %v5678, 0.0
      %v5699 = vmax.f32 %v5679, 0.0
      %v5700 = vmax.f32 %v5680, 0.0
      %v5701 = vmax.f32 %v5681, 0.0
      %v5702 = vmax.f32 %v5682, 0.0
      %v5703 = vmax.f32 %v5683, 0.0
      %v5704 = vmax.f32 %v5684, 0.0
      %v5705 = vmax.f32 %v5685, 0.0
      %v5706 = vmax.f32 %v5686, 0.0
      %v5707 = vmax.f32 %v5687, 0.0
      %v5708 = vmax.f32 %v5688, 0.0
      %v5709 = vmax.f32 %v5689, 0.0
      %v5710 = vmax.f32 %v5690, 0.0
      %v5711 = vmax.f32 %v5691, 0.0
      %v5712 = vmax.f32 %v5692, 0.0
      %v5713 = vmax.f32 %v5693, 0.0
      %v5714 = vmax.f32 %v5694, 0.0
      %v5715 = vmax.f32 %v5695, 0.0
      %v5716 = vmax.f32 %v5696, 0.0
      %v5717 = vpack.c.bf16 %v5699, %v5697
      %v5718 = vpack.c.bf16 %v5700, %v5698
      %v5719 = vpack.c.bf16 %v5703, %v5701
      %v5720 = vpack.c.bf16 %v5704, %v5702
      %v5721 = vpack.c.bf16 %v5707, %v5705
      %v5722 = vpack.c.bf16 %v5708, %v5706
      %v5723 = vpack.c.bf16 %v5711, %v5709
      %v5724 = vpack.c.bf16 %v5712, %v5710
      %v5725 = vpack.c.bf16 %v5715, %v5713
      %v5726 = vpack.c.bf16 %v5716, %v5714
      %v5727 = vld [vmem:[%s5] sm:$0xf]
      %v5728 = vld [vmem:[%s5 + $0x4] sm:$0xf]
      %v5729 = vld [vmem:[%s5 + $0x8] sm:$0xf]
      %v5730 = vld [vmem:[%s5 + $0xc] sm:$0xf]
      %v5731 = vld [vmem:[%s5 + $0x10] sm:$0xf]
      %v5732 = vld [vmem:[%s5 + $0x14] sm:$0xf]
      %v5733 = vld [vmem:[%s5 + $0x18] sm:$0xf]
      %v5734 = vld [vmem:[%s5 + $0x1c] sm:$0xf]
      %v5735 = vld [vmem:[%s5 + $0x20] sm:$0xf]
      %v5736 = vld [vmem:[%s5 + $0x24] sm:$0xf]
      %v5737 = vld [vmem:[%s5 + $0x28] sm:$0xf]
      %v5738 = vld [vmem:[%s5 + $0x2c] sm:$0xf]
      %v5739 = vld [vmem:[%s5 + $0x30] sm:$0xf]
      %v5740 = vld [vmem:[%s5 + $0x34] sm:$0xf]
      %v5741 = vld [vmem:[%s5 + $0x38] sm:$0xf]
      %v5742 = vld [vmem:[%s5 + $0x3c] sm:$0xf]
      %v5743 = vld [vmem:[%s5 + $0x40] sm:$0xf]
      %v5744 = vld [vmem:[%s5 + $0x44] sm:$0xf]
      %v5745 = vld [vmem:[%s5 + $0x48] sm:$0xf]
      %v5746 = vld [vmem:[%s5 + $0x4c] sm:$0xf]
      %v5747 = vld [vmem:[%s9] sm:$0x1]
      %v5749 = vperm.slane %v5747, 0
      %v5771 = vunpack.c.l.b16 %v5727
      %v5772 = vunpack.c.l.b16 %v5728
      %v5773 = vunpack.c.l.b16 %v5729
      %v5774 = vunpack.c.l.b16 %v5730
      %v5775 = vunpack.c.l.b16 %v5731
      %v5776 = vunpack.c.l.b16 %v5732
      %v5777 = vunpack.c.l.b16 %v5733
      %v5778 = vunpack.c.l.b16 %v5734
      %v5779 = vunpack.c.l.b16 %v5735
      %v5780 = vunpack.c.l.b16 %v5736
      %v5781 = vunpack.c.l.b16 %v5737
      %v5782 = vunpack.c.l.b16 %v5738
      %v5783 = vunpack.c.l.b16 %v5739
      %v5784 = vunpack.c.l.b16 %v5740
      %v5785 = vunpack.c.l.b16 %v5741
      %v5786 = vunpack.c.l.b16 %v5742
      %v5787 = vunpack.c.l.b16 %v5743
      %v5788 = vunpack.c.l.b16 %v5744
      %v5789 = vunpack.c.l.b16 %v5745
      %v5790 = vunpack.c.l.b16 %v5746
      %v5791 = vpack.c.b16 %v5772, %v5771
      %v5792 = vpack.c.b16 %v5774, %v5773
      %v5793 = vpack.c.b16 %v5776, %v5775
      %v5794 = vpack.c.b16 %v5778, %v5777
      %v5795 = vpack.c.b16 %v5780, %v5779
      %v5796 = vpack.c.b16 %v5782, %v5781
      %v5797 = vpack.c.b16 %v5784, %v5783
      %v5798 = vpack.c.b16 %v5786, %v5785
      %v5799 = vpack.c.b16 %v5788, %v5787
      %v5800 = vpack.c.b16 %v5790, %v5789
      %v5812 = vsel %vm1366, %v5718, 0
      %v5815 = vsel %vm1366, %v5720, 0
      %v5818 = vsel %vm1366, %v5722, 0
      %v5821 = vsel %vm1366, %v5724, 0
      %v5824 = vsel %vm1366, %v5726, 0
      %5826 = vmatpush.bf16.msra.mxu0 %v5798
      %5827 = vmatpush.bf16.msra.mxu0 %v5797
      %5828 = vmatpush.bf16.msra.mxu0 %v5796
      %5829 = vmatpush.bf16.msra.mxu0 %v5795
      %5830 = vmatpush.bf16.msra.mxu0 %v5794
      %5831 = vmatpush.bf16.msra.mxu0 %v5793
      %5832 = vmatpush.bf16.msra.mxu0 %v5792
      %5833 = vmatpush.bf16.msra.mxu0 %v5791
      %5834 = vmatmul.bf16.gmra.mxu0 %v5717
      %v5835 = vpop.f32.mrf.mxu0
      %v5836 = vadd.f32 %v5749, %v5835
      %v5837 = vpop.f32.mrf.mxu0
      %v5838 = vadd.f32 %v5749, %v5837
      %5839 = vmatmul.bf16.gmra.mxu0 %v5719
      %v5840 = vpop.f32.mrf.mxu0
      %v5841 = vadd.f32 %v5749, %v5840
      %v5842 = vpop.f32.mrf.mxu0
      %v5843 = vadd.f32 %v5749, %v5842
      %5844 = vmatmul.bf16.gmra.mxu0 %v5721
      %v5845 = vpop.f32.mrf.mxu0
      %v5846 = vadd.f32 %v5749, %v5845
      %v5847 = vpop.f32.mrf.mxu0
      %v5848 = vadd.f32 %v5749, %v5847
      %5849 = vmatmul.bf16.gmra.mxu0 %v5723
      %v5850 = vpop.f32.mrf.mxu0
      %v5851 = vadd.f32 %v5749, %v5850
      %v5852 = vpop.f32.mrf.mxu0
      %v5853 = vadd.f32 %v5749, %v5852
      %5854 = vmatmul.bf16.gmra.mxu0 %v5725
      %v5855 = vpop.f32.mrf.mxu0
      %v5856 = vadd.f32 %v5749, %v5855
      %v5857 = vpop.f32.mrf.mxu0
      %v5858 = vadd.f32 %v5749, %v5857
      %5859 = vdwg.mxu0
      %5860 = vmatpush.bf16.msra.mxu0 0
      %5861 = vmatpush.bf16.msra.mxu0 0
      %5862 = vmatpush.bf16.msra.mxu0 0
      %5863 = vmatpush.bf16.msra.mxu0 0
      %5864 = vmatpush.bf16.msra.mxu0 0
      %5865 = vmatpush.bf16.msra.mxu0 0
      %5866 = vmatpush.bf16.msra.mxu0 %v5800
      %5867 = vmatpush.bf16.msra.mxu0 %v5799
      %5868 = vmatmul.bf16.gmra.mxu0 %v5812
      %v5869 = vpop.f32.mrf.mxu0
      %v5870 = vadd.f32 %v5836, %v5869
      %v5871 = vpop.f32.mrf.mxu0
      %v5872 = vadd.f32 %v5838, %v5871
      %5873 = vmatmul.bf16.gmra.mxu0 %v5815
      %v5874 = vpop.f32.mrf.mxu0
      %v5875 = vadd.f32 %v5841, %v5874
      %v5876 = vpop.f32.mrf.mxu0
      %v5877 = vadd.f32 %v5843, %v5876
      %5878 = vmatmul.bf16.gmra.mxu0 %v5818
      %v5879 = vpop.f32.mrf.mxu0
      %v5880 = vadd.f32 %v5846, %v5879
      %v5881 = vpop.f32.mrf.mxu0
      %v5882 = vadd.f32 %v5848, %v5881
      %5883 = vmatmul.bf16.gmra.mxu0 %v5821
      %v5884 = vpop.f32.mrf.mxu0
      %v5885 = vadd.f32 %v5851, %v5884
      %v5886 = vpop.f32.mrf.mxu0
      %v5887 = vadd.f32 %v5853, %v5886
      %5888 = vmatmul.bf16.gmra.mxu0 %v5824
      %v5889 = vpop.f32.mrf.mxu0
      %v5890 = vadd.f32 %v5856, %v5889
      %v5891 = vpop.f32.mrf.mxu0
      %v5892 = vadd.f32 %v5858, %v5891
      %5893 = vdwg.mxu0
      %v5894 = vld [vmem:[%s10] sm:$0x1]
      %vm5895 = vcmp.gt.f32.partialorder %v5894, 0.0
      %v5896 = vxor.u32 %v5870, 2147483648
      %v5897 = vxor.u32 %v5872, 2147483648
      %v5898 = vxor.u32 %v5875, 2147483648
      %v5899 = vxor.u32 %v5877, 2147483648
      %v5900 = vxor.u32 %v5880, 2147483648
      %v5901 = vxor.u32 %v5882, 2147483648
      %v5902 = vxor.u32 %v5885, 2147483648
      %v5903 = vxor.u32 %v5887, 2147483648
      %v5904 = vxor.u32 %v5890, 2147483648
      %v5905 = vxor.u32 %v5892, 2147483648
      %v5906 = vmul.f32 %v5896, 1.442695
      %v5907 = vpow.pop %v5906
      %v5908 = vmul.f32 %v5897, 1.442695
      %v5909 = vpow.pop %v5908
      %v5910 = vmul.f32 %v5898, 1.442695
      %v5911 = vpow.pop %v5910
      %v5912 = vmul.f32 %v5899, 1.442695
      %v5913 = vpow.pop %v5912
      %v5914 = vmul.f32 %v5900, 1.442695
      %v5915 = vpow.pop %v5914
      %v5916 = vmul.f32 %v5901, 1.442695
      %v5917 = vpow.pop %v5916
      %v5918 = vmul.f32 %v5902, 1.442695
      %v5919 = vpow.pop %v5918
      %v5920 = vmul.f32 %v5903, 1.442695
      %v5921 = vpow.pop %v5920
      %v5922 = vmul.f32 %v5904, 1.442695
      %v5923 = vpow.pop %v5922
      %v5924 = vmul.f32 %v5905, 1.442695
      %v5925 = vpow.pop %v5924
      %v5926 = vadd.f32 %v5907, 1.0
      %v5927 = vadd.f32 %v5909, 1.0
      %v5928 = vadd.f32 %v5911, 1.0
      %v5929 = vadd.f32 %v5913, 1.0
      %v5930 = vadd.f32 %v5915, 1.0
      %v5931 = vadd.f32 %v5917, 1.0
      %v5932 = vadd.f32 %v5919, 1.0
      %v5933 = vadd.f32 %v5921, 1.0
      %v5934 = vadd.f32 %v5923, 1.0
      %v5935 = vadd.f32 %v5925, 1.0
      %v5936 = vrcp.pop %v5926
      %v5937 = vmul.f32 %v5926, %v5936
      %v5938 = vsub.f32 1.0, %v5937
      %v5939 = vmul.f32 %v5936, %v5938
      %v5940 = vadd.f32 %v5936, %v5939
      %vm5941 = vweird.f32 %v5926
      %vm5942 = vweird.f32 %v5936
      %vm5943 = vmor %vm5941, %vm5942
      %v5944 = vsel %vm5943, %v5936, %v5940
      %v5945 = vand.u32 2147483647, %v5926
      %vm5946 = vcmp.eq.f32.partialorder %v5945, 8.507059e+37
      %v5947 = vand.u32 %v5926, 2147483648
      %v5948 = vor.u32 1.1754944e-38, %v5947
      %v5949 = vsel %vm5946, %v5948, %v5944
      %v5950 = vmul.f32 1.0, %v5949
      %v5951 = vrcp.pop %v5927
      %v5952 = vmul.f32 %v5927, %v5951
      %v5953 = vsub.f32 1.0, %v5952
      %v5954 = vmul.f32 %v5951, %v5953
      %v5955 = vadd.f32 %v5951, %v5954
      %vm5956 = vweird.f32 %v5927
      %vm5957 = vweird.f32 %v5951
      %vm5958 = vmor %vm5956, %vm5957
      %v5959 = vsel %vm5958, %v5951, %v5955
      %v5960 = vand.u32 2147483647, %v5927
      %vm5961 = vcmp.eq.f32.partialorder %v5960, 8.507059e+37
      %v5962 = vand.u32 %v5927, 2147483648
      %v5963 = vor.u32 1.1754944e-38, %v5962
      %v5964 = vsel %vm5961, %v5963, %v5959
      %v5965 = vmul.f32 1.0, %v5964
      %v5966 = vrcp.pop %v5928
      %v5967 = vmul.f32 %v5928, %v5966
      %v5968 = vsub.f32 1.0, %v5967
      %v5969 = vmul.f32 %v5966, %v5968
      %v5970 = vadd.f32 %v5966, %v5969
      %vm5971 = vweird.f32 %v5928
      %vm5972 = vweird.f32 %v5966
      %vm5973 = vmor %vm5971, %vm5972
      %v5974 = vsel %vm5973, %v5966, %v5970
      %v5975 = vand.u32 2147483647, %v5928
      %vm5976 = vcmp.eq.f32.partialorder %v5975, 8.507059e+37
      %v5977 = vand.u32 %v5928, 2147483648
      %v5978 = vor.u32 1.1754944e-38, %v5977
      %v5979 = vsel %vm5976, %v5978, %v5974
      %v5980 = vmul.f32 1.0, %v5979
      %v5981 = vrcp.pop %v5929
      %v5982 = vmul.f32 %v5929, %v5981
      %v5983 = vsub.f32 1.0, %v5982
      %v5984 = vmul.f32 %v5981, %v5983
      %v5985 = vadd.f32 %v5981, %v5984
      %vm5986 = vweird.f32 %v5929
      %vm5987 = vweird.f32 %v5981
      %vm5988 = vmor %vm5986, %vm5987
      %v5989 = vsel %vm5988, %v5981, %v5985
      %v5990 = vand.u32 2147483647, %v5929
      %vm5991 = vcmp.eq.f32.partialorder %v5990, 8.507059e+37
      %v5992 = vand.u32 %v5929, 2147483648
      %v5993 = vor.u32 1.1754944e-38, %v5992
      %v5994 = vsel %vm5991, %v5993, %v5989
      %v5995 = vmul.f32 1.0, %v5994
      %v5996 = vrcp.pop %v5930
      %v5997 = vmul.f32 %v5930, %v5996
      %v5998 = vsub.f32 1.0, %v5997
      %v5999 = vmul.f32 %v5996, %v5998
      %v6000 = vadd.f32 %v5996, %v5999
      %vm6001 = vweird.f32 %v5930
      %vm6002 = vweird.f32 %v5996
      %vm6003 = vmor %vm6001, %vm6002
      %v6004 = vsel %vm6003, %v5996, %v6000
      %v6005 = vand.u32 2147483647, %v5930
      %vm6006 = vcmp.eq.f32.partialorder %v6005, 8.507059e+37
      %v6007 = vand.u32 %v5930, 2147483648
      %v6008 = vor.u32 1.1754944e-38, %v6007
      %v6009 = vsel %vm6006, %v6008, %v6004
      %v6010 = vmul.f32 1.0, %v6009
      %v6011 = vrcp.pop %v5931
      %v6012 = vmul.f32 %v5931, %v6011
      %v6013 = vsub.f32 1.0, %v6012
      %v6014 = vmul.f32 %v6011, %v6013
      %v6015 = vadd.f32 %v6011, %v6014
      %vm6016 = vweird.f32 %v5931
      %vm6017 = vweird.f32 %v6011
      %vm6018 = vmor %vm6016, %vm6017
      %v6019 = vsel %vm6018, %v6011, %v6015
      %v6020 = vand.u32 2147483647, %v5931
      %vm6021 = vcmp.eq.f32.partialorder %v6020, 8.507059e+37
      %v6022 = vand.u32 %v5931, 2147483648
      %v6023 = vor.u32 1.1754944e-38, %v6022
      %v6024 = vsel %vm6021, %v6023, %v6019
      %v6025 = vmul.f32 1.0, %v6024
      %v6026 = vrcp.pop %v5932
      %v6027 = vmul.f32 %v5932, %v6026
      %v6028 = vsub.f32 1.0, %v6027
      %v6029 = vmul.f32 %v6026, %v6028
      %v6030 = vadd.f32 %v6026, %v6029
      %vm6031 = vweird.f32 %v5932
      %vm6032 = vweird.f32 %v6026
      %vm6033 = vmor %vm6031, %vm6032
      %v6034 = vsel %vm6033, %v6026, %v6030
      %v6035 = vand.u32 2147483647, %v5932
      %vm6036 = vcmp.eq.f32.partialorder %v6035, 8.507059e+37
      %v6037 = vand.u32 %v5932, 2147483648
      %v6038 = vor.u32 1.1754944e-38, %v6037
      %v6039 = vsel %vm6036, %v6038, %v6034
      %v6040 = vmul.f32 1.0, %v6039
      %v6041 = vrcp.pop %v5933
      %v6042 = vmul.f32 %v5933, %v6041
      %v6043 = vsub.f32 1.0, %v6042
      %v6044 = vmul.f32 %v6041, %v6043
      %v6045 = vadd.f32 %v6041, %v6044
      %vm6046 = vweird.f32 %v5933
      %vm6047 = vweird.f32 %v6041
      %vm6048 = vmor %vm6046, %vm6047
      %v6049 = vsel %vm6048, %v6041, %v6045
      %v6050 = vand.u32 2147483647, %v5933
      %vm6051 = vcmp.eq.f32.partialorder %v6050, 8.507059e+37
      %v6052 = vand.u32 %v5933, 2147483648
      %v6053 = vor.u32 1.1754944e-38, %v6052
      %v6054 = vsel %vm6051, %v6053, %v6049
      %v6055 = vmul.f32 1.0, %v6054
      %v6056 = vrcp.pop %v5934
      %v6057 = vmul.f32 %v5934, %v6056
      %v6058 = vsub.f32 1.0, %v6057
      %v6059 = vmul.f32 %v6056, %v6058
      %v6060 = vadd.f32 %v6056, %v6059
      %vm6061 = vweird.f32 %v5934
      %vm6062 = vweird.f32 %v6056
      %vm6063 = vmor %vm6061, %vm6062
      %v6064 = vsel %vm6063, %v6056, %v6060
      %v6065 = vand.u32 2147483647, %v5934
      %vm6066 = vcmp.eq.f32.partialorder %v6065, 8.507059e+37
      %v6067 = vand.u32 %v5934, 2147483648
      %v6068 = vor.u32 1.1754944e-38, %v6067
      %v6069 = vsel %vm6066, %v6068, %v6064
      %v6070 = vmul.f32 1.0, %v6069
      %v6071 = vrcp.pop %v5935
      %v6072 = vmul.f32 %v5935, %v6071
      %v6073 = vsub.f32 1.0, %v6072
      %v6074 = vmul.f32 %v6071, %v6073
      %v6075 = vadd.f32 %v6071, %v6074
      %vm6076 = vweird.f32 %v5935
      %vm6077 = vweird.f32 %v6071
      %vm6078 = vmor %vm6076, %vm6077
      %v6079 = vsel %vm6078, %v6071, %v6075
      %v6080 = vand.u32 2147483647, %v5935
      %vm6081 = vcmp.eq.f32.partialorder %v6080, 8.507059e+37
      %v6082 = vand.u32 %v5935, 2147483648
      %v6083 = vor.u32 1.1754944e-38, %v6082
      %v6084 = vsel %vm6081, %v6083, %v6079
      %v6085 = vmul.f32 1.0, %v6084
      %v6086 = vsel %vm5895, 1, 0
      %v6087 = vperm.slane %v6086, 0
      %vm6088 = vcmp.eq.s32.totalorder %v6087, 1
      %v6089 = vsel %vm6088, %v5950, %v5870
      %v6090 = vsel %vm6088, %v5965, %v5872
      %v6091 = vsel %vm6088, %v5980, %v5875
      %v6092 = vsel %vm6088, %v5995, %v5877
      %v6093 = vsel %vm6088, %v6010, %v5880
      %v6094 = vsel %vm6088, %v6025, %v5882
      %v6095 = vsel %vm6088, %v6040, %v5885
      %v6096 = vsel %vm6088, %v6055, %v5887
      %v6097 = vsel %vm6088, %v6070, %v5890
      %v6098 = vsel %vm6088, %v6085, %v5892
      %6099 = vst [vmem:[%s440 + $0xa0] sm:$0xff] %v6089
      %6100 = vst [vmem:[%s440 + $0xa8] sm:$0xff] %v6090
      %6101 = vst [vmem:[%s440 + $0xb0] sm:$0xff] %v6091
      %6102 = vst [vmem:[%s440 + $0xb8] sm:$0xff] %v6092
      %6103 = vst [vmem:[%s440 + $0xc0] sm:$0xff] %v6093
      %6104 = vst [vmem:[%s440 + $0xc8] sm:$0xff] %v6094
      %6105 = vst [vmem:[%s440 + $0xd0] sm:$0xff] %v6095
      %6106 = vst [vmem:[%s440 + $0xd8] sm:$0xff] %v6096
      %6107 = vst [vmem:[%s440 + $0xe0] sm:$0xff] %v6097
      %6108 = vst [vmem:[%s440 + $0xe8] sm:$0xff] %v6098
      %v6109 = vld [vmem:[#allocation4 + $0xb] sm:$0xff]
      %v6110 = vld [vmem:[#allocation4 + $0x13] sm:$0xff]
      %v6111 = vld [vmem:[#allocation4 + $0x1b] sm:$0xff]
      %v6112 = vld [vmem:[#allocation4 + $0x23] sm:$0xff]
      %v6113 = vld [vmem:[#allocation4 + $0x2b] sm:$0xff]
      %v6114 = vld [vmem:[#allocation4 + $0x33] sm:$0xff]
      %v6115 = vld [vmem:[#allocation4 + $0x3b] sm:$0xff]
      %v6116 = vld [vmem:[#allocation4 + $0x43] sm:$0xff]
      %v6117 = vld [vmem:[#allocation4 + $0x4b] sm:$0xff]
      %v6118 = vld [vmem:[#allocation4 + $0x53] sm:$0xff]
      %v6119 = vpack.c.bf16 %v6110, %v6109
      %v6120 = vpack.c.bf16 %v6112, %v6111
      %v6121 = vpack.c.bf16 %v6114, %v6113
      %v6122 = vpack.c.bf16 %v6116, %v6115
      %v6123 = vpack.c.bf16 %v6118, %v6117
      %s6124 = scalar_lea.vmem %s4, 1536
      %v6125 = vld [vmem:[%s6124] sm:$0xff]
      %v6126 = vld [vmem:[%s6124 + $0x8] sm:$0xff]
      %v6127 = vld [vmem:[%s6124 + $0x10] sm:$0xff]
      %v6128 = vld [vmem:[%s6124 + $0x18] sm:$0xff]
      %v6129 = vld [vmem:[%s6124 + $0x20] sm:$0xff]
      %v6130 = vld [vmem:[%s6124 + $0x28] sm:$0xff]
      %v6131 = vld [vmem:[%s6124 + $0x30] sm:$0xff]
      %v6132 = vld [vmem:[%s6124 + $0x38] sm:$0xff]
      %v6133 = vld [vmem:[%s6124 + $0x40] sm:$0xff]
      %v6134 = vld [vmem:[%s6124 + $0x48] sm:$0xff]
      %v6135 = vld [vmem:[%s6124 + $0x50] sm:$0xff]
      %v6136 = vld [vmem:[%s6124 + $0x58] sm:$0xff]
      %v6137 = vld [vmem:[%s6124 + $0x60] sm:$0xff]
      %v6138 = vld [vmem:[%s6124 + $0x68] sm:$0xff]
      %v6139 = vld [vmem:[%s6124 + $0x70] sm:$0xff]
      %v6140 = vld [vmem:[%s6124 + $0x78] sm:$0xff]
      %v6141 = vld [vmem:[#allocation4 + $0xc] sm:$0xff]
      %v6142 = vld [vmem:[#allocation4 + $0x14] sm:$0xff]
      %v6143 = vld [vmem:[#allocation4 + $0x1c] sm:$0xff]
      %v6144 = vld [vmem:[#allocation4 + $0x24] sm:$0xff]
      %v6145 = vld [vmem:[#allocation4 + $0x2c] sm:$0xff]
      %v6146 = vld [vmem:[#allocation4 + $0x34] sm:$0xff]
      %v6147 = vld [vmem:[#allocation4 + $0x3c] sm:$0xff]
      %v6148 = vld [vmem:[#allocation4 + $0x44] sm:$0xff]
      %v6149 = vld [vmem:[#allocation4 + $0x4c] sm:$0xff]
      %v6150 = vld [vmem:[#allocation4 + $0x54] sm:$0xff]
      %v6151 = vpack.c.bf16 %v6142, %v6141
      %v6152 = vpack.c.bf16 %v6144, %v6143
      %v6153 = vpack.c.bf16 %v6146, %v6145
      %v6154 = vpack.c.bf16 %v6148, %v6147
      %v6155 = vpack.c.bf16 %v6150, %v6149
      %s6156 = scalar_lea.vmem %s4, 1664
      %v6157 = vld [vmem:[%s6156] sm:$0xff]
      %v6158 = vld [vmem:[%s6156 + $0x8] sm:$0xff]
      %v6159 = vld [vmem:[%s6156 + $0x10] sm:$0xff]
      %v6160 = vld [vmem:[%s6156 + $0x18] sm:$0xff]
      %v6161 = vld [vmem:[%s6156 + $0x20] sm:$0xff]
      %v6162 = vld [vmem:[%s6156 + $0x28] sm:$0xff]
      %v6163 = vld [vmem:[%s6156 + $0x30] sm:$0xff]
      %v6164 = vld [vmem:[%s6156 + $0x38] sm:$0xff]
      %v6165 = vld [vmem:[%s6156 + $0x40] sm:$0xff]
      %v6166 = vld [vmem:[%s6156 + $0x48] sm:$0xff]
      %v6167 = vld [vmem:[%s6156 + $0x50] sm:$0xff]
      %v6168 = vld [vmem:[%s6156 + $0x58] sm:$0xff]
      %v6169 = vld [vmem:[%s6156 + $0x60] sm:$0xff]
      %v6170 = vld [vmem:[%s6156 + $0x68] sm:$0xff]
      %v6171 = vld [vmem:[%s6156 + $0x70] sm:$0xff]
      %v6172 = vld [vmem:[%s6156 + $0x78] sm:$0xff]
      %v6189 = vunpack.c.l.b16 %v6157
      %v6190 = vunpack.c.h.b16 %v6157
      %v6191 = vunpack.c.l.b16 %v6158
      %v6192 = vunpack.c.h.b16 %v6158
      %v6193 = vunpack.c.l.b16 %v6159
      %v6194 = vunpack.c.h.b16 %v6159
      %v6195 = vunpack.c.l.b16 %v6160
      %v6196 = vunpack.c.h.b16 %v6160
      %v6197 = vunpack.c.l.b16 %v6161
      %v6198 = vunpack.c.h.b16 %v6161
      %v6199 = vunpack.c.l.b16 %v6162
      %v6200 = vunpack.c.h.b16 %v6162
      %v6201 = vunpack.c.l.b16 %v6163
      %v6202 = vunpack.c.h.b16 %v6163
      %v6203 = vunpack.c.l.b16 %v6164
      %v6204 = vunpack.c.h.b16 %v6164
      %v6205 = vunpack.c.l.b16 %v6165
      %v6206 = vunpack.c.h.b16 %v6165
      %v6207 = vunpack.c.l.b16 %v6166
      %v6208 = vunpack.c.h.b16 %v6166
      %v6209 = vunpack.c.l.b16 %v6167
      %v6210 = vunpack.c.h.b16 %v6167
      %v6211 = vunpack.c.l.b16 %v6168
      %v6212 = vunpack.c.h.b16 %v6168
      %v6213 = vunpack.c.l.b16 %v6169
      %v6214 = vunpack.c.h.b16 %v6169
      %v6215 = vunpack.c.l.b16 %v6170
      %v6216 = vunpack.c.h.b16 %v6170
      %v6217 = vunpack.c.l.b16 %v6171
      %v6218 = vunpack.c.h.b16 %v6171
      %v6219 = vunpack.c.l.b16 %v6172
      %v6220 = vunpack.c.h.b16 %v6172
      %v6221 = vpack.c.b16 %v6191, %v6189
      %v6222 = vpack.c.b16 %v6192, %v6190
      %v6223 = vpack.c.b16 %v6195, %v6193
      %v6224 = vpack.c.b16 %v6196, %v6194
      %v6225 = vpack.c.b16 %v6199, %v6197
      %v6226 = vpack.c.b16 %v6200, %v6198
      %v6227 = vpack.c.b16 %v6203, %v6201
      %v6228 = vpack.c.b16 %v6204, %v6202
      %v6229 = vpack.c.b16 %v6207, %v6205
      %v6230 = vpack.c.b16 %v6208, %v6206
      %v6231 = vpack.c.b16 %v6211, %v6209
      %v6232 = vpack.c.b16 %v6212, %v6210
      %v6233 = vpack.c.b16 %v6215, %v6213
      %v6234 = vpack.c.b16 %v6216, %v6214
      %v6235 = vpack.c.b16 %v6219, %v6217
      %v6236 = vpack.c.b16 %v6220, %v6218
      %6253 = vmatpush.bf16.msra.mxu0 %v6235
      %6254 = vmatpush.bf16.msra.mxu0 %v6233
      %6255 = vmatpush.bf16.msra.mxu0 %v6231
      %6256 = vmatpush.bf16.msra.mxu0 %v6229
      %6257 = vmatpush.bf16.msra.mxu0 %v6227
      %6258 = vmatpush.bf16.msra.mxu0 %v6225
      %6259 = vmatpush.bf16.msra.mxu0 %v6223
      %6260 = vmatpush.bf16.msra.mxu0 %v6221
      %6261 = vmatmul.bf16.gmra.mxu0 %v6151
      %v6262 = vpop.f32.mrf.mxu0
      %v6263 = vadd.f32 0.0, %v6262
      %v6264 = vpop.f32.mrf.mxu0
      %v6265 = vadd.f32 0.0, %v6264
      %6266 = vmatmul.bf16.gmra.mxu0 %v6152
      %v6267 = vpop.f32.mrf.mxu0
      %v6268 = vadd.f32 0.0, %v6267
      %v6269 = vpop.f32.mrf.mxu0
      %v6270 = vadd.f32 0.0, %v6269
      %6271 = vmatmul.bf16.gmra.mxu0 %v6153
      %v6272 = vpop.f32.mrf.mxu0
      %v6273 = vadd.f32 0.0, %v6272
      %v6274 = vpop.f32.mrf.mxu0
      %v6275 = vadd.f32 0.0, %v6274
      %6276 = vmatmul.bf16.gmra.mxu0 %v6154
      %v6277 = vpop.f32.mrf.mxu0
      %v6278 = vadd.f32 0.0, %v6277
      %v6279 = vpop.f32.mrf.mxu0
      %v6280 = vadd.f32 0.0, %v6279
      %6281 = vmatmul.bf16.gmra.mxu0 %v6155
      %v6282 = vpop.f32.mrf.mxu0
      %v6283 = vadd.f32 0.0, %v6282
      %v6284 = vpop.f32.mrf.mxu0
      %v6285 = vadd.f32 0.0, %v6284
      %6286 = vdwg.mxu0
      %6287 = vmatpush.bf16.msra.mxu0 %v6236
      %6288 = vmatpush.bf16.msra.mxu0 %v6234
      %6289 = vmatpush.bf16.msra.mxu0 %v6232
      %6290 = vmatpush.bf16.msra.mxu0 %v6230
      %6291 = vmatpush.bf16.msra.mxu0 %v6228
      %6292 = vmatpush.bf16.msra.mxu0 %v6226
      %6293 = vmatpush.bf16.msra.mxu0 %v6224
      %6294 = vmatpush.bf16.msra.mxu0 %v6222
      %6295 = vmatmul.bf16.gmra.mxu0 %v6151
      %v6296 = vpop.f32.mrf.mxu0
      %v6297 = vadd.f32 0.0, %v6296
      %v6298 = vpop.f32.mrf.mxu0
      %v6299 = vadd.f32 0.0, %v6298
      %6300 = vmatmul.bf16.gmra.mxu0 %v6152
      %v6301 = vpop.f32.mrf.mxu0
      %v6302 = vadd.f32 0.0, %v6301
      %v6303 = vpop.f32.mrf.mxu0
      %v6304 = vadd.f32 0.0, %v6303
      %6305 = vmatmul.bf16.gmra.mxu0 %v6153
      %v6306 = vpop.f32.mrf.mxu0
      %v6307 = vadd.f32 0.0, %v6306
      %v6308 = vpop.f32.mrf.mxu0
      %v6309 = vadd.f32 0.0, %v6308
      %6310 = vmatmul.bf16.gmra.mxu0 %v6154
      %v6311 = vpop.f32.mrf.mxu0
      %v6312 = vadd.f32 0.0, %v6311
      %v6313 = vpop.f32.mrf.mxu0
      %v6314 = vadd.f32 0.0, %v6313
      %6315 = vmatmul.bf16.gmra.mxu0 %v6155
      %v6316 = vpop.f32.mrf.mxu0
      %v6317 = vadd.f32 0.0, %v6316
      %v6318 = vpop.f32.mrf.mxu0
      %v6319 = vadd.f32 0.0, %v6318
      %6320 = vdwg.mxu0
      %v6337 = vunpack.c.l.b16 %v6125
      %v6338 = vunpack.c.h.b16 %v6125
      %v6339 = vunpack.c.l.b16 %v6126
      %v6340 = vunpack.c.h.b16 %v6126
      %v6341 = vunpack.c.l.b16 %v6127
      %v6342 = vunpack.c.h.b16 %v6127
      %v6343 = vunpack.c.l.b16 %v6128
      %v6344 = vunpack.c.h.b16 %v6128
      %v6345 = vunpack.c.l.b16 %v6129
      %v6346 = vunpack.c.h.b16 %v6129
      %v6347 = vunpack.c.l.b16 %v6130
      %v6348 = vunpack.c.h.b16 %v6130
      %v6349 = vunpack.c.l.b16 %v6131
      %v6350 = vunpack.c.h.b16 %v6131
      %v6351 = vunpack.c.l.b16 %v6132
      %v6352 = vunpack.c.h.b16 %v6132
      %v6353 = vunpack.c.l.b16 %v6133
      %v6354 = vunpack.c.h.b16 %v6133
      %v6355 = vunpack.c.l.b16 %v6134
      %v6356 = vunpack.c.h.b16 %v6134
      %v6357 = vunpack.c.l.b16 %v6135
      %v6358 = vunpack.c.h.b16 %v6135
      %v6359 = vunpack.c.l.b16 %v6136
      %v6360 = vunpack.c.h.b16 %v6136
      %v6361 = vunpack.c.l.b16 %v6137
      %v6362 = vunpack.c.h.b16 %v6137
      %v6363 = vunpack.c.l.b16 %v6138
      %v6364 = vunpack.c.h.b16 %v6138
      %v6365 = vunpack.c.l.b16 %v6139
      %v6366 = vunpack.c.h.b16 %v6139
      %v6367 = vunpack.c.l.b16 %v6140
      %v6368 = vunpack.c.h.b16 %v6140
      %v6369 = vpack.c.b16 %v6339, %v6337
      %v6370 = vpack.c.b16 %v6340, %v6338
      %v6371 = vpack.c.b16 %v6343, %v6341
      %v6372 = vpack.c.b16 %v6344, %v6342
      %v6373 = vpack.c.b16 %v6347, %v6345
      %v6374 = vpack.c.b16 %v6348, %v6346
      %v6375 = vpack.c.b16 %v6351, %v6349
      %v6376 = vpack.c.b16 %v6352, %v6350
      %v6377 = vpack.c.b16 %v6355, %v6353
      %v6378 = vpack.c.b16 %v6356, %v6354
      %v6379 = vpack.c.b16 %v6359, %v6357
      %v6380 = vpack.c.b16 %v6360, %v6358
      %v6381 = vpack.c.b16 %v6363, %v6361
      %v6382 = vpack.c.b16 %v6364, %v6362
      %v6383 = vpack.c.b16 %v6367, %v6365
      %v6384 = vpack.c.b16 %v6368, %v6366
      %6401 = vmatpush.bf16.msra.mxu0 %v6383
      %6402 = vmatpush.bf16.msra.mxu0 %v6381
      %6403 = vmatpush.bf16.msra.mxu0 %v6379
      %6404 = vmatpush.bf16.msra.mxu0 %v6377
      %6405 = vmatpush.bf16.msra.mxu0 %v6375
      %6406 = vmatpush.bf16.msra.mxu0 %v6373
      %6407 = vmatpush.bf16.msra.mxu0 %v6371
      %6408 = vmatpush.bf16.msra.mxu0 %v6369
      %6409 = vmatmul.bf16.gmra.mxu0 %v6119
      %v6410 = vpop.f32.mrf.mxu0
      %v6411 = vadd.f32 %v6263, %v6410
      %v6412 = vpop.f32.mrf.mxu0
      %v6413 = vadd.f32 %v6265, %v6412
      %6414 = vmatmul.bf16.gmra.mxu0 %v6120
      %v6415 = vpop.f32.mrf.mxu0
      %v6416 = vadd.f32 %v6268, %v6415
      %v6417 = vpop.f32.mrf.mxu0
      %v6418 = vadd.f32 %v6270, %v6417
      %6419 = vmatmul.bf16.gmra.mxu0 %v6121
      %v6420 = vpop.f32.mrf.mxu0
      %v6421 = vadd.f32 %v6273, %v6420
      %v6422 = vpop.f32.mrf.mxu0
      %v6423 = vadd.f32 %v6275, %v6422
      %6424 = vmatmul.bf16.gmra.mxu0 %v6122
      %v6425 = vpop.f32.mrf.mxu0
      %v6426 = vadd.f32 %v6278, %v6425
      %v6427 = vpop.f32.mrf.mxu0
      %v6428 = vadd.f32 %v6280, %v6427
      %6429 = vmatmul.bf16.gmra.mxu0 %v6123
      %v6430 = vpop.f32.mrf.mxu0
      %v6431 = vadd.f32 %v6283, %v6430
      %v6432 = vpop.f32.mrf.mxu0
      %v6433 = vadd.f32 %v6285, %v6432
      %6434 = vdwg.mxu0
      %6435 = vmatpush.bf16.msra.mxu0 %v6384
      %6436 = vmatpush.bf16.msra.mxu0 %v6382
      %6437 = vmatpush.bf16.msra.mxu0 %v6380
      %6438 = vmatpush.bf16.msra.mxu0 %v6378
      %6439 = vmatpush.bf16.msra.mxu0 %v6376
      %6440 = vmatpush.bf16.msra.mxu0 %v6374
      %6441 = vmatpush.bf16.msra.mxu0 %v6372
      %6442 = vmatpush.bf16.msra.mxu0 %v6370
      %6443 = vmatmul.bf16.gmra.mxu0 %v6119
      %v6444 = vpop.f32.mrf.mxu0
      %v6445 = vadd.f32 %v6297, %v6444
      %v6446 = vpop.f32.mrf.mxu0
      %v6447 = vadd.f32 %v6299, %v6446
      %6448 = vmatmul.bf16.gmra.mxu0 %v6120
      %v6449 = vpop.f32.mrf.mxu0
      %v6450 = vadd.f32 %v6302, %v6449
      %v6451 = vpop.f32.mrf.mxu0
      %v6452 = vadd.f32 %v6304, %v6451
      %6453 = vmatmul.bf16.gmra.mxu0 %v6121
      %v6454 = vpop.f32.mrf.mxu0
      %v6455 = vadd.f32 %v6307, %v6454
      %v6456 = vpop.f32.mrf.mxu0
      %v6457 = vadd.f32 %v6309, %v6456
      %6458 = vmatmul.bf16.gmra.mxu0 %v6122
      %v6459 = vpop.f32.mrf.mxu0
      %v6460 = vadd.f32 %v6312, %v6459
      %v6461 = vpop.f32.mrf.mxu0
      %v6462 = vadd.f32 %v6314, %v6461
      %6463 = vmatmul.bf16.gmra.mxu0 %v6123
      %v6464 = vpop.f32.mrf.mxu0
      %v6465 = vadd.f32 %v6317, %v6464
      %v6466 = vpop.f32.mrf.mxu0
      %v6467 = vadd.f32 %v6319, %v6466
      %6468 = vdwg.mxu0
      %v6469 = vld [vmem:[#allocation4 + $0x15] sm:$0xff]
      %v6470 = vld [vmem:[#allocation4 + $0x1d] sm:$0xff]
      %v6471 = vld [vmem:[#allocation4 + $0x25] sm:$0xff]
      %v6472 = vld [vmem:[#allocation4 + $0x2d] sm:$0xff]
      %v6473 = vld [vmem:[#allocation4 + $0x35] sm:$0xff]
      %v6474 = vld [vmem:[#allocation4 + $0x3d] sm:$0xff]
      %v6475 = vld [vmem:[#allocation4 + $0x45] sm:$0xff]
      %v6476 = vld [vmem:[#allocation4 + $0x4d] sm:$0xff]
      %v6477 = vld [vmem:[#allocation4 + $0x55] sm:$0xff]
      %v6478 = vld [vmem:[#allocation4 + $0x5d] sm:$0xff]
      %v6479 = vpack.c.bf16 %v6470, %v6469
      %v6480 = vpack.c.bf16 %v6472, %v6471
      %v6481 = vpack.c.bf16 %v6474, %v6473
      %v6482 = vpack.c.bf16 %v6476, %v6475
      %v6483 = vpack.c.bf16 %v6478, %v6477
      %s6484 = scalar_lea.vmem %s4, 1792
      %v6485 = vld [vmem:[%s6484] sm:$0xff]
      %v6486 = vld [vmem:[%s6484 + $0x8] sm:$0xff]
      %v6487 = vld [vmem:[%s6484 + $0x10] sm:$0xff]
      %v6488 = vld [vmem:[%s6484 + $0x18] sm:$0xff]
      %v6489 = vld [vmem:[%s6484 + $0x20] sm:$0xff]
      %v6490 = vld [vmem:[%s6484 + $0x28] sm:$0xff]
      %v6491 = vld [vmem:[%s6484 + $0x30] sm:$0xff]
      %v6492 = vld [vmem:[%s6484 + $0x38] sm:$0xff]
      %v6493 = vld [vmem:[%s6484 + $0x40] sm:$0xff]
      %v6494 = vld [vmem:[%s6484 + $0x48] sm:$0xff]
      %v6495 = vld [vmem:[%s6484 + $0x50] sm:$0xff]
      %v6496 = vld [vmem:[%s6484 + $0x58] sm:$0xff]
      %v6497 = vld [vmem:[%s6484 + $0x60] sm:$0xff]
      %v6498 = vld [vmem:[%s6484 + $0x68] sm:$0xff]
      %v6499 = vld [vmem:[%s6484 + $0x70] sm:$0xff]
      %v6500 = vld [vmem:[%s6484 + $0x78] sm:$0xff]
      %v6517 = vunpack.c.l.b16 %v6485
      %v6518 = vunpack.c.h.b16 %v6485
      %v6519 = vunpack.c.l.b16 %v6486
      %v6520 = vunpack.c.h.b16 %v6486
      %v6521 = vunpack.c.l.b16 %v6487
      %v6522 = vunpack.c.h.b16 %v6487
      %v6523 = vunpack.c.l.b16 %v6488
      %v6524 = vunpack.c.h.b16 %v6488
      %v6525 = vunpack.c.l.b16 %v6489
      %v6526 = vunpack.c.h.b16 %v6489
      %v6527 = vunpack.c.l.b16 %v6490
      %v6528 = vunpack.c.h.b16 %v6490
      %v6529 = vunpack.c.l.b16 %v6491
      %v6530 = vunpack.c.h.b16 %v6491
      %v6531 = vunpack.c.l.b16 %v6492
      %v6532 = vunpack.c.h.b16 %v6492
      %v6533 = vunpack.c.l.b16 %v6493
      %v6534 = vunpack.c.h.b16 %v6493
      %v6535 = vunpack.c.l.b16 %v6494
      %v6536 = vunpack.c.h.b16 %v6494
      %v6537 = vunpack.c.l.b16 %v6495
      %v6538 = vunpack.c.h.b16 %v6495
      %v6539 = vunpack.c.l.b16 %v6496
      %v6540 = vunpack.c.h.b16 %v6496
      %v6541 = vunpack.c.l.b16 %v6497
      %v6542 = vunpack.c.h.b16 %v6497
      %v6543 = vunpack.c.l.b16 %v6498
      %v6544 = vunpack.c.h.b16 %v6498
      %v6545 = vunpack.c.l.b16 %v6499
      %v6546 = vunpack.c.h.b16 %v6499
      %v6547 = vunpack.c.l.b16 %v6500
      %v6548 = vunpack.c.h.b16 %v6500
      %v6549 = vpack.c.b16 %v6519, %v6517
      %v6550 = vpack.c.b16 %v6520, %v6518
      %v6551 = vpack.c.b16 %v6523, %v6521
      %v6552 = vpack.c.b16 %v6524, %v6522
      %v6553 = vpack.c.b16 %v6527, %v6525
      %v6554 = vpack.c.b16 %v6528, %v6526
      %v6555 = vpack.c.b16 %v6531, %v6529
      %v6556 = vpack.c.b16 %v6532, %v6530
      %v6557 = vpack.c.b16 %v6535, %v6533
      %v6558 = vpack.c.b16 %v6536, %v6534
      %v6559 = vpack.c.b16 %v6539, %v6537
      %v6560 = vpack.c.b16 %v6540, %v6538
      %v6561 = vpack.c.b16 %v6543, %v6541
      %v6562 = vpack.c.b16 %v6544, %v6542
      %v6563 = vpack.c.b16 %v6547, %v6545
      %v6564 = vpack.c.b16 %v6548, %v6546
      %6581 = vmatpush.bf16.msra.mxu0 %v6563
      %6582 = vmatpush.bf16.msra.mxu0 %v6561
      %6583 = vmatpush.bf16.msra.mxu0 %v6559
      %6584 = vmatpush.bf16.msra.mxu0 %v6557
      %6585 = vmatpush.bf16.msra.mxu0 %v6555
      %6586 = vmatpush.bf16.msra.mxu0 %v6553
      %6587 = vmatpush.bf16.msra.mxu0 %v6551
      %6588 = vmatpush.bf16.msra.mxu0 %v6549
      %6589 = vmatmul.bf16.gmra.mxu0 %v6479
      %v6590 = vpop.f32.mrf.mxu0
      %v6591 = vadd.f32 0.0, %v6590
      %v6592 = vpop.f32.mrf.mxu0
      %v6593 = vadd.f32 0.0, %v6592
      %6594 = vmatmul.bf16.gmra.mxu0 %v6480
      %v6595 = vpop.f32.mrf.mxu0
      %v6596 = vadd.f32 0.0, %v6595
      %v6597 = vpop.f32.mrf.mxu0
      %v6598 = vadd.f32 0.0, %v6597
      %6599 = vmatmul.bf16.gmra.mxu0 %v6481
      %v6600 = vpop.f32.mrf.mxu0
      %v6601 = vadd.f32 0.0, %v6600
      %v6602 = vpop.f32.mrf.mxu0
      %v6603 = vadd.f32 0.0, %v6602
      %6604 = vmatmul.bf16.gmra.mxu0 %v6482
      %v6605 = vpop.f32.mrf.mxu0
      %v6606 = vadd.f32 0.0, %v6605
      %v6607 = vpop.f32.mrf.mxu0
      %v6608 = vadd.f32 0.0, %v6607
      %6609 = vmatmul.bf16.gmra.mxu0 %v6483
      %v6610 = vpop.f32.mrf.mxu0
      %v6611 = vadd.f32 0.0, %v6610
      %v6612 = vpop.f32.mrf.mxu0
      %v6613 = vadd.f32 0.0, %v6612
      %6614 = vdwg.mxu0
      %6615 = vmatpush.bf16.msra.mxu0 %v6564
      %6616 = vmatpush.bf16.msra.mxu0 %v6562
      %6617 = vmatpush.bf16.msra.mxu0 %v6560
      %6618 = vmatpush.bf16.msra.mxu0 %v6558
      %6619 = vmatpush.bf16.msra.mxu0 %v6556
      %6620 = vmatpush.bf16.msra.mxu0 %v6554
      %6621 = vmatpush.bf16.msra.mxu0 %v6552
      %6622 = vmatpush.bf16.msra.mxu0 %v6550
      %6623 = vmatmul.bf16.gmra.mxu0 %v6479
      %v6624 = vpop.f32.mrf.mxu0
      %v6625 = vadd.f32 0.0, %v6624
      %v6626 = vpop.f32.mrf.mxu0
      %v6627 = vadd.f32 0.0, %v6626
      %6628 = vmatmul.bf16.gmra.mxu0 %v6480
      %v6629 = vpop.f32.mrf.mxu0
      %v6630 = vadd.f32 0.0, %v6629
      %v6631 = vpop.f32.mrf.mxu0
      %v6632 = vadd.f32 0.0, %v6631
      %6633 = vmatmul.bf16.gmra.mxu0 %v6481
      %v6634 = vpop.f32.mrf.mxu0
      %v6635 = vadd.f32 0.0, %v6634
      %v6636 = vpop.f32.mrf.mxu0
      %v6637 = vadd.f32 0.0, %v6636
      %6638 = vmatmul.bf16.gmra.mxu0 %v6482
      %v6639 = vpop.f32.mrf.mxu0
      %v6640 = vadd.f32 0.0, %v6639
      %v6641 = vpop.f32.mrf.mxu0
      %v6642 = vadd.f32 0.0, %v6641
      %6643 = vmatmul.bf16.gmra.mxu0 %v6483
      %v6644 = vpop.f32.mrf.mxu0
      %v6645 = vadd.f32 0.0, %v6644
      %v6646 = vpop.f32.mrf.mxu0
      %v6647 = vadd.f32 0.0, %v6646
      %6648 = vdwg.mxu0
      %v6649 = vadd.f32 %v6411, %v6591
      %v6650 = vadd.f32 %v6445, %v6625
      %v6651 = vadd.f32 %v6413, %v6593
      %v6652 = vadd.f32 %v6447, %v6627
      %v6653 = vadd.f32 %v6416, %v6596
      %v6654 = vadd.f32 %v6450, %v6630
      %v6655 = vadd.f32 %v6418, %v6598
      %v6656 = vadd.f32 %v6452, %v6632
      %v6657 = vadd.f32 %v6421, %v6601
      %v6658 = vadd.f32 %v6455, %v6635
      %v6659 = vadd.f32 %v6423, %v6603
      %v6660 = vadd.f32 %v6457, %v6637
      %v6661 = vadd.f32 %v6426, %v6606
      %v6662 = vadd.f32 %v6460, %v6640
      %v6663 = vadd.f32 %v6428, %v6608
      %v6664 = vadd.f32 %v6462, %v6642
      %v6665 = vadd.f32 %v6431, %v6611
      %v6666 = vadd.f32 %v6465, %v6645
      %v6667 = vadd.f32 %v6433, %v6613
      %v6668 = vadd.f32 %v6467, %v6647
      %v6669 = vld [vmem:[#allocation4 + $0x16] sm:$0xff]
      %v6670 = vld [vmem:[#allocation4 + $0x1e] sm:$0xff]
      %v6671 = vld [vmem:[#allocation4 + $0x26] sm:$0xff]
      %v6672 = vld [vmem:[#allocation4 + $0x2e] sm:$0xff]
      %v6673 = vld [vmem:[#allocation4 + $0x36] sm:$0xff]
      %v6674 = vld [vmem:[#allocation4 + $0x3e] sm:$0xff]
      %v6675 = vld [vmem:[#allocation4 + $0x46] sm:$0xff]
      %v6676 = vld [vmem:[#allocation4 + $0x4e] sm:$0xff]
      %v6677 = vld [vmem:[#allocation4 + $0x56] sm:$0xff]
      %v6678 = vld [vmem:[#allocation4 + $0x5e] sm:$0xff]
      %v6679 = vpack.c.bf16 %v6670, %v6669
      %v6680 = vpack.c.bf16 %v6672, %v6671
      %v6681 = vpack.c.bf16 %v6674, %v6673
      %v6682 = vpack.c.bf16 %v6676, %v6675
      %v6683 = vpack.c.bf16 %v6678, %v6677
      %s6684 = scalar_lea.vmem %s4, 1920
      %v6685 = vld [vmem:[%s6684] sm:$0xff]
      %v6686 = vld [vmem:[%s6684 + $0x8] sm:$0xff]
      %v6687 = vld [vmem:[%s6684 + $0x10] sm:$0xff]
      %v6688 = vld [vmem:[%s6684 + $0x18] sm:$0xff]
      %v6689 = vld [vmem:[%s6684 + $0x20] sm:$0xff]
      %v6690 = vld [vmem:[%s6684 + $0x28] sm:$0xff]
      %v6691 = vld [vmem:[%s6684 + $0x30] sm:$0xff]
      %v6692 = vld [vmem:[%s6684 + $0x38] sm:$0xff]
      %v6693 = vld [vmem:[%s6684 + $0x40] sm:$0xff]
      %v6694 = vld [vmem:[%s6684 + $0x48] sm:$0xff]
      %v6695 = vld [vmem:[%s6684 + $0x50] sm:$0xff]
      %v6696 = vld [vmem:[%s6684 + $0x58] sm:$0xff]
      %v6697 = vld [vmem:[%s6684 + $0x60] sm:$0xff]
      %v6698 = vld [vmem:[%s6684 + $0x68] sm:$0xff]
      %v6699 = vld [vmem:[%s6684 + $0x70] sm:$0xff]
      %v6700 = vld [vmem:[%s6684 + $0x78] sm:$0xff]
      %v6717 = vunpack.c.l.b16 %v6685
      %v6718 = vunpack.c.h.b16 %v6685
      %v6719 = vunpack.c.l.b16 %v6686
      %v6720 = vunpack.c.h.b16 %v6686
      %v6721 = vunpack.c.l.b16 %v6687
      %v6722 = vunpack.c.h.b16 %v6687
      %v6723 = vunpack.c.l.b16 %v6688
      %v6724 = vunpack.c.h.b16 %v6688
      %v6725 = vunpack.c.l.b16 %v6689
      %v6726 = vunpack.c.h.b16 %v6689
      %v6727 = vunpack.c.l.b16 %v6690
      %v6728 = vunpack.c.h.b16 %v6690
      %v6729 = vunpack.c.l.b16 %v6691
      %v6730 = vunpack.c.h.b16 %v6691
      %v6731 = vunpack.c.l.b16 %v6692
      %v6732 = vunpack.c.h.b16 %v6692
      %v6733 = vunpack.c.l.b16 %v6693
      %v6734 = vunpack.c.h.b16 %v6693
      %v6735 = vunpack.c.l.b16 %v6694
      %v6736 = vunpack.c.h.b16 %v6694
      %v6737 = vunpack.c.l.b16 %v6695
      %v6738 = vunpack.c.h.b16 %v6695
      %v6739 = vunpack.c.l.b16 %v6696
      %v6740 = vunpack.c.h.b16 %v6696
      %v6741 = vunpack.c.l.b16 %v6697
      %v6742 = vunpack.c.h.b16 %v6697
      %v6743 = vunpack.c.l.b16 %v6698
      %v6744 = vunpack.c.h.b16 %v6698
      %v6745 = vunpack.c.l.b16 %v6699
      %v6746 = vunpack.c.h.b16 %v6699
      %v6747 = vunpack.c.l.b16 %v6700
      %v6748 = vunpack.c.h.b16 %v6700
      %v6749 = vpack.c.b16 %v6719, %v6717
      %v6750 = vpack.c.b16 %v6720, %v6718
      %v6751 = vpack.c.b16 %v6723, %v6721
      %v6752 = vpack.c.b16 %v6724, %v6722
      %v6753 = vpack.c.b16 %v6727, %v6725
      %v6754 = vpack.c.b16 %v6728, %v6726
      %v6755 = vpack.c.b16 %v6731, %v6729
      %v6756 = vpack.c.b16 %v6732, %v6730
      %v6757 = vpack.c.b16 %v6735, %v6733
      %v6758 = vpack.c.b16 %v6736, %v6734
      %v6759 = vpack.c.b16 %v6739, %v6737
      %v6760 = vpack.c.b16 %v6740, %v6738
      %v6761 = vpack.c.b16 %v6743, %v6741
      %v6762 = vpack.c.b16 %v6744, %v6742
      %v6763 = vpack.c.b16 %v6747, %v6745
      %v6764 = vpack.c.b16 %v6748, %v6746
      %6781 = vmatpush.bf16.msra.mxu0 %v6763
      %6782 = vmatpush.bf16.msra.mxu0 %v6761
      %6783 = vmatpush.bf16.msra.mxu0 %v6759
      %6784 = vmatpush.bf16.msra.mxu0 %v6757
      %6785 = vmatpush.bf16.msra.mxu0 %v6755
      %6786 = vmatpush.bf16.msra.mxu0 %v6753
      %6787 = vmatpush.bf16.msra.mxu0 %v6751
      %6788 = vmatpush.bf16.msra.mxu0 %v6749
      %6789 = vmatmul.bf16.gmra.mxu0 %v6679
      %v6790 = vpop.f32.mrf.mxu0
      %v6791 = vadd.f32 0.0, %v6790
      %v6792 = vpop.f32.mrf.mxu0
      %v6793 = vadd.f32 0.0, %v6792
      %6794 = vmatmul.bf16.gmra.mxu0 %v6680
      %v6795 = vpop.f32.mrf.mxu0
      %v6796 = vadd.f32 0.0, %v6795
      %v6797 = vpop.f32.mrf.mxu0
      %v6798 = vadd.f32 0.0, %v6797
      %6799 = vmatmul.bf16.gmra.mxu0 %v6681
      %v6800 = vpop.f32.mrf.mxu0
      %v6801 = vadd.f32 0.0, %v6800
      %v6802 = vpop.f32.mrf.mxu0
      %v6803 = vadd.f32 0.0, %v6802
      %6804 = vmatmul.bf16.gmra.mxu0 %v6682
      %v6805 = vpop.f32.mrf.mxu0
      %v6806 = vadd.f32 0.0, %v6805
      %v6807 = vpop.f32.mrf.mxu0
      %v6808 = vadd.f32 0.0, %v6807
      %6809 = vmatmul.bf16.gmra.mxu0 %v6683
      %v6810 = vpop.f32.mrf.mxu0
      %v6811 = vadd.f32 0.0, %v6810
      %v6812 = vpop.f32.mrf.mxu0
      %v6813 = vadd.f32 0.0, %v6812
      %6814 = vdwg.mxu0
      %6815 = vmatpush.bf16.msra.mxu0 %v6764
      %6816 = vmatpush.bf16.msra.mxu0 %v6762
      %6817 = vmatpush.bf16.msra.mxu0 %v6760
      %6818 = vmatpush.bf16.msra.mxu0 %v6758
      %6819 = vmatpush.bf16.msra.mxu0 %v6756
      %6820 = vmatpush.bf16.msra.mxu0 %v6754
      %6821 = vmatpush.bf16.msra.mxu0 %v6752
      %6822 = vmatpush.bf16.msra.mxu0 %v6750
      %6823 = vmatmul.bf16.gmra.mxu0 %v6679
      %v6824 = vpop.f32.mrf.mxu0
      %v6825 = vadd.f32 0.0, %v6824
      %v6826 = vpop.f32.mrf.mxu0
      %v6827 = vadd.f32 0.0, %v6826
      %6828 = vmatmul.bf16.gmra.mxu0 %v6680
      %v6829 = vpop.f32.mrf.mxu0
      %v6830 = vadd.f32 0.0, %v6829
      %v6831 = vpop.f32.mrf.mxu0
      %v6832 = vadd.f32 0.0, %v6831
      %6833 = vmatmul.bf16.gmra.mxu0 %v6681
      %v6834 = vpop.f32.mrf.mxu0
      %v6835 = vadd.f32 0.0, %v6834
      %v6836 = vpop.f32.mrf.mxu0
      %v6837 = vadd.f32 0.0, %v6836
      %6838 = vmatmul.bf16.gmra.mxu0 %v6682
      %v6839 = vpop.f32.mrf.mxu0
      %v6840 = vadd.f32 0.0, %v6839
      %v6841 = vpop.f32.mrf.mxu0
      %v6842 = vadd.f32 0.0, %v6841
      %6843 = vmatmul.bf16.gmra.mxu0 %v6683
      %v6844 = vpop.f32.mrf.mxu0
      %v6845 = vadd.f32 0.0, %v6844
      %v6846 = vpop.f32.mrf.mxu0
      %v6847 = vadd.f32 0.0, %v6846
      %6848 = vdwg.mxu0
      %v6849 = vadd.f32 %v6649, %v6791
      %v6850 = vadd.f32 %v6650, %v6825
      %v6851 = vadd.f32 %v6651, %v6793
      %v6852 = vadd.f32 %v6652, %v6827
      %v6853 = vadd.f32 %v6653, %v6796
      %v6854 = vadd.f32 %v6654, %v6830
      %v6855 = vadd.f32 %v6655, %v6798
      %v6856 = vadd.f32 %v6656, %v6832
      %v6857 = vadd.f32 %v6657, %v6801
      %v6858 = vadd.f32 %v6658, %v6835
      %v6859 = vadd.f32 %v6659, %v6803
      %v6860 = vadd.f32 %v6660, %v6837
      %v6861 = vadd.f32 %v6661, %v6806
      %v6862 = vadd.f32 %v6662, %v6840
      %v6863 = vadd.f32 %v6663, %v6808
      %v6864 = vadd.f32 %v6664, %v6842
      %v6865 = vadd.f32 %v6665, %v6811
      %v6866 = vadd.f32 %v6666, %v6845
      %v6867 = vadd.f32 %v6667, %v6813
      %v6868 = vadd.f32 %v6668, %v6847
      %v6869 = vld [vmem:[%s8] sm:$0x3]
      %v6871 = vperm.slane %v6869, 0
      %v6872 = vperm.slane %v6869, 1
      %v6875 = vadd.f32 %v6849, %v6871
      %v6876 = vadd.f32 %v6850, %v6872
      %v6877 = vadd.f32 %v6851, %v6871
      %v6878 = vadd.f32 %v6852, %v6872
      %v6879 = vadd.f32 %v6853, %v6871
      %v6880 = vadd.f32 %v6854, %v6872
      %v6881 = vadd.f32 %v6855, %v6871
      %v6882 = vadd.f32 %v6856, %v6872
      %v6883 = vadd.f32 %v6857, %v6871
      %v6884 = vadd.f32 %v6858, %v6872
      %v6885 = vadd.f32 %v6859, %v6871
      %v6886 = vadd.f32 %v6860, %v6872
      %v6887 = vadd.f32 %v6861, %v6871
      %v6888 = vadd.f32 %v6862, %v6872
      %v6889 = vadd.f32 %v6863, %v6871
      %v6890 = vadd.f32 %v6864, %v6872
      %v6891 = vadd.f32 %v6865, %v6871
      %v6892 = vadd.f32 %v6866, %v6872
      %v6893 = vadd.f32 %v6867, %v6871
      %v6894 = vadd.f32 %v6868, %v6872
      %v6895 = vmax.f32 %v6875, 0.0
      %v6896 = vmax.f32 %v6876, 0.0
      %v6897 = vmax.f32 %v6877, 0.0
      %v6898 = vmax.f32 %v6878, 0.0
      %v6899 = vmax.f32 %v6879, 0.0
      %v6900 = vmax.f32 %v6880, 0.0
      %v6901 = vmax.f32 %v6881, 0.0
      %v6902 = vmax.f32 %v6882, 0.0
      %v6903 = vmax.f32 %v6883, 0.0
      %v6904 = vmax.f32 %v6884, 0.0
      %v6905 = vmax.f32 %v6885, 0.0
      %v6906 = vmax.f32 %v6886, 0.0
      %v6907 = vmax.f32 %v6887, 0.0
      %v6908 = vmax.f32 %v6888, 0.0
      %v6909 = vmax.f32 %v6889, 0.0
      %v6910 = vmax.f32 %v6890, 0.0
      %v6911 = vmax.f32 %v6891, 0.0
      %v6912 = vmax.f32 %v6892, 0.0
      %v6913 = vmax.f32 %v6893, 0.0
      %v6914 = vmax.f32 %v6894, 0.0
      %v6915 = vpack.c.bf16 %v6897, %v6895
      %v6916 = vpack.c.bf16 %v6898, %v6896
      %v6917 = vpack.c.bf16 %v6901, %v6899
      %v6918 = vpack.c.bf16 %v6902, %v6900
      %v6919 = vpack.c.bf16 %v6905, %v6903
      %v6920 = vpack.c.bf16 %v6906, %v6904
      %v6921 = vpack.c.bf16 %v6909, %v6907
      %v6922 = vpack.c.bf16 %v6910, %v6908
      %v6923 = vpack.c.bf16 %v6913, %v6911
      %v6924 = vpack.c.bf16 %v6914, %v6912
      %v6925 = vld [vmem:[%s5] sm:$0xf]
      %v6926 = vld [vmem:[%s5 + $0x4] sm:$0xf]
      %v6927 = vld [vmem:[%s5 + $0x8] sm:$0xf]
      %v6928 = vld [vmem:[%s5 + $0xc] sm:$0xf]
      %v6929 = vld [vmem:[%s5 + $0x10] sm:$0xf]
      %v6930 = vld [vmem:[%s5 + $0x14] sm:$0xf]
      %v6931 = vld [vmem:[%s5 + $0x18] sm:$0xf]
      %v6932 = vld [vmem:[%s5 + $0x1c] sm:$0xf]
      %v6933 = vld [vmem:[%s5 + $0x20] sm:$0xf]
      %v6934 = vld [vmem:[%s5 + $0x24] sm:$0xf]
      %v6935 = vld [vmem:[%s5 + $0x28] sm:$0xf]
      %v6936 = vld [vmem:[%s5 + $0x2c] sm:$0xf]
      %v6937 = vld [vmem:[%s5 + $0x30] sm:$0xf]
      %v6938 = vld [vmem:[%s5 + $0x34] sm:$0xf]
      %v6939 = vld [vmem:[%s5 + $0x38] sm:$0xf]
      %v6940 = vld [vmem:[%s5 + $0x3c] sm:$0xf]
      %v6941 = vld [vmem:[%s5 + $0x40] sm:$0xf]
      %v6942 = vld [vmem:[%s5 + $0x44] sm:$0xf]
      %v6943 = vld [vmem:[%s5 + $0x48] sm:$0xf]
      %v6944 = vld [vmem:[%s5 + $0x4c] sm:$0xf]
      %v6945 = vld [vmem:[%s9] sm:$0x1]
      %v6947 = vperm.slane %v6945, 0
      %v6969 = vunpack.c.l.b16 %v6925
      %v6970 = vunpack.c.l.b16 %v6926
      %v6971 = vunpack.c.l.b16 %v6927
      %v6972 = vunpack.c.l.b16 %v6928
      %v6973 = vunpack.c.l.b16 %v6929
      %v6974 = vunpack.c.l.b16 %v6930
      %v6975 = vunpack.c.l.b16 %v6931
      %v6976 = vunpack.c.l.b16 %v6932
      %v6977 = vunpack.c.l.b16 %v6933
      %v6978 = vunpack.c.l.b16 %v6934
      %v6979 = vunpack.c.l.b16 %v6935
      %v6980 = vunpack.c.l.b16 %v6936
      %v6981 = vunpack.c.l.b16 %v6937
      %v6982 = vunpack.c.l.b16 %v6938
      %v6983 = vunpack.c.l.b16 %v6939
      %v6984 = vunpack.c.l.b16 %v6940
      %v6985 = vunpack.c.l.b16 %v6941
      %v6986 = vunpack.c.l.b16 %v6942
      %v6987 = vunpack.c.l.b16 %v6943
      %v6988 = vunpack.c.l.b16 %v6944
      %v6989 = vpack.c.b16 %v6970, %v6969
      %v6990 = vpack.c.b16 %v6972, %v6971
      %v6991 = vpack.c.b16 %v6974, %v6973
      %v6992 = vpack.c.b16 %v6976, %v6975
      %v6993 = vpack.c.b16 %v6978, %v6977
      %v6994 = vpack.c.b16 %v6980, %v6979
      %v6995 = vpack.c.b16 %v6982, %v6981
      %v6996 = vpack.c.b16 %v6984, %v6983
      %v6997 = vpack.c.b16 %v6986, %v6985
      %v6998 = vpack.c.b16 %v6988, %v6987
      %v7010 = vsel %vm1366, %v6916, 0
      %v7013 = vsel %vm1366, %v6918, 0
      %v7016 = vsel %vm1366, %v6920, 0
      %v7019 = vsel %vm1366, %v6922, 0
      %v7022 = vsel %vm1366, %v6924, 0
      %7024 = vmatpush.bf16.msra.mxu0 %v6996
      %7025 = vmatpush.bf16.msra.mxu0 %v6995
      %7026 = vmatpush.bf16.msra.mxu0 %v6994
      %7027 = vmatpush.bf16.msra.mxu0 %v6993
      %7028 = vmatpush.bf16.msra.mxu0 %v6992
      %7029 = vmatpush.bf16.msra.mxu0 %v6991
      %7030 = vmatpush.bf16.msra.mxu0 %v6990
      %7031 = vmatpush.bf16.msra.mxu0 %v6989
      %7032 = vmatmul.bf16.gmra.mxu0 %v6915
      %v7033 = vpop.f32.mrf.mxu0
      %v7034 = vadd.f32 %v6947, %v7033
      %v7035 = vpop.f32.mrf.mxu0
      %v7036 = vadd.f32 %v6947, %v7035
      %7037 = vmatmul.bf16.gmra.mxu0 %v6917
      %v7038 = vpop.f32.mrf.mxu0
      %v7039 = vadd.f32 %v6947, %v7038
      %v7040 = vpop.f32.mrf.mxu0
      %v7041 = vadd.f32 %v6947, %v7040
      %7042 = vmatmul.bf16.gmra.mxu0 %v6919
      %v7043 = vpop.f32.mrf.mxu0
      %v7044 = vadd.f32 %v6947, %v7043
      %v7045 = vpop.f32.mrf.mxu0
      %v7046 = vadd.f32 %v6947, %v7045
      %7047 = vmatmul.bf16.gmra.mxu0 %v6921
      %v7048 = vpop.f32.mrf.mxu0
      %v7049 = vadd.f32 %v6947, %v7048
      %v7050 = vpop.f32.mrf.mxu0
      %v7051 = vadd.f32 %v6947, %v7050
      %7052 = vmatmul.bf16.gmra.mxu0 %v6923
      %v7053 = vpop.f32.mrf.mxu0
      %v7054 = vadd.f32 %v6947, %v7053
      %v7055 = vpop.f32.mrf.mxu0
      %v7056 = vadd.f32 %v6947, %v7055
      %7057 = vdwg.mxu0
      %7058 = vmatpush.bf16.msra.mxu0 0
      %7059 = vmatpush.bf16.msra.mxu0 0
      %7060 = vmatpush.bf16.msra.mxu0 0
      %7061 = vmatpush.bf16.msra.mxu0 0
      %7062 = vmatpush.bf16.msra.mxu0 0
      %7063 = vmatpush.bf16.msra.mxu0 0
      %7064 = vmatpush.bf16.msra.mxu0 %v6998
      %7065 = vmatpush.bf16.msra.mxu0 %v6997
      %7066 = vmatmul.bf16.gmra.mxu0 %v7010
      %v7067 = vpop.f32.mrf.mxu0
      %v7068 = vadd.f32 %v7034, %v7067
      %v7069 = vpop.f32.mrf.mxu0
      %v7070 = vadd.f32 %v7036, %v7069
      %7071 = vmatmul.bf16.gmra.mxu0 %v7013
      %v7072 = vpop.f32.mrf.mxu0
      %v7073 = vadd.f32 %v7039, %v7072
      %v7074 = vpop.f32.mrf.mxu0
      %v7075 = vadd.f32 %v7041, %v7074
      %7076 = vmatmul.bf16.gmra.mxu0 %v7016
      %v7077 = vpop.f32.mrf.mxu0
      %v7078 = vadd.f32 %v7044, %v7077
      %v7079 = vpop.f32.mrf.mxu0
      %v7080 = vadd.f32 %v7046, %v7079
      %7081 = vmatmul.bf16.gmra.mxu0 %v7019
      %v7082 = vpop.f32.mrf.mxu0
      %v7083 = vadd.f32 %v7049, %v7082
      %v7084 = vpop.f32.mrf.mxu0
      %v7085 = vadd.f32 %v7051, %v7084
      %7086 = vmatmul.bf16.gmra.mxu0 %v7022
      %v7087 = vpop.f32.mrf.mxu0
      %v7088 = vadd.f32 %v7054, %v7087
      %v7089 = vpop.f32.mrf.mxu0
      %v7090 = vadd.f32 %v7056, %v7089
      %7091 = vdwg.mxu0
      %v7092 = vld [vmem:[%s10] sm:$0x1]
      %vm7093 = vcmp.gt.f32.partialorder %v7092, 0.0
      %v7094 = vxor.u32 %v7068, 2147483648
      %v7095 = vxor.u32 %v7070, 2147483648
      %v7096 = vxor.u32 %v7073, 2147483648
      %v7097 = vxor.u32 %v7075, 2147483648
      %v7098 = vxor.u32 %v7078, 2147483648
      %v7099 = vxor.u32 %v7080, 2147483648
      %v7100 = vxor.u32 %v7083, 2147483648
      %v7101 = vxor.u32 %v7085, 2147483648
      %v7102 = vxor.u32 %v7088, 2147483648
      %v7103 = vxor.u32 %v7090, 2147483648
      %v7104 = vmul.f32 %v7094, 1.442695
      %v7105 = vpow.pop %v7104
      %v7106 = vmul.f32 %v7095, 1.442695
      %v7107 = vpow.pop %v7106
      %v7108 = vmul.f32 %v7096, 1.442695
      %v7109 = vpow.pop %v7108
      %v7110 = vmul.f32 %v7097, 1.442695
      %v7111 = vpow.pop %v7110
      %v7112 = vmul.f32 %v7098, 1.442695
      %v7113 = vpow.pop %v7112
      %v7114 = vmul.f32 %v7099, 1.442695
      %v7115 = vpow.pop %v7114
      %v7116 = vmul.f32 %v7100, 1.442695
      %v7117 = vpow.pop %v7116
      %v7118 = vmul.f32 %v7101, 1.442695
      %v7119 = vpow.pop %v7118
      %v7120 = vmul.f32 %v7102, 1.442695
      %v7121 = vpow.pop %v7120
      %v7122 = vmul.f32 %v7103, 1.442695
      %v7123 = vpow.pop %v7122
      %v7124 = vadd.f32 %v7105, 1.0
      %v7125 = vadd.f32 %v7107, 1.0
      %v7126 = vadd.f32 %v7109, 1.0
      %v7127 = vadd.f32 %v7111, 1.0
      %v7128 = vadd.f32 %v7113, 1.0
      %v7129 = vadd.f32 %v7115, 1.0
      %v7130 = vadd.f32 %v7117, 1.0
      %v7131 = vadd.f32 %v7119, 1.0
      %v7132 = vadd.f32 %v7121, 1.0
      %v7133 = vadd.f32 %v7123, 1.0
      %v7134 = vrcp.pop %v7124
      %v7135 = vmul.f32 %v7124, %v7134
      %v7136 = vsub.f32 1.0, %v7135
      %v7137 = vmul.f32 %v7134, %v7136
      %v7138 = vadd.f32 %v7134, %v7137
      %vm7139 = vweird.f32 %v7124
      %vm7140 = vweird.f32 %v7134
      %vm7141 = vmor %vm7139, %vm7140
      %v7142 = vsel %vm7141, %v7134, %v7138
      %v7143 = vand.u32 2147483647, %v7124
      %vm7144 = vcmp.eq.f32.partialorder %v7143, 8.507059e+37
      %v7145 = vand.u32 %v7124, 2147483648
      %v7146 = vor.u32 1.1754944e-38, %v7145
      %v7147 = vsel %vm7144, %v7146, %v7142
      %v7148 = vmul.f32 1.0, %v7147
      %v7149 = vrcp.pop %v7125
      %v7150 = vmul.f32 %v7125, %v7149
      %v7151 = vsub.f32 1.0, %v7150
      %v7152 = vmul.f32 %v7149, %v7151
      %v7153 = vadd.f32 %v7149, %v7152
      %vm7154 = vweird.f32 %v7125
      %vm7155 = vweird.f32 %v7149
      %vm7156 = vmor %vm7154, %vm7155
      %v7157 = vsel %vm7156, %v7149, %v7153
      %v7158 = vand.u32 2147483647, %v7125
      %vm7159 = vcmp.eq.f32.partialorder %v7158, 8.507059e+37
      %v7160 = vand.u32 %v7125, 2147483648
      %v7161 = vor.u32 1.1754944e-38, %v7160
      %v7162 = vsel %vm7159, %v7161, %v7157
      %v7163 = vmul.f32 1.0, %v7162
      %v7164 = vrcp.pop %v7126
      %v7165 = vmul.f32 %v7126, %v7164
      %v7166 = vsub.f32 1.0, %v7165
      %v7167 = vmul.f32 %v7164, %v7166
      %v7168 = vadd.f32 %v7164, %v7167
      %vm7169 = vweird.f32 %v7126
      %vm7170 = vweird.f32 %v7164
      %vm7171 = vmor %vm7169, %vm7170
      %v7172 = vsel %vm7171, %v7164, %v7168
      %v7173 = vand.u32 2147483647, %v7126
      %vm7174 = vcmp.eq.f32.partialorder %v7173, 8.507059e+37
      %v7175 = vand.u32 %v7126, 2147483648
      %v7176 = vor.u32 1.1754944e-38, %v7175
      %v7177 = vsel %vm7174, %v7176, %v7172
      %v7178 = vmul.f32 1.0, %v7177
      %v7179 = vrcp.pop %v7127
      %v7180 = vmul.f32 %v7127, %v7179
      %v7181 = vsub.f32 1.0, %v7180
      %v7182 = vmul.f32 %v7179, %v7181
      %v7183 = vadd.f32 %v7179, %v7182
      %vm7184 = vweird.f32 %v7127
      %vm7185 = vweird.f32 %v7179
      %vm7186 = vmor %vm7184, %vm7185
      %v7187 = vsel %vm7186, %v7179, %v7183
      %v7188 = vand.u32 2147483647, %v7127
      %vm7189 = vcmp.eq.f32.partialorder %v7188, 8.507059e+37
      %v7190 = vand.u32 %v7127, 2147483648
      %v7191 = vor.u32 1.1754944e-38, %v7190
      %v7192 = vsel %vm7189, %v7191, %v7187
      %v7193 = vmul.f32 1.0, %v7192
      %v7194 = vrcp.pop %v7128
      %v7195 = vmul.f32 %v7128, %v7194
      %v7196 = vsub.f32 1.0, %v7195
      %v7197 = vmul.f32 %v7194, %v7196
      %v7198 = vadd.f32 %v7194, %v7197
      %vm7199 = vweird.f32 %v7128
      %vm7200 = vweird.f32 %v7194
      %vm7201 = vmor %vm7199, %vm7200
      %v7202 = vsel %vm7201, %v7194, %v7198
      %v7203 = vand.u32 2147483647, %v7128
      %vm7204 = vcmp.eq.f32.partialorder %v7203, 8.507059e+37
      %v7205 = vand.u32 %v7128, 2147483648
      %v7206 = vor.u32 1.1754944e-38, %v7205
      %v7207 = vsel %vm7204, %v7206, %v7202
      %v7208 = vmul.f32 1.0, %v7207
      %v7209 = vrcp.pop %v7129
      %v7210 = vmul.f32 %v7129, %v7209
      %v7211 = vsub.f32 1.0, %v7210
      %v7212 = vmul.f32 %v7209, %v7211
      %v7213 = vadd.f32 %v7209, %v7212
      %vm7214 = vweird.f32 %v7129
      %vm7215 = vweird.f32 %v7209
      %vm7216 = vmor %vm7214, %vm7215
      %v7217 = vsel %vm7216, %v7209, %v7213
      %v7218 = vand.u32 2147483647, %v7129
      %vm7219 = vcmp.eq.f32.partialorder %v7218, 8.507059e+37
      %v7220 = vand.u32 %v7129, 2147483648
      %v7221 = vor.u32 1.1754944e-38, %v7220
      %v7222 = vsel %vm7219, %v7221, %v7217
      %v7223 = vmul.f32 1.0, %v7222
      %v7224 = vrcp.pop %v7130
      %v7225 = vmul.f32 %v7130, %v7224
      %v7226 = vsub.f32 1.0, %v7225
      %v7227 = vmul.f32 %v7224, %v7226
      %v7228 = vadd.f32 %v7224, %v7227
      %vm7229 = vweird.f32 %v7130
      %vm7230 = vweird.f32 %v7224
      %vm7231 = vmor %vm7229, %vm7230
      %v7232 = vsel %vm7231, %v7224, %v7228
      %v7233 = vand.u32 2147483647, %v7130
      %vm7234 = vcmp.eq.f32.partialorder %v7233, 8.507059e+37
      %v7235 = vand.u32 %v7130, 2147483648
      %v7236 = vor.u32 1.1754944e-38, %v7235
      %v7237 = vsel %vm7234, %v7236, %v7232
      %v7238 = vmul.f32 1.0, %v7237
      %v7239 = vrcp.pop %v7131
      %v7240 = vmul.f32 %v7131, %v7239
      %v7241 = vsub.f32 1.0, %v7240
      %v7242 = vmul.f32 %v7239, %v7241
      %v7243 = vadd.f32 %v7239, %v7242
      %vm7244 = vweird.f32 %v7131
      %vm7245 = vweird.f32 %v7239
      %vm7246 = vmor %vm7244, %vm7245
      %v7247 = vsel %vm7246, %v7239, %v7243
      %v7248 = vand.u32 2147483647, %v7131
      %vm7249 = vcmp.eq.f32.partialorder %v7248, 8.507059e+37
      %v7250 = vand.u32 %v7131, 2147483648
      %v7251 = vor.u32 1.1754944e-38, %v7250
      %v7252 = vsel %vm7249, %v7251, %v7247
      %v7253 = vmul.f32 1.0, %v7252
      %v7254 = vrcp.pop %v7132
      %v7255 = vmul.f32 %v7132, %v7254
      %v7256 = vsub.f32 1.0, %v7255
      %v7257 = vmul.f32 %v7254, %v7256
      %v7258 = vadd.f32 %v7254, %v7257
      %vm7259 = vweird.f32 %v7132
      %vm7260 = vweird.f32 %v7254
      %vm7261 = vmor %vm7259, %vm7260
      %v7262 = vsel %vm7261, %v7254, %v7258
      %v7263 = vand.u32 2147483647, %v7132
      %vm7264 = vcmp.eq.f32.partialorder %v7263, 8.507059e+37
      %v7265 = vand.u32 %v7132, 2147483648
      %v7266 = vor.u32 1.1754944e-38, %v7265
      %v7267 = vsel %vm7264, %v7266, %v7262
      %v7268 = vmul.f32 1.0, %v7267
      %v7269 = vrcp.pop %v7133
      %v7270 = vmul.f32 %v7133, %v7269
      %v7271 = vsub.f32 1.0, %v7270
      %v7272 = vmul.f32 %v7269, %v7271
      %v7273 = vadd.f32 %v7269, %v7272
      %vm7274 = vweird.f32 %v7133
      %vm7275 = vweird.f32 %v7269
      %vm7276 = vmor %vm7274, %vm7275
      %v7277 = vsel %vm7276, %v7269, %v7273
      %v7278 = vand.u32 2147483647, %v7133
      %vm7279 = vcmp.eq.f32.partialorder %v7278, 8.507059e+37
      %v7280 = vand.u32 %v7133, 2147483648
      %v7281 = vor.u32 1.1754944e-38, %v7280
      %v7282 = vsel %vm7279, %v7281, %v7277
      %v7283 = vmul.f32 1.0, %v7282
      %v7284 = vsel %vm7093, 1, 0
      %v7285 = vperm.slane %v7284, 0
      %vm7286 = vcmp.eq.s32.totalorder %v7285, 1
      %v7287 = vsel %vm7286, %v7148, %v7068
      %v7288 = vsel %vm7286, %v7163, %v7070
      %v7289 = vsel %vm7286, %v7178, %v7073
      %v7290 = vsel %vm7286, %v7193, %v7075
      %v7291 = vsel %vm7286, %v7208, %v7078
      %v7292 = vsel %vm7286, %v7223, %v7080
      %v7293 = vsel %vm7286, %v7238, %v7083
      %v7294 = vsel %vm7286, %v7253, %v7085
      %v7295 = vsel %vm7286, %v7268, %v7088
      %v7296 = vsel %vm7286, %v7283, %v7090
      %7297 = vst [vmem:[%s440 + $0xf0] sm:$0xff] %v7287
      %7298 = vst [vmem:[%s440 + $0xf8] sm:$0xff] %v7288
      %7299 = vst [vmem:[%s440 + $0x100] sm:$0xff] %v7289
      %7300 = vst [vmem:[%s440 + $0x108] sm:$0xff] %v7290
      %7301 = vst [vmem:[%s440 + $0x110] sm:$0xff] %v7291
      %7302 = vst [vmem:[%s440 + $0x118] sm:$0xff] %v7292
      %7303 = vst [vmem:[%s440 + $0x120] sm:$0xff] %v7293
      %7304 = vst [vmem:[%s440 + $0x128] sm:$0xff] %v7294
      %7305 = vst [vmem:[%s440 + $0x130] sm:$0xff] %v7295
      %7306 = vst [vmem:[%s440 + $0x138] sm:$0xff] %v7296
      %p7307 = scmp.lt.s32.totalorder %s24, 1
      %s7308 = scalar_select %p7307, %s24, 1
      %s7309 = smul.addr %s7308, 40
      %s7310 = smul.addr %s7309, 8
      %s7311 = scalar_lea.vmem %s13, %s7310
      // Predicated region
      $region73: #{centernet_forward.1} parent=71 // pred_check
        %p7312 = pneg %p320
      $region74: #{centernet_forward.1} parent=71 // pred_check_branch
        %7314 = sbr.rel (%p7312) target = $region76
      $region75: #{centernet_forward.1} parent=71 // pred_region
        _
      $region76: #{centernet_forward.1} parent=71 // pred_fallthru
        _
    $region72: #{centernet_forward.1} parent=5 // pred_fallthru
      _
    %p7315 = scmp.le.s32.totalorder 2, %s19
    // Predicated region
    $region77: #{centernet_forward.1} parent=5 // pred_check
      %p7316 = pneg %p7315
    $region78: #{centernet_forward.1} parent=5 // pred_check_branch
      %7318 = sbr.rel (%p7316) target = $region80
    $region79: #{centernet_forward.1} parent=5 // pred_region
      %s7319 = ssub.s32 %s19, 2
      // Predicated region
      $region81: #{centernet_forward.1} parent=79 // pred_check
        %p7320 = pneg %p326
      $region82: #{centernet_forward.1} parent=79 // pred_check_branch
        %7322 = sbr.rel (%p7320) target = $region84
      $region83: #{centernet_forward.1} parent=79 // pred_region
        %p7323 = scmp.lt.s32.totalorder %s25, 1
        %s7324 = scalar_select %p7323, %s25, 1
        %s7325 = smul.addr %s7324, 40
        %s7326 = smul.addr %s7325, 8
        %s7327 = scalar_lea.vmem %s13, %s7326
      $region84: #{centernet_forward.1} parent=79 // pred_fallthru
        _
    $region80: #{centernet_forward.1} parent=5 // pred_fallthru
      _
  $region6: #{centernet_forward.1} parent=0 // loop_footer
    %s23 = sadd.s32 1, %s19
  $region7: #{centernet_forward.1} parent=0 // loop_footer_branch
    %18 = sbr.rel target = $region3
  $region8: #{centernet_forward.1} parent=0 // loop_exit
    _

</llo_original>
